<compile_context>
chip_gen: v7x
topology: tpu7x:2x2x1
jax: 0.10.0
libtpu: 0.0.40
codegen_flags: <defaults>
</compile_context>

<pallas_src>
import functools
import math

import jax
import jax.numpy as jnp
from jax.experimental import pallas as pl
from jax.experimental.pallas import tpu as pltpu

MATMUL_DTYPE = jnp.bfloat16   # MXU operand dtype (accumulation stays f32)
LN_EPS = 1e-5                 # matches nn.LayerNorm default


# ---------------------------------------------------------------------------
# In-kernel math helpers
# ---------------------------------------------------------------------------
def _ln(x, g, b):
    mu = jnp.mean(x, axis=-1, keepdims=True)
    var = jnp.mean(jnp.square(x - mu), axis=-1, keepdims=True)
    return (x - mu) * jax.lax.rsqrt(var + LN_EPS) * g + b


def _softmax(s):
    s = s - jnp.max(s, axis=-1, keepdims=True)
    e = jnp.exp(s)
    return e / jnp.sum(e, axis=-1, keepdims=True)


# ---------------------------------------------------------------------------
# The single fused kernel (grid axis = encoder layer, "arbitrary")
# ---------------------------------------------------------------------------
def _timexer_kernel(
    # constant-index inputs (fetched once)
    xp_ref, xe_ref, gt_ref, pw_ref, pb_ref, vw_ref, vb_ref, hw_ref, hb_ref,
    # per-layer stacked weights (block index = layer)
    wqkv_ref, bqkv_ref, wo_ref, bo_ref,
    wq_ref, bq_ref, wkv_ref, bkv_ref, woc_ref, boc_ref,
    lng_ref, lnb_ref, l2g_ref, l2b_ref,
    w1_ref, b1_ref, w2_ref, b2_ref,
    # outputs
    pred_ref,
    # VMEM scratch (persists across the layer grid)
    tok_scr, v_scr,
    *, batch, n_patch, exo_num, num_heads):

    layer = pl.program_id(0)
    E = tok_scr.shape[-1]
    T = n_patch + 1
    dh = E // num_heads

    def mm(x, w_ref, b_ref):
        """x @ W + b with bf16 MXU operands and f32 accumulation."""
        return (jnp.dot(x.astype(w_ref.dtype), w_ref[...],
                        preferred_element_type=jnp.float32) + b_ref[...])

    # ---- layer 0: embeddings (patch tokens, global token, exo variates) ----
    @pl.when(layer == 0)
    def _():
        pe = mm(xp_ref[...], pw_ref, pb_ref)                       # (B*Np, E)
        tok_scr[:, :n_patch, :] = pe.reshape(batch, n_patch, E)
        tok_scr[:, n_patch:, :] = jnp.broadcast_to(gt_ref[...], (batch, 1, E))
        xe = xe_ref[...]                                           # (B, Ne, S)
        vw = vw_ref[...]                                           # (Ne, S, E)
        vb = vb_ref[...]                                           # (Ne, 1, E)
        for n in range(exo_num):                                   # static, tiny
            y = jnp.dot(xe[:, n, :].astype(vw.dtype), vw[n],
                        preferred_element_type=jnp.float32) + vb[n]  # (B, E)
            v_scr[:, n:n + 1, :] = y[:, None, :]

    # ------------------------- encoder layer `layer` ------------------------
    tokens = tok_scr[...]                                          # (B, T, E)

    # self-attention over [patch tokens ; global token]  (scale folded into Q)
    qkv = mm(tokens.reshape(batch * T, E), wqkv_ref,
             bqkv_ref).reshape(batch, T, 3 * E)                    # f32
    wo_full = wo_ref[...]                                          # (E, E) bf16
    attn_out = jnp.zeros((batch, T, E), jnp.float32)
    for h in range(num_heads):                                     # static unroll
        q = qkv[:, :, h * dh:(h + 1) * dh].astype(MATMUL_DTYPE)
        k = qkv[:, :, E + h * dh:E + (h + 1) * dh].astype(MATMUL_DTYPE)
        v = qkv[:, :, 2 * E + h * dh:2 * E + (h + 1) * dh].astype(MATMUL_DTYPE)
        s = jnp.einsum('bqd,bkd->bqk', q, k,
                       preferred_element_type=jnp.float32)         # (B, T, T)
        p = _softmax(s)
        ctx = jnp.einsum('bqk,bkd->bqd', p.astype(MATMUL_DTYPE), v,
                         preferred_element_type=jnp.float32)       # (B, T, dh)
        # accumulate the output projection per head == concat-then-project
        attn_out = attn_out + jnp.einsum(
            'bqd,de->bqe', ctx.astype(MATMUL_DTYPE),
            wo_full[h * dh:(h + 1) * dh, :],
            preferred_element_type=jnp.float32)
    attn_out = attn_out + bo_ref[...]
    tokens = _ln(tokens + attn_out, lng_ref[...], lnb_ref[...])    # (B, T, E)

    # cross-attention: global token attends to exogenous variate embeddings
    g_in = tokens[:, n_patch:, :]                                  # (B, 1, E)
    q_all = mm(g_in.reshape(batch, E), wq_ref, bq_ref).reshape(batch, 1, E)
    kv_all = mm(v_scr[...].reshape(batch * exo_num, E), wkv_ref,
                bkv_ref).reshape(batch, exo_num, 2 * E)
    woc_full = woc_ref[...]
    cross_out = jnp.zeros((batch, 1, E), jnp.float32)
    for h in range(num_heads):
        q = q_all[:, :, h * dh:(h + 1) * dh].astype(MATMUL_DTYPE)
        k = kv_all[:, :, h * dh:(h + 1) * dh].astype(MATMUL_DTYPE)
        v = kv_all[:, :, E + h * dh:E + (h + 1) * dh].astype(MATMUL_DTYPE)
        s = jnp.einsum('bqd,bkd->bqk', q, k,
                       preferred_element_type=jnp.float32)         # (B, 1, Ne)
        p = _softmax(s)
        ctx = jnp.einsum('bqk,bkd->bqd', p.astype(MATMUL_DTYPE), v,
                         preferred_element_type=jnp.float32)       # (B, 1, dh)
        cross_out = cross_out + jnp.einsum(
            'bqd,de->bqe', ctx.astype(MATMUL_DTYPE),
            woc_full[h * dh:(h + 1) * dh, :],
            preferred_element_type=jnp.float32)
    cross_out = cross_out.reshape(batch, E) + boc_ref[...]
    g_new = _ln(g_in.reshape(batch, E) + cross_out,
                lng_ref[...], lnb_ref[...])                        # (B, E)

    # shared FFN (LayerNorm -> Linear -> ReLU -> Linear, no residual) applied
    # to the VMEM-resident patch rows and global rows (weights loaded once).
    def ffn(x2d):
        h = _ln(x2d, l2g_ref[...], l2b_ref[...])
        h = jnp.maximum(mm(h, w1_ref, b1_ref), 0.0)
        return mm(h, w2_ref, b2_ref)

    p_rows = ffn(tokens[:, :n_patch, :].reshape(batch * n_patch, E))
    g_rows = ffn(g_new)                                            # (B, E)

    tok_scr[:, :n_patch, :] = p_rows.reshape(batch, n_patch, E)
    tok_scr[:, n_patch:, :] = g_rows.reshape(batch, 1, E)

    # prediction head folded into the last layer's step
    @pl.when(layer == pl.num_programs(0) - 1)
    def _():
        pred_ref[...] = mm(g_rows, hw_ref, hb_ref)                 # (B, P)


# ---------------------------------------------------------------------------
# Wrapper: one pallas_call for the whole model
# ---------------------------------------------------------------------------
def timexer_forward(params, x_endo, x_exo, *, patch_length, num_heads):
    B, L, D = x_endo.shape
    n_patch = L // patch_length
    PD = patch_length * D
    E = params["patch_b"].shape[-1]
    Ne, S = params["var_w"].shape[0], params["var_w"].shape[1]
    P = params["head_b"].shape[-1]
    n_layers = params["wqkv"].shape[0]

    # cheap XLA-side layout glue only
    xp = x_endo[:, :n_patch * patch_length, :].reshape(B * n_patch, PD)
    xe = jnp.stack(x_exo, axis=1)                                  # (B, Ne, S)

    def c2(shape):
        return pl.BlockSpec(shape, lambda l: (0, 0))

    def c3(shape):
        return pl.BlockSpec(shape, lambda l: (0, 0, 0))

    def per_layer(r, c):
        return pl.BlockSpec((pl.Squeezed(), r, c), lambda l: (l, 0, 0))

    kernel = functools.partial(_timexer_kernel, batch=B, n_patch=n_patch,
                               exo_num=Ne, num_heads=num_heads)

    return pl.pallas_call(
        kernel,
        out_shape=jax.ShapeDtypeStruct((B, P), jnp.float32),
        grid=(n_layers,),
        in_specs=[
            c2((B * n_patch, PD)),                   # patched endogenous input
            c3((B, Ne, S)),                          # stacked exogenous input
            c3((1, 1, E)),                           # global token
            c2((PD, E)), c2((1, E)),                 # patch projection
            c3((Ne, S, E)), c3((Ne, 1, E)),          # variate projections
            c2((E, P)), c2((1, P)),                  # prediction head
            per_layer(E, 3 * E), per_layer(1, 3 * E),   # wqkv, bqkv
            per_layer(E, E), per_layer(1, E),           # wo, bo
            per_layer(E, E), per_layer(1, E),           # wq, bq (cross)
            per_layer(E, 2 * E), per_layer(1, 2 * E),   # wkv, bkv (cross)
            per_layer(E, E), per_layer(1, E),           # wo, bo (cross)
            per_layer(1, E), per_layer(1, E),           # shared LayerNorm
            per_layer(1, E), per_layer(1, E),           # FFN LayerNorm
            per_layer(E, E), per_layer(1, E),           # FFN w1, b1
            per_layer(E, E), per_layer(1, E),           # FFN w2, b2
        ],
        out_specs=pl.BlockSpec((B, P), lambda l: (0, 0)),
        scratch_shapes=[
            pltpu.VMEM((B, n_patch + 1, E), jnp.float32),   # [patch ; global]
            pltpu.VMEM((B, Ne, E), jnp.float32),            # variate embeds
        ],
        compiler_params=pltpu.CompilerParams(
            dimension_semantics=("arbitrary",)),
    )(xp, xe,
      params["global_token"],
      params["patch_w"], params["patch_b"],
      params["var_w"], params["var_b"],
      params["head_w"], params["head_b"],
      params["wqkv"], params["bqkv"], params["wo"], params["bo"],
      params["wq"], params["bq"], params["wkv"], params["bkv"],
      params["woc"], params["boc"],
      params["ln_g"], params["ln_b"],
      params["ffn_ln_g"], params["ffn_ln_b"],
      params["ffn_w1"], params["ffn_b1"],
      params["ffn_w2"], params["ffn_b2"])


# ---------------------------------------------------------------------------
# Deterministic parameter init (synthetic weights; bf16 matmul weights,
# (1, N) biases, per-layer stacking, attention scale folded into Q).
# ---------------------------------------------------------------------------
def init_params(key, in_dim, exo_num, exo_seq_len, patch_length, embed_dim,
                num_layers, num_heads, pred_len):
    keys = iter(jax.random.split(key, 512))
    attn_scale = 1.0 / math.sqrt(embed_dim // num_heads)

    def w(shape, scale=0.05):
        return scale * jax.random.normal(next(keys), shape, jnp.float32)

    def stack(shape, scale=0.05):
        return w((num_layers,) + shape, scale)

    wqkv = stack((embed_dim, 3 * embed_dim))
    bqkv = stack((1, 3 * embed_dim))
    # fold 1/sqrt(dh) into the Q projection (self- and cross-attention)
    wqkv = wqkv.at[:, :, :embed_dim].multiply(attn_scale)
    bqkv = bqkv.at[:, :, :embed_dim].multiply(attn_scale)
    wq = stack((embed_dim, embed_dim)) * attn_scale
    bq = stack((1, embed_dim)) * attn_scale

    return {
        "patch_w": w((patch_length * in_dim, embed_dim)).astype(MATMUL_DTYPE),
        "patch_b": w((1, embed_dim)),
        "global_token": w((1, 1, embed_dim), 1.0),
        "var_w": w((exo_num, exo_seq_len, embed_dim)).astype(MATMUL_DTYPE),
        "var_b": w((exo_num, 1, embed_dim)),
        "head_w": w((embed_dim, pred_len)).astype(MATMUL_DTYPE),
        "head_b": w((1, pred_len)),
        "wqkv": wqkv.astype(MATMUL_DTYPE), "bqkv": bqkv,
        "wo": stack((embed_dim, embed_dim)).astype(MATMUL_DTYPE),
        "bo": stack((1, embed_dim)),
        "wq": wq.astype(MATMUL_DTYPE), "bq": bq,
        "wkv": stack((embed_dim, 2 * embed_dim)).astype(MATMUL_DTYPE),
        "bkv": stack((1, 2 * embed_dim)),
        "woc": stack((embed_dim, embed_dim)).astype(MATMUL_DTYPE),
        "boc": stack((1, embed_dim)),
        "ln_g": jnp.ones((num_layers, 1, embed_dim), jnp.float32),
        "ln_b": jnp.zeros((num_layers, 1, embed_dim), jnp.float32),
        "ffn_ln_g": jnp.ones((num_layers, 1, embed_dim), jnp.float32),
        "ffn_ln_b": jnp.zeros((num_layers, 1, embed_dim), jnp.float32),
        "ffn_w1": stack((embed_dim, embed_dim)).astype(MATMUL_DTYPE),
        "ffn_b1": stack((1, embed_dim)),
        "ffn_w2": stack((embed_dim, embed_dim)).astype(MATMUL_DTYPE),
        "ffn_b2": stack((1, embed_dim)),
    }


# ---------------------------------------------------------------------------
if __name__ == "__main__":
    in_dim, exo_num, exo_seq_len = 3, 2, 12
    patch_length, embed_dim, num_layers, num_heads, pred_len = 4, 32, 2, 4, 6
    seq_len, B = 16, 2

    key = jax.random.PRNGKey(0)
    kparam, kendo, *kexo = jax.random.split(key, 2 + exo_num)

    params = init_params(kparam, in_dim, exo_num, exo_seq_len, patch_length,
                         embed_dim, num_layers, num_heads, pred_len)

    x_endo = jax.random.normal(kendo, (B, seq_len, in_dim), jnp.float32)
    x_exo = [
        jax.random.normal(kexo[i], (B, exo_seq_len), jnp.float32)
        for i in range(exo_num)
    ]

    fwd = jax.jit(functools.partial(timexer_forward,
                                    patch_length=patch_length,
                                    num_heads=num_heads))
    pred = fwd(params, x_endo, x_exo)
    jax.block_until_ready(pred)
    assert pred.shape == (B, pred_len), pred.shape
    assert bool(jnp.all(jnp.isfinite(pred)))
    print("KERNEL_OK")
</pallas_src>

<mosaic_0001>
module attributes {stable_mosaic.version = 11 : i64} {
  func.func @_timexer_kernel(%arg0: i32, %arg1: memref<8x12xf32, #tpu.memory_space<vmem>>, %arg2: memref<2x2x12xf32, #tpu.memory_space<vmem>>, %arg3: memref<1x1x32xf32, #tpu.memory_space<vmem>>, %arg4: memref<12x32xbf16, #tpu.memory_space<vmem>>, %arg5: memref<1x32xf32, #tpu.memory_space<vmem>>, %arg6: memref<2x12x32xbf16, #tpu.memory_space<vmem>>, %arg7: memref<2x1x32xf32, #tpu.memory_space<vmem>>, %arg8: memref<32x6xbf16, #tpu.memory_space<vmem>>, %arg9: memref<1x6xf32, #tpu.memory_space<vmem>>, %arg10: memref<1x32x96xbf16, #tpu.memory_space<vmem>>, %arg11: memref<1x1x96xf32, #tpu.memory_space<vmem>>, %arg12: memref<1x32x32xbf16, #tpu.memory_space<vmem>>, %arg13: memref<1x1x32xf32, #tpu.memory_space<vmem>>, %arg14: memref<1x32x32xbf16, #tpu.memory_space<vmem>>, %arg15: memref<1x1x32xf32, #tpu.memory_space<vmem>>, %arg16: memref<1x32x64xbf16, #tpu.memory_space<vmem>>, %arg17: memref<1x1x64xf32, #tpu.memory_space<vmem>>, %arg18: memref<1x32x32xbf16, #tpu.memory_space<vmem>>, %arg19: memref<1x1x32xf32, #tpu.memory_space<vmem>>, %arg20: memref<1x1x32xf32, #tpu.memory_space<vmem>>, %arg21: memref<1x1x32xf32, #tpu.memory_space<vmem>>, %arg22: memref<1x1x32xf32, #tpu.memory_space<vmem>>, %arg23: memref<1x1x32xf32, #tpu.memory_space<vmem>>, %arg24: memref<1x32x32xbf16, #tpu.memory_space<vmem>>, %arg25: memref<1x1x32xf32, #tpu.memory_space<vmem>>, %arg26: memref<1x32x32xbf16, #tpu.memory_space<vmem>>, %arg27: memref<1x1x32xf32, #tpu.memory_space<vmem>>, %arg28: memref<2x6xf32, #tpu.memory_space<vmem>>, %arg29: memref<2x5x32xf32, #tpu.memory_space<vmem>>, %arg30: memref<2x2x32xf32, #tpu.memory_space<vmem>>) attributes {dimension_semantics = [#tpu.dimension_semantics<arbitrary>], iteration_bounds = array<i64: 2>, scalar_prefetch = 0 : i64, scratch_operands = 2 : i64, tpu.core_type = #tpu.core_type<tc>, window_params = [{pipeline_mode = #tpu.pipeline_mode<synchronous>, transform_indices = @transform_0, window_bounds = array<i64: 8, 12>}, {pipeline_mode = #tpu.pipeline_mode<synchronous>, transform_indices = @transform_1, window_bounds = array<i64: 2, 2, 12>}, {pipeline_mode = #tpu.pipeline_mode<synchronous>, transform_indices = @transform_2, window_bounds = array<i64: 1, 1, 32>}, {pipeline_mode = #tpu.pipeline_mode<synchronous>, transform_indices = @transform_3, window_bounds = array<i64: 12, 32>}, {pipeline_mode = #tpu.pipeline_mode<synchronous>, transform_indices = @transform_4, window_bounds = array<i64: 1, 32>}, {pipeline_mode = #tpu.pipeline_mode<synchronous>, transform_indices = @transform_5, window_bounds = array<i64: 2, 12, 32>}, {pipeline_mode = #tpu.pipeline_mode<synchronous>, transform_indices = @transform_6, window_bounds = array<i64: 2, 1, 32>}, {pipeline_mode = #tpu.pipeline_mode<synchronous>, transform_indices = @transform_7, window_bounds = array<i64: 32, 6>}, {pipeline_mode = #tpu.pipeline_mode<synchronous>, transform_indices = @transform_8, window_bounds = array<i64: 1, 6>}, {transform_indices = @transform_9, window_bounds = array<i64: 1, 32, 96>}, {transform_indices = @transform_10, window_bounds = array<i64: 1, 1, 96>}, {transform_indices = @transform_11, window_bounds = array<i64: 1, 32, 32>}, {transform_indices = @transform_12, window_bounds = array<i64: 1, 1, 32>}, {transform_indices = @transform_13, window_bounds = array<i64: 1, 32, 32>}, {transform_indices = @transform_14, window_bounds = array<i64: 1, 1, 32>}, {transform_indices = @transform_15, window_bounds = array<i64: 1, 32, 64>}, {transform_indices = @transform_16, window_bounds = array<i64: 1, 1, 64>}, {transform_indices = @transform_17, window_bounds = array<i64: 1, 32, 32>}, {transform_indices = @transform_18, window_bounds = array<i64: 1, 1, 32>}, {transform_indices = @transform_19, window_bounds = array<i64: 1, 1, 32>}, {transform_indices = @transform_20, window_bounds = array<i64: 1, 1, 32>}, {transform_indices = @transform_21, window_bounds = array<i64: 1, 1, 32>}, {transform_indices = @transform_22, window_bounds = array<i64: 1, 1, 32>}, {transform_indices = @transform_23, window_bounds = array<i64: 1, 32, 32>}, {transform_indices = @transform_24, window_bounds = array<i64: 1, 1, 32>}, {transform_indices = @transform_25, window_bounds = array<i64: 1, 32, 32>}, {transform_indices = @transform_26, window_bounds = array<i64: 1, 1, 32>}, {pipeline_mode = #tpu.pipeline_mode<synchronous>, transform_indices = @transform_27, window_bounds = array<i64: 2, 6>}]} {
    %c0_i32 = arith.constant 0 : i32
    %0 = arith.cmpi eq, %arg0, %c0_i32 : i32
    %1 = arith.extui %0 : i1 to i32
    %c0_i32_0 = arith.constant 0 : i32
    %2 = arith.cmpi ne, %1, %c0_i32_0 : i32
    scf.if %2 {
      %c0_160 = arith.constant 0 : index
      %c0_161 = arith.constant 0 : index
      %382 = vector.load %arg1[%c0_160, %c0_161] : memref<8x12xf32, #tpu.memory_space<vmem>>, vector<8x12xf32>
      %383 = arith.truncf %382 : vector<8x12xf32> to vector<8x12xbf16>
      %c0_162 = arith.constant 0 : index
      %c0_163 = arith.constant 0 : index
      %384 = vector.load %arg4[%c0_162, %c0_163] : memref<12x32xbf16, #tpu.memory_space<vmem>>, vector<12x32xbf16>
      %cst_164 = arith.constant dense<0.000000e+00> : vector<8x32xf32>
      %385 = tpu.matmul %383, %384, %cst_164 {dimension_numbers = #tpu.dot_dimension_numbers<[1], [0], [0], [1], [0, 0, 1, 1], [], []>} : vector<8x12xbf16>, vector<12x32xbf16>, vector<8x32xf32> -> vector<8x32xf32>
      %c0_165 = arith.constant 0 : index
      %c0_166 = arith.constant 0 : index
      %386 = vector.load %arg5[%c0_165, %c0_166] : memref<1x32xf32, #tpu.memory_space<vmem>>, vector<1x32xf32>
      %387 = vector.broadcast %386 : vector<1x32xf32> to vector<8x32xf32>
      %388 = arith.addf %385, %387 : vector<8x32xf32>
      %389 = vector.shape_cast %388 : vector<8x32xf32> to vector<2x4x32xf32>
      %c0_167 = arith.constant 0 : index
      %c0_168 = arith.constant 0 : index
      %c0_169 = arith.constant 0 : index
      %390 = vector.load %arg29[%c0_167, %c0_168, %c0_169] : memref<2x5x32xf32, #tpu.memory_space<vmem>>, vector<2x4x32xf32>
      tpu.vector_store %arg29[%c0_167, %c0_168, %c0_169], %389 {strides = array<i32>} : memref<2x5x32xf32, #tpu.memory_space<vmem>>, vector<2x4x32xf32>,
      %c0_170 = arith.constant 0 : index
      %c0_171 = arith.constant 0 : index
      %c0_172 = arith.constant 0 : index
      %391 = vector.load %arg3[%c0_170, %c0_171, %c0_172] : memref<1x1x32xf32, #tpu.memory_space<vmem>>, vector<1x1x32xf32>
      %392 = vector.shape_cast %391 : vector<1x1x32xf32> to vector<1x1x32xf32>
      %393 = vector.broadcast %392 : vector<1x1x32xf32> to vector<2x1x32xf32>
      %c0_173 = arith.constant 0 : index
      %c4_174 = arith.constant 4 : index
      %c0_175 = arith.constant 0 : index
      %394 = vector.load %arg29[%c0_173, %c4_174, %c0_175] : memref<2x5x32xf32, #tpu.memory_space<vmem>>, vector<2x1x32xf32>
      tpu.vector_store %arg29[%c0_173, %c4_174, %c0_175], %393 {strides = array<i32>} : memref<2x5x32xf32, #tpu.memory_space<vmem>>, vector<2x1x32xf32>,
      %c0_176 = arith.constant 0 : index
      %c0_177 = arith.constant 0 : index
      %c0_178 = arith.constant 0 : index
      %395 = vector.load %arg2[%c0_176, %c0_177, %c0_178] : memref<2x2x12xf32, #tpu.memory_space<vmem>>, vector<2x2x12xf32>
      %c0_179 = arith.constant 0 : index
      %c0_180 = arith.constant 0 : index
      %c0_181 = arith.constant 0 : index
      %396 = vector.load %arg6[%c0_179, %c0_180, %c0_181] : memref<2x12x32xbf16, #tpu.memory_space<vmem>>, vector<2x12x32xbf16>
      %c0_182 = arith.constant 0 : index
      %c0_183 = arith.constant 0 : index
      %c0_184 = arith.constant 0 : index
      %397 = vector.load %arg7[%c0_182, %c0_183, %c0_184] : memref<2x1x32xf32, #tpu.memory_space<vmem>>, vector<2x1x32xf32>
      %398 = vector.extract_strided_slice %395 {offsets = [0, 0, 0], sizes = [2, 1, 12], strides = [1, 1, 1]} : vector<2x2x12xf32> to vector<2x1x12xf32>
      %399 = vector.shape_cast %398 : vector<2x1x12xf32> to vector<2x12xf32>
      %400 = arith.truncf %399 : vector<2x12xf32> to vector<2x12xbf16>
      %401 = vector.extract_strided_slice %396 {offsets = [0, 0, 0], sizes = [1, 12, 32], strides = [1, 1, 1]} : vector<2x12x32xbf16> to vector<1x12x32xbf16>
      %402 = vector.shape_cast %401 : vector<1x12x32xbf16> to vector<12x32xbf16>
      %cst_185 = arith.constant dense<0.000000e+00> : vector<2x32xf32>
      %403 = tpu.matmul %400, %402, %cst_185 {dimension_numbers = #tpu.dot_dimension_numbers<[1], [0], [0], [1], [0, 0, 1, 1], [], []>} : vector<2x12xbf16>, vector<12x32xbf16>, vector<2x32xf32> -> vector<2x32xf32>
      %404 = vector.extract_strided_slice %397 {offsets = [0, 0, 0], sizes = [1, 1, 32], strides = [1, 1, 1]} : vector<2x1x32xf32> to vector<1x1x32xf32>
      %405 = vector.shape_cast %404 : vector<1x1x32xf32> to vector<1x32xf32>
      %406 = vector.broadcast %405 : vector<1x32xf32> to vector<2x32xf32>
      %407 = arith.addf %403, %406 : vector<2x32xf32>
      %408 = vector.shape_cast %407 : vector<2x32xf32> to vector<2x1x32xf32>
      %c0_186 = arith.constant 0 : index
      %c0_187 = arith.constant 0 : index
      %c0_188 = arith.constant 0 : index
      %409 = vector.load %arg30[%c0_186, %c0_187, %c0_188] : memref<2x2x32xf32, #tpu.memory_space<vmem>>, vector<2x1x32xf32>
      tpu.vector_store %arg30[%c0_186, %c0_187, %c0_188], %408 {strides = array<i32>} : memref<2x2x32xf32, #tpu.memory_space<vmem>>, vector<2x1x32xf32>,
      %410 = vector.extract_strided_slice %395 {offsets = [0, 1, 0], sizes = [2, 1, 12], strides = [1, 1, 1]} : vector<2x2x12xf32> to vector<2x1x12xf32>
      %411 = vector.shape_cast %410 : vector<2x1x12xf32> to vector<2x12xf32>
      %412 = arith.truncf %411 : vector<2x12xf32> to vector<2x12xbf16>
      %413 = vector.extract_strided_slice %396 {offsets = [1, 0, 0], sizes = [1, 12, 32], strides = [1, 1, 1]} : vector<2x12x32xbf16> to vector<1x12x32xbf16>
      %414 = vector.shape_cast %413 : vector<1x12x32xbf16> to vector<12x32xbf16>
      %cst_189 = arith.constant dense<0.000000e+00> : vector<2x32xf32>
      %415 = tpu.matmul %412, %414, %cst_189 {dimension_numbers = #tpu.dot_dimension_numbers<[1], [0], [0], [1], [0, 0, 1, 1], [], []>} : vector<2x12xbf16>, vector<12x32xbf16>, vector<2x32xf32> -> vector<2x32xf32>
      %416 = vector.extract_strided_slice %397 {offsets = [1, 0, 0], sizes = [1, 1, 32], strides = [1, 1, 1]} : vector<2x1x32xf32> to vector<1x1x32xf32>
      %417 = vector.shape_cast %416 : vector<1x1x32xf32> to vector<1x32xf32>
      %418 = vector.broadcast %417 : vector<1x32xf32> to vector<2x32xf32>
      %419 = arith.addf %415, %418 : vector<2x32xf32>
      %420 = vector.shape_cast %419 : vector<2x32xf32> to vector<2x1x32xf32>
      %c0_190 = arith.constant 0 : index
      %c1 = arith.constant 1 : index
      %c0_191 = arith.constant 0 : index
      %421 = vector.load %arg30[%c0_190, %c1, %c0_191] : memref<2x2x32xf32, #tpu.memory_space<vmem>>, vector<2x1x32xf32>
      tpu.vector_store %arg30[%c0_190, %c1, %c0_191], %420 {strides = array<i32>} : memref<2x2x32xf32, #tpu.memory_space<vmem>>, vector<2x1x32xf32>,
    } else {
    }
    %c0 = arith.constant 0 : index
    %c0_1 = arith.constant 0 : index
    %c0_2 = arith.constant 0 : index
    %3 = vector.load %arg29[%c0, %c0_1, %c0_2] : memref<2x5x32xf32, #tpu.memory_space<vmem>>, vector<2x5x32xf32>
    %4 = vector.shape_cast %3 : vector<2x5x32xf32> to vector<10x32xf32>
    %5 = arith.truncf %4 : vector<10x32xf32> to vector<10x32xbf16>
    %c0_3 = arith.constant 0 : index
    %c0_4 = arith.constant 0 : index
    %c0_5 = arith.constant 0 : index
    %6 = vector.load %arg10[%c0_3, %c0_4, %c0_5] : memref<1x32x96xbf16, #tpu.memory_space<vmem>>, vector<1x32x96xbf16>
    %7 = vector.shape_cast %6 : vector<1x32x96xbf16> to vector<32x96xbf16>
    %cst = arith.constant dense<0.000000e+00> : vector<10x96xf32>
    %8 = tpu.matmul %5, %7, %cst {dimension_numbers = #tpu.dot_dimension_numbers<[1], [0], [0], [1], [0, 0, 1, 1], [], []>} : vector<10x32xbf16>, vector<32x96xbf16>, vector<10x96xf32> -> vector<10x96xf32>
    %c0_6 = arith.constant 0 : index
    %c0_7 = arith.constant 0 : index
    %c0_8 = arith.constant 0 : index
    %9 = vector.load %arg11[%c0_6, %c0_7, %c0_8] : memref<1x1x96xf32, #tpu.memory_space<vmem>>, vector<1x1x96xf32>
    %10 = vector.shape_cast %9 : vector<1x1x96xf32> to vector<1x96xf32>
    %11 = vector.broadcast %10 : vector<1x96xf32> to vector<10x96xf32>
    %12 = arith.addf %8, %11 : vector<10x96xf32>
    %13 = vector.shape_cast %12 : vector<10x96xf32> to vector<2x5x96xf32>
    %c0_9 = arith.constant 0 : index
    %c0_10 = arith.constant 0 : index
    %c0_11 = arith.constant 0 : index
    %14 = vector.load %arg12[%c0_9, %c0_10, %c0_11] : memref<1x32x32xbf16, #tpu.memory_space<vmem>>, vector<1x32x32xbf16>
    %15 = vector.shape_cast %14 : vector<1x32x32xbf16> to vector<32x32xbf16>
    %cst_12 = arith.constant 0.000000e+00 : f32
    %16 = vector.broadcast %cst_12 : f32 to vector<2x5x32xf32>
    %17 = vector.extract_strided_slice %13 {offsets = [0, 0, 0], sizes = [2, 5, 8], strides = [1, 1, 1]} : vector<2x5x96xf32> to vector<2x5x8xf32>
    %18 = arith.truncf %17 : vector<2x5x8xf32> to vector<2x5x8xbf16>
    %19 = vector.extract_strided_slice %13 {offsets = [0, 0, 32], sizes = [2, 5, 8], strides = [1, 1, 1]} : vector<2x5x96xf32> to vector<2x5x8xf32>
    %20 = arith.truncf %19 : vector<2x5x8xf32> to vector<2x5x8xbf16>
    %21 = vector.extract_strided_slice %13 {offsets = [0, 0, 64], sizes = [2, 5, 8], strides = [1, 1, 1]} : vector<2x5x96xf32> to vector<2x5x8xf32>
    %22 = arith.truncf %21 : vector<2x5x8xf32> to vector<2x5x8xbf16>
    "tpu.trace_start"() <{level = 10 : i32, message = "bqd,bkd->bqk"}> : () -> ()
    %cst_13 = arith.constant dense<0.000000e+00> : vector<2x5x5xf32>
    %23 = tpu.matmul %18, %20, %cst_13 {dimension_numbers = #tpu.dot_dimension_numbers<[2], [2], [1], [1], [0, 0, 0, 1, 1, 1], [0], [0]>} : vector<2x5x8xbf16>, vector<2x5x8xbf16>, vector<2x5x5xf32> -> vector<2x5x5xf32>
    "tpu.trace_stop"() : () -> ()
    %cst_14 = arith.constant dense<0xFF800000> : vector<2x5xf32>
    %24 = vector.multi_reduction <maximumf>, %23, %cst_14 [2] : vector<2x5x5xf32> to vector<2x5xf32>
    %25 = vector.shape_cast %24 : vector<2x5xf32> to vector<2x5x1xf32>
    %26 = vector.broadcast %25 : vector<2x5x1xf32> to vector<2x5x5xf32>
    %27 = arith.subf %23, %26 : vector<2x5x5xf32>
    %28 = math.exp %27 : vector<2x5x5xf32>
    %cst_15 = arith.constant dense<0.000000e+00> : vector<2x5xf32>
    %29 = vector.multi_reduction <add>, %28, %cst_15 [2] : vector<2x5x5xf32> to vector<2x5xf32>
    %30 = vector.shape_cast %29 : vector<2x5xf32> to vector<2x5x1xf32>
    %31 = vector.broadcast %30 : vector<2x5x1xf32> to vector<2x5x5xf32>
    %32 = arith.divf %28, %31 : vector<2x5x5xf32>
    %33 = arith.truncf %32 : vector<2x5x5xf32> to vector<2x5x5xbf16>
    "tpu.trace_start"() <{level = 10 : i32, message = "bqk,bkd->bqd"}> : () -> ()
    %cst_16 = arith.constant dense<0.000000e+00> : vector<2x5x8xf32>
    %34 = tpu.matmul %33, %22, %cst_16 {dimension_numbers = #tpu.dot_dimension_numbers<[2], [1], [1], [2], [0, 0, 0, 1, 1, 2], [0], [0]>} : vector<2x5x5xbf16>, vector<2x5x8xbf16>, vector<2x5x8xf32> -> vector<2x5x8xf32>
    "tpu.trace_stop"() : () -> ()
    %35 = arith.truncf %34 : vector<2x5x8xf32> to vector<2x5x8xbf16>
    %36 = vector.extract_strided_slice %15 {offsets = [0, 0], sizes = [8, 32], strides = [1, 1]} : vector<32x32xbf16> to vector<8x32xbf16>
    "tpu.trace_start"() <{level = 10 : i32, message = "bqd,de->bqe"}> : () -> ()
    %cst_17 = arith.constant dense<0.000000e+00> : vector<2x5x32xf32>
    %37 = tpu.matmul %35, %36, %cst_17 {dimension_numbers = #tpu.dot_dimension_numbers<[2], [0], [0, 1], [1], [0, 0, 0, 1, 1, 1], [], []>} : vector<2x5x8xbf16>, vector<8x32xbf16>, vector<2x5x32xf32> -> vector<2x5x32xf32>
    "tpu.trace_stop"() : () -> ()
    %38 = arith.addf %16, %37 : vector<2x5x32xf32>
    %39 = vector.extract_strided_slice %13 {offsets = [0, 0, 8], sizes = [2, 5, 8], strides = [1, 1, 1]} : vector<2x5x96xf32> to vector<2x5x8xf32>
    %40 = arith.truncf %39 : vector<2x5x8xf32> to vector<2x5x8xbf16>
    %41 = vector.extract_strided_slice %13 {offsets = [0, 0, 40], sizes = [2, 5, 8], strides = [1, 1, 1]} : vector<2x5x96xf32> to vector<2x5x8xf32>
    %42 = arith.truncf %41 : vector<2x5x8xf32> to vector<2x5x8xbf16>
    %43 = vector.extract_strided_slice %13 {offsets = [0, 0, 72], sizes = [2, 5, 8], strides = [1, 1, 1]} : vector<2x5x96xf32> to vector<2x5x8xf32>
    %44 = arith.truncf %43 : vector<2x5x8xf32> to vector<2x5x8xbf16>
    "tpu.trace_start"() <{level = 10 : i32, message = "bqd,bkd->bqk"}> : () -> ()
    %cst_18 = arith.constant dense<0.000000e+00> : vector<2x5x5xf32>
    %45 = tpu.matmul %40, %42, %cst_18 {dimension_numbers = #tpu.dot_dimension_numbers<[2], [2], [1], [1], [0, 0, 0, 1, 1, 1], [0], [0]>} : vector<2x5x8xbf16>, vector<2x5x8xbf16>, vector<2x5x5xf32> -> vector<2x5x5xf32>
    "tpu.trace_stop"() : () -> ()
    %cst_19 = arith.constant dense<0xFF800000> : vector<2x5xf32>
    %46 = vector.multi_reduction <maximumf>, %45, %cst_19 [2] : vector<2x5x5xf32> to vector<2x5xf32>
    %47 = vector.shape_cast %46 : vector<2x5xf32> to vector<2x5x1xf32>
    %48 = vector.broadcast %47 : vector<2x5x1xf32> to vector<2x5x5xf32>
    %49 = arith.subf %45, %48 : vector<2x5x5xf32>
    %50 = math.exp %49 : vector<2x5x5xf32>
    %cst_20 = arith.constant dense<0.000000e+00> : vector<2x5xf32>
    %51 = vector.multi_reduction <add>, %50, %cst_20 [2] : vector<2x5x5xf32> to vector<2x5xf32>
    %52 = vector.shape_cast %51 : vector<2x5xf32> to vector<2x5x1xf32>
    %53 = vector.broadcast %52 : vector<2x5x1xf32> to vector<2x5x5xf32>
    %54 = arith.divf %50, %53 : vector<2x5x5xf32>
    %55 = arith.truncf %54 : vector<2x5x5xf32> to vector<2x5x5xbf16>
    "tpu.trace_start"() <{level = 10 : i32, message = "bqk,bkd->bqd"}> : () -> ()
    %cst_21 = arith.constant dense<0.000000e+00> : vector<2x5x8xf32>
    %56 = tpu.matmul %55, %44, %cst_21 {dimension_numbers = #tpu.dot_dimension_numbers<[2], [1], [1], [2], [0, 0, 0, 1, 1, 2], [0], [0]>} : vector<2x5x5xbf16>, vector<2x5x8xbf16>, vector<2x5x8xf32> -> vector<2x5x8xf32>
    "tpu.trace_stop"() : () -> ()
    %57 = arith.truncf %56 : vector<2x5x8xf32> to vector<2x5x8xbf16>
    %58 = vector.extract_strided_slice %15 {offsets = [8, 0], sizes = [8, 32], strides = [1, 1]} : vector<32x32xbf16> to vector<8x32xbf16>
    "tpu.trace_start"() <{level = 10 : i32, message = "bqd,de->bqe"}> : () -> ()
    %cst_22 = arith.constant dense<0.000000e+00> : vector<2x5x32xf32>
    %59 = tpu.matmul %57, %58, %cst_22 {dimension_numbers = #tpu.dot_dimension_numbers<[2], [0], [0, 1], [1], [0, 0, 0, 1, 1, 1], [], []>} : vector<2x5x8xbf16>, vector<8x32xbf16>, vector<2x5x32xf32> -> vector<2x5x32xf32>
    "tpu.trace_stop"() : () -> ()
    %60 = arith.addf %38, %59 : vector<2x5x32xf32>
    %61 = vector.extract_strided_slice %13 {offsets = [0, 0, 16], sizes = [2, 5, 8], strides = [1, 1, 1]} : vector<2x5x96xf32> to vector<2x5x8xf32>
    %62 = arith.truncf %61 : vector<2x5x8xf32> to vector<2x5x8xbf16>
    %63 = vector.extract_strided_slice %13 {offsets = [0, 0, 48], sizes = [2, 5, 8], strides = [1, 1, 1]} : vector<2x5x96xf32> to vector<2x5x8xf32>
    %64 = arith.truncf %63 : vector<2x5x8xf32> to vector<2x5x8xbf16>
    %65 = vector.extract_strided_slice %13 {offsets = [0, 0, 80], sizes = [2, 5, 8], strides = [1, 1, 1]} : vector<2x5x96xf32> to vector<2x5x8xf32>
    %66 = arith.truncf %65 : vector<2x5x8xf32> to vector<2x5x8xbf16>
    "tpu.trace_start"() <{level = 10 : i32, message = "bqd,bkd->bqk"}> : () -> ()
    %cst_23 = arith.constant dense<0.000000e+00> : vector<2x5x5xf32>
    %67 = tpu.matmul %62, %64, %cst_23 {dimension_numbers = #tpu.dot_dimension_numbers<[2], [2], [1], [1], [0, 0, 0, 1, 1, 1], [0], [0]>} : vector<2x5x8xbf16>, vector<2x5x8xbf16>, vector<2x5x5xf32> -> vector<2x5x5xf32>
    "tpu.trace_stop"() : () -> ()
    %cst_24 = arith.constant dense<0xFF800000> : vector<2x5xf32>
    %68 = vector.multi_reduction <maximumf>, %67, %cst_24 [2] : vector<2x5x5xf32> to vector<2x5xf32>
    %69 = vector.shape_cast %68 : vector<2x5xf32> to vector<2x5x1xf32>
    %70 = vector.broadcast %69 : vector<2x5x1xf32> to vector<2x5x5xf32>
    %71 = arith.subf %67, %70 : vector<2x5x5xf32>
    %72 = math.exp %71 : vector<2x5x5xf32>
    %cst_25 = arith.constant dense<0.000000e+00> : vector<2x5xf32>
    %73 = vector.multi_reduction <add>, %72, %cst_25 [2] : vector<2x5x5xf32> to vector<2x5xf32>
    %74 = vector.shape_cast %73 : vector<2x5xf32> to vector<2x5x1xf32>
    %75 = vector.broadcast %74 : vector<2x5x1xf32> to vector<2x5x5xf32>
    %76 = arith.divf %72, %75 : vector<2x5x5xf32>
    %77 = arith.truncf %76 : vector<2x5x5xf32> to vector<2x5x5xbf16>
    "tpu.trace_start"() <{level = 10 : i32, message = "bqk,bkd->bqd"}> : () -> ()
    %cst_26 = arith.constant dense<0.000000e+00> : vector<2x5x8xf32>
    %78 = tpu.matmul %77, %66, %cst_26 {dimension_numbers = #tpu.dot_dimension_numbers<[2], [1], [1], [2], [0, 0, 0, 1, 1, 2], [0], [0]>} : vector<2x5x5xbf16>, vector<2x5x8xbf16>, vector<2x5x8xf32> -> vector<2x5x8xf32>
    "tpu.trace_stop"() : () -> ()
    %79 = arith.truncf %78 : vector<2x5x8xf32> to vector<2x5x8xbf16>
    %80 = vector.extract_strided_slice %15 {offsets = [16, 0], sizes = [8, 32], strides = [1, 1]} : vector<32x32xbf16> to vector<8x32xbf16>
    "tpu.trace_start"() <{level = 10 : i32, message = "bqd,de->bqe"}> : () -> ()
    %cst_27 = arith.constant dense<0.000000e+00> : vector<2x5x32xf32>
    %81 = tpu.matmul %79, %80, %cst_27 {dimension_numbers = #tpu.dot_dimension_numbers<[2], [0], [0, 1], [1], [0, 0, 0, 1, 1, 1], [], []>} : vector<2x5x8xbf16>, vector<8x32xbf16>, vector<2x5x32xf32> -> vector<2x5x32xf32>
    "tpu.trace_stop"() : () -> ()
    %82 = arith.addf %60, %81 : vector<2x5x32xf32>
    %83 = vector.extract_strided_slice %13 {offsets = [0, 0, 24], sizes = [2, 5, 8], strides = [1, 1, 1]} : vector<2x5x96xf32> to vector<2x5x8xf32>
    %84 = arith.truncf %83 : vector<2x5x8xf32> to vector<2x5x8xbf16>
    %85 = vector.extract_strided_slice %13 {offsets = [0, 0, 56], sizes = [2, 5, 8], strides = [1, 1, 1]} : vector<2x5x96xf32> to vector<2x5x8xf32>
    %86 = arith.truncf %85 : vector<2x5x8xf32> to vector<2x5x8xbf16>
    %87 = vector.extract_strided_slice %13 {offsets = [0, 0, 88], sizes = [2, 5, 8], strides = [1, 1, 1]} : vector<2x5x96xf32> to vector<2x5x8xf32>
    %88 = arith.truncf %87 : vector<2x5x8xf32> to vector<2x5x8xbf16>
    "tpu.trace_start"() <{level = 10 : i32, message = "bqd,bkd->bqk"}> : () -> ()
    %cst_28 = arith.constant dense<0.000000e+00> : vector<2x5x5xf32>
    %89 = tpu.matmul %84, %86, %cst_28 {dimension_numbers = #tpu.dot_dimension_numbers<[2], [2], [1], [1], [0, 0, 0, 1, 1, 1], [0], [0]>} : vector<2x5x8xbf16>, vector<2x5x8xbf16>, vector<2x5x5xf32> -> vector<2x5x5xf32>
    "tpu.trace_stop"() : () -> ()
    %cst_29 = arith.constant dense<0xFF800000> : vector<2x5xf32>
    %90 = vector.multi_reduction <maximumf>, %89, %cst_29 [2] : vector<2x5x5xf32> to vector<2x5xf32>
    %91 = vector.shape_cast %90 : vector<2x5xf32> to vector<2x5x1xf32>
    %92 = vector.broadcast %91 : vector<2x5x1xf32> to vector<2x5x5xf32>
    %93 = arith.subf %89, %92 : vector<2x5x5xf32>
    %94 = math.exp %93 : vector<2x5x5xf32>
    %cst_30 = arith.constant dense<0.000000e+00> : vector<2x5xf32>
    %95 = vector.multi_reduction <add>, %94, %cst_30 [2] : vector<2x5x5xf32> to vector<2x5xf32>
    %96 = vector.shape_cast %95 : vector<2x5xf32> to vector<2x5x1xf32>
    %97 = vector.broadcast %96 : vector<2x5x1xf32> to vector<2x5x5xf32>
    %98 = arith.divf %94, %97 : vector<2x5x5xf32>
    %99 = arith.truncf %98 : vector<2x5x5xf32> to vector<2x5x5xbf16>
    "tpu.trace_start"() <{level = 10 : i32, message = "bqk,bkd->bqd"}> : () -> ()
    %cst_31 = arith.constant dense<0.000000e+00> : vector<2x5x8xf32>
    %100 = tpu.matmul %99, %88, %cst_31 {dimension_numbers = #tpu.dot_dimension_numbers<[2], [1], [1], [2], [0, 0, 0, 1, 1, 2], [0], [0]>} : vector<2x5x5xbf16>, vector<2x5x8xbf16>, vector<2x5x8xf32> -> vector<2x5x8xf32>
    "tpu.trace_stop"() : () -> ()
    %101 = arith.truncf %100 : vector<2x5x8xf32> to vector<2x5x8xbf16>
    %102 = vector.extract_strided_slice %15 {offsets = [24, 0], sizes = [8, 32], strides = [1, 1]} : vector<32x32xbf16> to vector<8x32xbf16>
    "tpu.trace_start"() <{level = 10 : i32, message = "bqd,de->bqe"}> : () -> ()
    %cst_32 = arith.constant dense<0.000000e+00> : vector<2x5x32xf32>
    %103 = tpu.matmul %101, %102, %cst_32 {dimension_numbers = #tpu.dot_dimension_numbers<[2], [0], [0, 1], [1], [0, 0, 0, 1, 1, 1], [], []>} : vector<2x5x8xbf16>, vector<8x32xbf16>, vector<2x5x32xf32> -> vector<2x5x32xf32>
    "tpu.trace_stop"() : () -> ()
    %104 = arith.addf %82, %103 : vector<2x5x32xf32>
    %c0_33 = arith.constant 0 : index
    %c0_34 = arith.constant 0 : index
    %c0_35 = arith.constant 0 : index
    %105 = vector.load %arg13[%c0_33, %c0_34, %c0_35] : memref<1x1x32xf32, #tpu.memory_space<vmem>>, vector<1x1x32xf32>
    %106 = vector.shape_cast %105 : vector<1x1x32xf32> to vector<1x32xf32>
    %107 = vector.shape_cast %106 : vector<1x32xf32> to vector<1x1x32xf32>
    %108 = vector.broadcast %107 : vector<1x1x32xf32> to vector<2x5x32xf32>
    %109 = arith.addf %104, %108 : vector<2x5x32xf32>
    %110 = arith.addf %3, %109 : vector<2x5x32xf32>
    %c0_36 = arith.constant 0 : index
    %c0_37 = arith.constant 0 : index
    %c0_38 = arith.constant 0 : index
    %111 = vector.load %arg20[%c0_36, %c0_37, %c0_38] : memref<1x1x32xf32, #tpu.memory_space<vmem>>, vector<1x1x32xf32>
    %112 = vector.shape_cast %111 : vector<1x1x32xf32> to vector<1x32xf32>
    %c0_39 = arith.constant 0 : index
    %c0_40 = arith.constant 0 : index
    %c0_41 = arith.constant 0 : index
    %113 = vector.load %arg21[%c0_39, %c0_40, %c0_41] : memref<1x1x32xf32, #tpu.memory_space<vmem>>, vector<1x1x32xf32>
    %114 = vector.shape_cast %113 : vector<1x1x32xf32> to vector<1x32xf32>
    %cst_42 = arith.constant dense<0.000000e+00> : vector<2x5xf32>
    %115 = vector.multi_reduction <add>, %110, %cst_42 [2] : vector<2x5x32xf32> to vector<2x5xf32>
    %116 = vector.shape_cast %115 : vector<2x5xf32> to vector<2x5x1xf32>
    %cst_43 = arith.constant 3.200000e+01 : f32
    %117 = vector.broadcast %cst_43 : f32 to vector<2x5x1xf32>
    %118 = arith.divf %116, %117 : vector<2x5x1xf32>
    %119 = vector.broadcast %118 : vector<2x5x1xf32> to vector<2x5x32xf32>
    %120 = arith.subf %110, %119 : vector<2x5x32xf32>
    %121 = arith.mulf %120, %120 : vector<2x5x32xf32>
    %cst_44 = arith.constant dense<0.000000e+00> : vector<2x5xf32>
    %122 = vector.multi_reduction <add>, %121, %cst_44 [2] : vector<2x5x32xf32> to vector<2x5xf32>
    %123 = vector.shape_cast %122 : vector<2x5xf32> to vector<2x5x1xf32>
    %cst_45 = arith.constant 3.200000e+01 : f32
    %124 = vector.broadcast %cst_45 : f32 to vector<2x5x1xf32>
    %125 = arith.divf %123, %124 : vector<2x5x1xf32>
    %126 = vector.broadcast %118 : vector<2x5x1xf32> to vector<2x5x32xf32>
    %127 = arith.subf %110, %126 : vector<2x5x32xf32>
    %cst_46 = arith.constant 9.99999974E-6 : f32
    %128 = vector.broadcast %cst_46 : f32 to vector<2x5x1xf32>
    %129 = arith.addf %125, %128 : vector<2x5x1xf32>
    %130 = math.rsqrt %129 : vector<2x5x1xf32>
    %131 = vector.broadcast %130 : vector<2x5x1xf32> to vector<2x5x32xf32>
    %132 = arith.mulf %127, %131 : vector<2x5x32xf32>
    %133 = vector.shape_cast %112 : vector<1x32xf32> to vector<1x1x32xf32>
    %134 = vector.broadcast %133 : vector<1x1x32xf32> to vector<2x5x32xf32>
    %135 = arith.mulf %132, %134 : vector<2x5x32xf32>
    %136 = vector.shape_cast %114 : vector<1x32xf32> to vector<1x1x32xf32>
    %137 = vector.broadcast %136 : vector<1x1x32xf32> to vector<2x5x32xf32>
    %138 = arith.addf %135, %137 : vector<2x5x32xf32>
    %139 = vector.extract_strided_slice %138 {offsets = [0, 4, 0], sizes = [2, 1, 32], strides = [1, 1, 1]} : vector<2x5x32xf32> to vector<2x1x32xf32>
    %140 = vector.shape_cast %139 : vector<2x1x32xf32> to vector<2x32xf32>
    %141 = arith.truncf %140 : vector<2x32xf32> to vector<2x32xbf16>
    %c0_47 = arith.constant 0 : index
    %c0_48 = arith.constant 0 : index
    %c0_49 = arith.constant 0 : index
    %142 = vector.load %arg14[%c0_47, %c0_48, %c0_49] : memref<1x32x32xbf16, #tpu.memory_space<vmem>>, vector<1x32x32xbf16>
    %143 = vector.shape_cast %142 : vector<1x32x32xbf16> to vector<32x32xbf16>
    %cst_50 = arith.constant dense<0.000000e+00> : vector<2x32xf32>
    %144 = tpu.matmul %141, %143, %cst_50 {dimension_numbers = #tpu.dot_dimension_numbers<[1], [0], [0], [1], [0, 0, 1, 1], [], []>} : vector<2x32xbf16>, vector<32x32xbf16>, vector<2x32xf32> -> vector<2x32xf32>
    %c0_51 = arith.constant 0 : index
    %c0_52 = arith.constant 0 : index
    %c0_53 = arith.constant 0 : index
    %145 = vector.load %arg15[%c0_51, %c0_52, %c0_53] : memref<1x1x32xf32, #tpu.memory_space<vmem>>, vector<1x1x32xf32>
    %146 = vector.shape_cast %145 : vector<1x1x32xf32> to vector<1x32xf32>
    %147 = vector.broadcast %146 : vector<1x32xf32> to vector<2x32xf32>
    %148 = arith.addf %144, %147 : vector<2x32xf32>
    %149 = vector.shape_cast %148 : vector<2x32xf32> to vector<2x1x32xf32>
    %c0_54 = arith.constant 0 : index
    %c0_55 = arith.constant 0 : index
    %c0_56 = arith.constant 0 : index
    %150 = vector.load %arg30[%c0_54, %c0_55, %c0_56] : memref<2x2x32xf32, #tpu.memory_space<vmem>>, vector<2x2x32xf32>
    %151 = vector.shape_cast %150 : vector<2x2x32xf32> to vector<4x32xf32>
    %152 = arith.truncf %151 : vector<4x32xf32> to vector<4x32xbf16>
    %c0_57 = arith.constant 0 : index
    %c0_58 = arith.constant 0 : index
    %c0_59 = arith.constant 0 : index
    %153 = vector.load %arg16[%c0_57, %c0_58, %c0_59] : memref<1x32x64xbf16, #tpu.memory_space<vmem>>, vector<1x32x64xbf16>
    %154 = vector.shape_cast %153 : vector<1x32x64xbf16> to vector<32x64xbf16>
    %cst_60 = arith.constant dense<0.000000e+00> : vector<4x64xf32>
    %155 = tpu.matmul %152, %154, %cst_60 {dimension_numbers = #tpu.dot_dimension_numbers<[1], [0], [0], [1], [0, 0, 1, 1], [], []>} : vector<4x32xbf16>, vector<32x64xbf16>, vector<4x64xf32> -> vector<4x64xf32>
    %c0_61 = arith.constant 0 : index
    %c0_62 = arith.constant 0 : index
    %c0_63 = arith.constant 0 : index
    %156 = vector.load %arg17[%c0_61, %c0_62, %c0_63] : memref<1x1x64xf32, #tpu.memory_space<vmem>>, vector<1x1x64xf32>
    %157 = vector.shape_cast %156 : vector<1x1x64xf32> to vector<1x64xf32>
    %158 = vector.broadcast %157 : vector<1x64xf32> to vector<4x64xf32>
    %159 = arith.addf %155, %158 : vector<4x64xf32>
    %160 = vector.shape_cast %159 : vector<4x64xf32> to vector<2x2x64xf32>
    %c0_64 = arith.constant 0 : index
    %c0_65 = arith.constant 0 : index
    %c0_66 = arith.constant 0 : index
    %161 = vector.load %arg18[%c0_64, %c0_65, %c0_66] : memref<1x32x32xbf16, #tpu.memory_space<vmem>>, vector<1x32x32xbf16>
    %162 = vector.shape_cast %161 : vector<1x32x32xbf16> to vector<32x32xbf16>
    %cst_67 = arith.constant 0.000000e+00 : f32
    %163 = vector.broadcast %cst_67 : f32 to vector<2x1x32xf32>
    %164 = vector.extract_strided_slice %149 {offsets = [0, 0, 0], sizes = [2, 1, 8], strides = [1, 1, 1]} : vector<2x1x32xf32> to vector<2x1x8xf32>
    %165 = arith.truncf %164 : vector<2x1x8xf32> to vector<2x1x8xbf16>
    %166 = vector.extract_strided_slice %160 {offsets = [0, 0, 0], sizes = [2, 2, 8], strides = [1, 1, 1]} : vector<2x2x64xf32> to vector<2x2x8xf32>
    %167 = arith.truncf %166 : vector<2x2x8xf32> to vector<2x2x8xbf16>
    %168 = vector.extract_strided_slice %160 {offsets = [0, 0, 32], sizes = [2, 2, 8], strides = [1, 1, 1]} : vector<2x2x64xf32> to vector<2x2x8xf32>
    %169 = arith.truncf %168 : vector<2x2x8xf32> to vector<2x2x8xbf16>
    "tpu.trace_start"() <{level = 10 : i32, message = "bqd,bkd->bqk"}> : () -> ()
    %cst_68 = arith.constant dense<0.000000e+00> : vector<2x1x2xf32>
    %170 = tpu.matmul %165, %167, %cst_68 {dimension_numbers = #tpu.dot_dimension_numbers<[2], [2], [1], [1], [0, 0, 0, 1, 1, 1], [0], [0]>} : vector<2x1x8xbf16>, vector<2x2x8xbf16>, vector<2x1x2xf32> -> vector<2x1x2xf32>
    "tpu.trace_stop"() : () -> ()
    %cst_69 = arith.constant dense<0xFF800000> : vector<2x1xf32>
    %171 = vector.multi_reduction <maximumf>, %170, %cst_69 [2] : vector<2x1x2xf32> to vector<2x1xf32>
    %172 = vector.shape_cast %171 : vector<2x1xf32> to vector<2x1x1xf32>
    %173 = vector.broadcast %172 : vector<2x1x1xf32> to vector<2x1x2xf32>
    %174 = arith.subf %170, %173 : vector<2x1x2xf32>
    %175 = math.exp %174 : vector<2x1x2xf32>
    %cst_70 = arith.constant dense<0.000000e+00> : vector<2x1xf32>
    %176 = vector.multi_reduction <add>, %175, %cst_70 [2] : vector<2x1x2xf32> to vector<2x1xf32>
    %177 = vector.shape_cast %176 : vector<2x1xf32> to vector<2x1x1xf32>
    %178 = vector.broadcast %177 : vector<2x1x1xf32> to vector<2x1x2xf32>
    %179 = arith.divf %175, %178 : vector<2x1x2xf32>
    %180 = arith.truncf %179 : vector<2x1x2xf32> to vector<2x1x2xbf16>
    "tpu.trace_start"() <{level = 10 : i32, message = "bqk,bkd->bqd"}> : () -> ()
    %cst_71 = arith.constant dense<0.000000e+00> : vector<2x1x8xf32>
    %181 = tpu.matmul %180, %169, %cst_71 {dimension_numbers = #tpu.dot_dimension_numbers<[2], [1], [1], [2], [0, 0, 0, 1, 1, 2], [0], [0]>} : vector<2x1x2xbf16>, vector<2x2x8xbf16>, vector<2x1x8xf32> -> vector<2x1x8xf32>
    "tpu.trace_stop"() : () -> ()
    %182 = arith.truncf %181 : vector<2x1x8xf32> to vector<2x1x8xbf16>
    %183 = vector.extract_strided_slice %162 {offsets = [0, 0], sizes = [8, 32], strides = [1, 1]} : vector<32x32xbf16> to vector<8x32xbf16>
    "tpu.trace_start"() <{level = 10 : i32, message = "bqd,de->bqe"}> : () -> ()
    %cst_72 = arith.constant dense<0.000000e+00> : vector<2x1x32xf32>
    %184 = tpu.matmul %182, %183, %cst_72 {dimension_numbers = #tpu.dot_dimension_numbers<[2], [0], [0, 1], [1], [0, 0, 0, 1, 1, 1], [], []>} : vector<2x1x8xbf16>, vector<8x32xbf16>, vector<2x1x32xf32> -> vector<2x1x32xf32>
    "tpu.trace_stop"() : () -> ()
    %185 = arith.addf %163, %184 : vector<2x1x32xf32>
    %186 = vector.extract_strided_slice %149 {offsets = [0, 0, 8], sizes = [2, 1, 8], strides = [1, 1, 1]} : vector<2x1x32xf32> to vector<2x1x8xf32>
    %187 = arith.truncf %186 : vector<2x1x8xf32> to vector<2x1x8xbf16>
    %188 = vector.extract_strided_slice %160 {offsets = [0, 0, 8], sizes = [2, 2, 8], strides = [1, 1, 1]} : vector<2x2x64xf32> to vector<2x2x8xf32>
    %189 = arith.truncf %188 : vector<2x2x8xf32> to vector<2x2x8xbf16>
    %190 = vector.extract_strided_slice %160 {offsets = [0, 0, 40], sizes = [2, 2, 8], strides = [1, 1, 1]} : vector<2x2x64xf32> to vector<2x2x8xf32>
    %191 = arith.truncf %190 : vector<2x2x8xf32> to vector<2x2x8xbf16>
    "tpu.trace_start"() <{level = 10 : i32, message = "bqd,bkd->bqk"}> : () -> ()
    %cst_73 = arith.constant dense<0.000000e+00> : vector<2x1x2xf32>
    %192 = tpu.matmul %187, %189, %cst_73 {dimension_numbers = #tpu.dot_dimension_numbers<[2], [2], [1], [1], [0, 0, 0, 1, 1, 1], [0], [0]>} : vector<2x1x8xbf16>, vector<2x2x8xbf16>, vector<2x1x2xf32> -> vector<2x1x2xf32>
    "tpu.trace_stop"() : () -> ()
    %cst_74 = arith.constant dense<0xFF800000> : vector<2x1xf32>
    %193 = vector.multi_reduction <maximumf>, %192, %cst_74 [2] : vector<2x1x2xf32> to vector<2x1xf32>
    %194 = vector.shape_cast %193 : vector<2x1xf32> to vector<2x1x1xf32>
    %195 = vector.broadcast %194 : vector<2x1x1xf32> to vector<2x1x2xf32>
    %196 = arith.subf %192, %195 : vector<2x1x2xf32>
    %197 = math.exp %196 : vector<2x1x2xf32>
    %cst_75 = arith.constant dense<0.000000e+00> : vector<2x1xf32>
    %198 = vector.multi_reduction <add>, %197, %cst_75 [2] : vector<2x1x2xf32> to vector<2x1xf32>
    %199 = vector.shape_cast %198 : vector<2x1xf32> to vector<2x1x1xf32>
    %200 = vector.broadcast %199 : vector<2x1x1xf32> to vector<2x1x2xf32>
    %201 = arith.divf %197, %200 : vector<2x1x2xf32>
    %202 = arith.truncf %201 : vector<2x1x2xf32> to vector<2x1x2xbf16>
    "tpu.trace_start"() <{level = 10 : i32, message = "bqk,bkd->bqd"}> : () -> ()
    %cst_76 = arith.constant dense<0.000000e+00> : vector<2x1x8xf32>
    %203 = tpu.matmul %202, %191, %cst_76 {dimension_numbers = #tpu.dot_dimension_numbers<[2], [1], [1], [2], [0, 0, 0, 1, 1, 2], [0], [0]>} : vector<2x1x2xbf16>, vector<2x2x8xbf16>, vector<2x1x8xf32> -> vector<2x1x8xf32>
    "tpu.trace_stop"() : () -> ()
    %204 = arith.truncf %203 : vector<2x1x8xf32> to vector<2x1x8xbf16>
    %205 = vector.extract_strided_slice %162 {offsets = [8, 0], sizes = [8, 32], strides = [1, 1]} : vector<32x32xbf16> to vector<8x32xbf16>
    "tpu.trace_start"() <{level = 10 : i32, message = "bqd,de->bqe"}> : () -> ()
    %cst_77 = arith.constant dense<0.000000e+00> : vector<2x1x32xf32>
    %206 = tpu.matmul %204, %205, %cst_77 {dimension_numbers = #tpu.dot_dimension_numbers<[2], [0], [0, 1], [1], [0, 0, 0, 1, 1, 1], [], []>} : vector<2x1x8xbf16>, vector<8x32xbf16>, vector<2x1x32xf32> -> vector<2x1x32xf32>
    "tpu.trace_stop"() : () -> ()
    %207 = arith.addf %185, %206 : vector<2x1x32xf32>
    %208 = vector.extract_strided_slice %149 {offsets = [0, 0, 16], sizes = [2, 1, 8], strides = [1, 1, 1]} : vector<2x1x32xf32> to vector<2x1x8xf32>
    %209 = arith.truncf %208 : vector<2x1x8xf32> to vector<2x1x8xbf16>
    %210 = vector.extract_strided_slice %160 {offsets = [0, 0, 16], sizes = [2, 2, 8], strides = [1, 1, 1]} : vector<2x2x64xf32> to vector<2x2x8xf32>
    %211 = arith.truncf %210 : vector<2x2x8xf32> to vector<2x2x8xbf16>
    %212 = vector.extract_strided_slice %160 {offsets = [0, 0, 48], sizes = [2, 2, 8], strides = [1, 1, 1]} : vector<2x2x64xf32> to vector<2x2x8xf32>
    %213 = arith.truncf %212 : vector<2x2x8xf32> to vector<2x2x8xbf16>
    "tpu.trace_start"() <{level = 10 : i32, message = "bqd,bkd->bqk"}> : () -> ()
    %cst_78 = arith.constant dense<0.000000e+00> : vector<2x1x2xf32>
    %214 = tpu.matmul %209, %211, %cst_78 {dimension_numbers = #tpu.dot_dimension_numbers<[2], [2], [1], [1], [0, 0, 0, 1, 1, 1], [0], [0]>} : vector<2x1x8xbf16>, vector<2x2x8xbf16>, vector<2x1x2xf32> -> vector<2x1x2xf32>
    "tpu.trace_stop"() : () -> ()
    %cst_79 = arith.constant dense<0xFF800000> : vector<2x1xf32>
    %215 = vector.multi_reduction <maximumf>, %214, %cst_79 [2] : vector<2x1x2xf32> to vector<2x1xf32>
    %216 = vector.shape_cast %215 : vector<2x1xf32> to vector<2x1x1xf32>
    %217 = vector.broadcast %216 : vector<2x1x1xf32> to vector<2x1x2xf32>
    %218 = arith.subf %214, %217 : vector<2x1x2xf32>
    %219 = math.exp %218 : vector<2x1x2xf32>
    %cst_80 = arith.constant dense<0.000000e+00> : vector<2x1xf32>
    %220 = vector.multi_reduction <add>, %219, %cst_80 [2] : vector<2x1x2xf32> to vector<2x1xf32>
    %221 = vector.shape_cast %220 : vector<2x1xf32> to vector<2x1x1xf32>
    %222 = vector.broadcast %221 : vector<2x1x1xf32> to vector<2x1x2xf32>
    %223 = arith.divf %219, %222 : vector<2x1x2xf32>
    %224 = arith.truncf %223 : vector<2x1x2xf32> to vector<2x1x2xbf16>
    "tpu.trace_start"() <{level = 10 : i32, message = "bqk,bkd->bqd"}> : () -> ()
    %cst_81 = arith.constant dense<0.000000e+00> : vector<2x1x8xf32>
    %225 = tpu.matmul %224, %213, %cst_81 {dimension_numbers = #tpu.dot_dimension_numbers<[2], [1], [1], [2], [0, 0, 0, 1, 1, 2], [0], [0]>} : vector<2x1x2xbf16>, vector<2x2x8xbf16>, vector<2x1x8xf32> -> vector<2x1x8xf32>
    "tpu.trace_stop"() : () -> ()
    %226 = arith.truncf %225 : vector<2x1x8xf32> to vector<2x1x8xbf16>
    %227 = vector.extract_strided_slice %162 {offsets = [16, 0], sizes = [8, 32], strides = [1, 1]} : vector<32x32xbf16> to vector<8x32xbf16>
    "tpu.trace_start"() <{level = 10 : i32, message = "bqd,de->bqe"}> : () -> ()
    %cst_82 = arith.constant dense<0.000000e+00> : vector<2x1x32xf32>
    %228 = tpu.matmul %226, %227, %cst_82 {dimension_numbers = #tpu.dot_dimension_numbers<[2], [0], [0, 1], [1], [0, 0, 0, 1, 1, 1], [], []>} : vector<2x1x8xbf16>, vector<8x32xbf16>, vector<2x1x32xf32> -> vector<2x1x32xf32>
    "tpu.trace_stop"() : () -> ()
    %229 = arith.addf %207, %228 : vector<2x1x32xf32>
    %230 = vector.extract_strided_slice %149 {offsets = [0, 0, 24], sizes = [2, 1, 8], strides = [1, 1, 1]} : vector<2x1x32xf32> to vector<2x1x8xf32>
    %231 = arith.truncf %230 : vector<2x1x8xf32> to vector<2x1x8xbf16>
    %232 = vector.extract_strided_slice %160 {offsets = [0, 0, 24], sizes = [2, 2, 8], strides = [1, 1, 1]} : vector<2x2x64xf32> to vector<2x2x8xf32>
    %233 = arith.truncf %232 : vector<2x2x8xf32> to vector<2x2x8xbf16>
    %234 = vector.extract_strided_slice %160 {offsets = [0, 0, 56], sizes = [2, 2, 8], strides = [1, 1, 1]} : vector<2x2x64xf32> to vector<2x2x8xf32>
    %235 = arith.truncf %234 : vector<2x2x8xf32> to vector<2x2x8xbf16>
    "tpu.trace_start"() <{level = 10 : i32, message = "bqd,bkd->bqk"}> : () -> ()
    %cst_83 = arith.constant dense<0.000000e+00> : vector<2x1x2xf32>
    %236 = tpu.matmul %231, %233, %cst_83 {dimension_numbers = #tpu.dot_dimension_numbers<[2], [2], [1], [1], [0, 0, 0, 1, 1, 1], [0], [0]>} : vector<2x1x8xbf16>, vector<2x2x8xbf16>, vector<2x1x2xf32> -> vector<2x1x2xf32>
    "tpu.trace_stop"() : () -> ()
    %cst_84 = arith.constant dense<0xFF800000> : vector<2x1xf32>
    %237 = vector.multi_reduction <maximumf>, %236, %cst_84 [2] : vector<2x1x2xf32> to vector<2x1xf32>
    %238 = vector.shape_cast %237 : vector<2x1xf32> to vector<2x1x1xf32>
    %239 = vector.broadcast %238 : vector<2x1x1xf32> to vector<2x1x2xf32>
    %240 = arith.subf %236, %239 : vector<2x1x2xf32>
    %241 = math.exp %240 : vector<2x1x2xf32>
    %cst_85 = arith.constant dense<0.000000e+00> : vector<2x1xf32>
    %242 = vector.multi_reduction <add>, %241, %cst_85 [2] : vector<2x1x2xf32> to vector<2x1xf32>
    %243 = vector.shape_cast %242 : vector<2x1xf32> to vector<2x1x1xf32>
    %244 = vector.broadcast %243 : vector<2x1x1xf32> to vector<2x1x2xf32>
    %245 = arith.divf %241, %244 : vector<2x1x2xf32>
    %246 = arith.truncf %245 : vector<2x1x2xf32> to vector<2x1x2xbf16>
    "tpu.trace_start"() <{level = 10 : i32, message = "bqk,bkd->bqd"}> : () -> ()
    %cst_86 = arith.constant dense<0.000000e+00> : vector<2x1x8xf32>
    %247 = tpu.matmul %246, %235, %cst_86 {dimension_numbers = #tpu.dot_dimension_numbers<[2], [1], [1], [2], [0, 0, 0, 1, 1, 2], [0], [0]>} : vector<2x1x2xbf16>, vector<2x2x8xbf16>, vector<2x1x8xf32> -> vector<2x1x8xf32>
    "tpu.trace_stop"() : () -> ()
    %248 = arith.truncf %247 : vector<2x1x8xf32> to vector<2x1x8xbf16>
    %249 = vector.extract_strided_slice %162 {offsets = [24, 0], sizes = [8, 32], strides = [1, 1]} : vector<32x32xbf16> to vector<8x32xbf16>
    "tpu.trace_start"() <{level = 10 : i32, message = "bqd,de->bqe"}> : () -> ()
    %cst_87 = arith.constant dense<0.000000e+00> : vector<2x1x32xf32>
    %250 = tpu.matmul %248, %249, %cst_87 {dimension_numbers = #tpu.dot_dimension_numbers<[2], [0], [0, 1], [1], [0, 0, 0, 1, 1, 1], [], []>} : vector<2x1x8xbf16>, vector<8x32xbf16>, vector<2x1x32xf32> -> vector<2x1x32xf32>
    "tpu.trace_stop"() : () -> ()
    %251 = arith.addf %229, %250 : vector<2x1x32xf32>
    %252 = vector.shape_cast %251 : vector<2x1x32xf32> to vector<2x32xf32>
    %c0_88 = arith.constant 0 : index
    %c0_89 = arith.constant 0 : index
    %c0_90 = arith.constant 0 : index
    %253 = vector.load %arg19[%c0_88, %c0_89, %c0_90] : memref<1x1x32xf32, #tpu.memory_space<vmem>>, vector<1x1x32xf32>
    %254 = vector.shape_cast %253 : vector<1x1x32xf32> to vector<1x32xf32>
    %255 = vector.broadcast %254 : vector<1x32xf32> to vector<2x32xf32>
    %256 = arith.addf %252, %255 : vector<2x32xf32>
    %257 = vector.shape_cast %139 : vector<2x1x32xf32> to vector<2x32xf32>
    %258 = arith.addf %257, %256 : vector<2x32xf32>
    %c0_91 = arith.constant 0 : index
    %c0_92 = arith.constant 0 : index
    %c0_93 = arith.constant 0 : index
    %259 = vector.load %arg20[%c0_91, %c0_92, %c0_93] : memref<1x1x32xf32, #tpu.memory_space<vmem>>, vector<1x1x32xf32>
    %260 = vector.shape_cast %259 : vector<1x1x32xf32> to vector<1x32xf32>
    %c0_94 = arith.constant 0 : index
    %c0_95 = arith.constant 0 : index
    %c0_96 = arith.constant 0 : index
    %261 = vector.load %arg21[%c0_94, %c0_95, %c0_96] : memref<1x1x32xf32, #tpu.memory_space<vmem>>, vector<1x1x32xf32>
    %262 = vector.shape_cast %261 : vector<1x1x32xf32> to vector<1x32xf32>
    %cst_97 = arith.constant dense<0.000000e+00> : vector<2xf32>
    %263 = vector.multi_reduction <add>, %258, %cst_97 [1] : vector<2x32xf32> to vector<2xf32>
    %264 = vector.shape_cast %263 : vector<2xf32> to vector<2x1xf32>
    %cst_98 = arith.constant 3.200000e+01 : f32
    %265 = vector.broadcast %cst_98 : f32 to vector<2x1xf32>
    %266 = arith.divf %264, %265 : vector<2x1xf32>
    %267 = vector.broadcast %266 : vector<2x1xf32> to vector<2x32xf32>
    %268 = arith.subf %258, %267 : vector<2x32xf32>
    %269 = arith.mulf %268, %268 : vector<2x32xf32>
    %cst_99 = arith.constant dense<0.000000e+00> : vector<2xf32>
    %270 = vector.multi_reduction <add>, %269, %cst_99 [1] : vector<2x32xf32> to vector<2xf32>
    %271 = vector.shape_cast %270 : vector<2xf32> to vector<2x1xf32>
    %cst_100 = arith.constant 3.200000e+01 : f32
    %272 = vector.broadcast %cst_100 : f32 to vector<2x1xf32>
    %273 = arith.divf %271, %272 : vector<2x1xf32>
    %274 = vector.broadcast %266 : vector<2x1xf32> to vector<2x32xf32>
    %275 = arith.subf %258, %274 : vector<2x32xf32>
    %cst_101 = arith.constant 9.99999974E-6 : f32
    %276 = vector.broadcast %cst_101 : f32 to vector<2x1xf32>
    %277 = arith.addf %273, %276 : vector<2x1xf32>
    %278 = math.rsqrt %277 : vector<2x1xf32>
    %279 = vector.broadcast %278 : vector<2x1xf32> to vector<2x32xf32>
    %280 = arith.mulf %275, %279 : vector<2x32xf32>
    %281 = vector.broadcast %260 : vector<1x32xf32> to vector<2x32xf32>
    %282 = arith.mulf %280, %281 : vector<2x32xf32>
    %283 = vector.broadcast %262 : vector<1x32xf32> to vector<2x32xf32>
    %284 = arith.addf %282, %283 : vector<2x32xf32>
    %285 = vector.extract_strided_slice %138 {offsets = [0, 0, 0], sizes = [2, 4, 32], strides = [1, 1, 1]} : vector<2x5x32xf32> to vector<2x4x32xf32>
    %286 = vector.shape_cast %285 : vector<2x4x32xf32> to vector<8x32xf32>
    %c0_102 = arith.constant 0 : index
    %c0_103 = arith.constant 0 : index
    %c0_104 = arith.constant 0 : index
    %287 = vector.load %arg22[%c0_102, %c0_103, %c0_104] : memref<1x1x32xf32, #tpu.memory_space<vmem>>, vector<1x1x32xf32>
    %288 = vector.shape_cast %287 : vector<1x1x32xf32> to vector<1x32xf32>
    %c0_105 = arith.constant 0 : index
    %c0_106 = arith.constant 0 : index
    %c0_107 = arith.constant 0 : index
    %289 = vector.load %arg23[%c0_105, %c0_106, %c0_107] : memref<1x1x32xf32, #tpu.memory_space<vmem>>, vector<1x1x32xf32>
    %290 = vector.shape_cast %289 : vector<1x1x32xf32> to vector<1x32xf32>
    %cst_108 = arith.constant dense<0.000000e+00> : vector<8xf32>
    %291 = vector.multi_reduction <add>, %286, %cst_108 [1] : vector<8x32xf32> to vector<8xf32>
    %292 = vector.shape_cast %291 : vector<8xf32> to vector<8x1xf32>
    %cst_109 = arith.constant 3.200000e+01 : f32
    %293 = vector.broadcast %cst_109 : f32 to vector<8x1xf32>
    %294 = arith.divf %292, %293 : vector<8x1xf32>
    %295 = vector.broadcast %294 : vector<8x1xf32> to vector<8x32xf32>
    %296 = arith.subf %286, %295 : vector<8x32xf32>
    %297 = arith.mulf %296, %296 : vector<8x32xf32>
    %cst_110 = arith.constant dense<0.000000e+00> : vector<8xf32>
    %298 = vector.multi_reduction <add>, %297, %cst_110 [1] : vector<8x32xf32> to vector<8xf32>
    %299 = vector.shape_cast %298 : vector<8xf32> to vector<8x1xf32>
    %cst_111 = arith.constant 3.200000e+01 : f32
    %300 = vector.broadcast %cst_111 : f32 to vector<8x1xf32>
    %301 = arith.divf %299, %300 : vector<8x1xf32>
    %302 = vector.broadcast %294 : vector<8x1xf32> to vector<8x32xf32>
    %303 = arith.subf %286, %302 : vector<8x32xf32>
    %cst_112 = arith.constant 9.99999974E-6 : f32
    %304 = vector.broadcast %cst_112 : f32 to vector<8x1xf32>
    %305 = arith.addf %301, %304 : vector<8x1xf32>
    %306 = math.rsqrt %305 : vector<8x1xf32>
    %307 = vector.broadcast %306 : vector<8x1xf32> to vector<8x32xf32>
    %308 = arith.mulf %303, %307 : vector<8x32xf32>
    %309 = vector.broadcast %288 : vector<1x32xf32> to vector<8x32xf32>
    %310 = arith.mulf %308, %309 : vector<8x32xf32>
    %311 = vector.broadcast %290 : vector<1x32xf32> to vector<8x32xf32>
    %312 = arith.addf %310, %311 : vector<8x32xf32>
    %313 = arith.truncf %312 : vector<8x32xf32> to vector<8x32xbf16>
    %c0_113 = arith.constant 0 : index
    %c0_114 = arith.constant 0 : index
    %c0_115 = arith.constant 0 : index
    %314 = vector.load %arg24[%c0_113, %c0_114, %c0_115] : memref<1x32x32xbf16, #tpu.memory_space<vmem>>, vector<1x32x32xbf16>
    %315 = vector.shape_cast %314 : vector<1x32x32xbf16> to vector<32x32xbf16>
    %cst_116 = arith.constant dense<0.000000e+00> : vector<8x32xf32>
    %316 = tpu.matmul %313, %315, %cst_116 {dimension_numbers = #tpu.dot_dimension_numbers<[1], [0], [0], [1], [0, 0, 1, 1], [], []>} : vector<8x32xbf16>, vector<32x32xbf16>, vector<8x32xf32> -> vector<8x32xf32>
    %c0_117 = arith.constant 0 : index
    %c0_118 = arith.constant 0 : index
    %c0_119 = arith.constant 0 : index
    %317 = vector.load %arg25[%c0_117, %c0_118, %c0_119] : memref<1x1x32xf32, #tpu.memory_space<vmem>>, vector<1x1x32xf32>
    %318 = vector.shape_cast %317 : vector<1x1x32xf32> to vector<1x32xf32>
    %319 = vector.broadcast %318 : vector<1x32xf32> to vector<8x32xf32>
    %320 = arith.addf %316, %319 : vector<8x32xf32>
    %cst_120 = arith.constant 0.000000e+00 : f32
    %321 = vector.broadcast %cst_120 : f32 to vector<8x32xf32>
    %322 = arith.maximumf %320, %321 : vector<8x32xf32>
    %323 = arith.truncf %322 : vector<8x32xf32> to vector<8x32xbf16>
    %c0_121 = arith.constant 0 : index
    %c0_122 = arith.constant 0 : index
    %c0_123 = arith.constant 0 : index
    %324 = vector.load %arg26[%c0_121, %c0_122, %c0_123] : memref<1x32x32xbf16, #tpu.memory_space<vmem>>, vector<1x32x32xbf16>
    %325 = vector.shape_cast %324 : vector<1x32x32xbf16> to vector<32x32xbf16>
    %cst_124 = arith.constant dense<0.000000e+00> : vector<8x32xf32>
    %326 = tpu.matmul %323, %325, %cst_124 {dimension_numbers = #tpu.dot_dimension_numbers<[1], [0], [0], [1], [0, 0, 1, 1], [], []>} : vector<8x32xbf16>, vector<32x32xbf16>, vector<8x32xf32> -> vector<8x32xf32>
    %c0_125 = arith.constant 0 : index
    %c0_126 = arith.constant 0 : index
    %c0_127 = arith.constant 0 : index
    %327 = vector.load %arg27[%c0_125, %c0_126, %c0_127] : memref<1x1x32xf32, #tpu.memory_space<vmem>>, vector<1x1x32xf32>
    %328 = vector.shape_cast %327 : vector<1x1x32xf32> to vector<1x32xf32>
    %329 = vector.broadcast %328 : vector<1x32xf32> to vector<8x32xf32>
    %330 = arith.addf %326, %329 : vector<8x32xf32>
    %c0_128 = arith.constant 0 : index
    %c0_129 = arith.constant 0 : index
    %c0_130 = arith.constant 0 : index
    %331 = vector.load %arg22[%c0_128, %c0_129, %c0_130] : memref<1x1x32xf32, #tpu.memory_space<vmem>>, vector<1x1x32xf32>
    %332 = vector.shape_cast %331 : vector<1x1x32xf32> to vector<1x32xf32>
    %c0_131 = arith.constant 0 : index
    %c0_132 = arith.constant 0 : index
    %c0_133 = arith.constant 0 : index
    %333 = vector.load %arg23[%c0_131, %c0_132, %c0_133] : memref<1x1x32xf32, #tpu.memory_space<vmem>>, vector<1x1x32xf32>
    %334 = vector.shape_cast %333 : vector<1x1x32xf32> to vector<1x32xf32>
    %cst_134 = arith.constant dense<0.000000e+00> : vector<2xf32>
    %335 = vector.multi_reduction <add>, %284, %cst_134 [1] : vector<2x32xf32> to vector<2xf32>
    %336 = vector.shape_cast %335 : vector<2xf32> to vector<2x1xf32>
    %cst_135 = arith.constant 3.200000e+01 : f32
    %337 = vector.broadcast %cst_135 : f32 to vector<2x1xf32>
    %338 = arith.divf %336, %337 : vector<2x1xf32>
    %339 = vector.broadcast %338 : vector<2x1xf32> to vector<2x32xf32>
    %340 = arith.subf %284, %339 : vector<2x32xf32>
    %341 = arith.mulf %340, %340 : vector<2x32xf32>
    %cst_136 = arith.constant dense<0.000000e+00> : vector<2xf32>
    %342 = vector.multi_reduction <add>, %341, %cst_136 [1] : vector<2x32xf32> to vector<2xf32>
    %343 = vector.shape_cast %342 : vector<2xf32> to vector<2x1xf32>
    %cst_137 = arith.constant 3.200000e+01 : f32
    %344 = vector.broadcast %cst_137 : f32 to vector<2x1xf32>
    %345 = arith.divf %343, %344 : vector<2x1xf32>
    %346 = vector.broadcast %338 : vector<2x1xf32> to vector<2x32xf32>
    %347 = arith.subf %284, %346 : vector<2x32xf32>
    %cst_138 = arith.constant 9.99999974E-6 : f32
    %348 = vector.broadcast %cst_138 : f32 to vector<2x1xf32>
    %349 = arith.addf %345, %348 : vector<2x1xf32>
    %350 = math.rsqrt %349 : vector<2x1xf32>
    %351 = vector.broadcast %350 : vector<2x1xf32> to vector<2x32xf32>
    %352 = arith.mulf %347, %351 : vector<2x32xf32>
    %353 = vector.broadcast %332 : vector<1x32xf32> to vector<2x32xf32>
    %354 = arith.mulf %352, %353 : vector<2x32xf32>
    %355 = vector.broadcast %334 : vector<1x32xf32> to vector<2x32xf32>
    %356 = arith.addf %354, %355 : vector<2x32xf32>
    %357 = arith.truncf %356 : vector<2x32xf32> to vector<2x32xbf16>
    %c0_139 = arith.constant 0 : index
    %c0_140 = arith.constant 0 : index
    %c0_141 = arith.constant 0 : index
    %358 = vector.load %arg24[%c0_139, %c0_140, %c0_141] : memref<1x32x32xbf16, #tpu.memory_space<vmem>>, vector<1x32x32xbf16>
    %359 = vector.shape_cast %358 : vector<1x32x32xbf16> to vector<32x32xbf16>
    %cst_142 = arith.constant dense<0.000000e+00> : vector<2x32xf32>
    %360 = tpu.matmul %357, %359, %cst_142 {dimension_numbers = #tpu.dot_dimension_numbers<[1], [0], [0], [1], [0, 0, 1, 1], [], []>} : vector<2x32xbf16>, vector<32x32xbf16>, vector<2x32xf32> -> vector<2x32xf32>
    %c0_143 = arith.constant 0 : index
    %c0_144 = arith.constant 0 : index
    %c0_145 = arith.constant 0 : index
    %361 = vector.load %arg25[%c0_143, %c0_144, %c0_145] : memref<1x1x32xf32, #tpu.memory_space<vmem>>, vector<1x1x32xf32>
    %362 = vector.shape_cast %361 : vector<1x1x32xf32> to vector<1x32xf32>
    %363 = vector.broadcast %362 : vector<1x32xf32> to vector<2x32xf32>
    %364 = arith.addf %360, %363 : vector<2x32xf32>
    %cst_146 = arith.constant 0.000000e+00 : f32
    %365 = vector.broadcast %cst_146 : f32 to vector<2x32xf32>
    %366 = arith.maximumf %364, %365 : vector<2x32xf32>
    %367 = arith.truncf %366 : vector<2x32xf32> to vector<2x32xbf16>
    %c0_147 = arith.constant 0 : index
    %c0_148 = arith.constant 0 : index
    %c0_149 = arith.constant 0 : index
    %368 = vector.load %arg26[%c0_147, %c0_148, %c0_149] : memref<1x32x32xbf16, #tpu.memory_space<vmem>>, vector<1x32x32xbf16>
    %369 = vector.shape_cast %368 : vector<1x32x32xbf16> to vector<32x32xbf16>
    %cst_150 = arith.constant dense<0.000000e+00> : vector<2x32xf32>
    %370 = tpu.matmul %367, %369, %cst_150 {dimension_numbers = #tpu.dot_dimension_numbers<[1], [0], [0], [1], [0, 0, 1, 1], [], []>} : vector<2x32xbf16>, vector<32x32xbf16>, vector<2x32xf32> -> vector<2x32xf32>
    %c0_151 = arith.constant 0 : index
    %c0_152 = arith.constant 0 : index
    %c0_153 = arith.constant 0 : index
    %371 = vector.load %arg27[%c0_151, %c0_152, %c0_153] : memref<1x1x32xf32, #tpu.memory_space<vmem>>, vector<1x1x32xf32>
    %372 = vector.shape_cast %371 : vector<1x1x32xf32> to vector<1x32xf32>
    %373 = vector.broadcast %372 : vector<1x32xf32> to vector<2x32xf32>
    %374 = arith.addf %370, %373 : vector<2x32xf32>
    %375 = vector.shape_cast %330 : vector<8x32xf32> to vector<2x4x32xf32>
    %c0_154 = arith.constant 0 : index
    %c0_155 = arith.constant 0 : index
    %c0_156 = arith.constant 0 : index
    %376 = vector.load %arg29[%c0_154, %c0_155, %c0_156] : memref<2x5x32xf32, #tpu.memory_space<vmem>>, vector<2x4x32xf32>
    tpu.vector_store %arg29[%c0_154, %c0_155, %c0_156], %375 {strides = array<i32>} : memref<2x5x32xf32, #tpu.memory_space<vmem>>, vector<2x4x32xf32>,
    %377 = vector.shape_cast %374 : vector<2x32xf32> to vector<2x1x32xf32>
    %c0_157 = arith.constant 0 : index
    %c4 = arith.constant 4 : index
    %c0_158 = arith.constant 0 : index
    %378 = vector.load %arg29[%c0_157, %c4, %c0_158] : memref<2x5x32xf32, #tpu.memory_space<vmem>>, vector<2x1x32xf32>
    tpu.vector_store %arg29[%c0_157, %c4, %c0_158], %377 {strides = array<i32>} : memref<2x5x32xf32, #tpu.memory_space<vmem>>, vector<2x1x32xf32>,
    %c1_i32 = arith.constant 1 : i32
    %379 = arith.cmpi eq, %arg0, %c1_i32 : i32
    %380 = arith.extui %379 : i1 to i32
    %c0_i32_159 = arith.constant 0 : i32
    %381 = arith.cmpi ne, %380, %c0_i32_159 : i32
    scf.if %381 {
      %382 = arith.truncf %374 : vector<2x32xf32> to vector<2x32xbf16>
      %c0_160 = arith.constant 0 : index
      %c0_161 = arith.constant 0 : index
      %383 = vector.load %arg8[%c0_160, %c0_161] : memref<32x6xbf16, #tpu.memory_space<vmem>>, vector<32x6xbf16>
      %cst_162 = arith.constant dense<0.000000e+00> : vector<2x6xf32>
      %384 = tpu.matmul %382, %383, %cst_162 {dimension_numbers = #tpu.dot_dimension_numbers<[1], [0], [0], [1], [0, 0, 1, 1], [], []>} : vector<2x32xbf16>, vector<32x6xbf16>, vector<2x6xf32> -> vector<2x6xf32>
      %c0_163 = arith.constant 0 : index
      %c0_164 = arith.constant 0 : index
      %385 = vector.load %arg9[%c0_163, %c0_164] : memref<1x6xf32, #tpu.memory_space<vmem>>, vector<1x6xf32>
      %386 = vector.broadcast %385 : vector<1x6xf32> to vector<2x6xf32>
      %387 = arith.addf %384, %386 : vector<2x6xf32>
      %c0_165 = arith.constant 0 : index
      %c0_166 = arith.constant 0 : index
      %388 = vector.load %arg28[%c0_165, %c0_166] : memref<2x6xf32, #tpu.memory_space<vmem>>, vector<2x6xf32>
      tpu.vector_store %arg28[%c0_165, %c0_166], %387 {strides = array<i32>} : memref<2x6xf32, #tpu.memory_space<vmem>>, vector<2x6xf32>,
    } else {
    }
    return
  }
  func.func @transform_0(%arg0: i32) -> (i32, i32) {
    %c0_i32 = arith.constant 0 : i32
    %c0_i32_0 = arith.constant 0 : i32
    %c0_i32_1 = arith.constant 0 : i32
    return %c0_i32, %c0_i32_0 : i32, i32
  }
  func.func @transform_1(%arg0: i32) -> (i32, i32, i32) {
    %c0_i32 = arith.constant 0 : i32
    %c0_i32_0 = arith.constant 0 : i32
    %c0_i32_1 = arith.constant 0 : i32
    %c0_i32_2 = arith.constant 0 : i32
    return %c0_i32, %c0_i32_0, %c0_i32_1 : i32, i32, i32
  }
  func.func @transform_2(%arg0: i32) -> (i32, i32, i32) {
    %c0_i32 = arith.constant 0 : i32
    %c0_i32_0 = arith.constant 0 : i32
    %c0_i32_1 = arith.constant 0 : i32
    %c0_i32_2 = arith.constant 0 : i32
    return %c0_i32, %c0_i32_0, %c0_i32_1 : i32, i32, i32
  }
  func.func @transform_3(%arg0: i32) -> (i32, i32) {
    %c0_i32 = arith.constant 0 : i32
    %c0_i32_0 = arith.constant 0 : i32
    %c0_i32_1 = arith.constant 0 : i32
    return %c0_i32, %c0_i32_0 : i32, i32
  }
  func.func @transform_4(%arg0: i32) -> (i32, i32) {
    %c0_i32 = arith.constant 0 : i32
    %c0_i32_0 = arith.constant 0 : i32
    %c0_i32_1 = arith.constant 0 : i32
    return %c0_i32, %c0_i32_0 : i32, i32
  }
  func.func @transform_5(%arg0: i32) -> (i32, i32, i32) {
    %c0_i32 = arith.constant 0 : i32
    %c0_i32_0 = arith.constant 0 : i32
    %c0_i32_1 = arith.constant 0 : i32
    %c0_i32_2 = arith.constant 0 : i32
    return %c0_i32, %c0_i32_0, %c0_i32_1 : i32, i32, i32
  }
  func.func @transform_6(%arg0: i32) -> (i32, i32, i32) {
    %c0_i32 = arith.constant 0 : i32
    %c0_i32_0 = arith.constant 0 : i32
    %c0_i32_1 = arith.constant 0 : i32
    %c0_i32_2 = arith.constant 0 : i32
    return %c0_i32, %c0_i32_0, %c0_i32_1 : i32, i32, i32
  }
  func.func @transform_7(%arg0: i32) -> (i32, i32) {
    %c0_i32 = arith.constant 0 : i32
    %c0_i32_0 = arith.constant 0 : i32
    %c0_i32_1 = arith.constant 0 : i32
    return %c0_i32, %c0_i32_0 : i32, i32
  }
  func.func @transform_8(%arg0: i32) -> (i32, i32) {
    %c0_i32 = arith.constant 0 : i32
    %c0_i32_0 = arith.constant 0 : i32
    %c0_i32_1 = arith.constant 0 : i32
    return %c0_i32, %c0_i32_0 : i32, i32
  }
  func.func @transform_9(%arg0: i32) -> (i32, i32, i32) {
    %c0_i32 = arith.constant 0 : i32
    %c0_i32_0 = arith.constant 0 : i32
    %c0_i32_1 = arith.constant 0 : i32
    return %arg0, %c0_i32, %c0_i32_0 : i32, i32, i32
  }
  func.func @transform_10(%arg0: i32) -> (i32, i32, i32) {
    %c0_i32 = arith.constant 0 : i32
    %c0_i32_0 = arith.constant 0 : i32
    %c0_i32_1 = arith.constant 0 : i32
    return %arg0, %c0_i32, %c0_i32_0 : i32, i32, i32
  }
  func.func @transform_11(%arg0: i32) -> (i32, i32, i32) {
    %c0_i32 = arith.constant 0 : i32
    %c0_i32_0 = arith.constant 0 : i32
    %c0_i32_1 = arith.constant 0 : i32
    return %arg0, %c0_i32, %c0_i32_0 : i32, i32, i32
  }
  func.func @transform_12(%arg0: i32) -> (i32, i32, i32) {
    %c0_i32 = arith.constant 0 : i32
    %c0_i32_0 = arith.constant 0 : i32
    %c0_i32_1 = arith.constant 0 : i32
    return %arg0, %c0_i32, %c0_i32_0 : i32, i32, i32
  }
  func.func @transform_13(%arg0: i32) -> (i32, i32, i32) {
    %c0_i32 = arith.constant 0 : i32
    %c0_i32_0 = arith.constant 0 : i32
    %c0_i32_1 = arith.constant 0 : i32
    return %arg0, %c0_i32, %c0_i32_0 : i32, i32, i32
  }
  func.func @transform_14(%arg0: i32) -> (i32, i32, i32) {
    %c0_i32 = arith.constant 0 : i32
    %c0_i32_0 = arith.constant 0 : i32
    %c0_i32_1 = arith.constant 0 : i32
    return %arg0, %c0_i32, %c0_i32_0 : i32, i32, i32
  }
  func.func @transform_15(%arg0: i32) -> (i32, i32, i32) {
    %c0_i32 = arith.constant 0 : i32
    %c0_i32_0 = arith.constant 0 : i32
    %c0_i32_1 = arith.constant 0 : i32
    return %arg0, %c0_i32, %c0_i32_0 : i32, i32, i32
  }
  func.func @transform_16(%arg0: i32) -> (i32, i32, i32) {
    %c0_i32 = arith.constant 0 : i32
    %c0_i32_0 = arith.constant 0 : i32
    %c0_i32_1 = arith.constant 0 : i32
    return %arg0, %c0_i32, %c0_i32_0 : i32, i32, i32
  }
  func.func @transform_17(%arg0: i32) -> (i32, i32, i32) {
    %c0_i32 = arith.constant 0 : i32
    %c0_i32_0 = arith.constant 0 : i32
    %c0_i32_1 = arith.constant 0 : i32
    return %arg0, %c0_i32, %c0_i32_0 : i32, i32, i32
  }
  func.func @transform_18(%arg0: i32) -> (i32, i32, i32) {
    %c0_i32 = arith.constant 0 : i32
    %c0_i32_0 = arith.constant 0 : i32
    %c0_i32_1 = arith.constant 0 : i32
    return %arg0, %c0_i32, %c0_i32_0 : i32, i32, i32
  }
  func.func @transform_19(%arg0: i32) -> (i32, i32, i32) {
    %c0_i32 = arith.constant 0 : i32
    %c0_i32_0 = arith.constant 0 : i32
    %c0_i32_1 = arith.constant 0 : i32
    return %arg0, %c0_i32, %c0_i32_0 : i32, i32, i32
  }
  func.func @transform_20(%arg0: i32) -> (i32, i32, i32) {
    %c0_i32 = arith.constant 0 : i32
    %c0_i32_0 = arith.constant 0 : i32
    %c0_i32_1 = arith.constant 0 : i32
    return %arg0, %c0_i32, %c0_i32_0 : i32, i32, i32
  }
  func.func @transform_21(%arg0: i32) -> (i32, i32, i32) {
    %c0_i32 = arith.constant 0 : i32
    %c0_i32_0 = arith.constant 0 : i32
    %c0_i32_1 = arith.constant 0 : i32
    return %arg0, %c0_i32, %c0_i32_0 : i32, i32, i32
  }
  func.func @transform_22(%arg0: i32) -> (i32, i32, i32) {
    %c0_i32 = arith.constant 0 : i32
    %c0_i32_0 = arith.constant 0 : i32
    %c0_i32_1 = arith.constant 0 : i32
    return %arg0, %c0_i32, %c0_i32_0 : i32, i32, i32
  }
  func.func @transform_23(%arg0: i32) -> (i32, i32, i32) {
    %c0_i32 = arith.constant 0 : i32
    %c0_i32_0 = arith.constant 0 : i32
    %c0_i32_1 = arith.constant 0 : i32
    return %arg0, %c0_i32, %c0_i32_0 : i32, i32, i32
  }
  func.func @transform_24(%arg0: i32) -> (i32, i32, i32) {
    %c0_i32 = arith.constant 0 : i32
    %c0_i32_0 = arith.constant 0 : i32
    %c0_i32_1 = arith.constant 0 : i32
    return %arg0, %c0_i32, %c0_i32_0 : i32, i32, i32
  }
  func.func @transform_25(%arg0: i32) -> (i32, i32, i32) {
    %c0_i32 = arith.constant 0 : i32
    %c0_i32_0 = arith.constant 0 : i32
    %c0_i32_1 = arith.constant 0 : i32
    return %arg0, %c0_i32, %c0_i32_0 : i32, i32, i32
  }
  func.func @transform_26(%arg0: i32) -> (i32, i32, i32) {
    %c0_i32 = arith.constant 0 : i32
    %c0_i32_0 = arith.constant 0 : i32
    %c0_i32_1 = arith.constant 0 : i32
    return %arg0, %c0_i32, %c0_i32_0 : i32, i32, i32
  }
  func.func @transform_27(%arg0: i32) -> (i32, i32) {
    %c0_i32 = arith.constant 0 : i32
    %c0_i32_0 = arith.constant 0 : i32
    %c0_i32_1 = arith.constant 0 : i32
    return %c0_i32, %c0_i32_0 : i32, i32
  }
}

</mosaic_0001>

<llo_original>
// kernel: timexer_forward.1
$region0: #{timexer_forward.1}
  #allocation0 [shape = 'u32[]', space=smem, size = 0x4, offset = 0x4, fixed_abs, tag = 'smem constant byte address 0x4 - core index']
  #allocation1 [shape = 'u32[144,128]{1,0:T(1,128)}', space=vmem, size = 0x12000, scoped, tag = 'internal scratch']
  #allocation2 [shape = 'f32[2,5,32]{2,1,0:T(8,128)}', space=vmem, size = 0x2000, scoped, tag = 'scratch operand']
  #allocation3 [shape = 'f32[2,2,32]{2,1,0:T(2,128)}', space=vmem, size = 0x800, scoped, tag = 'scratch operand']
  %s0 = inlined_call_operand.vmem [shape: f32[8,12], index: 0, kind: input, shape index: {}]
  %s1 = inlined_call_operand.vmem [shape: f32[2,2,12], index: 1, kind: input, shape index: {}]
  %s2 = inlined_call_operand.hbm [shape: f32[1,1,32], index: 2, kind: input, shape index: {}]
  %s3 = inlined_call_operand.hbm [shape: bf16[12,32], index: 3, kind: input, shape index: {}]
  %s4 = inlined_call_operand.hbm [shape: f32[1,32], index: 4, kind: input, shape index: {}]
  %s5 = inlined_call_operand.vmem [shape: bf16[2,12,32], index: 5, kind: input, shape index: {}]
  %s6 = inlined_call_operand.hbm [shape: f32[2,1,32], index: 6, kind: input, shape index: {}]
  %s7 = inlined_call_operand.vmem [shape: bf16[32,6], index: 7, kind: input, shape index: {}]
  %s8 = inlined_call_operand.hbm [shape: f32[1,6], index: 8, kind: input, shape index: {}]
  %s9 = inlined_call_operand.vmem [shape: bf16[2,32,96], index: 9, kind: input, shape index: {}]
  %s10 = inlined_call_operand.vmem [shape: f32[2,1,96], index: 10, kind: input, shape index: {}]
  %s11 = inlined_call_operand.vmem [shape: bf16[2,32,32], index: 11, kind: input, shape index: {}]
  %s12 = inlined_call_operand.vmem [shape: f32[2,1,32], index: 12, kind: input, shape index: {}]
  %s13 = inlined_call_operand.vmem [shape: bf16[2,32,32], index: 13, kind: input, shape index: {}]
  %s14 = inlined_call_operand.vmem [shape: f32[2,1,32], index: 14, kind: input, shape index: {}]
  %s15 = inlined_call_operand.vmem [shape: bf16[2,32,64], index: 15, kind: input, shape index: {}]
  %s16 = inlined_call_operand.vmem [shape: f32[2,1,64], index: 16, kind: input, shape index: {}]
  %s17 = inlined_call_operand.hbm [shape: bf16[2,32,32], index: 17, kind: input, shape index: {}]
  %s18 = inlined_call_operand.vmem [shape: f32[2,1,32], index: 18, kind: input, shape index: {}]
  %s19 = inlined_call_operand.hbm [shape: f32[2,1,32], index: 19, kind: input, shape index: {}]
  %s20 = inlined_call_operand.hbm [shape: f32[2,1,32], index: 20, kind: input, shape index: {}]
  %s21 = inlined_call_operand.vmem [shape: f32[2,1,32], index: 21, kind: input, shape index: {}]
  %s22 = inlined_call_operand.vmem [shape: f32[2,1,32], index: 22, kind: input, shape index: {}]
  %s23 = inlined_call_operand.vmem [shape: bf16[2,32,32], index: 23, kind: input, shape index: {}]
  %s24 = inlined_call_operand.vmem [shape: f32[2,1,32], index: 24, kind: input, shape index: {}]
  %s25 = inlined_call_operand.hbm [shape: bf16[2,32,32], index: 25, kind: input, shape index: {}]
  %s26 = inlined_call_operand.vmem [shape: f32[2,1,32], index: 26, kind: input, shape index: {}]
  %s27 = inlined_call_operand.hbm [shape: f32[2,6], index: 27, kind: output, shape index: {}]
  %s28 = sld [smem:[#allocation0]]
  $region185: #{timexer_forward.1} parent=0
    _
  %s30 = ssub.s32 1, %s28
  %s31 = scalar_select 0, %s30, %s28
  $region1: #{timexer_forward.1} parent=0
    #allocation4 [shape = 'u8[512]{0}', space=vmem, size = 0x400, scoped, tag = 'input window, operand 2, single buffered']
    #allocation5 [shape = 's32[2]{0}', space=sflag, size = 0x8, scoped, tag = 'scoped memory for timexer_forward.1']
    #allocation6 [shape = 's32[2]{0}', space=sflag, size = 0x8, scoped, tag = 'scoped memory for timexer_forward.1']
    #allocation7 [shape = 'u8[4096]{0}', space=vmem, size = 0x1000, scoped, tag = 'input window, operand 3, single buffered']
    #allocation8 [shape = 's32[1]{0}', space=sflag, size = 0x4, scoped, tag = 'scoped memory for timexer_forward.1']
    #allocation9 [shape = 'u8[512]{0}', space=vmem, size = 0x400, scoped, tag = 'input window, operand 4, single buffered']
    #allocation10 [shape = 'u8[1024]{0}', space=vmem, size = 0x400, scoped, tag = 'input window, operand 6, single buffered']
    #allocation11 [shape = 's32[1]{0}', space=sflag, size = 0x4, scoped, tag = 'scoped memory for timexer_forward.1']
    #allocation12 [shape = 'u8[512]{0}', space=vmem, size = 0x400, scoped, tag = 'input window, operand 8, single buffered']
    #allocation13 [shape = 'u8[16384]{0}', space=vmem, size = 0x4000, scoped, tag = 'input window, operand 17']
    #allocation14 [shape = 's32[2]{0}', space=sflag, size = 0x8, scoped, tag = 'scoped memory for timexer_forward.1']
    #allocation15 [shape = 'u8[1024]{0}', space=vmem, size = 0x400, scoped, tag = 'input window, operand 19']
    #allocation16 [shape = 'u8[1024]{0}', space=vmem, size = 0x400, scoped, tag = 'input window, operand 20']
    #allocation17 [shape = 's32[2]{0}', space=sflag, size = 0x8, scoped, tag = 'scoped memory for timexer_forward.1']
    #allocation18 [shape = 'u8[16384]{0}', space=vmem, size = 0x4000, scoped, tag = 'input window, operand 25']
    #allocation19 [shape = 'u8[1024]{0}', space=vmem, size = 0x400, scoped, tag = 'output window, operand 0, single buffered']
    %32 = vsyncpa [#allocation5], 0
    %33 = vsyncpa [#allocation8], 0
    %34 = vsyncpa [#allocation11], 0
    %35 = vsyncpa [#allocation14], 0
    %s36 = scalar_lea.sflag [#allocation14], 1
    %37 = vsyncpa %s36, 0
    %38 = vsyncpa [#allocation17], 0
    %s39 = scalar_lea.sflag [#allocation17], 1
    %40 = vsyncpa %s39, 0
    %41 = vsyncpa [#allocation6], 0
    loop: start=0, step=1, limit=4
    $region2: #{timexer_forward.1} parent=1 // loop_pre_header
      _
    $region3: #{timexer_forward.1} parent=1 // loop_header
      %s43 = sphi 0, %s47
      %p44 = scmp.ge.s32.totalorder %s43, 4
      %s51 = sphi 0, %s51
      %s53 = sphi 0, %s51
      %s54 = sphi 0, %s53
      %s68 = sphi 0, %s54
      %s72 = sphi 0, %s72
      %s74 = sphi 0, %s72
      %s75 = sphi 0, %s74
      %s89 = sphi 0, %s75
      %s93 = sphi 0, %s93
      %s95 = sphi 0, %s93
      %s96 = sphi 0, %s95
      %s110 = sphi 0, %s96
      %s114 = sphi 0, %s114
      %s116 = sphi 0, %s114
      %s117 = sphi 0, %s116
      %s131 = sphi 0, %s117
      %s135 = sphi 0, %s135
      %s137 = sphi 0, %s135
      %s138 = sphi 0, %s137
      %s152 = sphi 0, %s138
      %s156 = sphi 0, %s156
      %s158 = sphi 0, %s156
      %s159 = sphi 0, %s158
      %s173 = sphi 0, %s159
      %s177 = sphi 0, %s177
      %s179 = sphi 0, %s177
      %s180 = sphi 0, %s179
      %s194 = sphi 0, %s180
      %s198 = sphi 0, %s198
      %s200 = sphi 0, %s198
      %s201 = sphi 0, %s200
      %s215 = sphi 0, %s201
      %s219 = sphi 0, %s219
      %s221 = sphi 0, %s219
      %s222 = sphi 0, %s221
      %s236 = sphi 0, %s222
      %s242 = sphi 0, %s244
      %s245 = sphi 0, %s242
      %s246 = sphi 0, %s245
      %s262 = sphi 0, %s246
      %s268 = sphi 0, %s270
      %s271 = sphi 0, %s268
      %s272 = sphi 0, %s271
      %s288 = sphi 0, %s272
      %s294 = sphi 0, %s296
      %s297 = sphi 0, %s294
      %s298 = sphi 0, %s297
      %s314 = sphi 0, %s298
      %s320 = sphi 0, %s322
      %s323 = sphi 0, %s320
      %s324 = sphi 0, %s323
      %s340 = sphi 0, %s324
      %s346 = sphi 0, %s348
      %s349 = sphi 0, %s346
      %s350 = sphi 0, %s349
      %s366 = sphi 0, %s350
      %s372 = sphi 0, %s374
      %s375 = sphi 0, %s372
      %s376 = sphi 0, %s375
      %s392 = sphi 0, %s376
      %s398 = sphi 0, %s400
      %s401 = sphi 0, %s398
      %s402 = sphi 0, %s401
      %s418 = sphi 0, %s402
      %s424 = sphi 0, %s426
      %s427 = sphi 0, %s424
      %s428 = sphi 0, %s427
      %s444 = sphi 0, %s428
      %s450 = sphi 0, %s452
      %s453 = sphi 0, %s450
      %s454 = sphi 0, %s453
      %s470 = sphi 0, %s454
      %s476 = sphi 0, %s478
      %s479 = sphi 0, %s476
      %s480 = sphi 0, %s479
      %s496 = sphi 0, %s480
      %s502 = sphi 0, %s504
      %s505 = sphi 0, %s502
      %s506 = sphi 0, %s505
      %s522 = sphi 0, %s506
      %s528 = sphi 0, %s530
      %s531 = sphi 0, %s528
      %s532 = sphi 0, %s531
      %s548 = sphi 0, %s532
      %s554 = sphi 0, %s556
      %s557 = sphi 0, %s554
      %s558 = sphi 0, %s557
      %s574 = sphi 0, %s558
      %s580 = sphi 0, %s582
      %s583 = sphi 0, %s580
      %s584 = sphi 0, %s583
      %s600 = sphi 0, %s584
      %s606 = sphi 0, %s608
      %s609 = sphi 0, %s606
      %s610 = sphi 0, %s609
      %s626 = sphi 0, %s610
      %s632 = sphi 0, %s634
      %s635 = sphi 0, %s632
      %s636 = sphi 0, %s635
      %s652 = sphi 0, %s636
      %s658 = sphi 0, %s660
      %s661 = sphi 0, %s658
      %s662 = sphi 0, %s661
      %s678 = sphi 0, %s662
      %s684 = sphi 0, %s686
      %s687 = sphi 0, %s684
      %s688 = sphi 0, %s687
      %s704 = sphi 0, %s688
      %s708 = sphi 0, %s708
      %s710 = sphi 0, %s708
      %s711 = sphi 0, %s710
      %s725 = sphi 0, %s711
    $region4: #{timexer_forward.1} parent=1 // loop_header_branch
      %46 = sbr.rel (%p44) target = $region8
    $region5: #{timexer_forward.1} parent=1 // loop_body
      %s48 = ssub.s32 %s43, 1
      %s49 = ssub.s32 %s43, 2
      %s50 = sadd.s32 %s43, 1
      %s52 = sadd.s32 %s51, 1
      %p55 = scmp.eq.s32.totalorder %s43, 1
      %p56 = scmp.ne.s32.totalorder %s51, %s53
      %p57 = scmp.eq.s32.totalorder %s43, 0
      %p58 = por %p56, %p57
      %p59 = scmp.ne.s32.totalorder %s51, %s53
      %p60 = scmp.eq.s32.totalorder %s48, 1
      %p61 = por %p59, %p60
      %p62 = scmp.ne.s32.totalorder %s53, %s54
      %p63 = scmp.eq.s32.totalorder %s48, 0
      %p64 = por %p62, %p63
      %p65 = scmp.ne.s32.totalorder %s53, %s54
      %p66 = scmp.eq.s32.totalorder %s49, 1
      %p67 = por %p65, %p66
      %p69 = scmp.ne.s32.totalorder %s54, %s68
      %p70 = scmp.eq.s32.totalorder %s49, 0
      %p71 = por %p69, %p70
      %s73 = sadd.s32 %s72, 1
      %p76 = scmp.eq.s32.totalorder %s43, 1
      %p77 = scmp.ne.s32.totalorder %s72, %s74
      %p78 = scmp.eq.s32.totalorder %s43, 0
      %p79 = por %p77, %p78
      %p80 = scmp.ne.s32.totalorder %s72, %s74
      %p81 = scmp.eq.s32.totalorder %s48, 1
      %p82 = por %p80, %p81
      %p83 = scmp.ne.s32.totalorder %s74, %s75
      %p84 = scmp.eq.s32.totalorder %s48, 0
      %p85 = por %p83, %p84
      %p86 = scmp.ne.s32.totalorder %s74, %s75
      %p87 = scmp.eq.s32.totalorder %s49, 1
      %p88 = por %p86, %p87
      %p90 = scmp.ne.s32.totalorder %s75, %s89
      %p91 = scmp.eq.s32.totalorder %s49, 0
      %p92 = por %p90, %p91
      %s94 = sadd.s32 %s93, 1
      %p97 = scmp.eq.s32.totalorder %s43, 1
      %p98 = scmp.ne.s32.totalorder %s93, %s95
      %p99 = scmp.eq.s32.totalorder %s43, 0
      %p100 = por %p98, %p99
      %p101 = scmp.ne.s32.totalorder %s93, %s95
      %p102 = scmp.eq.s32.totalorder %s48, 1
      %p103 = por %p101, %p102
      %p104 = scmp.ne.s32.totalorder %s95, %s96
      %p105 = scmp.eq.s32.totalorder %s48, 0
      %p106 = por %p104, %p105
      %p107 = scmp.ne.s32.totalorder %s95, %s96
      %p108 = scmp.eq.s32.totalorder %s49, 1
      %p109 = por %p107, %p108
      %p111 = scmp.ne.s32.totalorder %s96, %s110
      %p112 = scmp.eq.s32.totalorder %s49, 0
      %p113 = por %p111, %p112
      %s115 = sadd.s32 %s114, 1
      %p118 = scmp.eq.s32.totalorder %s43, 1
      %p119 = scmp.ne.s32.totalorder %s114, %s116
      %p120 = scmp.eq.s32.totalorder %s43, 0
      %p121 = por %p119, %p120
      %p122 = scmp.ne.s32.totalorder %s114, %s116
      %p123 = scmp.eq.s32.totalorder %s48, 1
      %p124 = por %p122, %p123
      %p125 = scmp.ne.s32.totalorder %s116, %s117
      %p126 = scmp.eq.s32.totalorder %s48, 0
      %p127 = por %p125, %p126
      %p128 = scmp.ne.s32.totalorder %s116, %s117
      %p129 = scmp.eq.s32.totalorder %s49, 1
      %p130 = por %p128, %p129
      %p132 = scmp.ne.s32.totalorder %s117, %s131
      %p133 = scmp.eq.s32.totalorder %s49, 0
      %p134 = por %p132, %p133
      %s136 = sadd.s32 %s135, 1
      %p139 = scmp.eq.s32.totalorder %s43, 1
      %p140 = scmp.ne.s32.totalorder %s135, %s137
      %p141 = scmp.eq.s32.totalorder %s43, 0
      %p142 = por %p140, %p141
      %p143 = scmp.ne.s32.totalorder %s135, %s137
      %p144 = scmp.eq.s32.totalorder %s48, 1
      %p145 = por %p143, %p144
      %p146 = scmp.ne.s32.totalorder %s137, %s138
      %p147 = scmp.eq.s32.totalorder %s48, 0
      %p148 = por %p146, %p147
      %p149 = scmp.ne.s32.totalorder %s137, %s138
      %p150 = scmp.eq.s32.totalorder %s49, 1
      %p151 = por %p149, %p150
      %p153 = scmp.ne.s32.totalorder %s138, %s152
      %p154 = scmp.eq.s32.totalorder %s49, 0
      %p155 = por %p153, %p154
      %s157 = sadd.s32 %s156, 1
      %p160 = scmp.eq.s32.totalorder %s43, 1
      %p161 = scmp.ne.s32.totalorder %s156, %s158
      %p162 = scmp.eq.s32.totalorder %s43, 0
      %p163 = por %p161, %p162
      %p164 = scmp.ne.s32.totalorder %s156, %s158
      %p165 = scmp.eq.s32.totalorder %s48, 1
      %p166 = por %p164, %p165
      %p167 = scmp.ne.s32.totalorder %s158, %s159
      %p168 = scmp.eq.s32.totalorder %s48, 0
      %p169 = por %p167, %p168
      %p170 = scmp.ne.s32.totalorder %s158, %s159
      %p171 = scmp.eq.s32.totalorder %s49, 1
      %p172 = por %p170, %p171
      %p174 = scmp.ne.s32.totalorder %s159, %s173
      %p175 = scmp.eq.s32.totalorder %s49, 0
      %p176 = por %p174, %p175
      %s178 = sadd.s32 %s177, 1
      %p181 = scmp.eq.s32.totalorder %s43, 1
      %p182 = scmp.ne.s32.totalorder %s177, %s179
      %p183 = scmp.eq.s32.totalorder %s43, 0
      %p184 = por %p182, %p183
      %p185 = scmp.ne.s32.totalorder %s177, %s179
      %p186 = scmp.eq.s32.totalorder %s48, 1
      %p187 = por %p185, %p186
      %p188 = scmp.ne.s32.totalorder %s179, %s180
      %p189 = scmp.eq.s32.totalorder %s48, 0
      %p190 = por %p188, %p189
      %p191 = scmp.ne.s32.totalorder %s179, %s180
      %p192 = scmp.eq.s32.totalorder %s49, 1
      %p193 = por %p191, %p192
      %p195 = scmp.ne.s32.totalorder %s180, %s194
      %p196 = scmp.eq.s32.totalorder %s49, 0
      %p197 = por %p195, %p196
      %s199 = sadd.s32 %s198, 1
      %p202 = scmp.eq.s32.totalorder %s43, 1
      %p203 = scmp.ne.s32.totalorder %s198, %s200
      %p204 = scmp.eq.s32.totalorder %s43, 0
      %p205 = por %p203, %p204
      %p206 = scmp.ne.s32.totalorder %s198, %s200
      %p207 = scmp.eq.s32.totalorder %s48, 1
      %p208 = por %p206, %p207
      %p209 = scmp.ne.s32.totalorder %s200, %s201
      %p210 = scmp.eq.s32.totalorder %s48, 0
      %p211 = por %p209, %p210
      %p212 = scmp.ne.s32.totalorder %s200, %s201
      %p213 = scmp.eq.s32.totalorder %s49, 1
      %p214 = por %p212, %p213
      %p216 = scmp.ne.s32.totalorder %s201, %s215
      %p217 = scmp.eq.s32.totalorder %s49, 0
      %p218 = por %p216, %p217
      %s220 = sadd.s32 %s219, 1
      %p223 = scmp.eq.s32.totalorder %s43, 1
      %p224 = scmp.ne.s32.totalorder %s219, %s221
      %p225 = scmp.eq.s32.totalorder %s43, 0
      %p226 = por %p224, %p225
      %p227 = scmp.ne.s32.totalorder %s219, %s221
      %p228 = scmp.eq.s32.totalorder %s48, 1
      %p229 = por %p227, %p228
      %p230 = scmp.ne.s32.totalorder %s221, %s222
      %p231 = scmp.eq.s32.totalorder %s48, 0
      %p232 = por %p230, %p231
      %p233 = scmp.ne.s32.totalorder %s221, %s222
      %p234 = scmp.eq.s32.totalorder %s49, 1
      %p235 = por %p233, %p234
      %p237 = scmp.ne.s32.totalorder %s222, %s236
      %p238 = scmp.eq.s32.totalorder %s49, 0
      %p239 = por %p237, %p238
      %s240 = ssub.s32 %s43, %s50
      %p241 = scmp.eq.s32.totalorder %s240, 0
      %s243 = sadd.s32 %s242, 1
      %s244 = scalar_select %p241, %s242, %s243
      %p247 = pneg %p241
      %p248 = scmp.eq.s32.totalorder %s43, 1
      %p249 = por %p247, %p248
      %p250 = scmp.ne.s32.totalorder %s242, %s245
      %p251 = scmp.eq.s32.totalorder %s43, 0
      %p252 = por %p250, %p251
      %p253 = scmp.ne.s32.totalorder %s242, %s245
      %p254 = scmp.eq.s32.totalorder %s48, 1
      %p255 = por %p253, %p254
      %p256 = scmp.ne.s32.totalorder %s245, %s246
      %p257 = scmp.eq.s32.totalorder %s48, 0
      %p258 = por %p256, %p257
      %p259 = scmp.ne.s32.totalorder %s245, %s246
      %p260 = scmp.eq.s32.totalorder %s49, 1
      %p261 = por %p259, %p260
      %p263 = scmp.ne.s32.totalorder %s246, %s262
      %p264 = scmp.eq.s32.totalorder %s49, 0
      %p265 = por %p263, %p264
      %s266 = ssub.s32 %s43, %s50
      %p267 = scmp.eq.s32.totalorder %s266, 0
      %s269 = sadd.s32 %s268, 1
      %s270 = scalar_select %p267, %s268, %s269
      %p273 = pneg %p267
      %p274 = scmp.eq.s32.totalorder %s43, 1
      %p275 = por %p273, %p274
      %p276 = scmp.ne.s32.totalorder %s268, %s271
      %p277 = scmp.eq.s32.totalorder %s43, 0
      %p278 = por %p276, %p277
      %p279 = scmp.ne.s32.totalorder %s268, %s271
      %p280 = scmp.eq.s32.totalorder %s48, 1
      %p281 = por %p279, %p280
      %p282 = scmp.ne.s32.totalorder %s271, %s272
      %p283 = scmp.eq.s32.totalorder %s48, 0
      %p284 = por %p282, %p283
      %p285 = scmp.ne.s32.totalorder %s271, %s272
      %p286 = scmp.eq.s32.totalorder %s49, 1
      %p287 = por %p285, %p286
      %p289 = scmp.ne.s32.totalorder %s272, %s288
      %p290 = scmp.eq.s32.totalorder %s49, 0
      %p291 = por %p289, %p290
      %s292 = ssub.s32 %s43, %s50
      %p293 = scmp.eq.s32.totalorder %s292, 0
      %s295 = sadd.s32 %s294, 1
      %s296 = scalar_select %p293, %s294, %s295
      %p299 = pneg %p293
      %p300 = scmp.eq.s32.totalorder %s43, 1
      %p301 = por %p299, %p300
      %p302 = scmp.ne.s32.totalorder %s294, %s297
      %p303 = scmp.eq.s32.totalorder %s43, 0
      %p304 = por %p302, %p303
      %p305 = scmp.ne.s32.totalorder %s294, %s297
      %p306 = scmp.eq.s32.totalorder %s48, 1
      %p307 = por %p305, %p306
      %p308 = scmp.ne.s32.totalorder %s297, %s298
      %p309 = scmp.eq.s32.totalorder %s48, 0
      %p310 = por %p308, %p309
      %p311 = scmp.ne.s32.totalorder %s297, %s298
      %p312 = scmp.eq.s32.totalorder %s49, 1
      %p313 = por %p311, %p312
      %p315 = scmp.ne.s32.totalorder %s298, %s314
      %p316 = scmp.eq.s32.totalorder %s49, 0
      %p317 = por %p315, %p316
      %s318 = ssub.s32 %s43, %s50
      %p319 = scmp.eq.s32.totalorder %s318, 0
      %s321 = sadd.s32 %s320, 1
      %s322 = scalar_select %p319, %s320, %s321
      %p325 = pneg %p319
      %p326 = scmp.eq.s32.totalorder %s43, 1
      %p327 = por %p325, %p326
      %p328 = scmp.ne.s32.totalorder %s320, %s323
      %p329 = scmp.eq.s32.totalorder %s43, 0
      %p330 = por %p328, %p329
      %p331 = scmp.ne.s32.totalorder %s320, %s323
      %p332 = scmp.eq.s32.totalorder %s48, 1
      %p333 = por %p331, %p332
      %p334 = scmp.ne.s32.totalorder %s323, %s324
      %p335 = scmp.eq.s32.totalorder %s48, 0
      %p336 = por %p334, %p335
      %p337 = scmp.ne.s32.totalorder %s323, %s324
      %p338 = scmp.eq.s32.totalorder %s49, 1
      %p339 = por %p337, %p338
      %p341 = scmp.ne.s32.totalorder %s324, %s340
      %p342 = scmp.eq.s32.totalorder %s49, 0
      %p343 = por %p341, %p342
      %s344 = ssub.s32 %s43, %s50
      %p345 = scmp.eq.s32.totalorder %s344, 0
      %s347 = sadd.s32 %s346, 1
      %s348 = scalar_select %p345, %s346, %s347
      %p351 = pneg %p345
      %p352 = scmp.eq.s32.totalorder %s43, 1
      %p353 = por %p351, %p352
      %p354 = scmp.ne.s32.totalorder %s346, %s349
      %p355 = scmp.eq.s32.totalorder %s43, 0
      %p356 = por %p354, %p355
      %p357 = scmp.ne.s32.totalorder %s346, %s349
      %p358 = scmp.eq.s32.totalorder %s48, 1
      %p359 = por %p357, %p358
      %p360 = scmp.ne.s32.totalorder %s349, %s350
      %p361 = scmp.eq.s32.totalorder %s48, 0
      %p362 = por %p360, %p361
      %p363 = scmp.ne.s32.totalorder %s349, %s350
      %p364 = scmp.eq.s32.totalorder %s49, 1
      %p365 = por %p363, %p364
      %p367 = scmp.ne.s32.totalorder %s350, %s366
      %p368 = scmp.eq.s32.totalorder %s49, 0
      %p369 = por %p367, %p368
      %s370 = ssub.s32 %s43, %s50
      %p371 = scmp.eq.s32.totalorder %s370, 0
      %s373 = sadd.s32 %s372, 1
      %s374 = scalar_select %p371, %s372, %s373
      %p377 = pneg %p371
      %p378 = scmp.eq.s32.totalorder %s43, 1
      %p379 = por %p377, %p378
      %p380 = scmp.ne.s32.totalorder %s372, %s375
      %p381 = scmp.eq.s32.totalorder %s43, 0
      %p382 = por %p380, %p381
      %p383 = scmp.ne.s32.totalorder %s372, %s375
      %p384 = scmp.eq.s32.totalorder %s48, 1
      %p385 = por %p383, %p384
      %p386 = scmp.ne.s32.totalorder %s375, %s376
      %p387 = scmp.eq.s32.totalorder %s48, 0
      %p388 = por %p386, %p387
      %p389 = scmp.ne.s32.totalorder %s375, %s376
      %p390 = scmp.eq.s32.totalorder %s49, 1
      %p391 = por %p389, %p390
      %p393 = scmp.ne.s32.totalorder %s376, %s392
      %p394 = scmp.eq.s32.totalorder %s49, 0
      %p395 = por %p393, %p394
      %s396 = ssub.s32 %s43, %s50
      %p397 = scmp.eq.s32.totalorder %s396, 0
      %s399 = sadd.s32 %s398, 1
      %s400 = scalar_select %p397, %s398, %s399
      %p403 = pneg %p397
      %p404 = scmp.eq.s32.totalorder %s43, 1
      %p405 = por %p403, %p404
      %p406 = scmp.ne.s32.totalorder %s398, %s401
      %p407 = scmp.eq.s32.totalorder %s43, 0
      %p408 = por %p406, %p407
      %p409 = scmp.ne.s32.totalorder %s398, %s401
      %p410 = scmp.eq.s32.totalorder %s48, 1
      %p411 = por %p409, %p410
      %p412 = scmp.ne.s32.totalorder %s401, %s402
      %p413 = scmp.eq.s32.totalorder %s48, 0
      %p414 = por %p412, %p413
      %p415 = scmp.ne.s32.totalorder %s401, %s402
      %p416 = scmp.eq.s32.totalorder %s49, 1
      %p417 = por %p415, %p416
      %p419 = scmp.ne.s32.totalorder %s402, %s418
      %p420 = scmp.eq.s32.totalorder %s49, 0
      %p421 = por %p419, %p420
      %s422 = ssub.s32 %s43, %s50
      %p423 = scmp.eq.s32.totalorder %s422, 0
      %s425 = sadd.s32 %s424, 1
      %s426 = scalar_select %p423, %s424, %s425
      %p429 = pneg %p423
      %p430 = scmp.eq.s32.totalorder %s43, 1
      %p431 = por %p429, %p430
      %p432 = scmp.ne.s32.totalorder %s424, %s427
      %p433 = scmp.eq.s32.totalorder %s43, 0
      %p434 = por %p432, %p433
      %p435 = scmp.ne.s32.totalorder %s424, %s427
      %p436 = scmp.eq.s32.totalorder %s48, 1
      %p437 = por %p435, %p436
      %p438 = scmp.ne.s32.totalorder %s427, %s428
      %p439 = scmp.eq.s32.totalorder %s48, 0
      %p440 = por %p438, %p439
      %p441 = scmp.ne.s32.totalorder %s427, %s428
      %p442 = scmp.eq.s32.totalorder %s49, 1
      %p443 = por %p441, %p442
      %p445 = scmp.ne.s32.totalorder %s428, %s444
      %p446 = scmp.eq.s32.totalorder %s49, 0
      %p447 = por %p445, %p446
      %s448 = ssub.s32 %s43, %s50
      %p449 = scmp.eq.s32.totalorder %s448, 0
      %s451 = sadd.s32 %s450, 1
      %s452 = scalar_select %p449, %s450, %s451
      %p455 = pneg %p449
      %p456 = scmp.eq.s32.totalorder %s43, 1
      %p457 = por %p455, %p456
      %p458 = scmp.ne.s32.totalorder %s450, %s453
      %p459 = scmp.eq.s32.totalorder %s43, 0
      %p460 = por %p458, %p459
      %p461 = scmp.ne.s32.totalorder %s450, %s453
      %p462 = scmp.eq.s32.totalorder %s48, 1
      %p463 = por %p461, %p462
      %p464 = scmp.ne.s32.totalorder %s453, %s454
      %p465 = scmp.eq.s32.totalorder %s48, 0
      %p466 = por %p464, %p465
      %p467 = scmp.ne.s32.totalorder %s453, %s454
      %p468 = scmp.eq.s32.totalorder %s49, 1
      %p469 = por %p467, %p468
      %p471 = scmp.ne.s32.totalorder %s454, %s470
      %p472 = scmp.eq.s32.totalorder %s49, 0
      %p473 = por %p471, %p472
      %s474 = ssub.s32 %s43, %s50
      %p475 = scmp.eq.s32.totalorder %s474, 0
      %s477 = sadd.s32 %s476, 1
      %s478 = scalar_select %p475, %s476, %s477
      %p481 = pneg %p475
      %p482 = scmp.eq.s32.totalorder %s43, 1
      %p483 = por %p481, %p482
      %p484 = scmp.ne.s32.totalorder %s476, %s479
      %p485 = scmp.eq.s32.totalorder %s43, 0
      %p486 = por %p484, %p485
      %p487 = scmp.ne.s32.totalorder %s476, %s479
      %p488 = scmp.eq.s32.totalorder %s48, 1
      %p489 = por %p487, %p488
      %p490 = scmp.ne.s32.totalorder %s479, %s480
      %p491 = scmp.eq.s32.totalorder %s48, 0
      %p492 = por %p490, %p491
      %p493 = scmp.ne.s32.totalorder %s479, %s480
      %p494 = scmp.eq.s32.totalorder %s49, 1
      %p495 = por %p493, %p494
      %p497 = scmp.ne.s32.totalorder %s480, %s496
      %p498 = scmp.eq.s32.totalorder %s49, 0
      %p499 = por %p497, %p498
      %s500 = ssub.s32 %s43, %s50
      %p501 = scmp.eq.s32.totalorder %s500, 0
      %s503 = sadd.s32 %s502, 1
      %s504 = scalar_select %p501, %s502, %s503
      %p507 = pneg %p501
      %p508 = scmp.eq.s32.totalorder %s43, 1
      %p509 = por %p507, %p508
      %p510 = scmp.ne.s32.totalorder %s502, %s505
      %p511 = scmp.eq.s32.totalorder %s43, 0
      %p512 = por %p510, %p511
      %p513 = scmp.ne.s32.totalorder %s502, %s505
      %p514 = scmp.eq.s32.totalorder %s48, 1
      %p515 = por %p513, %p514
      %p516 = scmp.ne.s32.totalorder %s505, %s506
      %p517 = scmp.eq.s32.totalorder %s48, 0
      %p518 = por %p516, %p517
      %p519 = scmp.ne.s32.totalorder %s505, %s506
      %p520 = scmp.eq.s32.totalorder %s49, 1
      %p521 = por %p519, %p520
      %p523 = scmp.ne.s32.totalorder %s506, %s522
      %p524 = scmp.eq.s32.totalorder %s49, 0
      %p525 = por %p523, %p524
      %s526 = ssub.s32 %s43, %s50
      %p527 = scmp.eq.s32.totalorder %s526, 0
      %s529 = sadd.s32 %s528, 1
      %s530 = scalar_select %p527, %s528, %s529
      %p533 = pneg %p527
      %p534 = scmp.eq.s32.totalorder %s43, 1
      %p535 = por %p533, %p534
      %p536 = scmp.ne.s32.totalorder %s528, %s531
      %p537 = scmp.eq.s32.totalorder %s43, 0
      %p538 = por %p536, %p537
      %p539 = scmp.ne.s32.totalorder %s528, %s531
      %p540 = scmp.eq.s32.totalorder %s48, 1
      %p541 = por %p539, %p540
      %p542 = scmp.ne.s32.totalorder %s531, %s532
      %p543 = scmp.eq.s32.totalorder %s48, 0
      %p544 = por %p542, %p543
      %p545 = scmp.ne.s32.totalorder %s531, %s532
      %p546 = scmp.eq.s32.totalorder %s49, 1
      %p547 = por %p545, %p546
      %p549 = scmp.ne.s32.totalorder %s532, %s548
      %p550 = scmp.eq.s32.totalorder %s49, 0
      %p551 = por %p549, %p550
      %s552 = ssub.s32 %s43, %s50
      %p553 = scmp.eq.s32.totalorder %s552, 0
      %s555 = sadd.s32 %s554, 1
      %s556 = scalar_select %p553, %s554, %s555
      %p559 = pneg %p553
      %p560 = scmp.eq.s32.totalorder %s43, 1
      %p561 = por %p559, %p560
      %p562 = scmp.ne.s32.totalorder %s554, %s557
      %p563 = scmp.eq.s32.totalorder %s43, 0
      %p564 = por %p562, %p563
      %p565 = scmp.ne.s32.totalorder %s554, %s557
      %p566 = scmp.eq.s32.totalorder %s48, 1
      %p567 = por %p565, %p566
      %p568 = scmp.ne.s32.totalorder %s557, %s558
      %p569 = scmp.eq.s32.totalorder %s48, 0
      %p570 = por %p568, %p569
      %p571 = scmp.ne.s32.totalorder %s557, %s558
      %p572 = scmp.eq.s32.totalorder %s49, 1
      %p573 = por %p571, %p572
      %p575 = scmp.ne.s32.totalorder %s558, %s574
      %p576 = scmp.eq.s32.totalorder %s49, 0
      %p577 = por %p575, %p576
      %s578 = ssub.s32 %s43, %s50
      %p579 = scmp.eq.s32.totalorder %s578, 0
      %s581 = sadd.s32 %s580, 1
      %s582 = scalar_select %p579, %s580, %s581
      %p585 = pneg %p579
      %p586 = scmp.eq.s32.totalorder %s43, 1
      %p587 = por %p585, %p586
      %p588 = scmp.ne.s32.totalorder %s580, %s583
      %p589 = scmp.eq.s32.totalorder %s43, 0
      %p590 = por %p588, %p589
      %p591 = scmp.ne.s32.totalorder %s580, %s583
      %p592 = scmp.eq.s32.totalorder %s48, 1
      %p593 = por %p591, %p592
      %p594 = scmp.ne.s32.totalorder %s583, %s584
      %p595 = scmp.eq.s32.totalorder %s48, 0
      %p596 = por %p594, %p595
      %p597 = scmp.ne.s32.totalorder %s583, %s584
      %p598 = scmp.eq.s32.totalorder %s49, 1
      %p599 = por %p597, %p598
      %p601 = scmp.ne.s32.totalorder %s584, %s600
      %p602 = scmp.eq.s32.totalorder %s49, 0
      %p603 = por %p601, %p602
      %s604 = ssub.s32 %s43, %s50
      %p605 = scmp.eq.s32.totalorder %s604, 0
      %s607 = sadd.s32 %s606, 1
      %s608 = scalar_select %p605, %s606, %s607
      %p611 = pneg %p605
      %p612 = scmp.eq.s32.totalorder %s43, 1
      %p613 = por %p611, %p612
      %p614 = scmp.ne.s32.totalorder %s606, %s609
      %p615 = scmp.eq.s32.totalorder %s43, 0
      %p616 = por %p614, %p615
      %p617 = scmp.ne.s32.totalorder %s606, %s609
      %p618 = scmp.eq.s32.totalorder %s48, 1
      %p619 = por %p617, %p618
      %p620 = scmp.ne.s32.totalorder %s609, %s610
      %p621 = scmp.eq.s32.totalorder %s48, 0
      %p622 = por %p620, %p621
      %p623 = scmp.ne.s32.totalorder %s609, %s610
      %p624 = scmp.eq.s32.totalorder %s49, 1
      %p625 = por %p623, %p624
      %p627 = scmp.ne.s32.totalorder %s610, %s626
      %p628 = scmp.eq.s32.totalorder %s49, 0
      %p629 = por %p627, %p628
      %s630 = ssub.s32 %s43, %s50
      %p631 = scmp.eq.s32.totalorder %s630, 0
      %s633 = sadd.s32 %s632, 1
      %s634 = scalar_select %p631, %s632, %s633
      %p637 = pneg %p631
      %p638 = scmp.eq.s32.totalorder %s43, 1
      %p639 = por %p637, %p638
      %p640 = scmp.ne.s32.totalorder %s632, %s635
      %p641 = scmp.eq.s32.totalorder %s43, 0
      %p642 = por %p640, %p641
      %p643 = scmp.ne.s32.totalorder %s632, %s635
      %p644 = scmp.eq.s32.totalorder %s48, 1
      %p645 = por %p643, %p644
      %p646 = scmp.ne.s32.totalorder %s635, %s636
      %p647 = scmp.eq.s32.totalorder %s48, 0
      %p648 = por %p646, %p647
      %p649 = scmp.ne.s32.totalorder %s635, %s636
      %p650 = scmp.eq.s32.totalorder %s49, 1
      %p651 = por %p649, %p650
      %p653 = scmp.ne.s32.totalorder %s636, %s652
      %p654 = scmp.eq.s32.totalorder %s49, 0
      %p655 = por %p653, %p654
      %s656 = ssub.s32 %s43, %s50
      %p657 = scmp.eq.s32.totalorder %s656, 0
      %s659 = sadd.s32 %s658, 1
      %s660 = scalar_select %p657, %s658, %s659
      %p663 = pneg %p657
      %p664 = scmp.eq.s32.totalorder %s43, 1
      %p665 = por %p663, %p664
      %p666 = scmp.ne.s32.totalorder %s658, %s661
      %p667 = scmp.eq.s32.totalorder %s43, 0
      %p668 = por %p666, %p667
      %p669 = scmp.ne.s32.totalorder %s658, %s661
      %p670 = scmp.eq.s32.totalorder %s48, 1
      %p671 = por %p669, %p670
      %p672 = scmp.ne.s32.totalorder %s661, %s662
      %p673 = scmp.eq.s32.totalorder %s48, 0
      %p674 = por %p672, %p673
      %p675 = scmp.ne.s32.totalorder %s661, %s662
      %p676 = scmp.eq.s32.totalorder %s49, 1
      %p677 = por %p675, %p676
      %p679 = scmp.ne.s32.totalorder %s662, %s678
      %p680 = scmp.eq.s32.totalorder %s49, 0
      %p681 = por %p679, %p680
      %s682 = ssub.s32 %s43, %s50
      %p683 = scmp.eq.s32.totalorder %s682, 0
      %s685 = sadd.s32 %s684, 1
      %s686 = scalar_select %p683, %s684, %s685
      %p689 = pneg %p683
      %p690 = scmp.eq.s32.totalorder %s43, 1
      %p691 = por %p689, %p690
      %p692 = scmp.ne.s32.totalorder %s684, %s687
      %p693 = scmp.eq.s32.totalorder %s43, 0
      %p694 = por %p692, %p693
      %p695 = scmp.ne.s32.totalorder %s684, %s687
      %p696 = scmp.eq.s32.totalorder %s48, 1
      %p697 = por %p695, %p696
      %p698 = scmp.ne.s32.totalorder %s687, %s688
      %p699 = scmp.eq.s32.totalorder %s48, 0
      %p700 = por %p698, %p699
      %p701 = scmp.ne.s32.totalorder %s687, %s688
      %p702 = scmp.eq.s32.totalorder %s49, 1
      %p703 = por %p701, %p702
      %p705 = scmp.ne.s32.totalorder %s688, %s704
      %p706 = scmp.eq.s32.totalorder %s49, 0
      %p707 = por %p705, %p706
      %s709 = sadd.s32 %s708, 1
      %p712 = scmp.eq.s32.totalorder %s43, 1
      %p713 = scmp.ne.s32.totalorder %s708, %s710
      %p714 = scmp.eq.s32.totalorder %s43, 0
      %p715 = por %p713, %p714
      %p716 = scmp.ne.s32.totalorder %s708, %s710
      %p717 = scmp.eq.s32.totalorder %s48, 1
      %p718 = por %p716, %p717
      %p719 = scmp.ne.s32.totalorder %s710, %s711
      %p720 = scmp.eq.s32.totalorder %s48, 0
      %p721 = por %p719, %p720
      %p722 = scmp.ne.s32.totalorder %s710, %s711
      %p723 = scmp.eq.s32.totalorder %s49, 1
      %p724 = por %p722, %p723
      %p726 = scmp.ne.s32.totalorder %s711, %s725
      %p727 = scmp.eq.s32.totalorder %s49, 0
      %p728 = por %p726, %p727
      %p729 = scmp.le.s32.totalorder 1, %s43
      %p730 = scmp.lt.s32.totalorder %s43, 3
      %p731 = pnand %p729, %p730
      %p732 = pneg %p731
      // Predicated region
      $region9: #{timexer_forward.1} parent=5 // pred_check
        _
      $region10: #{timexer_forward.1} parent=5 // pred_check_branch
        %734 = sbr.rel (%p731) target = $region12
      $region11: #{timexer_forward.1} parent=5 // pred_region
        %s735 = ssub.s32 %s43, 1
        // Predicated region
        $region13: #{timexer_forward.1} parent=11 // pred_check
          %p736 = pneg %p64
        $region14: #{timexer_forward.1} parent=11 // pred_check_branch
          %738 = sbr.rel (%p736) target = $region16
        $region15: #{timexer_forward.1} parent=11 // pred_region
          _
        $region16: #{timexer_forward.1} parent=11 // pred_fallthru
          _
        // Predicated region
        $region17: #{timexer_forward.1} parent=11 // pred_check
          %p739 = pneg %p85
        $region18: #{timexer_forward.1} parent=11 // pred_check_branch
          %741 = sbr.rel (%p739) target = $region20
        $region19: #{timexer_forward.1} parent=11 // pred_region
          _
        $region20: #{timexer_forward.1} parent=11 // pred_fallthru
          _
        // Predicated region
        $region21: #{timexer_forward.1} parent=11 // pred_check
          %p742 = pneg %p106
        $region22: #{timexer_forward.1} parent=11 // pred_check_branch
          %744 = sbr.rel (%p742) target = $region24
        $region23: #{timexer_forward.1} parent=11 // pred_region
          %s746 = ssub.s32 16, 16
          %747 = vsyncadd [#allocation5], %s746
          %s749 = sshll.u32 [#allocation4], 4
          %s750 = int_to_ptr.vmem [resolvable:$true] %s749
          %752 = dma.hbm_to_vmem [thread:$0]  %s2, 16, %s750, [#allocation5]
        $region24: #{timexer_forward.1} parent=11 // pred_fallthru
          _
        // Predicated region
        $region25: #{timexer_forward.1} parent=11 // pred_check
          %p753 = pneg %p127
        $region26: #{timexer_forward.1} parent=11 // pred_check_branch
          %755 = sbr.rel (%p753) target = $region28
        $region27: #{timexer_forward.1} parent=11 // pred_region
          %s757 = ssub.s32 128, 128
          %758 = vsyncadd [#allocation8], %s757
          %s759 = sshll.u32 [#allocation7], 4
          %s760 = int_to_ptr.vmem [resolvable:$true] %s759
          %765 = dma.hbm_to_vmem [thread:$0]  %s3, 128, %s760, [#allocation8], 64, 64, 4
        $region28: #{timexer_forward.1} parent=11 // pred_fallthru
          _
        // Predicated region
        $region29: #{timexer_forward.1} parent=11 // pred_check
          %p766 = pneg %p148
        $region30: #{timexer_forward.1} parent=11 // pred_check_branch
          %768 = sbr.rel (%p766) target = $region32
        $region31: #{timexer_forward.1} parent=11 // pred_region
          %s770 = ssub.s32 16, 16
          %771 = vsyncadd [#allocation8], %s770
          %s773 = sshll.u32 [#allocation9], 4
          %s774 = int_to_ptr.vmem [resolvable:$true] %s773
          %776 = dma.hbm_to_vmem [thread:$0]  %s4, 16, %s774, [#allocation8]
        $region32: #{timexer_forward.1} parent=11 // pred_fallthru
          _
        // Predicated region
        $region33: #{timexer_forward.1} parent=11 // pred_check
          %p777 = pneg %p169
        $region34: #{timexer_forward.1} parent=11 // pred_check_branch
          %779 = sbr.rel (%p777) target = $region36
        $region35: #{timexer_forward.1} parent=11 // pred_region
          _
        $region36: #{timexer_forward.1} parent=11 // pred_fallthru
          _
        // Predicated region
        $region37: #{timexer_forward.1} parent=11 // pred_check
          %p780 = pneg %p190
        $region38: #{timexer_forward.1} parent=11 // pred_check_branch
          %782 = sbr.rel (%p780) target = $region40
        $region39: #{timexer_forward.1} parent=11 // pred_region
          %s784 = ssub.s32 32, 32
          %785 = vsyncadd [#allocation11], %s784
          %s786 = sshll.u32 [#allocation10], 4
          %s787 = int_to_ptr.vmem [resolvable:$true] %s786
          %792 = dma.hbm_to_vmem [thread:$0]  %s6, 32, %s787, [#allocation11], 16, 16, 1
        $region40: #{timexer_forward.1} parent=11 // pred_fallthru
          _
        // Predicated region
        $region41: #{timexer_forward.1} parent=11 // pred_check
          %p793 = pneg %p211
        $region42: #{timexer_forward.1} parent=11 // pred_check_branch
          %795 = sbr.rel (%p793) target = $region44
        $region43: #{timexer_forward.1} parent=11 // pred_region
          _
        $region44: #{timexer_forward.1} parent=11 // pred_fallthru
          _
        // Predicated region
        $region45: #{timexer_forward.1} parent=11 // pred_check
          %p796 = pneg %p232
        $region46: #{timexer_forward.1} parent=11 // pred_check_branch
          %798 = sbr.rel (%p796) target = $region48
        $region47: #{timexer_forward.1} parent=11 // pred_region
          %s800 = ssub.s32 16, 16
          %801 = vsyncadd [#allocation11], %s800
          %s803 = sshll.u32 [#allocation12], 4
          %s804 = int_to_ptr.vmem [resolvable:$true] %s803
          %806 = dma.hbm_to_vmem [thread:$0]  %s8, 16, %s804, [#allocation11]
        $region48: #{timexer_forward.1} parent=11 // pred_fallthru
          _
      $region12: #{timexer_forward.1} parent=5 // pred_fallthru
        _
      %p807 = scmp.lt.s32.totalorder %s43, 2
      // Predicated region
      $region49: #{timexer_forward.1} parent=5 // pred_check
        %p808 = pneg %p807
      $region50: #{timexer_forward.1} parent=5 // pred_check_branch
        %810 = sbr.rel (%p808) target = $region52
      $region51: #{timexer_forward.1} parent=5 // pred_region
        // Predicated region
        $region53: #{timexer_forward.1} parent=51 // pred_check
          %p811 = pneg %p252
        $region54: #{timexer_forward.1} parent=51 // pred_check_branch
          %813 = sbr.rel (%p811) target = $region56
        $region55: #{timexer_forward.1} parent=51 // pred_region
          %p814 = scmp.lt.s32.totalorder %s43, 1
          %s815 = scalar_select %p814, %s43, 1
          %s816 = smul.addr %s815, 4
          %s817 = smul.addr %s816, 4
          %s818 = scalar_lea.vmem %s9, %s817
        $region56: #{timexer_forward.1} parent=51 // pred_fallthru
          _
        // Predicated region
        $region57: #{timexer_forward.1} parent=51 // pred_check
          %p819 = pneg %p278
        $region58: #{timexer_forward.1} parent=51 // pred_check_branch
          %821 = sbr.rel (%p819) target = $region60
        $region59: #{timexer_forward.1} parent=51 // pred_region
          %p822 = scmp.lt.s32.totalorder %s43, 1
          %s823 = scalar_select %p822, %s43, 1
          %s824 = scalar_lea.vmem %s10, %s823
        $region60: #{timexer_forward.1} parent=51 // pred_fallthru
          _
        // Predicated region
        $region61: #{timexer_forward.1} parent=51 // pred_check
          %p825 = pneg %p304
        $region62: #{timexer_forward.1} parent=51 // pred_check_branch
          %827 = sbr.rel (%p825) target = $region64
        $region63: #{timexer_forward.1} parent=51 // pred_region
          %p828 = scmp.lt.s32.totalorder %s43, 1
          %s829 = scalar_select %p828, %s43, 1
          %s830 = smul.addr %s829, 4
          %s831 = smul.addr %s830, 4
          %s832 = scalar_lea.vmem %s11, %s831
        $region64: #{timexer_forward.1} parent=51 // pred_fallthru
          _
        // Predicated region
        $region65: #{timexer_forward.1} parent=51 // pred_check
          %p833 = pneg %p330
        $region66: #{timexer_forward.1} parent=51 // pred_check_branch
          %835 = sbr.rel (%p833) target = $region68
        $region67: #{timexer_forward.1} parent=51 // pred_region
          %p836 = scmp.lt.s32.totalorder %s43, 1
          %s837 = scalar_select %p836, %s43, 1
          %s838 = scalar_lea.vmem %s12, %s837
        $region68: #{timexer_forward.1} parent=51 // pred_fallthru
          _
        // Predicated region
        $region69: #{timexer_forward.1} parent=51 // pred_check
          %p839 = pneg %p356
        $region70: #{timexer_forward.1} parent=51 // pred_check_branch
          %841 = sbr.rel (%p839) target = $region72
        $region71: #{timexer_forward.1} parent=51 // pred_region
          %p842 = scmp.lt.s32.totalorder %s43, 1
          %s843 = scalar_select %p842, %s43, 1
          %s844 = smul.addr %s843, 4
          %s845 = smul.addr %s844, 4
          %s846 = scalar_lea.vmem %s13, %s845
        $region72: #{timexer_forward.1} parent=51 // pred_fallthru
          _
        // Predicated region
        $region73: #{timexer_forward.1} parent=51 // pred_check
          %p847 = pneg %p382
        $region74: #{timexer_forward.1} parent=51 // pred_check_branch
          %849 = sbr.rel (%p847) target = $region76
        $region75: #{timexer_forward.1} parent=51 // pred_region
          %p850 = scmp.lt.s32.totalorder %s43, 1
          %s851 = scalar_select %p850, %s43, 1
          %s852 = scalar_lea.vmem %s14, %s851
        $region76: #{timexer_forward.1} parent=51 // pred_fallthru
          _
        // Predicated region
        $region77: #{timexer_forward.1} parent=51 // pred_check
          %p853 = pneg %p408
        $region78: #{timexer_forward.1} parent=51 // pred_check_branch
          %855 = sbr.rel (%p853) target = $region80
        $region79: #{timexer_forward.1} parent=51 // pred_region
          %p856 = scmp.lt.s32.totalorder %s43, 1
          %s857 = scalar_select %p856, %s43, 1
          %s858 = smul.addr %s857, 4
          %s859 = smul.addr %s858, 4
          %s860 = scalar_lea.vmem %s15, %s859
        $region80: #{timexer_forward.1} parent=51 // pred_fallthru
          _
        // Predicated region
        $region81: #{timexer_forward.1} parent=51 // pred_check
          %p861 = pneg %p434
        $region82: #{timexer_forward.1} parent=51 // pred_check_branch
          %863 = sbr.rel (%p861) target = $region84
        $region83: #{timexer_forward.1} parent=51 // pred_region
          %p864 = scmp.lt.s32.totalorder %s43, 1
          %s865 = scalar_select %p864, %s43, 1
          %s866 = scalar_lea.vmem %s16, %s865
        $region84: #{timexer_forward.1} parent=51 // pred_fallthru
          _
        // Predicated region
        $region85: #{timexer_forward.1} parent=51 // pred_check
          %p867 = pneg %p460
        $region86: #{timexer_forward.1} parent=51 // pred_check_branch
          %869 = sbr.rel (%p867) target = $region88
        $region87: #{timexer_forward.1} parent=51 // pred_region
          %s870 = sand.u32 %s43, 1
          %s871 = scalar_lea.sflag [#allocation14], %s870
          %s872 = sand.u32 %s450, 1
          %s873 = smul.addr %s872, 16
          %s874 = scalar_lea.vmem [#allocation13], %s873
          %s876 = ssub.s32 256, 256
          %877 = vsyncadd %s871, %s876
          %s878 = smul.addr %s43, 4
          %s879 = smul.addr %s878, 64
          %s880 = scalar_lea.hbm %s17, %s879
          %s881 = sshll.u32 %s874, 4
          %s882 = int_to_ptr.vmem [resolvable:$true] %s881
          %887 = dma.hbm_to_vmem [thread:$0]  %s880, 256, %s882, %s871, 64, 64, 4
        $region88: #{timexer_forward.1} parent=51 // pred_fallthru
          _
        // Predicated region
        $region89: #{timexer_forward.1} parent=51 // pred_check
          %p888 = pneg %p486
        $region90: #{timexer_forward.1} parent=51 // pred_check_branch
          %890 = sbr.rel (%p888) target = $region92
        $region91: #{timexer_forward.1} parent=51 // pred_region
          %p891 = scmp.lt.s32.totalorder %s43, 1
          %s892 = scalar_select %p891, %s43, 1
          %s893 = scalar_lea.vmem %s18, %s892
        $region92: #{timexer_forward.1} parent=51 // pred_fallthru
          _
        // Predicated region
        $region93: #{timexer_forward.1} parent=51 // pred_check
          %p894 = pneg %p512
        $region94: #{timexer_forward.1} parent=51 // pred_check_branch
          %896 = sbr.rel (%p894) target = $region96
        $region95: #{timexer_forward.1} parent=51 // pred_region
          %s897 = sand.u32 %s43, 1
          %s898 = scalar_lea.sflag [#allocation14], %s897
          %s899 = sand.u32 %s502, 1
          %s900 = scalar_lea.vmem [#allocation15], %s899
          %s902 = ssub.s32 16, 16
          %903 = vsyncadd %s898, %s902
          %s904 = smul.addr %s43, 16
          %s905 = scalar_lea.hbm %s19, %s904
          %s907 = sshll.u32 %s900, 4
          %s908 = int_to_ptr.vmem [resolvable:$true] %s907
          %910 = dma.hbm_to_vmem [thread:$0]  %s905, 16, %s908, %s898
        $region96: #{timexer_forward.1} parent=51 // pred_fallthru
          _
        // Predicated region
        $region97: #{timexer_forward.1} parent=51 // pred_check
          %p911 = pneg %p538
        $region98: #{timexer_forward.1} parent=51 // pred_check_branch
          %913 = sbr.rel (%p911) target = $region100
        $region99: #{timexer_forward.1} parent=51 // pred_region
          %s914 = sand.u32 %s43, 1
          %s915 = scalar_lea.sflag [#allocation17], %s914
          %s916 = sand.u32 %s528, 1
          %s917 = scalar_lea.vmem [#allocation16], %s916
          %s919 = ssub.s32 16, 16
          %920 = vsyncadd %s915, %s919
          %s921 = smul.addr %s43, 16
          %s922 = scalar_lea.hbm %s20, %s921
          %s924 = sshll.u32 %s917, 4
          %s925 = int_to_ptr.vmem [resolvable:$true] %s924
          %927 = dma.hbm_to_vmem [thread:$0]  %s922, 16, %s925, %s915
        $region100: #{timexer_forward.1} parent=51 // pred_fallthru
          _
        // Predicated region
        $region101: #{timexer_forward.1} parent=51 // pred_check
          %p928 = pneg %p564
        $region102: #{timexer_forward.1} parent=51 // pred_check_branch
          %930 = sbr.rel (%p928) target = $region104
        $region103: #{timexer_forward.1} parent=51 // pred_region
          %p931 = scmp.lt.s32.totalorder %s43, 1
          %s932 = scalar_select %p931, %s43, 1
          %s933 = scalar_lea.vmem %s21, %s932
        $region104: #{timexer_forward.1} parent=51 // pred_fallthru
          _
        // Predicated region
        $region105: #{timexer_forward.1} parent=51 // pred_check
          %p934 = pneg %p590
        $region106: #{timexer_forward.1} parent=51 // pred_check_branch
          %936 = sbr.rel (%p934) target = $region108
        $region107: #{timexer_forward.1} parent=51 // pred_region
          %p937 = scmp.lt.s32.totalorder %s43, 1
          %s938 = scalar_select %p937, %s43, 1
          %s939 = scalar_lea.vmem %s22, %s938
        $region108: #{timexer_forward.1} parent=51 // pred_fallthru
          _
        // Predicated region
        $region109: #{timexer_forward.1} parent=51 // pred_check
          %p940 = pneg %p616
        $region110: #{timexer_forward.1} parent=51 // pred_check_branch
          %942 = sbr.rel (%p940) target = $region112
        $region111: #{timexer_forward.1} parent=51 // pred_region
          %p943 = scmp.lt.s32.totalorder %s43, 1
          %s944 = scalar_select %p943, %s43, 1
          %s945 = smul.addr %s944, 4
          %s946 = smul.addr %s945, 4
          %s947 = scalar_lea.vmem %s23, %s946
        $region112: #{timexer_forward.1} parent=51 // pred_fallthru
          _
        // Predicated region
        $region113: #{timexer_forward.1} parent=51 // pred_check
          %p948 = pneg %p642
        $region114: #{timexer_forward.1} parent=51 // pred_check_branch
          %950 = sbr.rel (%p948) target = $region116
        $region115: #{timexer_forward.1} parent=51 // pred_region
          %p951 = scmp.lt.s32.totalorder %s43, 1
          %s952 = scalar_select %p951, %s43, 1
          %s953 = scalar_lea.vmem %s24, %s952
        $region116: #{timexer_forward.1} parent=51 // pred_fallthru
          _
        // Predicated region
        $region117: #{timexer_forward.1} parent=51 // pred_check
          %p954 = pneg %p668
        $region118: #{timexer_forward.1} parent=51 // pred_check_branch
          %956 = sbr.rel (%p954) target = $region120
        $region119: #{timexer_forward.1} parent=51 // pred_region
          %s957 = sand.u32 %s43, 1
          %s958 = scalar_lea.sflag [#allocation17], %s957
          %s959 = sand.u32 %s658, 1
          %s960 = smul.addr %s959, 16
          %s961 = scalar_lea.vmem [#allocation18], %s960
          %s963 = ssub.s32 256, 256
          %964 = vsyncadd %s958, %s963
          %s965 = smul.addr %s43, 4
          %s966 = smul.addr %s965, 64
          %s967 = scalar_lea.hbm %s25, %s966
          %s968 = sshll.u32 %s961, 4
          %s969 = int_to_ptr.vmem [resolvable:$true] %s968
          %974 = dma.hbm_to_vmem [thread:$0]  %s967, 256, %s969, %s958, 64, 64, 4
        $region120: #{timexer_forward.1} parent=51 // pred_fallthru
          _
        // Predicated region
        $region121: #{timexer_forward.1} parent=51 // pred_check
          %p975 = pneg %p694
        $region122: #{timexer_forward.1} parent=51 // pred_check_branch
          %977 = sbr.rel (%p975) target = $region124
        $region123: #{timexer_forward.1} parent=51 // pred_region
          %p978 = scmp.lt.s32.totalorder %s43, 1
          %s979 = scalar_select %p978, %s43, 1
          %s980 = scalar_lea.vmem %s26, %s979
        $region124: #{timexer_forward.1} parent=51 // pred_fallthru
          _
      $region52: #{timexer_forward.1} parent=5 // pred_fallthru
        _
      %p981 = scmp.le.s32.totalorder 1, %s43
      %p982 = scmp.lt.s32.totalorder %s43, 3
      %p983 = pnand %p981, %p982
      %p984 = pneg %p983
      // Predicated region
      $region125: #{timexer_forward.1} parent=5 // pred_check
        _
      $region126: #{timexer_forward.1} parent=5 // pred_check_branch
        %986 = sbr.rel (%p983) target = $region128
      $region127: #{timexer_forward.1} parent=5 // pred_region
        %s987 = ssub.s32 %s43, 1
        // Predicated region
        $region129: #{timexer_forward.1} parent=127 // pred_check
          %p988 = pneg %p106
        $region130: #{timexer_forward.1} parent=127 // pred_check_branch
          %990 = sbr.rel (%p988) target = $region132
        $region131: #{timexer_forward.1} parent=127 // pred_region
          %991 = dma.done [#allocation5], 16
        $region132: #{timexer_forward.1} parent=127 // pred_fallthru
          _
        // Predicated region
        $region133: #{timexer_forward.1} parent=127 // pred_check
          %p992 = pneg %p127
        $region134: #{timexer_forward.1} parent=127 // pred_check_branch
          %994 = sbr.rel (%p992) target = $region136
        $region135: #{timexer_forward.1} parent=127 // pred_region
          %995 = dma.done [#allocation8], 128
        $region136: #{timexer_forward.1} parent=127 // pred_fallthru
          _
        // Predicated region
        $region137: #{timexer_forward.1} parent=127 // pred_check
          %p996 = pneg %p148
        $region138: #{timexer_forward.1} parent=127 // pred_check_branch
          %998 = sbr.rel (%p996) target = $region140
        $region139: #{timexer_forward.1} parent=127 // pred_region
          %999 = dma.done [#allocation8], 16
        $region140: #{timexer_forward.1} parent=127 // pred_fallthru
          _
        // Predicated region
        $region141: #{timexer_forward.1} parent=127 // pred_check
          %p1000 = pneg %p190
        $region142: #{timexer_forward.1} parent=127 // pred_check_branch
          %1002 = sbr.rel (%p1000) target = $region144
        $region143: #{timexer_forward.1} parent=127 // pred_region
          %1003 = dma.done [#allocation11], 32
        $region144: #{timexer_forward.1} parent=127 // pred_fallthru
          _
        // Predicated region
        $region145: #{timexer_forward.1} parent=127 // pred_check
          %p1004 = pneg %p232
        $region146: #{timexer_forward.1} parent=127 // pred_check_branch
          %1006 = sbr.rel (%p1004) target = $region148
        $region147: #{timexer_forward.1} parent=127 // pred_region
          %1007 = dma.done [#allocation11], 16
        $region148: #{timexer_forward.1} parent=127 // pred_fallthru
          _
        %s1008 = sand.u32 %s48, 1
        %s1009 = scalar_lea.sflag [#allocation14], %s1008
        %s1010 = sand.u32 %s453, 1
        %s1011 = smul.addr %s1010, 16
        %s1012 = scalar_lea.vmem [#allocation13], %s1011
        // Predicated region
        $region149: #{timexer_forward.1} parent=127 // pred_check
          %p1013 = pneg %p466
        $region150: #{timexer_forward.1} parent=127 // pred_check_branch
          %1015 = sbr.rel (%p1013) target = $region152
        $region151: #{timexer_forward.1} parent=127 // pred_region
          %1016 = dma.done %s1009, 256
        $region152: #{timexer_forward.1} parent=127 // pred_fallthru
          _
        %s1017 = sand.u32 %s48, 1
        %s1018 = scalar_lea.sflag [#allocation14], %s1017
        %s1019 = sand.u32 %s505, 1
        %s1020 = scalar_lea.vmem [#allocation15], %s1019
        // Predicated region
        $region153: #{timexer_forward.1} parent=127 // pred_check
          %p1021 = pneg %p518
        $region154: #{timexer_forward.1} parent=127 // pred_check_branch
          %1023 = sbr.rel (%p1021) target = $region156
        $region155: #{timexer_forward.1} parent=127 // pred_region
          %1024 = dma.done %s1018, 16
        $region156: #{timexer_forward.1} parent=127 // pred_fallthru
          _
        %s1025 = sand.u32 %s48, 1
        %s1026 = scalar_lea.sflag [#allocation17], %s1025
        %s1027 = sand.u32 %s531, 1
        %s1028 = scalar_lea.vmem [#allocation16], %s1027
        // Predicated region
        $region157: #{timexer_forward.1} parent=127 // pred_check
          %p1029 = pneg %p544
        $region158: #{timexer_forward.1} parent=127 // pred_check_branch
          %1031 = sbr.rel (%p1029) target = $region160
        $region159: #{timexer_forward.1} parent=127 // pred_region
          %1032 = dma.done %s1026, 16
        $region160: #{timexer_forward.1} parent=127 // pred_fallthru
          _
        %s1033 = sand.u32 %s48, 1
        %s1034 = scalar_lea.sflag [#allocation17], %s1033
        %s1035 = sand.u32 %s661, 1
        %s1036 = smul.addr %s1035, 16
        %s1037 = scalar_lea.vmem [#allocation18], %s1036
        // Predicated region
        $region161: #{timexer_forward.1} parent=127 // pred_check
          %p1038 = pneg %p674
        $region162: #{timexer_forward.1} parent=127 // pred_check_branch
          %1040 = sbr.rel (%p1038) target = $region164
        $region163: #{timexer_forward.1} parent=127 // pred_region
          %1041 = dma.done %s1034, 256
        $region164: #{timexer_forward.1} parent=127 // pred_fallthru
          _
        %p1042 = pneg %p64
        %p1043 = pneg %p61
        %p1044 = pneg %p85
        %p1045 = pneg %p82
        %p1046 = pneg %p106
        %p1047 = pneg %p103
        %p1048 = pneg %p127
        %p1049 = pneg %p124
        %p1050 = pneg %p148
        %p1051 = pneg %p145
        %p1052 = pneg %p169
        %p1053 = pneg %p166
        %p1054 = pneg %p190
        %p1055 = pneg %p187
        %p1056 = pneg %p211
        %p1057 = pneg %p208
        %p1058 = pneg %p232
        %p1059 = pneg %p229
        %p1060 = scmp.lt.s32.totalorder %s48, 1
        %s1061 = scalar_select %p1060, %s48, 1
        %s1062 = smul.addr %s1061, 4
        %s1063 = smul.addr %s1062, 4
        %s1064 = scalar_lea.vmem %s9, %s1063
        %p1065 = pneg %p258
        %p1066 = pneg %p255
        %p1067 = scmp.lt.s32.totalorder %s48, 1
        %s1068 = scalar_select %p1067, %s48, 1
        %s1069 = scalar_lea.vmem %s10, %s1068
        %p1070 = pneg %p284
        %p1071 = pneg %p281
        %p1072 = scmp.lt.s32.totalorder %s48, 1
        %s1073 = scalar_select %p1072, %s48, 1
        %s1074 = smul.addr %s1073, 4
        %s1075 = smul.addr %s1074, 4
        %s1076 = scalar_lea.vmem %s11, %s1075
        %p1077 = pneg %p310
        %p1078 = pneg %p307
        %p1079 = scmp.lt.s32.totalorder %s48, 1
        %s1080 = scalar_select %p1079, %s48, 1
        %s1081 = scalar_lea.vmem %s12, %s1080
        %p1082 = pneg %p336
        %p1083 = pneg %p333
        %p1084 = scmp.lt.s32.totalorder %s48, 1
        %s1085 = scalar_select %p1084, %s48, 1
        %s1086 = smul.addr %s1085, 4
        %s1087 = smul.addr %s1086, 4
        %s1088 = scalar_lea.vmem %s13, %s1087
        %p1089 = pneg %p362
        %p1090 = pneg %p359
        %p1091 = scmp.lt.s32.totalorder %s48, 1
        %s1092 = scalar_select %p1091, %s48, 1
        %s1093 = scalar_lea.vmem %s14, %s1092
        %p1094 = pneg %p388
        %p1095 = pneg %p385
        %p1096 = scmp.lt.s32.totalorder %s48, 1
        %s1097 = scalar_select %p1096, %s48, 1
        %s1098 = smul.addr %s1097, 4
        %s1099 = smul.addr %s1098, 4
        %s1100 = scalar_lea.vmem %s15, %s1099
        %p1101 = pneg %p414
        %p1102 = pneg %p411
        %p1103 = scmp.lt.s32.totalorder %s48, 1
        %s1104 = scalar_select %p1103, %s48, 1
        %s1105 = scalar_lea.vmem %s16, %s1104
        %p1106 = pneg %p440
        %p1107 = pneg %p437
        %s1108 = sand.u32 %s48, 1
        %s1109 = scalar_lea.sflag [#allocation14], %s1108
        %s1110 = sand.u32 %s453, 1
        %s1111 = smul.addr %s1110, 16
        %s1112 = scalar_lea.vmem [#allocation13], %s1111
        %p1113 = pneg %p466
        %p1114 = pneg %p463
        %p1115 = scmp.lt.s32.totalorder %s48, 1
        %s1116 = scalar_select %p1115, %s48, 1
        %s1117 = scalar_lea.vmem %s18, %s1116
        %p1118 = pneg %p492
        %p1119 = pneg %p489
        %s1120 = sand.u32 %s48, 1
        %s1121 = scalar_lea.sflag [#allocation14], %s1120
        %s1122 = sand.u32 %s505, 1
        %s1123 = scalar_lea.vmem [#allocation15], %s1122
        %p1124 = pneg %p518
        %p1125 = pneg %p515
        %s1126 = sand.u32 %s48, 1
        %s1127 = scalar_lea.sflag [#allocation17], %s1126
        %s1128 = sand.u32 %s531, 1
        %s1129 = scalar_lea.vmem [#allocation16], %s1128
        %p1130 = pneg %p544
        %p1131 = pneg %p541
        %p1132 = scmp.lt.s32.totalorder %s48, 1
        %s1133 = scalar_select %p1132, %s48, 1
        %s1134 = scalar_lea.vmem %s21, %s1133
        %p1135 = pneg %p570
        %p1136 = pneg %p567
        %p1137 = scmp.lt.s32.totalorder %s48, 1
        %s1138 = scalar_select %p1137, %s48, 1
        %s1139 = scalar_lea.vmem %s22, %s1138
        %p1140 = pneg %p596
        %p1141 = pneg %p593
        %p1142 = scmp.lt.s32.totalorder %s48, 1
        %s1143 = scalar_select %p1142, %s48, 1
        %s1144 = smul.addr %s1143, 4
        %s1145 = smul.addr %s1144, 4
        %s1146 = scalar_lea.vmem %s23, %s1145
        %p1147 = pneg %p622
        %p1148 = pneg %p619
        %p1149 = scmp.lt.s32.totalorder %s48, 1
        %s1150 = scalar_select %p1149, %s48, 1
        %s1151 = scalar_lea.vmem %s24, %s1150
        %p1152 = pneg %p648
        %p1153 = pneg %p645
        %s1154 = sand.u32 %s48, 1
        %s1155 = scalar_lea.sflag [#allocation17], %s1154
        %s1156 = sand.u32 %s661, 1
        %s1157 = smul.addr %s1156, 16
        %s1158 = scalar_lea.vmem [#allocation18], %s1157
        %p1159 = pneg %p674
        %p1160 = pneg %p671
        %p1161 = scmp.lt.s32.totalorder %s48, 1
        %s1162 = scalar_select %p1161, %s48, 1
        %s1163 = scalar_lea.vmem %s26, %s1162
        %p1164 = pneg %p700
        %p1165 = pneg %p697
        %p1166 = pneg %p721
        %p1167 = pneg %p718
        %p1168 = scmp.lt.s32.totalorder %s48, 1
        %s1169 = scalar_select %p1168, %s48, 1
        %s1170 = smul.addr %s1169, 4
        %s1171 = smul.addr %s1170, 4
        %s1172 = scalar_lea.vmem %s9, %s1171
        %p1173 = scmp.lt.s32.totalorder %s48, 1
        %s1174 = scalar_select %p1173, %s48, 1
        %s1175 = scalar_lea.vmem %s10, %s1174
        %p1176 = scmp.lt.s32.totalorder %s48, 1
        %s1177 = scalar_select %p1176, %s48, 1
        %s1178 = smul.addr %s1177, 4
        %s1179 = smul.addr %s1178, 4
        %s1180 = scalar_lea.vmem %s11, %s1179
        %p1181 = scmp.lt.s32.totalorder %s48, 1
        %s1182 = scalar_select %p1181, %s48, 1
        %s1183 = scalar_lea.vmem %s12, %s1182
        %p1184 = scmp.lt.s32.totalorder %s48, 1
        %s1185 = scalar_select %p1184, %s48, 1
        %s1186 = smul.addr %s1185, 4
        %s1187 = smul.addr %s1186, 4
        %s1188 = scalar_lea.vmem %s13, %s1187
        %p1189 = scmp.lt.s32.totalorder %s48, 1
        %s1190 = scalar_select %p1189, %s48, 1
        %s1191 = scalar_lea.vmem %s14, %s1190
        %p1192 = scmp.lt.s32.totalorder %s48, 1
        %s1193 = scalar_select %p1192, %s48, 1
        %s1194 = smul.addr %s1193, 4
        %s1195 = smul.addr %s1194, 4
        %s1196 = scalar_lea.vmem %s15, %s1195
        %p1197 = scmp.lt.s32.totalorder %s48, 1
        %s1198 = scalar_select %p1197, %s48, 1
        %s1199 = scalar_lea.vmem %s16, %s1198
        %p1200 = scmp.lt.s32.totalorder %s48, 1
        %s1201 = scalar_select %p1200, %s48, 1
        %s1202 = scalar_lea.vmem %s18, %s1201
        %p1203 = scmp.lt.s32.totalorder %s48, 1
        %s1204 = scalar_select %p1203, %s48, 1
        %s1205 = scalar_lea.vmem %s21, %s1204
        %p1206 = scmp.lt.s32.totalorder %s48, 1
        %s1207 = scalar_select %p1206, %s48, 1
        %s1208 = scalar_lea.vmem %s22, %s1207
        %p1209 = scmp.lt.s32.totalorder %s48, 1
        %s1210 = scalar_select %p1209, %s48, 1
        %s1211 = smul.addr %s1210, 4
        %s1212 = smul.addr %s1211, 4
        %s1213 = scalar_lea.vmem %s23, %s1212
        %p1214 = scmp.lt.s32.totalorder %s48, 1
        %s1215 = scalar_select %p1214, %s48, 1
        %s1216 = scalar_lea.vmem %s24, %s1215
        %p1217 = scmp.lt.s32.totalorder %s48, 1
        %s1218 = scalar_select %p1217, %s48, 1
        %s1219 = scalar_lea.vmem %s26, %s1218
        %p1221 = scmp.eq.s32.totalorder %s48, 0
        // Predicated region
        $region165: #{timexer_forward.1} parent=127 // pred_check
          %p1222 = pneg %p1221
        $region166: #{timexer_forward.1} parent=127 // pred_check_branch
          %1224 = sbr.rel (%p1222) target = $region168
        $region167: #{timexer_forward.1} parent=127 // pred_region
          %v1225 = vld [vmem:[%s0] sm:$0xff]
          %v1226 = vpack.c.bf16 %v1225, %v1225
          %v1227 = vld [vmem:[#allocation7] sm:$0xf]
          %v1228 = vld [vmem:[#allocation7 + $0x4] sm:$0x3]
          %v1229 = vld [vmem:[#allocation9] sm:$0x1]
          %v1231 = vlaneseq
          %v1232 = vshrl.u32 %v1231, 7
          %v1233 = vsub.s32 0, %v1232
          %v1234 = vrot.slane %v1229, %v1233
          %v1238 = vunpack.c.l.b16 %v1227
          %v1239 = vunpack.c.l.b16 %v1228
          %v1240 = vpack.c.b16 %v1239, %v1238
          %vm1241 = vcmask 97280
          %v1243 = vsel %vm1241, %v1226, 0
          %vm1245 = vcmask 1045504
          %v1247 = vsel %vm1245, %v1240, 0
          %1249 = vmatprep.subr.bf16.mxu0 0
          %1250 = vmatpush1.bf16.msra.mxu0 %v1247
          %1251 = vmatprep.subr.bf16.mxu0 0
          %1252 = vmatpush1.bf16.msra.mxu0 0
          %1253 = vmatprep.subr.bf16.mxu0 0
          %1254 = vmatpush1.bf16.msra.mxu0 0
          %1255 = vmatprep.subr.bf16.mxu0 0
          %1256 = vmatpush1.bf16.msra.mxu0 0
          %1257 = vmatprep.subr.bf16.mxu0 0
          %1258 = vmatpush1.bf16.msra.mxu0 0
          %1259 = vmatprep.subr.bf16.mxu0 0
          %1260 = vmatpush1.bf16.msra.mxu0 0
          %1261 = vmatprep.subr.bf16.mxu0 0
          %1262 = vmatpush1.bf16.msra.mxu0 0
          %1263 = vmatprep.subr.bf16.mxu0 0
          %1264 = vmatpush1.bf16.msra.mxu0 0
          %1265 = vmatprep.subr.bf16.mxu0 0
          %1266 = vmatpush1.bf16.msra.mxu0 0
          %1267 = vmatprep.subr.bf16.mxu0 0
          %1268 = vmatpush1.bf16.msra.mxu0 0
          %1269 = vmatprep.subr.bf16.mxu0 0
          %1270 = vmatpush1.bf16.msra.mxu0 0
          %1271 = vmatprep.subr.bf16.mxu0 0
          %1272 = vmatpush1.bf16.msra.mxu0 0
          %1273 = vmatprep.subr.bf16.mxu0 0
          %1274 = vmatpush1.bf16.msra.mxu0 0
          %1275 = vmatprep.subr.bf16.mxu0 0
          %1276 = vmatpush1.bf16.msra.mxu0 0
          %1277 = vmatprep.subr.bf16.mxu0 0
          %1278 = vmatpush1.bf16.msra.mxu0 0
          %1279 = vmatprep.subr.bf16.mxu0 0
          %1280 = vmatpush1.bf16.msra.mxu0 0
          %1281 = vmatprep.mubr.bf16.mxu0 0
          %1282 = vmatmul.mubr.bf16.gmra.mrb[0].mxu0 %v1243
          %v1283 = vpop.f32.mrb[0].mxu0
          %v1284 = vadd.f32 %v1234, %v1283
          %v1285 = vpop.f32.mrb[0].mxu0
          %v1286 = vpop.f32.mrb[0].mxu0
          %v1287 = vpop.f32.mrb[0].mxu0
          %1288 = vdwg.mxu0
          %v1290 = vcombine.high %v1284, %v1284
          %vm1292 = vcmask 257024
          %1293 = vst.msk [vmem:[#allocation2] sm:$0xf] %vm1292, %v1284
          %1294 = vst.msk [vmem:[#allocation2 + $0x8] sm:$0xf] %vm1292, %v1290
          %v1295 = vld [vmem:[#allocation4] sm:$0x1]
          %vm1296 = vcmask 253952
          %1297 = vst.msk [vmem:[#allocation2 + $0x4] sm:$0x1] %vm1296, %v1295
          %1298 = vst.msk [vmem:[#allocation2 + $0xc] sm:$0x1] %vm1296, %v1295
          %v1299 = vld [vmem:[%s1] sm:$0x3]
          %v1300 = vld [vmem:[%s1 + $0x2] sm:$0x3]
          %v1301 = vld [vmem:[%s5] sm:$0xf]
          %v1302 = vld [vmem:[%s5 + $0x4] sm:$0x3]
          %v1303 = vld [vmem:[%s5 + $0x8] sm:$0xf]
          %v1304 = vld [vmem:[%s5 + $0xc] sm:$0x3]
          %v1305 = vld [vmem:[#allocation10] sm:$0x1]
          %v1306 = vld [vmem:[#allocation10 + $0x1] sm:$0x1]
          %v1307 = vpack.c.bf16 %v1299, %v1299
          %v1308 = vpack.c.bf16 %v1300, %v1300
          %v1310 = vlaneseq
          %v1311 = vshrl.u32 %v1310, 7
          %v1312 = vsub.s32 0, %v1311
          %v1313 = vrot.slane %v1305, %v1312
          %v1317 = vunpack.c.l.b16 %v1307
          %v1318 = vunpack.c.l.b16 %v1308
          %v1319 = vrot.slane %v1318, 7
          %vm1320 = vcmask 1041409
          %v1321 = vsel %vm1320, %v1319, %v1317
          %v1322 = vpack.c.b16 %v1321, %v1321
          %v1325 = vunpack.c.l.b16 %v1301
          %v1326 = vunpack.c.l.b16 %v1302
          %v1327 = vpack.c.b16 %v1326, %v1325
          %v1329 = vsel %vm1241, %v1322, 0
          %v1332 = vsel %vm1245, %v1327, 0
          %1334 = vmatprep.subr.bf16.mxu0 0
          %1335 = vmatpush1.bf16.msra.mxu0 %v1332
          %1336 = vmatprep.subr.bf16.mxu0 0
          %1337 = vmatpush1.bf16.msra.mxu0 0
          %1338 = vmatprep.subr.bf16.mxu0 0
          %1339 = vmatpush1.bf16.msra.mxu0 0
          %1340 = vmatprep.subr.bf16.mxu0 0
          %1341 = vmatpush1.bf16.msra.mxu0 0
          %1342 = vmatprep.subr.bf16.mxu0 0
          %1343 = vmatpush1.bf16.msra.mxu0 0
          %1344 = vmatprep.subr.bf16.mxu0 0
          %1345 = vmatpush1.bf16.msra.mxu0 0
          %1346 = vmatprep.subr.bf16.mxu0 0
          %1347 = vmatpush1.bf16.msra.mxu0 0
          %1348 = vmatprep.subr.bf16.mxu0 0
          %1349 = vmatpush1.bf16.msra.mxu0 0
          %1350 = vmatprep.subr.bf16.mxu0 0
          %1351 = vmatpush1.bf16.msra.mxu0 0
          %1352 = vmatprep.subr.bf16.mxu0 0
          %1353 = vmatpush1.bf16.msra.mxu0 0
          %1354 = vmatprep.subr.bf16.mxu0 0
          %1355 = vmatpush1.bf16.msra.mxu0 0
          %1356 = vmatprep.subr.bf16.mxu0 0
          %1357 = vmatpush1.bf16.msra.mxu0 0
          %1358 = vmatprep.subr.bf16.mxu0 0
          %1359 = vmatpush1.bf16.msra.mxu0 0
          %1360 = vmatprep.subr.bf16.mxu0 0
          %1361 = vmatpush1.bf16.msra.mxu0 0
          %1362 = vmatprep.subr.bf16.mxu0 0
          %1363 = vmatpush1.bf16.msra.mxu0 0
          %1364 = vmatprep.subr.bf16.mxu0 0
          %1365 = vmatpush1.bf16.msra.mxu0 0
          %1366 = vmatprep.mubr.bf16.mxu0 0
          %1367 = vmatmul.mubr.bf16.gmra.mrb[0].mxu0 %v1329
          %v1368 = vpop.f32.mrb[0].mxu0
          %v1369 = vadd.f32 %v1313, %v1368
          %v1370 = vpop.f32.mrb[0].mxu0
          %v1371 = vpop.f32.mrb[0].mxu0
          %v1372 = vpop.f32.mrb[0].mxu0
          %1373 = vdwg.mxu0
          %v1376 = vunpack.c.l.s4 1966171168
          %v1377 = vunpack.c.0.s8 %v1376
          %v1378 = vlaneseq
          %v1379 = vshrl.u32 %v1378, 7
          %v1380 = vsub.s32 %v1377, %v1379
          %v1381 = vrot.slane %v1369, %v1380
          %v1382 = vcombine.high %v1381, %v1381
          %v1384 = vunpack.c.l.s4 1966171168
          %v1385 = vunpack.c.0.s8 %v1384
          %v1386 = vlaneseq
          %v1387 = vshrl.u32 %v1386, 7
          %v1388 = vsub.s32 %v1385, %v1387
          %v1389 = vrot.slane %v1381, %v1388
          %v1391 = vunpack.c.l.s4 1966171168
          %v1392 = vunpack.c.0.s8 %v1391
          %v1393 = vlaneseq
          %v1394 = vshrl.u32 %v1393, 7
          %v1395 = vsub.s32 %v1392, %v1394
          %v1396 = vrot.slane %v1382, %v1395
          %1399 = vst.msk [vmem:[#allocation3] sm:$0x1] %vm1296, %v1389
          %1400 = vst.msk [vmem:[#allocation3 + $0x2] sm:$0x1] %vm1296, %v1396
          %v1402 = vlaneseq
          %v1403 = vshrl.u32 %v1402, 7
          %v1404 = vsub.s32 0, %v1403
          %v1405 = vrot.slane %v1306, %v1404
          %v1407 = vrot.slane %v1317, 1
          %v1408 = vsel %vm1320, %v1318, %v1407
          %v1409 = vpack.c.b16 %v1408, %v1408
          %v1412 = vunpack.c.l.b16 %v1303
          %v1413 = vunpack.c.l.b16 %v1304
          %v1414 = vpack.c.b16 %v1413, %v1412
          %v1416 = vsel %vm1241, %v1409, 0
          %v1419 = vsel %vm1245, %v1414, 0
          %1421 = vmatprep.subr.bf16.mxu0 0
          %1422 = vmatpush1.bf16.msra.mxu0 %v1419
          %1423 = vmatprep.subr.bf16.mxu0 0
          %1424 = vmatpush1.bf16.msra.mxu0 0
          %1425 = vmatprep.subr.bf16.mxu0 0
          %1426 = vmatpush1.bf16.msra.mxu0 0
          %1427 = vmatprep.subr.bf16.mxu0 0
          %1428 = vmatpush1.bf16.msra.mxu0 0
          %1429 = vmatprep.subr.bf16.mxu0 0
          %1430 = vmatpush1.bf16.msra.mxu0 0
          %1431 = vmatprep.subr.bf16.mxu0 0
          %1432 = vmatpush1.bf16.msra.mxu0 0
          %1433 = vmatprep.subr.bf16.mxu0 0
          %1434 = vmatpush1.bf16.msra.mxu0 0
          %1435 = vmatprep.subr.bf16.mxu0 0
          %1436 = vmatpush1.bf16.msra.mxu0 0
          %1437 = vmatprep.subr.bf16.mxu0 0
          %1438 = vmatpush1.bf16.msra.mxu0 0
          %1439 = vmatprep.subr.bf16.mxu0 0
          %1440 = vmatpush1.bf16.msra.mxu0 0
          %1441 = vmatprep.subr.bf16.mxu0 0
          %1442 = vmatpush1.bf16.msra.mxu0 0
          %1443 = vmatprep.subr.bf16.mxu0 0
          %1444 = vmatpush1.bf16.msra.mxu0 0
          %1445 = vmatprep.subr.bf16.mxu0 0
          %1446 = vmatpush1.bf16.msra.mxu0 0
          %1447 = vmatprep.subr.bf16.mxu0 0
          %1448 = vmatpush1.bf16.msra.mxu0 0
          %1449 = vmatprep.subr.bf16.mxu0 0
          %1450 = vmatpush1.bf16.msra.mxu0 0
          %1451 = vmatprep.subr.bf16.mxu0 0
          %1452 = vmatpush1.bf16.msra.mxu0 0
          %1453 = vmatprep.mubr.bf16.mxu0 0
          %1454 = vmatmul.mubr.bf16.gmra.mrb[0].mxu0 %v1416
          %v1455 = vpop.f32.mrb[0].mxu0
          %v1456 = vadd.f32 %v1405, %v1455
          %v1457 = vpop.f32.mrb[0].mxu0
          %v1458 = vpop.f32.mrb[0].mxu0
          %v1459 = vpop.f32.mrb[0].mxu0
          %1460 = vdwg.mxu0
          %v1463 = vunpack.c.l.s4 1966171168
          %v1464 = vunpack.c.0.s8 %v1463
          %v1465 = vlaneseq
          %v1466 = vshrl.u32 %v1465, 7
          %v1467 = vsub.s32 %v1464, %v1466
          %v1468 = vrot.slane %v1456, %v1467
          %v1469 = vcombine.high %v1468, %v1468
          %v1471 = vunpack.c.l.s4 1966171168
          %v1472 = vunpack.c.0.s8 %v1471
          %v1473 = vlaneseq
          %v1474 = vshrl.u32 %v1473, 7
          %v1475 = vsub.s32 %v1472, %v1474
          %v1476 = vrot.slane %v1468, %v1475
          %v1478 = vunpack.c.l.s4 1966171168
          %v1479 = vunpack.c.0.s8 %v1478
          %v1480 = vlaneseq
          %v1481 = vshrl.u32 %v1480, 7
          %v1482 = vsub.s32 %v1479, %v1481
          %v1483 = vrot.slane %v1469, %v1482
          %1486 = vst.msk [vmem:[#allocation3 + $0x1] sm:$0x1] %vm1296, %v1476
          %1487 = vst.msk [vmem:[#allocation3 + $0x3] sm:$0x1] %vm1296, %v1483
        $region168: #{timexer_forward.1} parent=127 // pred_fallthru
          _
        %v1488 = vld [vmem:[#allocation2] sm:$0x1f]
        %v1489 = vld [vmem:[#allocation2 + $0x8] sm:$0x1f]
        %v1492 = vcombine.high %v1488, %v1488
        %v1494 = vunpack.c.l.s4 1966171168
        %v1495 = vunpack.c.0.s8 %v1494
        %v1496 = vlaneseq
        %v1497 = vshrl.u32 %v1496, 7
        %v1498 = vsub.s32 %v1495, %v1497
        %v1499 = vrot.slane %v1488, %v1498
        %v1501 = vunpack.c.l.s4 1966171168
        %v1502 = vunpack.c.0.s8 %v1501
        %v1503 = vlaneseq
        %v1504 = vshrl.u32 %v1503, 7
        %v1505 = vsub.s32 %v1502, %v1504
        %v1506 = vrot.slane %v1492, %v1505
        %v1507 = vcombine.high %v1499, %v1499
        %v1509 = vunpack.c.l.s4 1966171168
        %v1510 = vunpack.c.0.s8 %v1509
        %v1511 = vlaneseq
        %v1512 = vshrl.u32 %v1511, 7
        %v1513 = vsub.s32 %v1510, %v1512
        %v1514 = vrot.slane %v1499, %v1513
        %v1516 = vunpack.c.l.s4 1966171168
        %v1517 = vunpack.c.0.s8 %v1516
        %v1518 = vlaneseq
        %v1519 = vshrl.u32 %v1518, 7
        %v1520 = vsub.s32 %v1517, %v1519
        %v1521 = vrot.slane %v1506, %v1520
        %v1523 = vunpack.c.l.s4 1966171168
        %v1524 = vunpack.c.0.s8 %v1523
        %v1525 = vlaneseq
        %v1526 = vshrl.u32 %v1525, 7
        %v1527 = vsub.s32 %v1524, %v1526
        %v1528 = vrot.slane %v1507, %v1527
        %v1529 = vcombine.high %v1514, %v1514
        %v1530 = vcombine.high %v1528, %v1528
        %v1531 = vcombine.high %v1489, %v1489
        %v1533 = vunpack.c.l.s4 1966171168
        %v1534 = vunpack.c.0.s8 %v1533
        %v1535 = vlaneseq
        %v1536 = vshrl.u32 %v1535, 7
        %v1537 = vsub.s32 %v1534, %v1536
        %v1538 = vrot.slane %v1489, %v1537
        %v1540 = vunpack.c.l.s4 1966171168
        %v1541 = vunpack.c.0.s8 %v1540
        %v1542 = vlaneseq
        %v1543 = vshrl.u32 %v1542, 7
        %v1544 = vsub.s32 %v1541, %v1543
        %v1545 = vrot.slane %v1531, %v1544
        %v1546 = vcombine.high %v1538, %v1538
        %v1548 = vunpack.c.l.s4 1966171168
        %v1549 = vunpack.c.0.s8 %v1548
        %v1550 = vlaneseq
        %v1551 = vshrl.u32 %v1550, 7
        %v1552 = vsub.s32 %v1549, %v1551
        %v1553 = vrot.slane %v1538, %v1552
        %v1555 = vunpack.c.l.s4 1966171168
        %v1556 = vunpack.c.0.s8 %v1555
        %v1557 = vlaneseq
        %v1558 = vshrl.u32 %v1557, 7
        %v1559 = vsub.s32 %v1556, %v1558
        %v1560 = vrot.slane %v1545, %v1559
        %v1562 = vunpack.c.l.s4 1966171168
        %v1563 = vunpack.c.0.s8 %v1562
        %v1564 = vlaneseq
        %v1565 = vshrl.u32 %v1564, 7
        %v1566 = vsub.s32 %v1563, %v1565
        %v1567 = vrot.slane %v1546, %v1566
        %v1568 = vcombine.high %v1553, %v1553
        %v1569 = vcombine.high %v1567, %v1567
        %v1570 = vcombine.low %v1514, %v1528
        %v1571 = vcombine.low %v1529, %v1530
        %v1572 = vcombine.low %v1521, %v1553
        %v1573 = vcombine.low %v1567, %v1568
        %v1575 = vunpack.c.l.s4 1966171168
        %v1576 = vunpack.c.0.s8 %v1575
        %v1577 = vlaneseq
        %v1578 = vshrl.u32 %v1577, 7
        %v1579 = vsub.s32 %v1576, %v1578
        %v1580 = vrot.slane %v1570, %v1579
        %v1582 = vunpack.c.l.s4 1966171168
        %v1583 = vunpack.c.0.s8 %v1582
        %v1584 = vlaneseq
        %v1585 = vshrl.u32 %v1584, 7
        %v1586 = vsub.s32 %v1583, %v1585
        %v1587 = vrot.slane %v1571, %v1586
        %v1589 = vunpack.c.l.s4 1966171168
        %v1590 = vunpack.c.0.s8 %v1589
        %v1591 = vlaneseq
        %v1592 = vshrl.u32 %v1591, 7
        %v1593 = vsub.s32 %v1590, %v1592
        %v1594 = vrot.slane %v1572, %v1593
        %v1596 = vunpack.c.l.s4 1966171168
        %v1597 = vunpack.c.0.s8 %v1596
        %v1598 = vlaneseq
        %v1599 = vshrl.u32 %v1598, 7
        %v1600 = vsub.s32 %v1597, %v1599
        %v1601 = vrot.slane %v1573, %v1600
        %v1602 = vcombine.low %v1580, %v1587
        %v1603 = vcombine.low %v1594, %v1601
        %v1605 = vunpack.c.l.s4 1966171168
        %v1606 = vunpack.c.0.s8 %v1605
        %v1607 = vlaneseq
        %v1608 = vshrl.u32 %v1607, 7
        %v1609 = vsub.s32 %v1606, %v1608
        %v1610 = vrot.slane %v1602, %v1609
        %v1612 = vunpack.c.l.s4 1966171168
        %v1613 = vunpack.c.0.s8 %v1612
        %v1614 = vlaneseq
        %v1615 = vshrl.u32 %v1614, 7
        %v1616 = vsub.s32 %v1613, %v1615
        %v1617 = vrot.slane %v1603, %v1616
        %v1618 = vcombine.low %v1610, %v1617
        %v1619 = vcombine.low %v1569, %v1560
        %v1621 = vunpack.c.l.s4 1966171168
        %v1622 = vunpack.c.0.s8 %v1621
        %v1623 = vlaneseq
        %v1624 = vshrl.u32 %v1623, 7
        %v1625 = vsub.s32 %v1622, %v1624
        %v1626 = vrot.slane %v1619, %v1625
        %v1628 = vunpack.c.l.s4 1966171168
        %v1629 = vunpack.c.0.s8 %v1628
        %v1630 = vlaneseq
        %v1631 = vshrl.u32 %v1630, 7
        %v1632 = vsub.s32 %v1629, %v1631
        %v1633 = vrot.slane %v1626, %v1632
        %v1636 = vpack.c.bf16 %v1633, %v1618
        %v1637 = vld [vmem:[%s1172] sm:$0xf]
        %v1638 = vld [vmem:[%s1172 + $0x4] sm:$0xf]
        %v1639 = vld [vmem:[%s1172 + $0x8] sm:$0xf]
        %v1640 = vld [vmem:[%s1172 + $0xc] sm:$0xf]
        %v1641 = vld [vmem:[%s1175] sm:$0x1]
        %v1643 = vlaneseq
        %v1644 = vshrl.u32 %v1643, 7
        %v1645 = vsub.s32 0, %v1644
        %v1646 = vrot.slane %v1641, %v1645
        %v1652 = vunpack.c.l.b16 %v1637
        %v1653 = vunpack.c.l.b16 %v1638
        %v1654 = vunpack.c.l.b16 %v1639
        %v1655 = vunpack.c.l.b16 %v1640
        %v1656 = vpack.c.b16 %v1653, %v1652
        %v1657 = vpack.c.b16 %v1655, %v1654
        %vm1660 = vcmask 261120
        %v1662 = vsel %vm1660, %v1636, 0
        %1664 = vmatprep.subr.bf16.mxu0 0
        %1665 = vmatpush1.bf16.msra.mxu0 %v1656
        %1666 = vmatprep.subr.bf16.mxu0 0
        %1667 = vmatpush1.bf16.msra.mxu0 %v1657
        %1668 = vmatprep.subr.bf16.mxu0 0
        %1669 = vmatpush1.bf16.msra.mxu0 0
        %1670 = vmatprep.subr.bf16.mxu0 0
        %1671 = vmatpush1.bf16.msra.mxu0 0
        %1672 = vmatprep.subr.bf16.mxu0 0
        %1673 = vmatpush1.bf16.msra.mxu0 0
        %1674 = vmatprep.subr.bf16.mxu0 0
        %1675 = vmatpush1.bf16.msra.mxu0 0
        %1676 = vmatprep.subr.bf16.mxu0 0
        %1677 = vmatpush1.bf16.msra.mxu0 0
        %1678 = vmatprep.subr.bf16.mxu0 0
        %1679 = vmatpush1.bf16.msra.mxu0 0
        %1680 = vmatprep.subr.bf16.mxu0 0
        %1681 = vmatpush1.bf16.msra.mxu0 0
        %1682 = vmatprep.subr.bf16.mxu0 0
        %1683 = vmatpush1.bf16.msra.mxu0 0
        %1684 = vmatprep.subr.bf16.mxu0 0
        %1685 = vmatpush1.bf16.msra.mxu0 0
        %1686 = vmatprep.subr.bf16.mxu0 0
        %1687 = vmatpush1.bf16.msra.mxu0 0
        %1688 = vmatprep.subr.bf16.mxu0 0
        %1689 = vmatpush1.bf16.msra.mxu0 0
        %1690 = vmatprep.subr.bf16.mxu0 0
        %1691 = vmatpush1.bf16.msra.mxu0 0
        %1692 = vmatprep.subr.bf16.mxu0 0
        %1693 = vmatpush1.bf16.msra.mxu0 0
        %1694 = vmatprep.subr.bf16.mxu0 0
        %1695 = vmatpush1.bf16.msra.mxu0 0
        %1696 = vmatprep.mubr.bf16.mxu0 0
        %1697 = vmatmul.mubr.bf16.gmra.mrb[0].mxu0 %v1662
        %v1698 = vpop.f32.mrb[0].mxu0
        %v1699 = vadd.f32 %v1646, %v1698
        %v1700 = vpop.f32.mrb[0].mxu0
        %v1701 = vpop.f32.mrb[0].mxu0
        %v1702 = vadd.f32 %v1646, %v1701
        %v1703 = vpop.f32.mrb[0].mxu0
        %1704 = vdwg.mxu0
        %v1707 = vcombine.high %v1699, %v1699
        %v1709 = vunpack.c.l.s4 1966171168
        %v1710 = vunpack.c.0.s8 %v1709
        %v1711 = vlaneseq
        %v1712 = vshrl.u32 %v1711, 7
        %v1713 = vsub.s32 %v1710, %v1712
        %v1714 = vrot.slane %v1699, %v1713
        %v1716 = vunpack.c.l.s4 1966171168
        %v1717 = vunpack.c.0.s8 %v1716
        %v1718 = vlaneseq
        %v1719 = vshrl.u32 %v1718, 7
        %v1720 = vsub.s32 %v1717, %v1719
        %v1721 = vrot.slane %v1707, %v1720
        %v1722 = vcombine.high %v1714, %v1714
        %v1723 = vcombine.high %v1721, %v1721
        %v1725 = vunpack.c.l.s4 1966171168
        %v1726 = vunpack.c.0.s8 %v1725
        %v1727 = vlaneseq
        %v1728 = vshrl.u32 %v1727, 7
        %v1729 = vsub.s32 %v1726, %v1728
        %v1730 = vrot.slane %v1714, %v1729
        %v1732 = vunpack.c.l.s4 1966171168
        %v1733 = vunpack.c.0.s8 %v1732
        %v1734 = vlaneseq
        %v1735 = vshrl.u32 %v1734, 7
        %v1736 = vsub.s32 %v1733, %v1735
        %v1737 = vrot.slane %v1721, %v1736
        %v1739 = vunpack.c.l.s4 1966171168
        %v1740 = vunpack.c.0.s8 %v1739
        %v1741 = vlaneseq
        %v1742 = vshrl.u32 %v1741, 7
        %v1743 = vsub.s32 %v1740, %v1742
        %v1744 = vrot.slane %v1722, %v1743
        %v1746 = vunpack.c.l.s4 1966171168
        %v1747 = vunpack.c.0.s8 %v1746
        %v1748 = vlaneseq
        %v1749 = vshrl.u32 %v1748, 7
        %v1750 = vsub.s32 %v1747, %v1749
        %v1751 = vrot.slane %v1723, %v1750
        %v1752 = vcombine.high %v1730, %v1730
        %v1753 = vcombine.high %v1737, %v1737
        %v1754 = vcombine.high %v1744, %v1744
        %v1755 = vcombine.high %v1751, %v1751
        %v1757 = vunpack.c.l.s4 1966171168
        %v1758 = vunpack.c.0.s8 %v1757
        %v1759 = vlaneseq
        %v1760 = vshrl.u32 %v1759, 7
        %v1761 = vsub.s32 %v1758, %v1760
        %v1762 = vrot.slane %v1702, %v1761
        %v1763 = vcombine.high %v1762, %v1762
        %v1765 = vunpack.c.l.s4 1966171168
        %v1766 = vunpack.c.0.s8 %v1765
        %v1767 = vlaneseq
        %v1768 = vshrl.u32 %v1767, 7
        %v1769 = vsub.s32 %v1766, %v1768
        %v1770 = vrot.slane %v1762, %v1769
        %v1772 = vunpack.c.l.s4 1966171168
        %v1773 = vunpack.c.0.s8 %v1772
        %v1774 = vlaneseq
        %v1775 = vshrl.u32 %v1774, 7
        %v1776 = vsub.s32 %v1773, %v1775
        %v1777 = vrot.slane %v1763, %v1776
        %v1778 = vld [vmem:[%s1180] sm:$0xf]
        %v1779 = vld [vmem:[%s1180 + $0x4] sm:$0xf]
        %v1780 = vld [vmem:[%s1180 + $0x8] sm:$0xf]
        %v1781 = vld [vmem:[%s1180 + $0xc] sm:$0xf]
        %v1782 = vcombine.low %v1730, %v1744
        %v1783 = vcombine.low %v1752, %v1754
        %v1785 = vunpack.c.l.s4 1966171168
        %v1786 = vunpack.c.0.s8 %v1785
        %v1787 = vlaneseq
        %v1788 = vshrl.u32 %v1787, 7
        %v1789 = vsub.s32 %v1786, %v1788
        %v1790 = vrot.slane %v1782, %v1789
        %v1792 = vunpack.c.l.s4 1966171168
        %v1793 = vunpack.c.0.s8 %v1792
        %v1794 = vlaneseq
        %v1795 = vshrl.u32 %v1794, 7
        %v1796 = vsub.s32 %v1793, %v1795
        %v1797 = vrot.slane %v1783, %v1796
        %v1799 = vunpack.c.l.s4 1966171168
        %v1800 = vunpack.c.0.s8 %v1799
        %v1801 = vlaneseq
        %v1802 = vshrl.u32 %v1801, 7
        %v1803 = vsub.s32 %v1800, %v1802
        %v1804 = vrot.slane %v1737, %v1803
        %v1805 = vcombine.low %v1790, %v1797
        %v1807 = vunpack.c.l.s4 1966171168
        %v1808 = vunpack.c.0.s8 %v1807
        %v1809 = vlaneseq
        %v1810 = vshrl.u32 %v1809, 7
        %v1811 = vsub.s32 %v1808, %v1810
        %v1812 = vrot.slane %v1805, %v1811
        %v1814 = vunpack.c.l.s4 1966171168
        %v1815 = vunpack.c.0.s8 %v1814
        %v1816 = vlaneseq
        %v1817 = vshrl.u32 %v1816, 7
        %v1818 = vsub.s32 %v1815, %v1817
        %v1819 = vrot.slane %v1804, %v1818
        %v1820 = vcombine.low %v1812, %v1819
        %v1821 = vcombine.low %v1751, %v1753
        %v1822 = vcombine.low %v1755, %v1770
        %v1824 = vunpack.c.l.s4 1966171168
        %v1825 = vunpack.c.0.s8 %v1824
        %v1826 = vlaneseq
        %v1827 = vshrl.u32 %v1826, 7
        %v1828 = vsub.s32 %v1825, %v1827
        %v1829 = vrot.slane %v1821, %v1828
        %v1831 = vunpack.c.l.s4 1966171168
        %v1832 = vunpack.c.0.s8 %v1831
        %v1833 = vlaneseq
        %v1834 = vshrl.u32 %v1833, 7
        %v1835 = vsub.s32 %v1832, %v1834
        %v1836 = vrot.slane %v1822, %v1835
        %v1838 = vunpack.c.l.s4 1966171168
        %v1839 = vunpack.c.0.s8 %v1838
        %v1840 = vlaneseq
        %v1841 = vshrl.u32 %v1840, 7
        %v1842 = vsub.s32 %v1839, %v1841
        %v1843 = vrot.slane %v1777, %v1842
        %v1844 = vcombine.low %v1829, %v1836
        %v1846 = vunpack.c.l.s4 1966171168
        %v1847 = vunpack.c.0.s8 %v1846
        %v1848 = vlaneseq
        %v1849 = vshrl.u32 %v1848, 7
        %v1850 = vsub.s32 %v1847, %v1849
        %v1851 = vrot.slane %v1844, %v1850
        %v1853 = vunpack.c.l.s4 1966171168
        %v1854 = vunpack.c.0.s8 %v1853
        %v1855 = vlaneseq
        %v1856 = vshrl.u32 %v1855, 7
        %v1857 = vsub.s32 %v1854, %v1856
        %v1858 = vrot.slane %v1843, %v1857
        %v1859 = vcombine.low %v1851, %v1858
        %v1862 = vpack.c.bf16 %v1820, %v1820
        %v1863 = vpack.c.bf16 %v1859, %v1859
        %1865 = vrot.lane.b32.xlu0 %v1862, 96
        %v1866 = vpop.permute.xlu0 %1865
        %vm1867 = vcmask 64512
        %v1869 = vsel %vm1867, %v1862, 0
        %v1872 = vsel %vm1867, %v1866, 0
        %1874 = vmatprep.subr.bf16.mxu0 0
        %1875 = vmatpush1.bf16.xpose.msra.mxu0 %v1872
        %1876 = vmatprep.subr.bf16.mxu0 0
        %1877 = vmatpush1.bf16.xpose.msra.mxu0 0
        %1878 = vmatprep.subr.bf16.mxu0 0
        %1879 = vmatpush1.bf16.xpose.msra.mxu0 0
        %1880 = vmatprep.subr.bf16.mxu0 0
        %1881 = vmatpush1.bf16.xpose.msra.mxu0 0
        %1882 = vmatprep.subr.bf16.mxu0 0
        %1883 = vmatpush1.bf16.xpose.msra.mxu0 0
        %1884 = vmatprep.subr.bf16.mxu0 0
        %1885 = vmatpush1.bf16.xpose.msra.mxu0 0
        %1886 = vmatprep.subr.bf16.mxu0 0
        %1887 = vmatpush1.bf16.xpose.msra.mxu0 0
        %1888 = vmatprep.subr.bf16.mxu0 0
        %1889 = vmatpush1.bf16.xpose.msra.mxu0 0
        %1890 = vmatprep.subr.bf16.mxu0 0
        %1891 = vmatpush1.bf16.xpose.msra.mxu0 0
        %1892 = vmatprep.subr.bf16.mxu0 0
        %1893 = vmatpush1.bf16.xpose.msra.mxu0 0
        %1894 = vmatprep.subr.bf16.mxu0 0
        %1895 = vmatpush1.bf16.xpose.msra.mxu0 0
        %1896 = vmatprep.subr.bf16.mxu0 0
        %1897 = vmatpush1.bf16.xpose.msra.mxu0 0
        %1898 = vmatprep.subr.bf16.mxu0 0
        %1899 = vmatpush1.bf16.xpose.msra.mxu0 0
        %1900 = vmatprep.subr.bf16.mxu0 0
        %1901 = vmatpush1.bf16.xpose.msra.mxu0 0
        %1902 = vmatprep.subr.bf16.mxu0 0
        %1903 = vmatpush1.bf16.xpose.msra.mxu0 0
        %1904 = vmatprep.subr.bf16.mxu0 0
        %1905 = vmatpush1.bf16.xpose.msra.mxu0 0
        %1906 = vmatprep.mubr.bf16.mxu0 0
        %1907 = vmatmul.mubr.bf16.gmra.mrb[0].mxu0 %v1869
        %v1908 = vpop.f32.mrb[0].mxu0
        %v1909 = vadd.f32 0.0, %v1908
        %v1910 = vpop.f32.mrb[0].mxu0
        %v1911 = vpop.f32.mrb[0].mxu0
        %v1912 = vpop.f32.mrb[0].mxu0
        %1913 = vdwg.mxu0
        %1915 = vrot.lane.b32.xlu0 %v1863, 96
        %v1916 = vpop.permute.xlu0 %1915
        %v1918 = vsel %vm1867, %v1863, 0
        %v1921 = vsel %vm1867, %v1916, 0
        %1923 = vmatprep.subr.bf16.mxu0 0
        %1924 = vmatpush1.bf16.xpose.msra.mxu0 %v1921
        %1925 = vmatprep.subr.bf16.mxu0 0
        %1926 = vmatpush1.bf16.xpose.msra.mxu0 0
        %1927 = vmatprep.subr.bf16.mxu0 0
        %1928 = vmatpush1.bf16.xpose.msra.mxu0 0
        %1929 = vmatprep.subr.bf16.mxu0 0
        %1930 = vmatpush1.bf16.xpose.msra.mxu0 0
        %1931 = vmatprep.subr.bf16.mxu0 0
        %1932 = vmatpush1.bf16.xpose.msra.mxu0 0
        %1933 = vmatprep.subr.bf16.mxu0 0
        %1934 = vmatpush1.bf16.xpose.msra.mxu0 0
        %1935 = vmatprep.subr.bf16.mxu0 0
        %1936 = vmatpush1.bf16.xpose.msra.mxu0 0
        %1937 = vmatprep.subr.bf16.mxu0 0
        %1938 = vmatpush1.bf16.xpose.msra.mxu0 0
        %1939 = vmatprep.subr.bf16.mxu0 0
        %1940 = vmatpush1.bf16.xpose.msra.mxu0 0
        %1941 = vmatprep.subr.bf16.mxu0 0
        %1942 = vmatpush1.bf16.xpose.msra.mxu0 0
        %1943 = vmatprep.subr.bf16.mxu0 0
        %1944 = vmatpush1.bf16.xpose.msra.mxu0 0
        %1945 = vmatprep.subr.bf16.mxu0 0
        %1946 = vmatpush1.bf16.xpose.msra.mxu0 0
        %1947 = vmatprep.subr.bf16.mxu0 0
        %1948 = vmatpush1.bf16.xpose.msra.mxu0 0
        %1949 = vmatprep.subr.bf16.mxu0 0
        %1950 = vmatpush1.bf16.xpose.msra.mxu0 0
        %1951 = vmatprep.subr.bf16.mxu0 0
        %1952 = vmatpush1.bf16.xpose.msra.mxu0 0
        %1953 = vmatprep.subr.bf16.mxu0 0
        %1954 = vmatpush1.bf16.xpose.msra.mxu0 0
        %1955 = vmatprep.mubr.bf16.mxu0 0
        %1956 = vmatmul.mubr.bf16.gmra.mrb[0].mxu0 %v1918
        %v1957 = vpop.f32.mrb[0].mxu0
        %v1958 = vadd.f32 0.0, %v1957
        %v1959 = vpop.f32.mrb[0].mxu0
        %v1960 = vpop.f32.mrb[0].mxu0
        %v1961 = vpop.f32.mrb[0].mxu0
        %1962 = vdwg.mxu0
        %vm1963 = vcmask 36864
        %v1964 = vsel %vm1963, %v1909, -inf
        %1965 = vmax.xlane.f32.xlu0 %v1964
        %v1966 = vpop.xlane.xlu0 %1965
        %v1967 = vsel %vm1963, %v1958, -inf
        %1968 = vmax.xlane.f32.xlu0 %v1967
        %v1969 = vpop.xlane.xlu0 %1968
        %v1970 = vsub.f32 %v1909, %v1966
        %v1971 = vsub.f32 %v1958, %v1969
        %v1972 = vmul.f32 %v1970, 1.442695
        %v1973 = vpow.pop %v1972
        %v1974 = vmul.f32 %v1971, 1.442695
        %v1975 = vpow.pop %v1974
        %v1976 = vsel %vm1963, %v1973, 0.0
        %1977 = vadd.xlane.f32.xlu0 %v1976
        %v1978 = vpop.xlane.xlu0 %1977
        %v1979 = vsel %vm1963, %v1975, 0.0
        %1980 = vadd.xlane.f32.xlu0 %v1979
        %v1981 = vpop.xlane.xlu0 %1980
        %v1982 = vrcp.pop %v1978
        %v1983 = vmul.f32 %v1973, %v1982
        %v1984 = vrcp.pop %v1981
        %v1985 = vmul.f32 %v1975, %v1984
        %v1986 = vpack.c.bf16 %v1983, %v1983
        %v1987 = vpack.c.bf16 %v1985, %v1985
        %1988 = vrot.lane.b32.xlu0 %v1862, 64
        %v1989 = vpop.permute.xlu0 %1988
        %vm1990 = vcmask 39936
        %v1992 = vsel %vm1990, %v1986, 0
        %vm1994 = vcmask 1041408
        %vm1995 = vcmask 1042432
        %v1996 = vsel %vm1994, 4294967295, 65535
        %v1997 = vsel %vm1995, %v1996, 0
        %v1999 = vand.u32 %v1989, %v1997
        %2001 = vmatprep.subr.bf16.mxu0 0
        %2002 = vmatpush1.bf16.msra.mxu0 %v1999
        %2003 = vmatprep.subr.bf16.mxu0 0
        %2004 = vmatpush1.bf16.msra.mxu0 0
        %2005 = vmatprep.subr.bf16.mxu0 0
        %2006 = vmatpush1.bf16.msra.mxu0 0
        %2007 = vmatprep.subr.bf16.mxu0 0
        %2008 = vmatpush1.bf16.msra.mxu0 0
        %2009 = vmatprep.subr.bf16.mxu0 0
        %2010 = vmatpush1.bf16.msra.mxu0 0
        %2011 = vmatprep.subr.bf16.mxu0 0
        %2012 = vmatpush1.bf16.msra.mxu0 0
        %2013 = vmatprep.subr.bf16.mxu0 0
        %2014 = vmatpush1.bf16.msra.mxu0 0
        %2015 = vmatprep.subr.bf16.mxu0 0
        %2016 = vmatpush1.bf16.msra.mxu0 0
        %2017 = vmatprep.subr.bf16.mxu0 0
        %2018 = vmatpush1.bf16.msra.mxu0 0
        %2019 = vmatprep.subr.bf16.mxu0 0
        %2020 = vmatpush1.bf16.msra.mxu0 0
        %2021 = vmatprep.subr.bf16.mxu0 0
        %2022 = vmatpush1.bf16.msra.mxu0 0
        %2023 = vmatprep.subr.bf16.mxu0 0
        %2024 = vmatpush1.bf16.msra.mxu0 0
        %2025 = vmatprep.subr.bf16.mxu0 0
        %2026 = vmatpush1.bf16.msra.mxu0 0
        %2027 = vmatprep.subr.bf16.mxu0 0
        %2028 = vmatpush1.bf16.msra.mxu0 0
        %2029 = vmatprep.subr.bf16.mxu0 0
        %2030 = vmatpush1.bf16.msra.mxu0 0
        %2031 = vmatprep.subr.bf16.mxu0 0
        %2032 = vmatpush1.bf16.msra.mxu0 0
        %2033 = vmatprep.mubr.bf16.mxu0 0
        %2034 = vmatmul.mubr.bf16.gmra.mrb[0].mxu0 %v1992
        %v2035 = vpop.f32.mrb[0].mxu0
        %v2036 = vadd.f32 0.0, %v2035
        %v2037 = vpop.f32.mrb[0].mxu0
        %v2038 = vpop.f32.mrb[0].mxu0
        %v2039 = vpop.f32.mrb[0].mxu0
        %2040 = vdwg.mxu0
        %2041 = vrot.lane.b32.xlu0 %v1863, 64
        %v2042 = vpop.permute.xlu0 %2041
        %v2044 = vsel %vm1990, %v1987, 0
        %v2047 = vand.u32 %v2042, %v1997
        %2049 = vmatprep.subr.bf16.mxu0 0
        %2050 = vmatpush1.bf16.msra.mxu0 %v2047
        %2051 = vmatprep.subr.bf16.mxu0 0
        %2052 = vmatpush1.bf16.msra.mxu0 0
        %2053 = vmatprep.subr.bf16.mxu0 0
        %2054 = vmatpush1.bf16.msra.mxu0 0
        %2055 = vmatprep.subr.bf16.mxu0 0
        %2056 = vmatpush1.bf16.msra.mxu0 0
        %2057 = vmatprep.subr.bf16.mxu0 0
        %2058 = vmatpush1.bf16.msra.mxu0 0
        %2059 = vmatprep.subr.bf16.mxu0 0
        %2060 = vmatpush1.bf16.msra.mxu0 0
        %2061 = vmatprep.subr.bf16.mxu0 0
        %2062 = vmatpush1.bf16.msra.mxu0 0
        %2063 = vmatprep.subr.bf16.mxu0 0
        %2064 = vmatpush1.bf16.msra.mxu0 0
        %2065 = vmatprep.subr.bf16.mxu0 0
        %2066 = vmatpush1.bf16.msra.mxu0 0
        %2067 = vmatprep.subr.bf16.mxu0 0
        %2068 = vmatpush1.bf16.msra.mxu0 0
        %2069 = vmatprep.subr.bf16.mxu0 0
        %2070 = vmatpush1.bf16.msra.mxu0 0
        %2071 = vmatprep.subr.bf16.mxu0 0
        %2072 = vmatpush1.bf16.msra.mxu0 0
        %2073 = vmatprep.subr.bf16.mxu0 0
        %2074 = vmatpush1.bf16.msra.mxu0 0
        %2075 = vmatprep.subr.bf16.mxu0 0
        %2076 = vmatpush1.bf16.msra.mxu0 0
        %2077 = vmatprep.subr.bf16.mxu0 0
        %2078 = vmatpush1.bf16.msra.mxu0 0
        %2079 = vmatprep.subr.bf16.mxu0 0
        %2080 = vmatpush1.bf16.msra.mxu0 0
        %2081 = vmatprep.mubr.bf16.mxu0 0
        %2082 = vmatmul.mubr.bf16.gmra.mrb[0].mxu0 %v2044
        %v2083 = vpop.f32.mrb[0].mxu0
        %v2084 = vadd.f32 0.0, %v2083
        %v2085 = vpop.f32.mrb[0].mxu0
        %v2086 = vpop.f32.mrb[0].mxu0
        %v2087 = vpop.f32.mrb[0].mxu0
        %2088 = vdwg.mxu0
        %v2089 = vpack.c.bf16 %v2036, %v2036
        %v2090 = vpack.c.bf16 %v2084, %v2084
        %2091 = vrot.lane.b32.xlu0 %v1862, 120
        %v2092 = vpop.permute.xlu0 %2091
        %2093 = vrot.lane.b32.xlu0 %v1862, 88
        %v2094 = vpop.permute.xlu0 %2093
        %v2096 = vsel %vm1867, %v2092, 0
        %v2099 = vsel %vm1867, %v2094, 0
        %2101 = vmatprep.subr.bf16.mxu0 0
        %2102 = vmatpush1.bf16.xpose.msra.mxu0 %v2099
        %2103 = vmatprep.subr.bf16.mxu0 0
        %2104 = vmatpush1.bf16.xpose.msra.mxu0 0
        %2105 = vmatprep.subr.bf16.mxu0 0
        %2106 = vmatpush1.bf16.xpose.msra.mxu0 0
        %2107 = vmatprep.subr.bf16.mxu0 0
        %2108 = vmatpush1.bf16.xpose.msra.mxu0 0
        %2109 = vmatprep.subr.bf16.mxu0 0
        %2110 = vmatpush1.bf16.xpose.msra.mxu0 0
        %2111 = vmatprep.subr.bf16.mxu0 0
        %2112 = vmatpush1.bf16.xpose.msra.mxu0 0
        %2113 = vmatprep.subr.bf16.mxu0 0
        %2114 = vmatpush1.bf16.xpose.msra.mxu0 0
        %2115 = vmatprep.subr.bf16.mxu0 0
        %2116 = vmatpush1.bf16.xpose.msra.mxu0 0
        %2117 = vmatprep.subr.bf16.mxu0 0
        %2118 = vmatpush1.bf16.xpose.msra.mxu0 0
        %2119 = vmatprep.subr.bf16.mxu0 0
        %2120 = vmatpush1.bf16.xpose.msra.mxu0 0
        %2121 = vmatprep.subr.bf16.mxu0 0
        %2122 = vmatpush1.bf16.xpose.msra.mxu0 0
        %2123 = vmatprep.subr.bf16.mxu0 0
        %2124 = vmatpush1.bf16.xpose.msra.mxu0 0
        %2125 = vmatprep.subr.bf16.mxu0 0
        %2126 = vmatpush1.bf16.xpose.msra.mxu0 0
        %2127 = vmatprep.subr.bf16.mxu0 0
        %2128 = vmatpush1.bf16.xpose.msra.mxu0 0
        %2129 = vmatprep.subr.bf16.mxu0 0
        %2130 = vmatpush1.bf16.xpose.msra.mxu0 0
        %2131 = vmatprep.subr.bf16.mxu0 0
        %2132 = vmatpush1.bf16.xpose.msra.mxu0 0
        %2133 = vmatprep.mubr.bf16.mxu0 0
        %2134 = vmatmul.mubr.bf16.gmra.mrb[0].mxu0 %v2096
        %v2135 = vpop.f32.mrb[0].mxu0
        %v2136 = vadd.f32 0.0, %v2135
        %v2137 = vpop.f32.mrb[0].mxu0
        %v2138 = vpop.f32.mrb[0].mxu0
        %v2139 = vpop.f32.mrb[0].mxu0
        %2140 = vdwg.mxu0
        %2141 = vrot.lane.b32.xlu0 %v1863, 120
        %v2142 = vpop.permute.xlu0 %2141
        %2143 = vrot.lane.b32.xlu0 %v1863, 88
        %v2144 = vpop.permute.xlu0 %2143
        %v2146 = vsel %vm1867, %v2142, 0
        %v2149 = vsel %vm1867, %v2144, 0
        %2151 = vmatprep.subr.bf16.mxu0 0
        %2152 = vmatpush1.bf16.xpose.msra.mxu0 %v2149
        %2153 = vmatprep.subr.bf16.mxu0 0
        %2154 = vmatpush1.bf16.xpose.msra.mxu0 0
        %2155 = vmatprep.subr.bf16.mxu0 0
        %2156 = vmatpush1.bf16.xpose.msra.mxu0 0
        %2157 = vmatprep.subr.bf16.mxu0 0
        %2158 = vmatpush1.bf16.xpose.msra.mxu0 0
        %2159 = vmatprep.subr.bf16.mxu0 0
        %2160 = vmatpush1.bf16.xpose.msra.mxu0 0
        %2161 = vmatprep.subr.bf16.mxu0 0
        %2162 = vmatpush1.bf16.xpose.msra.mxu0 0
        %2163 = vmatprep.subr.bf16.mxu0 0
        %2164 = vmatpush1.bf16.xpose.msra.mxu0 0
        %2165 = vmatprep.subr.bf16.mxu0 0
        %2166 = vmatpush1.bf16.xpose.msra.mxu0 0
        %2167 = vmatprep.subr.bf16.mxu0 0
        %2168 = vmatpush1.bf16.xpose.msra.mxu0 0
        %2169 = vmatprep.subr.bf16.mxu0 0
        %2170 = vmatpush1.bf16.xpose.msra.mxu0 0
        %2171 = vmatprep.subr.bf16.mxu0 0
        %2172 = vmatpush1.bf16.xpose.msra.mxu0 0
        %2173 = vmatprep.subr.bf16.mxu0 0
        %2174 = vmatpush1.bf16.xpose.msra.mxu0 0
        %2175 = vmatprep.subr.bf16.mxu0 0
        %2176 = vmatpush1.bf16.xpose.msra.mxu0 0
        %2177 = vmatprep.subr.bf16.mxu0 0
        %2178 = vmatpush1.bf16.xpose.msra.mxu0 0
        %2179 = vmatprep.subr.bf16.mxu0 0
        %2180 = vmatpush1.bf16.xpose.msra.mxu0 0
        %2181 = vmatprep.subr.bf16.mxu0 0
        %2182 = vmatpush1.bf16.xpose.msra.mxu0 0
        %2183 = vmatprep.mubr.bf16.mxu0 0
        %2184 = vmatmul.mubr.bf16.gmra.mrb[0].mxu0 %v2146
        %v2185 = vpop.f32.mrb[0].mxu0
        %v2186 = vadd.f32 0.0, %v2185
        %v2187 = vpop.f32.mrb[0].mxu0
        %v2188 = vpop.f32.mrb[0].mxu0
        %v2189 = vpop.f32.mrb[0].mxu0
        %2190 = vdwg.mxu0
        %v2191 = vsel %vm1963, %v2136, -inf
        %2192 = vmax.xlane.f32.xlu0 %v2191
        %v2193 = vpop.xlane.xlu0 %2192
        %v2194 = vsel %vm1963, %v2186, -inf
        %2195 = vmax.xlane.f32.xlu0 %v2194
        %v2196 = vpop.xlane.xlu0 %2195
        %v2197 = vsub.f32 %v2136, %v2193
        %v2198 = vsub.f32 %v2186, %v2196
        %v2199 = vmul.f32 %v2197, 1.442695
        %v2200 = vpow.pop %v2199
        %v2201 = vmul.f32 %v2198, 1.442695
        %v2202 = vpow.pop %v2201
        %v2203 = vsel %vm1963, %v2200, 0.0
        %2204 = vadd.xlane.f32.xlu0 %v2203
        %v2205 = vpop.xlane.xlu0 %2204
        %v2206 = vsel %vm1963, %v2202, 0.0
        %2207 = vadd.xlane.f32.xlu0 %v2206
        %v2208 = vpop.xlane.xlu0 %2207
        %v2209 = vrcp.pop %v2205
        %v2210 = vmul.f32 %v2200, %v2209
        %v2211 = vrcp.pop %v2208
        %v2212 = vmul.f32 %v2202, %v2211
        %v2213 = vpack.c.bf16 %v2210, %v2210
        %v2214 = vpack.c.bf16 %v2212, %v2212
        %2215 = vrot.lane.b32.xlu0 %v1862, 56
        %v2216 = vpop.permute.xlu0 %2215
        %v2218 = vsel %vm1990, %v2213, 0
        %v2221 = vand.u32 %v2216, %v1997
        %2223 = vmatprep.subr.bf16.mxu0 0
        %2224 = vmatpush1.bf16.msra.mxu0 %v2221
        %2225 = vmatprep.subr.bf16.mxu0 0
        %2226 = vmatpush1.bf16.msra.mxu0 0
        %2227 = vmatprep.subr.bf16.mxu0 0
        %2228 = vmatpush1.bf16.msra.mxu0 0
        %2229 = vmatprep.subr.bf16.mxu0 0
        %2230 = vmatpush1.bf16.msra.mxu0 0
        %2231 = vmatprep.subr.bf16.mxu0 0
        %2232 = vmatpush1.bf16.msra.mxu0 0
        %2233 = vmatprep.subr.bf16.mxu0 0
        %2234 = vmatpush1.bf16.msra.mxu0 0
        %2235 = vmatprep.subr.bf16.mxu0 0
        %2236 = vmatpush1.bf16.msra.mxu0 0
        %2237 = vmatprep.subr.bf16.mxu0 0
        %2238 = vmatpush1.bf16.msra.mxu0 0
        %2239 = vmatprep.subr.bf16.mxu0 0
        %2240 = vmatpush1.bf16.msra.mxu0 0
        %2241 = vmatprep.subr.bf16.mxu0 0
        %2242 = vmatpush1.bf16.msra.mxu0 0
        %2243 = vmatprep.subr.bf16.mxu0 0
        %2244 = vmatpush1.bf16.msra.mxu0 0
        %2245 = vmatprep.subr.bf16.mxu0 0
        %2246 = vmatpush1.bf16.msra.mxu0 0
        %2247 = vmatprep.subr.bf16.mxu0 0
        %2248 = vmatpush1.bf16.msra.mxu0 0
        %2249 = vmatprep.subr.bf16.mxu0 0
        %2250 = vmatpush1.bf16.msra.mxu0 0
        %2251 = vmatprep.subr.bf16.mxu0 0
        %2252 = vmatpush1.bf16.msra.mxu0 0
        %2253 = vmatprep.subr.bf16.mxu0 0
        %2254 = vmatpush1.bf16.msra.mxu0 0
        %2255 = vmatprep.mubr.bf16.mxu0 0
        %2256 = vmatmul.mubr.bf16.gmra.mrb[0].mxu0 %v2218
        %v2257 = vpop.f32.mrb[0].mxu0
        %v2258 = vadd.f32 0.0, %v2257
        %v2259 = vpop.f32.mrb[0].mxu0
        %v2260 = vpop.f32.mrb[0].mxu0
        %v2261 = vpop.f32.mrb[0].mxu0
        %2262 = vdwg.mxu0
        %2263 = vrot.lane.b32.xlu0 %v1863, 56
        %v2264 = vpop.permute.xlu0 %2263
        %v2266 = vsel %vm1990, %v2214, 0
        %v2269 = vand.u32 %v2264, %v1997
        %2271 = vmatprep.subr.bf16.mxu0 0
        %2272 = vmatpush1.bf16.msra.mxu0 %v2269
        %2273 = vmatprep.subr.bf16.mxu0 0
        %2274 = vmatpush1.bf16.msra.mxu0 0
        %2275 = vmatprep.subr.bf16.mxu0 0
        %2276 = vmatpush1.bf16.msra.mxu0 0
        %2277 = vmatprep.subr.bf16.mxu0 0
        %2278 = vmatpush1.bf16.msra.mxu0 0
        %2279 = vmatprep.subr.bf16.mxu0 0
        %2280 = vmatpush1.bf16.msra.mxu0 0
        %2281 = vmatprep.subr.bf16.mxu0 0
        %2282 = vmatpush1.bf16.msra.mxu0 0
        %2283 = vmatprep.subr.bf16.mxu0 0
        %2284 = vmatpush1.bf16.msra.mxu0 0
        %2285 = vmatprep.subr.bf16.mxu0 0
        %2286 = vmatpush1.bf16.msra.mxu0 0
        %2287 = vmatprep.subr.bf16.mxu0 0
        %2288 = vmatpush1.bf16.msra.mxu0 0
        %2289 = vmatprep.subr.bf16.mxu0 0
        %2290 = vmatpush1.bf16.msra.mxu0 0
        %2291 = vmatprep.subr.bf16.mxu0 0
        %2292 = vmatpush1.bf16.msra.mxu0 0
        %2293 = vmatprep.subr.bf16.mxu0 0
        %2294 = vmatpush1.bf16.msra.mxu0 0
        %2295 = vmatprep.subr.bf16.mxu0 0
        %2296 = vmatpush1.bf16.msra.mxu0 0
        %2297 = vmatprep.subr.bf16.mxu0 0
        %2298 = vmatpush1.bf16.msra.mxu0 0
        %2299 = vmatprep.subr.bf16.mxu0 0
        %2300 = vmatpush1.bf16.msra.mxu0 0
        %2301 = vmatprep.subr.bf16.mxu0 0
        %2302 = vmatpush1.bf16.msra.mxu0 0
        %2303 = vmatprep.mubr.bf16.mxu0 0
        %2304 = vmatmul.mubr.bf16.gmra.mrb[0].mxu0 %v2266
        %v2305 = vpop.f32.mrb[0].mxu0
        %v2306 = vadd.f32 0.0, %v2305
        %v2307 = vpop.f32.mrb[0].mxu0
        %v2308 = vpop.f32.mrb[0].mxu0
        %v2309 = vpop.f32.mrb[0].mxu0
        %2310 = vdwg.mxu0
        %v2311 = vpack.c.bf16 %v2258, %v2258
        %v2312 = vpack.c.bf16 %v2306, %v2306
        %v2316 = vunpack.c.l.s4 1966171168
        %v2317 = vunpack.c.0.s8 %v2316
        %v2318 = vlaneseq
        %v2319 = vshrl.u32 %v2318, 7
        %v2320 = vsub.s32 %v2317, %v2319
        %v2321 = vrot.slane %v2311, %v2320
        %v2322 = vcombine.high %v2321, %v2321
        %v2324 = vunpack.c.l.s4 1966171168
        %v2325 = vunpack.c.0.s8 %v2324
        %v2326 = vlaneseq
        %v2327 = vshrl.u32 %v2326, 7
        %v2328 = vsub.s32 %v2325, %v2327
        %v2329 = vrot.slane %v2321, %v2328
        %v2331 = vunpack.c.l.s4 1966171168
        %v2332 = vunpack.c.0.s8 %v2331
        %v2333 = vlaneseq
        %v2334 = vshrl.u32 %v2333, 7
        %v2335 = vsub.s32 %v2332, %v2334
        %v2336 = vrot.slane %v2322, %v2335
        %v2337 = vcombine.high %v2329, %v2329
        %v2339 = vunpack.c.l.s4 1966171168
        %v2340 = vunpack.c.0.s8 %v2339
        %v2341 = vlaneseq
        %v2342 = vshrl.u32 %v2341, 7
        %v2343 = vsub.s32 %v2340, %v2342
        %v2344 = vrot.slane %v2312, %v2343
        %v2345 = vcombine.high %v2344, %v2344
        %v2347 = vunpack.c.l.s4 1966171168
        %v2348 = vunpack.c.0.s8 %v2347
        %v2349 = vlaneseq
        %v2350 = vshrl.u32 %v2349, 7
        %v2351 = vsub.s32 %v2348, %v2350
        %v2352 = vrot.slane %v2344, %v2351
        %v2354 = vunpack.c.l.s4 1966171168
        %v2355 = vunpack.c.0.s8 %v2354
        %v2356 = vlaneseq
        %v2357 = vshrl.u32 %v2356, 7
        %v2358 = vsub.s32 %v2355, %v2357
        %v2359 = vrot.slane %v2345, %v2358
        %v2360 = vcombine.high %v2352, %v2352
        %v2361 = vunpack.i.l.s16 %v2329
        %v2362 = vunpack.i.h.s16 %v2329
        %v2363 = vunpack.i.l.s16 %v2336
        %v2364 = vunpack.i.h.s16 %v2336
        %v2365 = vunpack.i.l.s16 %v2337
        %v2366 = vunpack.i.l.s16 %v2352
        %v2367 = vunpack.i.h.s16 %v2352
        %v2368 = vunpack.i.l.s16 %v2359
        %v2369 = vunpack.i.h.s16 %v2359
        %v2370 = vunpack.i.l.s16 %v2360
        %v2371 = vpack.i.b16 %v2362, %v2361
        %v2372 = vpack.i.b16 %v2364, %v2363
        %v2373 = vpack.i.b16 %v2366, %v2365
        %v2374 = vpack.i.b16 %v2368, %v2367
        %v2375 = vpack.i.b16 %v2370, %v2369
        %v2376 = vcombine.low %v2371, %v2372
        %v2377 = vcombine.low %v2373, %v2374
        %v2379 = vunpack.c.l.s4 1966171168
        %v2380 = vunpack.c.0.s8 %v2379
        %v2381 = vlaneseq
        %v2382 = vshrl.u32 %v2381, 7
        %v2383 = vsub.s32 %v2380, %v2382
        %v2384 = vrot.slane %v2376, %v2383
        %v2386 = vunpack.c.l.s4 1966171168
        %v2387 = vunpack.c.0.s8 %v2386
        %v2388 = vlaneseq
        %v2389 = vshrl.u32 %v2388, 7
        %v2390 = vsub.s32 %v2387, %v2389
        %v2391 = vrot.slane %v2377, %v2390
        %v2393 = vunpack.c.l.s4 1966171168
        %v2394 = vunpack.c.0.s8 %v2393
        %v2395 = vlaneseq
        %v2396 = vshrl.u32 %v2395, 7
        %v2397 = vsub.s32 %v2394, %v2396
        %v2398 = vrot.slane %v2375, %v2397
        %v2399 = vcombine.low %v2384, %v2391
        %v2401 = vunpack.c.l.s4 1966171168
        %v2402 = vunpack.c.0.s8 %v2401
        %v2403 = vlaneseq
        %v2404 = vshrl.u32 %v2403, 7
        %v2405 = vsub.s32 %v2402, %v2404
        %v2406 = vrot.slane %v2399, %v2405
        %v2408 = vunpack.c.l.s4 1966171168
        %v2409 = vunpack.c.0.s8 %v2408
        %v2410 = vlaneseq
        %v2411 = vshrl.u32 %v2410, 7
        %v2412 = vsub.s32 %v2409, %v2411
        %v2413 = vrot.slane %v2398, %v2412
        %v2414 = vcombine.low %v2406, %v2413
        %v2416 = vsel %vm1867, %v2414, 0
        %vm2418 = vcmask 1043456
        %v2420 = vsel %vm2418, %v1779, 0
        %2422 = vmatprep.subr.bf16.mxu0 0
        %2423 = vmatpush1.bf16.msra.mxu0 %v2420
        %2424 = vmatprep.subr.bf16.mxu0 0
        %2425 = vmatpush1.bf16.msra.mxu0 0
        %2426 = vmatprep.subr.bf16.mxu0 0
        %2427 = vmatpush1.bf16.msra.mxu0 0
        %2428 = vmatprep.subr.bf16.mxu0 0
        %2429 = vmatpush1.bf16.msra.mxu0 0
        %2430 = vmatprep.subr.bf16.mxu0 0
        %2431 = vmatpush1.bf16.msra.mxu0 0
        %2432 = vmatprep.subr.bf16.mxu0 0
        %2433 = vmatpush1.bf16.msra.mxu0 0
        %2434 = vmatprep.subr.bf16.mxu0 0
        %2435 = vmatpush1.bf16.msra.mxu0 0
        %2436 = vmatprep.subr.bf16.mxu0 0
        %2437 = vmatpush1.bf16.msra.mxu0 0
        %2438 = vmatprep.subr.bf16.mxu0 0
        %2439 = vmatpush1.bf16.msra.mxu0 0
        %2440 = vmatprep.subr.bf16.mxu0 0
        %2441 = vmatpush1.bf16.msra.mxu0 0
        %2442 = vmatprep.subr.bf16.mxu0 0
        %2443 = vmatpush1.bf16.msra.mxu0 0
        %2444 = vmatprep.subr.bf16.mxu0 0
        %2445 = vmatpush1.bf16.msra.mxu0 0
        %2446 = vmatprep.subr.bf16.mxu0 0
        %2447 = vmatpush1.bf16.msra.mxu0 0
        %2448 = vmatprep.subr.bf16.mxu0 0
        %2449 = vmatpush1.bf16.msra.mxu0 0
        %2450 = vmatprep.subr.bf16.mxu0 0
        %2451 = vmatpush1.bf16.msra.mxu0 0
        %2452 = vmatprep.subr.bf16.mxu0 0
        %2453 = vmatpush1.bf16.msra.mxu0 0
        %2454 = vmatprep.mubr.bf16.mxu0 0
        %2455 = vmatmul.mubr.bf16.gmra.mrb[0].mxu0 %v2416
        %v2456 = vpop.f32.mrb[0].mxu0
        %v2457 = vadd.f32 0.0, %v2456
        %v2458 = vpop.f32.mrb[0].mxu0
        %v2459 = vpop.f32.mrb[0].mxu0
        %v2460 = vadd.f32 0.0, %v2459
        %v2461 = vpop.f32.mrb[0].mxu0
        %2462 = vdwg.mxu0
        %v2466 = vunpack.c.l.s4 1966171168
        %v2467 = vunpack.c.0.s8 %v2466
        %v2468 = vlaneseq
        %v2469 = vshrl.u32 %v2468, 7
        %v2470 = vsub.s32 %v2467, %v2469
        %v2471 = vrot.slane %v2089, %v2470
        %v2472 = vcombine.high %v2471, %v2471
        %v2474 = vunpack.c.l.s4 1966171168
        %v2475 = vunpack.c.0.s8 %v2474
        %v2476 = vlaneseq
        %v2477 = vshrl.u32 %v2476, 7
        %v2478 = vsub.s32 %v2475, %v2477
        %v2479 = vrot.slane %v2471, %v2478
        %v2481 = vunpack.c.l.s4 1966171168
        %v2482 = vunpack.c.0.s8 %v2481
        %v2483 = vlaneseq
        %v2484 = vshrl.u32 %v2483, 7
        %v2485 = vsub.s32 %v2482, %v2484
        %v2486 = vrot.slane %v2472, %v2485
        %v2487 = vcombine.high %v2479, %v2479
        %v2489 = vunpack.c.l.s4 1966171168
        %v2490 = vunpack.c.0.s8 %v2489
        %v2491 = vlaneseq
        %v2492 = vshrl.u32 %v2491, 7
        %v2493 = vsub.s32 %v2490, %v2492
        %v2494 = vrot.slane %v2090, %v2493
        %v2495 = vcombine.high %v2494, %v2494
        %v2497 = vunpack.c.l.s4 1966171168
        %v2498 = vunpack.c.0.s8 %v2497
        %v2499 = vlaneseq
        %v2500 = vshrl.u32 %v2499, 7
        %v2501 = vsub.s32 %v2498, %v2500
        %v2502 = vrot.slane %v2494, %v2501
        %v2504 = vunpack.c.l.s4 1966171168
        %v2505 = vunpack.c.0.s8 %v2504
        %v2506 = vlaneseq
        %v2507 = vshrl.u32 %v2506, 7
        %v2508 = vsub.s32 %v2505, %v2507
        %v2509 = vrot.slane %v2495, %v2508
        %v2510 = vcombine.high %v2502, %v2502
        %v2511 = vunpack.i.l.s16 %v2479
        %v2512 = vunpack.i.h.s16 %v2479
        %v2513 = vunpack.i.l.s16 %v2486
        %v2514 = vunpack.i.h.s16 %v2486
        %v2515 = vunpack.i.l.s16 %v2487
        %v2516 = vunpack.i.l.s16 %v2502
        %v2517 = vunpack.i.h.s16 %v2502
        %v2518 = vunpack.i.l.s16 %v2509
        %v2519 = vunpack.i.h.s16 %v2509
        %v2520 = vunpack.i.l.s16 %v2510
        %v2521 = vpack.i.b16 %v2512, %v2511
        %v2522 = vpack.i.b16 %v2514, %v2513
        %v2523 = vpack.i.b16 %v2516, %v2515
        %v2524 = vpack.i.b16 %v2518, %v2517
        %v2525 = vpack.i.b16 %v2520, %v2519
        %v2526 = vcombine.low %v2521, %v2522
        %v2527 = vcombine.low %v2523, %v2524
        %v2529 = vunpack.c.l.s4 1966171168
        %v2530 = vunpack.c.0.s8 %v2529
        %v2531 = vlaneseq
        %v2532 = vshrl.u32 %v2531, 7
        %v2533 = vsub.s32 %v2530, %v2532
        %v2534 = vrot.slane %v2526, %v2533
        %v2536 = vunpack.c.l.s4 1966171168
        %v2537 = vunpack.c.0.s8 %v2536
        %v2538 = vlaneseq
        %v2539 = vshrl.u32 %v2538, 7
        %v2540 = vsub.s32 %v2537, %v2539
        %v2541 = vrot.slane %v2527, %v2540
        %v2543 = vunpack.c.l.s4 1966171168
        %v2544 = vunpack.c.0.s8 %v2543
        %v2545 = vlaneseq
        %v2546 = vshrl.u32 %v2545, 7
        %v2547 = vsub.s32 %v2544, %v2546
        %v2548 = vrot.slane %v2525, %v2547
        %v2549 = vcombine.low %v2534, %v2541
        %v2551 = vunpack.c.l.s4 1966171168
        %v2552 = vunpack.c.0.s8 %v2551
        %v2553 = vlaneseq
        %v2554 = vshrl.u32 %v2553, 7
        %v2555 = vsub.s32 %v2552, %v2554
        %v2556 = vrot.slane %v2549, %v2555
        %v2558 = vunpack.c.l.s4 1966171168
        %v2559 = vunpack.c.0.s8 %v2558
        %v2560 = vlaneseq
        %v2561 = vshrl.u32 %v2560, 7
        %v2562 = vsub.s32 %v2559, %v2561
        %v2563 = vrot.slane %v2548, %v2562
        %v2564 = vcombine.low %v2556, %v2563
        %v2566 = vsel %vm1867, %v2564, 0
        %v2569 = vsel %vm2418, %v1778, 0
        %2571 = vmatprep.subr.bf16.mxu0 0
        %2572 = vmatpush1.bf16.msra.mxu0 %v2569
        %2573 = vmatprep.subr.bf16.mxu0 0
        %2574 = vmatpush1.bf16.msra.mxu0 0
        %2575 = vmatprep.subr.bf16.mxu0 0
        %2576 = vmatpush1.bf16.msra.mxu0 0
        %2577 = vmatprep.subr.bf16.mxu0 0
        %2578 = vmatpush1.bf16.msra.mxu0 0
        %2579 = vmatprep.subr.bf16.mxu0 0
        %2580 = vmatpush1.bf16.msra.mxu0 0
        %2581 = vmatprep.subr.bf16.mxu0 0
        %2582 = vmatpush1.bf16.msra.mxu0 0
        %2583 = vmatprep.subr.bf16.mxu0 0
        %2584 = vmatpush1.bf16.msra.mxu0 0
        %2585 = vmatprep.subr.bf16.mxu0 0
        %2586 = vmatpush1.bf16.msra.mxu0 0
        %2587 = vmatprep.subr.bf16.mxu0 0
        %2588 = vmatpush1.bf16.msra.mxu0 0
        %2589 = vmatprep.subr.bf16.mxu0 0
        %2590 = vmatpush1.bf16.msra.mxu0 0
        %2591 = vmatprep.subr.bf16.mxu0 0
        %2592 = vmatpush1.bf16.msra.mxu0 0
        %2593 = vmatprep.subr.bf16.mxu0 0
        %2594 = vmatpush1.bf16.msra.mxu0 0
        %2595 = vmatprep.subr.bf16.mxu0 0
        %2596 = vmatpush1.bf16.msra.mxu0 0
        %2597 = vmatprep.subr.bf16.mxu0 0
        %2598 = vmatpush1.bf16.msra.mxu0 0
        %2599 = vmatprep.subr.bf16.mxu0 0
        %2600 = vmatpush1.bf16.msra.mxu0 0
        %2601 = vmatprep.subr.bf16.mxu0 0
        %2602 = vmatpush1.bf16.msra.mxu0 0
        %2603 = vmatprep.mubr.bf16.mxu0 0
        %2604 = vmatmul.mubr.bf16.gmra.mrb[0].mxu0 %v2566
        %v2605 = vpop.f32.mrb[0].mxu0
        %v2606 = vadd.f32 %v2457, %v2605
        %v2607 = vpop.f32.mrb[0].mxu0
        %v2608 = vpop.f32.mrb[0].mxu0
        %v2609 = vadd.f32 %v2460, %v2608
        %v2610 = vpop.f32.mrb[0].mxu0
        %2611 = vdwg.mxu0
        %v2614 = vcombine.high %v2606, %v2606
        %v2616 = vunpack.c.l.s4 1966171168
        %v2617 = vunpack.c.0.s8 %v2616
        %v2618 = vlaneseq
        %v2619 = vshrl.u32 %v2618, 7
        %v2620 = vsub.s32 %v2617, %v2619
        %v2621 = vrot.slane %v2606, %v2620
        %v2623 = vunpack.c.l.s4 1966171168
        %v2624 = vunpack.c.0.s8 %v2623
        %v2625 = vlaneseq
        %v2626 = vshrl.u32 %v2625, 7
        %v2627 = vsub.s32 %v2624, %v2626
        %v2628 = vrot.slane %v2614, %v2627
        %v2629 = vcombine.high %v2621, %v2621
        %v2630 = vcombine.high %v2628, %v2628
        %v2632 = vunpack.c.l.s4 1966171168
        %v2633 = vunpack.c.0.s8 %v2632
        %v2634 = vlaneseq
        %v2635 = vshrl.u32 %v2634, 7
        %v2636 = vsub.s32 %v2633, %v2635
        %v2637 = vrot.slane %v2621, %v2636
        %v2639 = vunpack.c.l.s4 1966171168
        %v2640 = vunpack.c.0.s8 %v2639
        %v2641 = vlaneseq
        %v2642 = vshrl.u32 %v2641, 7
        %v2643 = vsub.s32 %v2640, %v2642
        %v2644 = vrot.slane %v2628, %v2643
        %v2646 = vunpack.c.l.s4 1966171168
        %v2647 = vunpack.c.0.s8 %v2646
        %v2648 = vlaneseq
        %v2649 = vshrl.u32 %v2648, 7
        %v2650 = vsub.s32 %v2647, %v2649
        %v2651 = vrot.slane %v2629, %v2650
        %v2653 = vunpack.c.l.s4 1966171168
        %v2654 = vunpack.c.0.s8 %v2653
        %v2655 = vlaneseq
        %v2656 = vshrl.u32 %v2655, 7
        %v2657 = vsub.s32 %v2654, %v2656
        %v2658 = vrot.slane %v2630, %v2657
        %v2659 = vcombine.high %v2637, %v2637
        %v2660 = vcombine.high %v2644, %v2644
        %v2661 = vcombine.high %v2651, %v2651
        %v2662 = vcombine.high %v2658, %v2658
        %v2664 = vunpack.c.l.s4 1966171168
        %v2665 = vunpack.c.0.s8 %v2664
        %v2666 = vlaneseq
        %v2667 = vshrl.u32 %v2666, 7
        %v2668 = vsub.s32 %v2665, %v2667
        %v2669 = vrot.slane %v2609, %v2668
        %v2670 = vcombine.high %v2669, %v2669
        %v2672 = vunpack.c.l.s4 1966171168
        %v2673 = vunpack.c.0.s8 %v2672
        %v2674 = vlaneseq
        %v2675 = vshrl.u32 %v2674, 7
        %v2676 = vsub.s32 %v2673, %v2675
        %v2677 = vrot.slane %v2669, %v2676
        %v2679 = vunpack.c.l.s4 1966171168
        %v2680 = vunpack.c.0.s8 %v2679
        %v2681 = vlaneseq
        %v2682 = vshrl.u32 %v2681, 7
        %v2683 = vsub.s32 %v2680, %v2682
        %v2684 = vrot.slane %v2670, %v2683
        %2695 = vrot.lane.b32.xlu0 %v1862, 112
        %v2696 = vpop.permute.xlu0 %2695
        %2697 = vrot.lane.b32.xlu0 %v1862, 80
        %v2698 = vpop.permute.xlu0 %2697
        %v2700 = vsel %vm1867, %v2696, 0
        %v2703 = vsel %vm1867, %v2698, 0
        %2705 = vmatprep.subr.bf16.mxu0 0
        %2706 = vmatpush1.bf16.xpose.msra.mxu0 %v2703
        %2707 = vmatprep.subr.bf16.mxu0 0
        %2708 = vmatpush1.bf16.xpose.msra.mxu0 0
        %2709 = vmatprep.subr.bf16.mxu0 0
        %2710 = vmatpush1.bf16.xpose.msra.mxu0 0
        %2711 = vmatprep.subr.bf16.mxu0 0
        %2712 = vmatpush1.bf16.xpose.msra.mxu0 0
        %2713 = vmatprep.subr.bf16.mxu0 0
        %2714 = vmatpush1.bf16.xpose.msra.mxu0 0
        %2715 = vmatprep.subr.bf16.mxu0 0
        %2716 = vmatpush1.bf16.xpose.msra.mxu0 0
        %2717 = vmatprep.subr.bf16.mxu0 0
        %2718 = vmatpush1.bf16.xpose.msra.mxu0 0
        %2719 = vmatprep.subr.bf16.mxu0 0
        %2720 = vmatpush1.bf16.xpose.msra.mxu0 0
        %2721 = vmatprep.subr.bf16.mxu0 0
        %2722 = vmatpush1.bf16.xpose.msra.mxu0 0
        %2723 = vmatprep.subr.bf16.mxu0 0
        %2724 = vmatpush1.bf16.xpose.msra.mxu0 0
        %2725 = vmatprep.subr.bf16.mxu0 0
        %2726 = vmatpush1.bf16.xpose.msra.mxu0 0
        %2727 = vmatprep.subr.bf16.mxu0 0
        %2728 = vmatpush1.bf16.xpose.msra.mxu0 0
        %2729 = vmatprep.subr.bf16.mxu0 0
        %2730 = vmatpush1.bf16.xpose.msra.mxu0 0
        %2731 = vmatprep.subr.bf16.mxu0 0
        %2732 = vmatpush1.bf16.xpose.msra.mxu0 0
        %2733 = vmatprep.subr.bf16.mxu0 0
        %2734 = vmatpush1.bf16.xpose.msra.mxu0 0
        %2735 = vmatprep.subr.bf16.mxu0 0
        %2736 = vmatpush1.bf16.xpose.msra.mxu0 0
        %2737 = vmatprep.mubr.bf16.mxu0 0
        %2738 = vmatmul.mubr.bf16.gmra.mrb[0].mxu0 %v2700
        %v2739 = vpop.f32.mrb[0].mxu0
        %v2740 = vadd.f32 0.0, %v2739
        %v2741 = vpop.f32.mrb[0].mxu0
        %v2742 = vpop.f32.mrb[0].mxu0
        %v2743 = vpop.f32.mrb[0].mxu0
        %2744 = vdwg.mxu0
        %2745 = vrot.lane.b32.xlu0 %v1863, 112
        %v2746 = vpop.permute.xlu0 %2745
        %2747 = vrot.lane.b32.xlu0 %v1863, 80
        %v2748 = vpop.permute.xlu0 %2747
        %v2750 = vsel %vm1867, %v2746, 0
        %v2753 = vsel %vm1867, %v2748, 0
        %2755 = vmatprep.subr.bf16.mxu0 0
        %2756 = vmatpush1.bf16.xpose.msra.mxu0 %v2753
        %2757 = vmatprep.subr.bf16.mxu0 0
        %2758 = vmatpush1.bf16.xpose.msra.mxu0 0
        %2759 = vmatprep.subr.bf16.mxu0 0
        %2760 = vmatpush1.bf16.xpose.msra.mxu0 0
        %2761 = vmatprep.subr.bf16.mxu0 0
        %2762 = vmatpush1.bf16.xpose.msra.mxu0 0
        %2763 = vmatprep.subr.bf16.mxu0 0
        %2764 = vmatpush1.bf16.xpose.msra.mxu0 0
        %2765 = vmatprep.subr.bf16.mxu0 0
        %2766 = vmatpush1.bf16.xpose.msra.mxu0 0
        %2767 = vmatprep.subr.bf16.mxu0 0
        %2768 = vmatpush1.bf16.xpose.msra.mxu0 0
        %2769 = vmatprep.subr.bf16.mxu0 0
        %2770 = vmatpush1.bf16.xpose.msra.mxu0 0
        %2771 = vmatprep.subr.bf16.mxu0 0
        %2772 = vmatpush1.bf16.xpose.msra.mxu0 0
        %2773 = vmatprep.subr.bf16.mxu0 0
        %2774 = vmatpush1.bf16.xpose.msra.mxu0 0
        %2775 = vmatprep.subr.bf16.mxu0 0
        %2776 = vmatpush1.bf16.xpose.msra.mxu0 0
        %2777 = vmatprep.subr.bf16.mxu0 0
        %2778 = vmatpush1.bf16.xpose.msra.mxu0 0
        %2779 = vmatprep.subr.bf16.mxu0 0
        %2780 = vmatpush1.bf16.xpose.msra.mxu0 0
        %2781 = vmatprep.subr.bf16.mxu0 0
        %2782 = vmatpush1.bf16.xpose.msra.mxu0 0
        %2783 = vmatprep.subr.bf16.mxu0 0
        %2784 = vmatpush1.bf16.xpose.msra.mxu0 0
        %2785 = vmatprep.subr.bf16.mxu0 0
        %2786 = vmatpush1.bf16.xpose.msra.mxu0 0
        %2787 = vmatprep.mubr.bf16.mxu0 0
        %2788 = vmatmul.mubr.bf16.gmra.mrb[0].mxu0 %v2750
        %v2789 = vpop.f32.mrb[0].mxu0
        %v2790 = vadd.f32 0.0, %v2789
        %v2791 = vpop.f32.mrb[0].mxu0
        %v2792 = vpop.f32.mrb[0].mxu0
        %v2793 = vpop.f32.mrb[0].mxu0
        %2794 = vdwg.mxu0
        %v2795 = vsel %vm1963, %v2740, -inf
        %2796 = vmax.xlane.f32.xlu0 %v2795
        %v2797 = vpop.xlane.xlu0 %2796
        %v2798 = vsel %vm1963, %v2790, -inf
        %2799 = vmax.xlane.f32.xlu0 %v2798
        %v2800 = vpop.xlane.xlu0 %2799
        %v2801 = vsub.f32 %v2740, %v2797
        %v2802 = vsub.f32 %v2790, %v2800
        %v2803 = vmul.f32 %v2801, 1.442695
        %v2804 = vpow.pop %v2803
        %v2805 = vmul.f32 %v2802, 1.442695
        %v2806 = vpow.pop %v2805
        %v2807 = vsel %vm1963, %v2804, 0.0
        %2808 = vadd.xlane.f32.xlu0 %v2807
        %v2809 = vpop.xlane.xlu0 %2808
        %v2810 = vsel %vm1963, %v2806, 0.0
        %2811 = vadd.xlane.f32.xlu0 %v2810
        %v2812 = vpop.xlane.xlu0 %2811
        %v2813 = vrcp.pop %v2809
        %v2814 = vmul.f32 %v2804, %v2813
        %v2815 = vrcp.pop %v2812
        %v2816 = vmul.f32 %v2806, %v2815
        %v2817 = vpack.c.bf16 %v2814, %v2814
        %v2818 = vpack.c.bf16 %v2816, %v2816
        %2819 = vrot.lane.b32.xlu0 %v1862, 48
        %v2820 = vpop.permute.xlu0 %2819
        %v2822 = vsel %vm1990, %v2817, 0
        %v2825 = vand.u32 %v2820, %v1997
        %2827 = vmatprep.subr.bf16.mxu0 0
        %2828 = vmatpush1.bf16.msra.mxu0 %v2825
        %2829 = vmatprep.subr.bf16.mxu0 0
        %2830 = vmatpush1.bf16.msra.mxu0 0
        %2831 = vmatprep.subr.bf16.mxu0 0
        %2832 = vmatpush1.bf16.msra.mxu0 0
        %2833 = vmatprep.subr.bf16.mxu0 0
        %2834 = vmatpush1.bf16.msra.mxu0 0
        %2835 = vmatprep.subr.bf16.mxu0 0
        %2836 = vmatpush1.bf16.msra.mxu0 0
        %2837 = vmatprep.subr.bf16.mxu0 0
        %2838 = vmatpush1.bf16.msra.mxu0 0
        %2839 = vmatprep.subr.bf16.mxu0 0
        %2840 = vmatpush1.bf16.msra.mxu0 0
        %2841 = vmatprep.subr.bf16.mxu0 0
        %2842 = vmatpush1.bf16.msra.mxu0 0
        %2843 = vmatprep.subr.bf16.mxu0 0
        %2844 = vmatpush1.bf16.msra.mxu0 0
        %2845 = vmatprep.subr.bf16.mxu0 0
        %2846 = vmatpush1.bf16.msra.mxu0 0
        %2847 = vmatprep.subr.bf16.mxu0 0
        %2848 = vmatpush1.bf16.msra.mxu0 0
        %2849 = vmatprep.subr.bf16.mxu0 0
        %2850 = vmatpush1.bf16.msra.mxu0 0
        %2851 = vmatprep.subr.bf16.mxu0 0
        %2852 = vmatpush1.bf16.msra.mxu0 0
        %2853 = vmatprep.subr.bf16.mxu0 0
        %2854 = vmatpush1.bf16.msra.mxu0 0
        %2855 = vmatprep.subr.bf16.mxu0 0
        %2856 = vmatpush1.bf16.msra.mxu0 0
        %2857 = vmatprep.subr.bf16.mxu0 0
        %2858 = vmatpush1.bf16.msra.mxu0 0
        %2859 = vmatprep.mubr.bf16.mxu0 0
        %2860 = vmatmul.mubr.bf16.gmra.mrb[0].mxu0 %v2822
        %v2861 = vpop.f32.mrb[0].mxu0
        %v2862 = vadd.f32 0.0, %v2861
        %v2863 = vpop.f32.mrb[0].mxu0
        %v2864 = vpop.f32.mrb[0].mxu0
        %v2865 = vpop.f32.mrb[0].mxu0
        %2866 = vdwg.mxu0
        %2867 = vrot.lane.b32.xlu0 %v1863, 48
        %v2868 = vpop.permute.xlu0 %2867
        %v2870 = vsel %vm1990, %v2818, 0
        %v2873 = vand.u32 %v2868, %v1997
        %2875 = vmatprep.subr.bf16.mxu0 0
        %2876 = vmatpush1.bf16.msra.mxu0 %v2873
        %2877 = vmatprep.subr.bf16.mxu0 0
        %2878 = vmatpush1.bf16.msra.mxu0 0
        %2879 = vmatprep.subr.bf16.mxu0 0
        %2880 = vmatpush1.bf16.msra.mxu0 0
        %2881 = vmatprep.subr.bf16.mxu0 0
        %2882 = vmatpush1.bf16.msra.mxu0 0
        %2883 = vmatprep.subr.bf16.mxu0 0
        %2884 = vmatpush1.bf16.msra.mxu0 0
        %2885 = vmatprep.subr.bf16.mxu0 0
        %2886 = vmatpush1.bf16.msra.mxu0 0
        %2887 = vmatprep.subr.bf16.mxu0 0
        %2888 = vmatpush1.bf16.msra.mxu0 0
        %2889 = vmatprep.subr.bf16.mxu0 0
        %2890 = vmatpush1.bf16.msra.mxu0 0
        %2891 = vmatprep.subr.bf16.mxu0 0
        %2892 = vmatpush1.bf16.msra.mxu0 0
        %2893 = vmatprep.subr.bf16.mxu0 0
        %2894 = vmatpush1.bf16.msra.mxu0 0
        %2895 = vmatprep.subr.bf16.mxu0 0
        %2896 = vmatpush1.bf16.msra.mxu0 0
        %2897 = vmatprep.subr.bf16.mxu0 0
        %2898 = vmatpush1.bf16.msra.mxu0 0
        %2899 = vmatprep.subr.bf16.mxu0 0
        %2900 = vmatpush1.bf16.msra.mxu0 0
        %2901 = vmatprep.subr.bf16.mxu0 0
        %2902 = vmatpush1.bf16.msra.mxu0 0
        %2903 = vmatprep.subr.bf16.mxu0 0
        %2904 = vmatpush1.bf16.msra.mxu0 0
        %2905 = vmatprep.subr.bf16.mxu0 0
        %2906 = vmatpush1.bf16.msra.mxu0 0
        %2907 = vmatprep.mubr.bf16.mxu0 0
        %2908 = vmatmul.mubr.bf16.gmra.mrb[0].mxu0 %v2870
        %v2909 = vpop.f32.mrb[0].mxu0
        %v2910 = vadd.f32 0.0, %v2909
        %v2911 = vpop.f32.mrb[0].mxu0
        %v2912 = vpop.f32.mrb[0].mxu0
        %v2913 = vpop.f32.mrb[0].mxu0
        %2914 = vdwg.mxu0
        %v2915 = vpack.c.bf16 %v2862, %v2862
        %v2916 = vpack.c.bf16 %v2910, %v2910
        %v2920 = vunpack.c.l.s4 1966171168
        %v2921 = vunpack.c.0.s8 %v2920
        %v2922 = vlaneseq
        %v2923 = vshrl.u32 %v2922, 7
        %v2924 = vsub.s32 %v2921, %v2923
        %v2925 = vrot.slane %v2915, %v2924
        %v2926 = vcombine.high %v2925, %v2925
        %v2928 = vunpack.c.l.s4 1966171168
        %v2929 = vunpack.c.0.s8 %v2928
        %v2930 = vlaneseq
        %v2931 = vshrl.u32 %v2930, 7
        %v2932 = vsub.s32 %v2929, %v2931
        %v2933 = vrot.slane %v2925, %v2932
        %v2935 = vunpack.c.l.s4 1966171168
        %v2936 = vunpack.c.0.s8 %v2935
        %v2937 = vlaneseq
        %v2938 = vshrl.u32 %v2937, 7
        %v2939 = vsub.s32 %v2936, %v2938
        %v2940 = vrot.slane %v2926, %v2939
        %v2941 = vcombine.high %v2933, %v2933
        %v2943 = vunpack.c.l.s4 1966171168
        %v2944 = vunpack.c.0.s8 %v2943
        %v2945 = vlaneseq
        %v2946 = vshrl.u32 %v2945, 7
        %v2947 = vsub.s32 %v2944, %v2946
        %v2948 = vrot.slane %v2916, %v2947
        %v2949 = vcombine.high %v2948, %v2948
        %v2951 = vunpack.c.l.s4 1966171168
        %v2952 = vunpack.c.0.s8 %v2951
        %v2953 = vlaneseq
        %v2954 = vshrl.u32 %v2953, 7
        %v2955 = vsub.s32 %v2952, %v2954
        %v2956 = vrot.slane %v2948, %v2955
        %v2958 = vunpack.c.l.s4 1966171168
        %v2959 = vunpack.c.0.s8 %v2958
        %v2960 = vlaneseq
        %v2961 = vshrl.u32 %v2960, 7
        %v2962 = vsub.s32 %v2959, %v2961
        %v2963 = vrot.slane %v2949, %v2962
        %v2964 = vcombine.high %v2956, %v2956
        %v2965 = vunpack.i.l.s16 %v2933
        %v2966 = vunpack.i.h.s16 %v2933
        %v2967 = vunpack.i.l.s16 %v2940
        %v2968 = vunpack.i.h.s16 %v2940
        %v2969 = vunpack.i.l.s16 %v2941
        %v2970 = vunpack.i.l.s16 %v2956
        %v2971 = vunpack.i.h.s16 %v2956
        %v2972 = vunpack.i.l.s16 %v2963
        %v2973 = vunpack.i.h.s16 %v2963
        %v2974 = vunpack.i.l.s16 %v2964
        %v2975 = vpack.i.b16 %v2966, %v2965
        %v2976 = vpack.i.b16 %v2968, %v2967
        %v2977 = vpack.i.b16 %v2970, %v2969
        %v2978 = vpack.i.b16 %v2972, %v2971
        %v2979 = vpack.i.b16 %v2974, %v2973
        %v2980 = vcombine.low %v2975, %v2976
        %v2981 = vcombine.low %v2977, %v2978
        %v2983 = vunpack.c.l.s4 1966171168
        %v2984 = vunpack.c.0.s8 %v2983
        %v2985 = vlaneseq
        %v2986 = vshrl.u32 %v2985, 7
        %v2987 = vsub.s32 %v2984, %v2986
        %v2988 = vrot.slane %v2980, %v2987
        %v2990 = vunpack.c.l.s4 1966171168
        %v2991 = vunpack.c.0.s8 %v2990
        %v2992 = vlaneseq
        %v2993 = vshrl.u32 %v2992, 7
        %v2994 = vsub.s32 %v2991, %v2993
        %v2995 = vrot.slane %v2981, %v2994
        %v2997 = vunpack.c.l.s4 1966171168
        %v2998 = vunpack.c.0.s8 %v2997
        %v2999 = vlaneseq
        %v3000 = vshrl.u32 %v2999, 7
        %v3001 = vsub.s32 %v2998, %v3000
        %v3002 = vrot.slane %v2979, %v3001
        %v3003 = vcombine.low %v2988, %v2995
        %v3005 = vunpack.c.l.s4 1966171168
        %v3006 = vunpack.c.0.s8 %v3005
        %v3007 = vlaneseq
        %v3008 = vshrl.u32 %v3007, 7
        %v3009 = vsub.s32 %v3006, %v3008
        %v3010 = vrot.slane %v3003, %v3009
        %v3012 = vunpack.c.l.s4 1966171168
        %v3013 = vunpack.c.0.s8 %v3012
        %v3014 = vlaneseq
        %v3015 = vshrl.u32 %v3014, 7
        %v3016 = vsub.s32 %v3013, %v3015
        %v3017 = vrot.slane %v3002, %v3016
        %v3018 = vcombine.low %v3010, %v3017
        %v3020 = vsel %vm1867, %v3018, 0
        %v3023 = vsel %vm2418, %v1780, 0
        %3025 = vmatprep.subr.bf16.mxu0 0
        %3026 = vmatpush1.bf16.msra.mxu0 %v3023
        %3027 = vmatprep.subr.bf16.mxu0 0
        %3028 = vmatpush1.bf16.msra.mxu0 0
        %3029 = vmatprep.subr.bf16.mxu0 0
        %3030 = vmatpush1.bf16.msra.mxu0 0
        %3031 = vmatprep.subr.bf16.mxu0 0
        %3032 = vmatpush1.bf16.msra.mxu0 0
        %3033 = vmatprep.subr.bf16.mxu0 0
        %3034 = vmatpush1.bf16.msra.mxu0 0
        %3035 = vmatprep.subr.bf16.mxu0 0
        %3036 = vmatpush1.bf16.msra.mxu0 0
        %3037 = vmatprep.subr.bf16.mxu0 0
        %3038 = vmatpush1.bf16.msra.mxu0 0
        %3039 = vmatprep.subr.bf16.mxu0 0
        %3040 = vmatpush1.bf16.msra.mxu0 0
        %3041 = vmatprep.subr.bf16.mxu0 0
        %3042 = vmatpush1.bf16.msra.mxu0 0
        %3043 = vmatprep.subr.bf16.mxu0 0
        %3044 = vmatpush1.bf16.msra.mxu0 0
        %3045 = vmatprep.subr.bf16.mxu0 0
        %3046 = vmatpush1.bf16.msra.mxu0 0
        %3047 = vmatprep.subr.bf16.mxu0 0
        %3048 = vmatpush1.bf16.msra.mxu0 0
        %3049 = vmatprep.subr.bf16.mxu0 0
        %3050 = vmatpush1.bf16.msra.mxu0 0
        %3051 = vmatprep.subr.bf16.mxu0 0
        %3052 = vmatpush1.bf16.msra.mxu0 0
        %3053 = vmatprep.subr.bf16.mxu0 0
        %3054 = vmatpush1.bf16.msra.mxu0 0
        %3055 = vmatprep.subr.bf16.mxu0 0
        %3056 = vmatpush1.bf16.msra.mxu0 0
        %3057 = vmatprep.mubr.bf16.mxu0 0
        %3058 = vmatmul.mubr.bf16.gmra.mrb[0].mxu0 %v3020
        %v3059 = vpop.f32.mrb[0].mxu0
        %v3060 = vadd.f32 0.0, %v3059
        %v3061 = vpop.f32.mrb[0].mxu0
        %v3062 = vpop.f32.mrb[0].mxu0
        %v3063 = vadd.f32 0.0, %v3062
        %v3064 = vpop.f32.mrb[0].mxu0
        %3065 = vdwg.mxu0
        %v3068 = vcombine.high %v3060, %v3060
        %v3070 = vunpack.c.l.s4 1966171168
        %v3071 = vunpack.c.0.s8 %v3070
        %v3072 = vlaneseq
        %v3073 = vshrl.u32 %v3072, 7
        %v3074 = vsub.s32 %v3071, %v3073
        %v3075 = vrot.slane %v3060, %v3074
        %v3077 = vunpack.c.l.s4 1966171168
        %v3078 = vunpack.c.0.s8 %v3077
        %v3079 = vlaneseq
        %v3080 = vshrl.u32 %v3079, 7
        %v3081 = vsub.s32 %v3078, %v3080
        %v3082 = vrot.slane %v3068, %v3081
        %v3083 = vcombine.high %v3075, %v3075
        %v3084 = vcombine.high %v3082, %v3082
        %v3086 = vunpack.c.l.s4 1966171168
        %v3087 = vunpack.c.0.s8 %v3086
        %v3088 = vlaneseq
        %v3089 = vshrl.u32 %v3088, 7
        %v3090 = vsub.s32 %v3087, %v3089
        %v3091 = vrot.slane %v3075, %v3090
        %v3093 = vunpack.c.l.s4 1966171168
        %v3094 = vunpack.c.0.s8 %v3093
        %v3095 = vlaneseq
        %v3096 = vshrl.u32 %v3095, 7
        %v3097 = vsub.s32 %v3094, %v3096
        %v3098 = vrot.slane %v3082, %v3097
        %v3100 = vunpack.c.l.s4 1966171168
        %v3101 = vunpack.c.0.s8 %v3100
        %v3102 = vlaneseq
        %v3103 = vshrl.u32 %v3102, 7
        %v3104 = vsub.s32 %v3101, %v3103
        %v3105 = vrot.slane %v3083, %v3104
        %v3107 = vunpack.c.l.s4 1966171168
        %v3108 = vunpack.c.0.s8 %v3107
        %v3109 = vlaneseq
        %v3110 = vshrl.u32 %v3109, 7
        %v3111 = vsub.s32 %v3108, %v3110
        %v3112 = vrot.slane %v3084, %v3111
        %v3113 = vcombine.high %v3091, %v3091
        %v3114 = vcombine.high %v3098, %v3098
        %v3115 = vcombine.high %v3105, %v3105
        %v3116 = vcombine.high %v3112, %v3112
        %v3118 = vunpack.c.l.s4 1966171168
        %v3119 = vunpack.c.0.s8 %v3118
        %v3120 = vlaneseq
        %v3121 = vshrl.u32 %v3120, 7
        %v3122 = vsub.s32 %v3119, %v3121
        %v3123 = vrot.slane %v3063, %v3122
        %v3124 = vcombine.high %v3123, %v3123
        %v3126 = vunpack.c.l.s4 1966171168
        %v3127 = vunpack.c.0.s8 %v3126
        %v3128 = vlaneseq
        %v3129 = vshrl.u32 %v3128, 7
        %v3130 = vsub.s32 %v3127, %v3129
        %v3131 = vrot.slane %v3123, %v3130
        %v3133 = vunpack.c.l.s4 1966171168
        %v3134 = vunpack.c.0.s8 %v3133
        %v3135 = vlaneseq
        %v3136 = vshrl.u32 %v3135, 7
        %v3137 = vsub.s32 %v3134, %v3136
        %v3138 = vrot.slane %v3124, %v3137
        %v3149 = vadd.f32 %v2637, %v3091
        %v3150 = vadd.f32 %v2651, %v3105
        %v3151 = vadd.f32 %v2659, %v3113
        %v3152 = vadd.f32 %v2661, %v3115
        %v3153 = vadd.f32 %v2644, %v3098
        %v3154 = vadd.f32 %v2658, %v3112
        %v3155 = vadd.f32 %v2660, %v3114
        %v3156 = vadd.f32 %v2662, %v3116
        %v3157 = vadd.f32 %v2677, %v3131
        %v3158 = vadd.f32 %v2684, %v3138
        %3159 = vrot.lane.b32.xlu0 %v1862, 104
        %v3160 = vpop.permute.xlu0 %3159
        %3161 = vrot.lane.b32.xlu0 %v1862, 72
        %v3162 = vpop.permute.xlu0 %3161
        %v3164 = vsel %vm1867, %v3160, 0
        %v3167 = vsel %vm1867, %v3162, 0
        %3169 = vmatprep.subr.bf16.mxu0 0
        %3170 = vmatpush1.bf16.xpose.msra.mxu0 %v3167
        %3171 = vmatprep.subr.bf16.mxu0 0
        %3172 = vmatpush1.bf16.xpose.msra.mxu0 0
        %3173 = vmatprep.subr.bf16.mxu0 0
        %3174 = vmatpush1.bf16.xpose.msra.mxu0 0
        %3175 = vmatprep.subr.bf16.mxu0 0
        %3176 = vmatpush1.bf16.xpose.msra.mxu0 0
        %3177 = vmatprep.subr.bf16.mxu0 0
        %3178 = vmatpush1.bf16.xpose.msra.mxu0 0
        %3179 = vmatprep.subr.bf16.mxu0 0
        %3180 = vmatpush1.bf16.xpose.msra.mxu0 0
        %3181 = vmatprep.subr.bf16.mxu0 0
        %3182 = vmatpush1.bf16.xpose.msra.mxu0 0
        %3183 = vmatprep.subr.bf16.mxu0 0
        %3184 = vmatpush1.bf16.xpose.msra.mxu0 0
        %3185 = vmatprep.subr.bf16.mxu0 0
        %3186 = vmatpush1.bf16.xpose.msra.mxu0 0
        %3187 = vmatprep.subr.bf16.mxu0 0
        %3188 = vmatpush1.bf16.xpose.msra.mxu0 0
        %3189 = vmatprep.subr.bf16.mxu0 0
        %3190 = vmatpush1.bf16.xpose.msra.mxu0 0
        %3191 = vmatprep.subr.bf16.mxu0 0
        %3192 = vmatpush1.bf16.xpose.msra.mxu0 0
        %3193 = vmatprep.subr.bf16.mxu0 0
        %3194 = vmatpush1.bf16.xpose.msra.mxu0 0
        %3195 = vmatprep.subr.bf16.mxu0 0
        %3196 = vmatpush1.bf16.xpose.msra.mxu0 0
        %3197 = vmatprep.subr.bf16.mxu0 0
        %3198 = vmatpush1.bf16.xpose.msra.mxu0 0
        %3199 = vmatprep.subr.bf16.mxu0 0
        %3200 = vmatpush1.bf16.xpose.msra.mxu0 0
        %3201 = vmatprep.mubr.bf16.mxu0 0
        %3202 = vmatmul.mubr.bf16.gmra.mrb[0].mxu0 %v3164
        %v3203 = vpop.f32.mrb[0].mxu0
        %v3204 = vadd.f32 0.0, %v3203
        %v3205 = vpop.f32.mrb[0].mxu0
        %v3206 = vpop.f32.mrb[0].mxu0
        %v3207 = vpop.f32.mrb[0].mxu0
        %3208 = vdwg.mxu0
        %3209 = vrot.lane.b32.xlu0 %v1863, 104
        %v3210 = vpop.permute.xlu0 %3209
        %3211 = vrot.lane.b32.xlu0 %v1863, 72
        %v3212 = vpop.permute.xlu0 %3211
        %v3214 = vsel %vm1867, %v3210, 0
        %v3217 = vsel %vm1867, %v3212, 0
        %3219 = vmatprep.subr.bf16.mxu0 0
        %3220 = vmatpush1.bf16.xpose.msra.mxu0 %v3217
        %3221 = vmatprep.subr.bf16.mxu0 0
        %3222 = vmatpush1.bf16.xpose.msra.mxu0 0
        %3223 = vmatprep.subr.bf16.mxu0 0
        %3224 = vmatpush1.bf16.xpose.msra.mxu0 0
        %3225 = vmatprep.subr.bf16.mxu0 0
        %3226 = vmatpush1.bf16.xpose.msra.mxu0 0
        %3227 = vmatprep.subr.bf16.mxu0 0
        %3228 = vmatpush1.bf16.xpose.msra.mxu0 0
        %3229 = vmatprep.subr.bf16.mxu0 0
        %3230 = vmatpush1.bf16.xpose.msra.mxu0 0
        %3231 = vmatprep.subr.bf16.mxu0 0
        %3232 = vmatpush1.bf16.xpose.msra.mxu0 0
        %3233 = vmatprep.subr.bf16.mxu0 0
        %3234 = vmatpush1.bf16.xpose.msra.mxu0 0
        %3235 = vmatprep.subr.bf16.mxu0 0
        %3236 = vmatpush1.bf16.xpose.msra.mxu0 0
        %3237 = vmatprep.subr.bf16.mxu0 0
        %3238 = vmatpush1.bf16.xpose.msra.mxu0 0
        %3239 = vmatprep.subr.bf16.mxu0 0
        %3240 = vmatpush1.bf16.xpose.msra.mxu0 0
        %3241 = vmatprep.subr.bf16.mxu0 0
        %3242 = vmatpush1.bf16.xpose.msra.mxu0 0
        %3243 = vmatprep.subr.bf16.mxu0 0
        %3244 = vmatpush1.bf16.xpose.msra.mxu0 0
        %3245 = vmatprep.subr.bf16.mxu0 0
        %3246 = vmatpush1.bf16.xpose.msra.mxu0 0
        %3247 = vmatprep.subr.bf16.mxu0 0
        %3248 = vmatpush1.bf16.xpose.msra.mxu0 0
        %3249 = vmatprep.subr.bf16.mxu0 0
        %3250 = vmatpush1.bf16.xpose.msra.mxu0 0
        %3251 = vmatprep.mubr.bf16.mxu0 0
        %3252 = vmatmul.mubr.bf16.gmra.mrb[0].mxu0 %v3214
        %v3253 = vpop.f32.mrb[0].mxu0
        %v3254 = vadd.f32 0.0, %v3253
        %v3255 = vpop.f32.mrb[0].mxu0
        %v3256 = vpop.f32.mrb[0].mxu0
        %v3257 = vpop.f32.mrb[0].mxu0
        %3258 = vdwg.mxu0
        %v3259 = vsel %vm1963, %v3204, -inf
        %3260 = vmax.xlane.f32.xlu0 %v3259
        %v3261 = vpop.xlane.xlu0 %3260
        %v3262 = vsel %vm1963, %v3254, -inf
        %3263 = vmax.xlane.f32.xlu0 %v3262
        %v3264 = vpop.xlane.xlu0 %3263
        %v3265 = vsub.f32 %v3204, %v3261
        %v3266 = vsub.f32 %v3254, %v3264
        %v3267 = vmul.f32 %v3265, 1.442695
        %v3268 = vpow.pop %v3267
        %v3269 = vmul.f32 %v3266, 1.442695
        %v3270 = vpow.pop %v3269
        %v3271 = vsel %vm1963, %v3268, 0.0
        %3272 = vadd.xlane.f32.xlu0 %v3271
        %v3273 = vpop.xlane.xlu0 %3272
        %v3274 = vsel %vm1963, %v3270, 0.0
        %3275 = vadd.xlane.f32.xlu0 %v3274
        %v3276 = vpop.xlane.xlu0 %3275
        %v3277 = vrcp.pop %v3273
        %v3278 = vmul.f32 %v3268, %v3277
        %v3279 = vrcp.pop %v3276
        %v3280 = vmul.f32 %v3270, %v3279
        %v3281 = vpack.c.bf16 %v3278, %v3278
        %v3282 = vpack.c.bf16 %v3280, %v3280
        %3283 = vrot.lane.b32.xlu0 %v1862, 40
        %v3284 = vpop.permute.xlu0 %3283
        %v3286 = vsel %vm1990, %v3281, 0
        %v3289 = vand.u32 %v3284, %v1997
        %3291 = vmatprep.subr.bf16.mxu0 0
        %3292 = vmatpush1.bf16.msra.mxu0 %v3289
        %3293 = vmatprep.subr.bf16.mxu0 0
        %3294 = vmatpush1.bf16.msra.mxu0 0
        %3295 = vmatprep.subr.bf16.mxu0 0
        %3296 = vmatpush1.bf16.msra.mxu0 0
        %3297 = vmatprep.subr.bf16.mxu0 0
        %3298 = vmatpush1.bf16.msra.mxu0 0
        %3299 = vmatprep.subr.bf16.mxu0 0
        %3300 = vmatpush1.bf16.msra.mxu0 0
        %3301 = vmatprep.subr.bf16.mxu0 0
        %3302 = vmatpush1.bf16.msra.mxu0 0
        %3303 = vmatprep.subr.bf16.mxu0 0
        %3304 = vmatpush1.bf16.msra.mxu0 0
        %3305 = vmatprep.subr.bf16.mxu0 0
        %3306 = vmatpush1.bf16.msra.mxu0 0
        %3307 = vmatprep.subr.bf16.mxu0 0
        %3308 = vmatpush1.bf16.msra.mxu0 0
        %3309 = vmatprep.subr.bf16.mxu0 0
        %3310 = vmatpush1.bf16.msra.mxu0 0
        %3311 = vmatprep.subr.bf16.mxu0 0
        %3312 = vmatpush1.bf16.msra.mxu0 0
        %3313 = vmatprep.subr.bf16.mxu0 0
        %3314 = vmatpush1.bf16.msra.mxu0 0
        %3315 = vmatprep.subr.bf16.mxu0 0
        %3316 = vmatpush1.bf16.msra.mxu0 0
        %3317 = vmatprep.subr.bf16.mxu0 0
        %3318 = vmatpush1.bf16.msra.mxu0 0
        %3319 = vmatprep.subr.bf16.mxu0 0
        %3320 = vmatpush1.bf16.msra.mxu0 0
        %3321 = vmatprep.subr.bf16.mxu0 0
        %3322 = vmatpush1.bf16.msra.mxu0 0
        %3323 = vmatprep.mubr.bf16.mxu0 0
        %3324 = vmatmul.mubr.bf16.gmra.mrb[0].mxu0 %v3286
        %v3325 = vpop.f32.mrb[0].mxu0
        %v3326 = vadd.f32 0.0, %v3325
        %v3327 = vpop.f32.mrb[0].mxu0
        %v3328 = vpop.f32.mrb[0].mxu0
        %v3329 = vpop.f32.mrb[0].mxu0
        %3330 = vdwg.mxu0
        %3331 = vrot.lane.b32.xlu0 %v1863, 40
        %v3332 = vpop.permute.xlu0 %3331
        %v3334 = vsel %vm1990, %v3282, 0
        %v3337 = vand.u32 %v3332, %v1997
        %3339 = vmatprep.subr.bf16.mxu0 0
        %3340 = vmatpush1.bf16.msra.mxu0 %v3337
        %3341 = vmatprep.subr.bf16.mxu0 0
        %3342 = vmatpush1.bf16.msra.mxu0 0
        %3343 = vmatprep.subr.bf16.mxu0 0
        %3344 = vmatpush1.bf16.msra.mxu0 0
        %3345 = vmatprep.subr.bf16.mxu0 0
        %3346 = vmatpush1.bf16.msra.mxu0 0
        %3347 = vmatprep.subr.bf16.mxu0 0
        %3348 = vmatpush1.bf16.msra.mxu0 0
        %3349 = vmatprep.subr.bf16.mxu0 0
        %3350 = vmatpush1.bf16.msra.mxu0 0
        %3351 = vmatprep.subr.bf16.mxu0 0
        %3352 = vmatpush1.bf16.msra.mxu0 0
        %3353 = vmatprep.subr.bf16.mxu0 0
        %3354 = vmatpush1.bf16.msra.mxu0 0
        %3355 = vmatprep.subr.bf16.mxu0 0
        %3356 = vmatpush1.bf16.msra.mxu0 0
        %3357 = vmatprep.subr.bf16.mxu0 0
        %3358 = vmatpush1.bf16.msra.mxu0 0
        %3359 = vmatprep.subr.bf16.mxu0 0
        %3360 = vmatpush1.bf16.msra.mxu0 0
        %3361 = vmatprep.subr.bf16.mxu0 0
        %3362 = vmatpush1.bf16.msra.mxu0 0
        %3363 = vmatprep.subr.bf16.mxu0 0
        %3364 = vmatpush1.bf16.msra.mxu0 0
        %3365 = vmatprep.subr.bf16.mxu0 0
        %3366 = vmatpush1.bf16.msra.mxu0 0
        %3367 = vmatprep.subr.bf16.mxu0 0
        %3368 = vmatpush1.bf16.msra.mxu0 0
        %3369 = vmatprep.subr.bf16.mxu0 0
        %3370 = vmatpush1.bf16.msra.mxu0 0
        %3371 = vmatprep.mubr.bf16.mxu0 0
        %3372 = vmatmul.mubr.bf16.gmra.mrb[0].mxu0 %v3334
        %v3373 = vpop.f32.mrb[0].mxu0
        %v3374 = vadd.f32 0.0, %v3373
        %v3375 = vpop.f32.mrb[0].mxu0
        %v3376 = vpop.f32.mrb[0].mxu0
        %v3377 = vpop.f32.mrb[0].mxu0
        %3378 = vdwg.mxu0
        %v3379 = vpack.c.bf16 %v3326, %v3326
        %v3380 = vpack.c.bf16 %v3374, %v3374
        %v3384 = vunpack.c.l.s4 1966171168
        %v3385 = vunpack.c.0.s8 %v3384
        %v3386 = vlaneseq
        %v3387 = vshrl.u32 %v3386, 7
        %v3388 = vsub.s32 %v3385, %v3387
        %v3389 = vrot.slane %v3379, %v3388
        %v3390 = vcombine.high %v3389, %v3389
        %v3392 = vunpack.c.l.s4 1966171168
        %v3393 = vunpack.c.0.s8 %v3392
        %v3394 = vlaneseq
        %v3395 = vshrl.u32 %v3394, 7
        %v3396 = vsub.s32 %v3393, %v3395
        %v3397 = vrot.slane %v3389, %v3396
        %v3399 = vunpack.c.l.s4 1966171168
        %v3400 = vunpack.c.0.s8 %v3399
        %v3401 = vlaneseq
        %v3402 = vshrl.u32 %v3401, 7
        %v3403 = vsub.s32 %v3400, %v3402
        %v3404 = vrot.slane %v3390, %v3403
        %v3405 = vcombine.high %v3397, %v3397
        %v3407 = vunpack.c.l.s4 1966171168
        %v3408 = vunpack.c.0.s8 %v3407
        %v3409 = vlaneseq
        %v3410 = vshrl.u32 %v3409, 7
        %v3411 = vsub.s32 %v3408, %v3410
        %v3412 = vrot.slane %v3380, %v3411
        %v3413 = vcombine.high %v3412, %v3412
        %v3415 = vunpack.c.l.s4 1966171168
        %v3416 = vunpack.c.0.s8 %v3415
        %v3417 = vlaneseq
        %v3418 = vshrl.u32 %v3417, 7
        %v3419 = vsub.s32 %v3416, %v3418
        %v3420 = vrot.slane %v3412, %v3419
        %v3422 = vunpack.c.l.s4 1966171168
        %v3423 = vunpack.c.0.s8 %v3422
        %v3424 = vlaneseq
        %v3425 = vshrl.u32 %v3424, 7
        %v3426 = vsub.s32 %v3423, %v3425
        %v3427 = vrot.slane %v3413, %v3426
        %v3428 = vcombine.high %v3420, %v3420
        %v3429 = vunpack.i.l.s16 %v3397
        %v3430 = vunpack.i.h.s16 %v3397
        %v3431 = vunpack.i.l.s16 %v3404
        %v3432 = vunpack.i.h.s16 %v3404
        %v3433 = vunpack.i.l.s16 %v3405
        %v3434 = vunpack.i.l.s16 %v3420
        %v3435 = vunpack.i.h.s16 %v3420
        %v3436 = vunpack.i.l.s16 %v3427
        %v3437 = vunpack.i.h.s16 %v3427
        %v3438 = vunpack.i.l.s16 %v3428
        %v3439 = vpack.i.b16 %v3430, %v3429
        %v3440 = vpack.i.b16 %v3432, %v3431
        %v3441 = vpack.i.b16 %v3434, %v3433
        %v3442 = vpack.i.b16 %v3436, %v3435
        %v3443 = vpack.i.b16 %v3438, %v3437
        %v3444 = vcombine.low %v3439, %v3440
        %v3445 = vcombine.low %v3441, %v3442
        %v3447 = vunpack.c.l.s4 1966171168
        %v3448 = vunpack.c.0.s8 %v3447
        %v3449 = vlaneseq
        %v3450 = vshrl.u32 %v3449, 7
        %v3451 = vsub.s32 %v3448, %v3450
        %v3452 = vrot.slane %v3444, %v3451
        %v3454 = vunpack.c.l.s4 1966171168
        %v3455 = vunpack.c.0.s8 %v3454
        %v3456 = vlaneseq
        %v3457 = vshrl.u32 %v3456, 7
        %v3458 = vsub.s32 %v3455, %v3457
        %v3459 = vrot.slane %v3445, %v3458
        %v3461 = vunpack.c.l.s4 1966171168
        %v3462 = vunpack.c.0.s8 %v3461
        %v3463 = vlaneseq
        %v3464 = vshrl.u32 %v3463, 7
        %v3465 = vsub.s32 %v3462, %v3464
        %v3466 = vrot.slane %v3443, %v3465
        %v3467 = vcombine.low %v3452, %v3459
        %v3469 = vunpack.c.l.s4 1966171168
        %v3470 = vunpack.c.0.s8 %v3469
        %v3471 = vlaneseq
        %v3472 = vshrl.u32 %v3471, 7
        %v3473 = vsub.s32 %v3470, %v3472
        %v3474 = vrot.slane %v3467, %v3473
        %v3476 = vunpack.c.l.s4 1966171168
        %v3477 = vunpack.c.0.s8 %v3476
        %v3478 = vlaneseq
        %v3479 = vshrl.u32 %v3478, 7
        %v3480 = vsub.s32 %v3477, %v3479
        %v3481 = vrot.slane %v3466, %v3480
        %v3482 = vcombine.low %v3474, %v3481
        %v3484 = vsel %vm1867, %v3482, 0
        %v3487 = vsel %vm2418, %v1781, 0
        %3489 = vmatprep.subr.bf16.mxu0 0
        %3490 = vmatpush1.bf16.msra.mxu0 %v3487
        %3491 = vmatprep.subr.bf16.mxu0 0
        %3492 = vmatpush1.bf16.msra.mxu0 0
        %3493 = vmatprep.subr.bf16.mxu0 0
        %3494 = vmatpush1.bf16.msra.mxu0 0
        %3495 = vmatprep.subr.bf16.mxu0 0
        %3496 = vmatpush1.bf16.msra.mxu0 0
        %3497 = vmatprep.subr.bf16.mxu0 0
        %3498 = vmatpush1.bf16.msra.mxu0 0
        %3499 = vmatprep.subr.bf16.mxu0 0
        %3500 = vmatpush1.bf16.msra.mxu0 0
        %3501 = vmatprep.subr.bf16.mxu0 0
        %3502 = vmatpush1.bf16.msra.mxu0 0
        %3503 = vmatprep.subr.bf16.mxu0 0
        %3504 = vmatpush1.bf16.msra.mxu0 0
        %3505 = vmatprep.subr.bf16.mxu0 0
        %3506 = vmatpush1.bf16.msra.mxu0 0
        %3507 = vmatprep.subr.bf16.mxu0 0
        %3508 = vmatpush1.bf16.msra.mxu0 0
        %3509 = vmatprep.subr.bf16.mxu0 0
        %3510 = vmatpush1.bf16.msra.mxu0 0
        %3511 = vmatprep.subr.bf16.mxu0 0
        %3512 = vmatpush1.bf16.msra.mxu0 0
        %3513 = vmatprep.subr.bf16.mxu0 0
        %3514 = vmatpush1.bf16.msra.mxu0 0
        %3515 = vmatprep.subr.bf16.mxu0 0
        %3516 = vmatpush1.bf16.msra.mxu0 0
        %3517 = vmatprep.subr.bf16.mxu0 0
        %3518 = vmatpush1.bf16.msra.mxu0 0
        %3519 = vmatprep.subr.bf16.mxu0 0
        %3520 = vmatpush1.bf16.msra.mxu0 0
        %3521 = vmatprep.mubr.bf16.mxu0 0
        %3522 = vmatmul.mubr.bf16.gmra.mrb[0].mxu0 %v3484
        %v3523 = vpop.f32.mrb[0].mxu0
        %v3524 = vadd.f32 0.0, %v3523
        %v3525 = vpop.f32.mrb[0].mxu0
        %v3526 = vpop.f32.mrb[0].mxu0
        %v3527 = vadd.f32 0.0, %v3526
        %v3528 = vpop.f32.mrb[0].mxu0
        %3529 = vdwg.mxu0
        %v3532 = vcombine.high %v3524, %v3524
        %v3534 = vunpack.c.l.s4 1966171168
        %v3535 = vunpack.c.0.s8 %v3534
        %v3536 = vlaneseq
        %v3537 = vshrl.u32 %v3536, 7
        %v3538 = vsub.s32 %v3535, %v3537
        %v3539 = vrot.slane %v3524, %v3538
        %v3541 = vunpack.c.l.s4 1966171168
        %v3542 = vunpack.c.0.s8 %v3541
        %v3543 = vlaneseq
        %v3544 = vshrl.u32 %v3543, 7
        %v3545 = vsub.s32 %v3542, %v3544
        %v3546 = vrot.slane %v3532, %v3545
        %v3547 = vcombine.high %v3539, %v3539
        %v3548 = vcombine.high %v3546, %v3546
        %v3550 = vunpack.c.l.s4 1966171168
        %v3551 = vunpack.c.0.s8 %v3550
        %v3552 = vlaneseq
        %v3553 = vshrl.u32 %v3552, 7
        %v3554 = vsub.s32 %v3551, %v3553
        %v3555 = vrot.slane %v3539, %v3554
        %v3557 = vunpack.c.l.s4 1966171168
        %v3558 = vunpack.c.0.s8 %v3557
        %v3559 = vlaneseq
        %v3560 = vshrl.u32 %v3559, 7
        %v3561 = vsub.s32 %v3558, %v3560
        %v3562 = vrot.slane %v3546, %v3561
        %v3564 = vunpack.c.l.s4 1966171168
        %v3565 = vunpack.c.0.s8 %v3564
        %v3566 = vlaneseq
        %v3567 = vshrl.u32 %v3566, 7
        %v3568 = vsub.s32 %v3565, %v3567
        %v3569 = vrot.slane %v3547, %v3568
        %v3571 = vunpack.c.l.s4 1966171168
        %v3572 = vunpack.c.0.s8 %v3571
        %v3573 = vlaneseq
        %v3574 = vshrl.u32 %v3573, 7
        %v3575 = vsub.s32 %v3572, %v3574
        %v3576 = vrot.slane %v3548, %v3575
        %v3577 = vcombine.high %v3555, %v3555
        %v3578 = vcombine.high %v3562, %v3562
        %v3579 = vcombine.high %v3569, %v3569
        %v3580 = vcombine.high %v3576, %v3576
        %v3582 = vunpack.c.l.s4 1966171168
        %v3583 = vunpack.c.0.s8 %v3582
        %v3584 = vlaneseq
        %v3585 = vshrl.u32 %v3584, 7
        %v3586 = vsub.s32 %v3583, %v3585
        %v3587 = vrot.slane %v3527, %v3586
        %v3588 = vcombine.high %v3587, %v3587
        %v3590 = vunpack.c.l.s4 1966171168
        %v3591 = vunpack.c.0.s8 %v3590
        %v3592 = vlaneseq
        %v3593 = vshrl.u32 %v3592, 7
        %v3594 = vsub.s32 %v3591, %v3593
        %v3595 = vrot.slane %v3587, %v3594
        %v3597 = vunpack.c.l.s4 1966171168
        %v3598 = vunpack.c.0.s8 %v3597
        %v3599 = vlaneseq
        %v3600 = vshrl.u32 %v3599, 7
        %v3601 = vsub.s32 %v3598, %v3600
        %v3602 = vrot.slane %v3588, %v3601
        %v3613 = vadd.f32 %v3149, %v3555
        %v3614 = vadd.f32 %v3150, %v3569
        %v3615 = vadd.f32 %v3151, %v3577
        %v3616 = vadd.f32 %v3152, %v3579
        %v3617 = vadd.f32 %v3153, %v3562
        %v3618 = vadd.f32 %v3154, %v3576
        %v3619 = vadd.f32 %v3155, %v3578
        %v3620 = vadd.f32 %v3156, %v3580
        %v3621 = vadd.f32 %v3157, %v3595
        %v3622 = vadd.f32 %v3158, %v3602
        %v3623 = vld [vmem:[%s1183] sm:$0x1]
        %v3625 = vlaneseq
        %v3626 = vshrl.u32 %v3625, 7
        %v3627 = vsub.s32 0, %v3626
        %v3628 = vrot.slane %v3623, %v3627
        %v3629 = vcombine.high %v3628, %v3628
        %v3631 = vunpack.c.l.s4 1966171168
        %v3632 = vunpack.c.0.s8 %v3631
        %v3633 = vlaneseq
        %v3634 = vshrl.u32 %v3633, 7
        %v3635 = vsub.s32 %v3632, %v3634
        %v3636 = vrot.slane %v3628, %v3635
        %v3638 = vunpack.c.l.s4 1966171168
        %v3639 = vunpack.c.0.s8 %v3638
        %v3640 = vlaneseq
        %v3641 = vshrl.u32 %v3640, 7
        %v3642 = vsub.s32 %v3639, %v3641
        %v3643 = vrot.slane %v3629, %v3642
        %v3644 = vcombine.high %v3636, %v3636
        %v3646 = vunpack.c.l.s4 1966171168
        %v3647 = vunpack.c.0.s8 %v3646
        %v3648 = vlaneseq
        %v3649 = vshrl.u32 %v3648, 7
        %v3650 = vsub.s32 %v3647, %v3649
        %v3651 = vrot.slane %v3636, %v3650
        %v3653 = vunpack.c.l.s4 1966171168
        %v3654 = vunpack.c.0.s8 %v3653
        %v3655 = vlaneseq
        %v3656 = vshrl.u32 %v3655, 7
        %v3657 = vsub.s32 %v3654, %v3656
        %v3658 = vrot.slane %v3643, %v3657
        %v3660 = vunpack.c.l.s4 1966171168
        %v3661 = vunpack.c.0.s8 %v3660
        %v3662 = vlaneseq
        %v3663 = vshrl.u32 %v3662, 7
        %v3664 = vsub.s32 %v3661, %v3663
        %v3665 = vrot.slane %v3644, %v3664
        %v3666 = vcombine.high %v3651, %v3651
        %v3667 = vcombine.high %v3665, %v3665
        %v3673 = vadd.f32 %v3613, %v3651
        %v3674 = vadd.f32 %v3614, %v3665
        %v3675 = vadd.f32 %v3615, %v3666
        %v3676 = vadd.f32 %v3616, %v3667
        %v3677 = vadd.f32 %v3617, %v3658
        %v3678 = vadd.f32 %v3618, %v3651
        %v3679 = vadd.f32 %v3619, %v3665
        %v3680 = vadd.f32 %v3620, %v3666
        %v3681 = vadd.f32 %v3621, %v3667
        %v3682 = vadd.f32 %v3622, %v3658
        %v3693 = vcombine.low %v3673, %v3674
        %v3694 = vcombine.low %v3675, %v3676
        %v3696 = vunpack.c.l.s4 1966171168
        %v3697 = vunpack.c.0.s8 %v3696
        %v3698 = vlaneseq
        %v3699 = vshrl.u32 %v3698, 7
        %v3700 = vsub.s32 %v3697, %v3699
        %v3701 = vrot.slane %v3693, %v3700
        %v3703 = vunpack.c.l.s4 1966171168
        %v3704 = vunpack.c.0.s8 %v3703
        %v3705 = vlaneseq
        %v3706 = vshrl.u32 %v3705, 7
        %v3707 = vsub.s32 %v3704, %v3706
        %v3708 = vrot.slane %v3694, %v3707
        %v3710 = vunpack.c.l.s4 1966171168
        %v3711 = vunpack.c.0.s8 %v3710
        %v3712 = vlaneseq
        %v3713 = vshrl.u32 %v3712, 7
        %v3714 = vsub.s32 %v3711, %v3713
        %v3715 = vrot.slane %v3677, %v3714
        %v3716 = vcombine.low %v3701, %v3708
        %v3718 = vunpack.c.l.s4 1966171168
        %v3719 = vunpack.c.0.s8 %v3718
        %v3720 = vlaneseq
        %v3721 = vshrl.u32 %v3720, 7
        %v3722 = vsub.s32 %v3719, %v3721
        %v3723 = vrot.slane %v3716, %v3722
        %v3725 = vunpack.c.l.s4 1966171168
        %v3726 = vunpack.c.0.s8 %v3725
        %v3727 = vlaneseq
        %v3728 = vshrl.u32 %v3727, 7
        %v3729 = vsub.s32 %v3726, %v3728
        %v3730 = vrot.slane %v3715, %v3729
        %v3731 = vcombine.low %v3723, %v3730
        %v3732 = vcombine.low %v3678, %v3679
        %v3733 = vcombine.low %v3680, %v3681
        %v3735 = vunpack.c.l.s4 1966171168
        %v3736 = vunpack.c.0.s8 %v3735
        %v3737 = vlaneseq
        %v3738 = vshrl.u32 %v3737, 7
        %v3739 = vsub.s32 %v3736, %v3738
        %v3740 = vrot.slane %v3732, %v3739
        %v3742 = vunpack.c.l.s4 1966171168
        %v3743 = vunpack.c.0.s8 %v3742
        %v3744 = vlaneseq
        %v3745 = vshrl.u32 %v3744, 7
        %v3746 = vsub.s32 %v3743, %v3745
        %v3747 = vrot.slane %v3733, %v3746
        %v3749 = vunpack.c.l.s4 1966171168
        %v3750 = vunpack.c.0.s8 %v3749
        %v3751 = vlaneseq
        %v3752 = vshrl.u32 %v3751, 7
        %v3753 = vsub.s32 %v3750, %v3752
        %v3754 = vrot.slane %v3682, %v3753
        %v3755 = vcombine.low %v3740, %v3747
        %v3757 = vunpack.c.l.s4 1966171168
        %v3758 = vunpack.c.0.s8 %v3757
        %v3759 = vlaneseq
        %v3760 = vshrl.u32 %v3759, 7
        %v3761 = vsub.s32 %v3758, %v3760
        %v3762 = vrot.slane %v3755, %v3761
        %v3764 = vunpack.c.l.s4 1966171168
        %v3765 = vunpack.c.0.s8 %v3764
        %v3766 = vlaneseq
        %v3767 = vshrl.u32 %v3766, 7
        %v3768 = vsub.s32 %v3765, %v3767
        %v3769 = vrot.slane %v3754, %v3768
        %v3770 = vcombine.low %v3762, %v3769
        %v3773 = vadd.f32 %v1488, %v3731
        %v3774 = vadd.f32 %v1489, %v3770
        %v3775 = vld [vmem:[%s1020] sm:$0x1]
        %v3776 = vld [vmem:[%s1028] sm:$0x1]
        %vm3777 = vcmask 258048
        %v3778 = vsel %vm3777, %v3773, 0.0
        %3779 = vadd.xlane.f32.xlu0 %v3778
        %v3780 = vpop.xlane.xlu0 %3779
        %v3781 = vsel %vm3777, %v3774, 0.0
        %3782 = vadd.xlane.f32.xlu0 %v3781
        %v3783 = vpop.xlane.xlu0 %3782
        %v3784 = vrcp.pop 32.0
        %v3785 = vmul.f32 %v3780, %v3784
        %v3786 = vmul.f32 %v3783, %v3784
        %v3787 = vsub.f32 %v3773, %v3785
        %v3788 = vsub.f32 %v3774, %v3786
        %v3789 = vmul.f32 %v3787, %v3787
        %v3790 = vmul.f32 %v3788, %v3788
        %v3791 = vsel %vm3777, %v3789, 0.0
        %3792 = vadd.xlane.f32.xlu0 %v3791
        %v3793 = vpop.xlane.xlu0 %3792
        %v3794 = vsel %vm3777, %v3790, 0.0
        %3795 = vadd.xlane.f32.xlu0 %v3794
        %v3796 = vpop.xlane.xlu0 %3795
        %v3797 = vmul.f32 %v3793, %v3784
        %v3798 = vmul.f32 %v3796, %v3784
        %v3799 = vadd.f32 %v3797, 1e-05
        %v3800 = vadd.f32 %v3798, 1e-05
        %v3801 = vrsqrt.pop %v3799
        %v3802 = vrsqrt.pop %v3800
        %v3803 = vmul.f32 %v3787, %v3801
        %v3804 = vmul.f32 %v3788, %v3802
        %v3806 = vlaneseq
        %v3807 = vshrl.u32 %v3806, 7
        %v3808 = vsub.s32 0, %v3807
        %v3809 = vrot.slane %v3775, %v3808
        %v3811 = vmul.f32 %v3803, %v3809
        %v3812 = vmul.f32 %v3804, %v3809
        %v3814 = vlaneseq
        %v3815 = vshrl.u32 %v3814, 7
        %v3816 = vsub.s32 0, %v3815
        %v3817 = vrot.slane %v3776, %v3816
        %v3819 = vadd.f32 %v3811, %v3817
        %v3820 = vadd.f32 %v3812, %v3817
        %v3821 = vpack.c.bf16 %v3819, %v3819
        %v3822 = vpack.c.bf16 %v3820, %v3820
        %v3823 = vld [vmem:[%s1188] sm:$0xf]
        %v3824 = vld [vmem:[%s1188 + $0x4] sm:$0xf]
        %v3825 = vld [vmem:[%s1188 + $0x8] sm:$0xf]
        %v3826 = vld [vmem:[%s1188 + $0xc] sm:$0xf]
        %v3827 = vld [vmem:[%s1191] sm:$0x1]
        %v3829 = vlaneseq
        %v3830 = vshrl.u32 %v3829, 7
        %v3831 = vsub.s32 0, %v3830
        %v3832 = vrot.slane %v3827, %v3831
        %v3836 = vunpack.c.l.b16 %v3821
        %v3837 = vunpack.c.l.b16 %v3822
        %v3838 = vrot.slane %v3836, 4
        %v3839 = vrot.slane %v3837, 3
        %vm3840 = vcmask 1041409
        %v3841 = vsel %vm3840, %v3839, %v3838
        %v3842 = vpack.c.b16 %v3841, %v3841
        %v3847 = vunpack.c.l.b16 %v3823
        %v3848 = vunpack.c.l.b16 %v3824
        %v3849 = vunpack.c.l.b16 %v3825
        %v3850 = vunpack.c.l.b16 %v3826
        %v3851 = vpack.c.b16 %v3848, %v3847
        %v3852 = vpack.c.b16 %v3850, %v3849
        %v3856 = vsel %vm1660, %v3842, 0
        %3858 = vmatprep.subr.bf16.mxu0 0
        %3859 = vmatpush1.bf16.msra.mxu0 %v3851
        %3860 = vmatprep.subr.bf16.mxu0 0
        %3861 = vmatpush1.bf16.msra.mxu0 %v3852
        %3862 = vmatprep.subr.bf16.mxu0 0
        %3863 = vmatpush1.bf16.msra.mxu0 0
        %3864 = vmatprep.subr.bf16.mxu0 0
        %3865 = vmatpush1.bf16.msra.mxu0 0
        %3866 = vmatprep.subr.bf16.mxu0 0
        %3867 = vmatpush1.bf16.msra.mxu0 0
        %3868 = vmatprep.subr.bf16.mxu0 0
        %3869 = vmatpush1.bf16.msra.mxu0 0
        %3870 = vmatprep.subr.bf16.mxu0 0
        %3871 = vmatpush1.bf16.msra.mxu0 0
        %3872 = vmatprep.subr.bf16.mxu0 0
        %3873 = vmatpush1.bf16.msra.mxu0 0
        %3874 = vmatprep.subr.bf16.mxu0 0
        %3875 = vmatpush1.bf16.msra.mxu0 0
        %3876 = vmatprep.subr.bf16.mxu0 0
        %3877 = vmatpush1.bf16.msra.mxu0 0
        %3878 = vmatprep.subr.bf16.mxu0 0
        %3879 = vmatpush1.bf16.msra.mxu0 0
        %3880 = vmatprep.subr.bf16.mxu0 0
        %3881 = vmatpush1.bf16.msra.mxu0 0
        %3882 = vmatprep.subr.bf16.mxu0 0
        %3883 = vmatpush1.bf16.msra.mxu0 0
        %3884 = vmatprep.subr.bf16.mxu0 0
        %3885 = vmatpush1.bf16.msra.mxu0 0
        %3886 = vmatprep.subr.bf16.mxu0 0
        %3887 = vmatpush1.bf16.msra.mxu0 0
        %3888 = vmatprep.subr.bf16.mxu0 0
        %3889 = vmatpush1.bf16.msra.mxu0 0
        %3890 = vmatprep.mubr.bf16.mxu0 0
        %3891 = vmatmul.mubr.bf16.gmra.mrb[0].mxu0 %v3856
        %v3892 = vpop.f32.mrb[0].mxu0
        %v3893 = vadd.f32 %v3832, %v3892
        %v3894 = vpop.f32.mrb[0].mxu0
        %v3895 = vpop.f32.mrb[0].mxu0
        %v3896 = vpop.f32.mrb[0].mxu0
        %3897 = vdwg.mxu0
        %v3900 = vunpack.c.l.s4 1966171168
        %v3901 = vunpack.c.0.s8 %v3900
        %v3902 = vlaneseq
        %v3903 = vshrl.u32 %v3902, 7
        %v3904 = vsub.s32 %v3901, %v3903
        %v3905 = vrot.slane %v3893, %v3904
        %v3906 = vcombine.high %v3905, %v3905
        %v3908 = vunpack.c.l.s4 1966171168
        %v3909 = vunpack.c.0.s8 %v3908
        %v3910 = vlaneseq
        %v3911 = vshrl.u32 %v3910, 7
        %v3912 = vsub.s32 %v3909, %v3911
        %v3913 = vrot.slane %v3905, %v3912
        %v3915 = vunpack.c.l.s4 1966171168
        %v3916 = vunpack.c.0.s8 %v3915
        %v3917 = vlaneseq
        %v3918 = vshrl.u32 %v3917, 7
        %v3919 = vsub.s32 %v3916, %v3918
        %v3920 = vrot.slane %v3906, %v3919
        %v3923 = vld [vmem:[#allocation3] sm:$0x3]
        %v3924 = vld [vmem:[#allocation3 + $0x2] sm:$0x3]
        %v3927 = vcombine.low %v3923, %v3924
        %v3929 = vunpack.c.l.s4 1983009808
        %v3930 = vunpack.c.0.s8 %v3929
        %v3931 = vlaneseq
        %v3932 = vshrl.u32 %v3931, 7
        %v3933 = vsub.s32 %v3930, %v3932
        %v3934 = vrot.slane %v3927, %v3933
        %v3936 = vpack.c.bf16 %v3934, %v3934
        %v3937 = vld [vmem:[%s1196] sm:$0xf]
        %v3938 = vld [vmem:[%s1196 + $0x4] sm:$0xf]
        %v3939 = vld [vmem:[%s1196 + $0x8] sm:$0xf]
        %v3940 = vld [vmem:[%s1196 + $0xc] sm:$0xf]
        %v3941 = vld [vmem:[%s1199] sm:$0x1]
        %v3943 = vlaneseq
        %v3944 = vshrl.u32 %v3943, 7
        %v3945 = vsub.s32 0, %v3944
        %v3946 = vrot.slane %v3941, %v3945
        %v3952 = vunpack.c.l.b16 %v3937
        %v3953 = vunpack.c.l.b16 %v3938
        %v3954 = vunpack.c.l.b16 %v3939
        %v3955 = vunpack.c.l.b16 %v3940
        %v3956 = vpack.c.b16 %v3953, %v3952
        %v3957 = vpack.c.b16 %v3955, %v3954
        %v3961 = vsel %vm1660, %v3936, 0
        %3963 = vmatprep.subr.bf16.mxu0 0
        %3964 = vmatpush1.bf16.msra.mxu0 %v3956
        %3965 = vmatprep.subr.bf16.mxu0 0
        %3966 = vmatpush1.bf16.msra.mxu0 %v3957
        %3967 = vmatprep.subr.bf16.mxu0 0
        %3968 = vmatpush1.bf16.msra.mxu0 0
        %3969 = vmatprep.subr.bf16.mxu0 0
        %3970 = vmatpush1.bf16.msra.mxu0 0
        %3971 = vmatprep.subr.bf16.mxu0 0
        %3972 = vmatpush1.bf16.msra.mxu0 0
        %3973 = vmatprep.subr.bf16.mxu0 0
        %3974 = vmatpush1.bf16.msra.mxu0 0
        %3975 = vmatprep.subr.bf16.mxu0 0
        %3976 = vmatpush1.bf16.msra.mxu0 0
        %3977 = vmatprep.subr.bf16.mxu0 0
        %3978 = vmatpush1.bf16.msra.mxu0 0
        %3979 = vmatprep.subr.bf16.mxu0 0
        %3980 = vmatpush1.bf16.msra.mxu0 0
        %3981 = vmatprep.subr.bf16.mxu0 0
        %3982 = vmatpush1.bf16.msra.mxu0 0
        %3983 = vmatprep.subr.bf16.mxu0 0
        %3984 = vmatpush1.bf16.msra.mxu0 0
        %3985 = vmatprep.subr.bf16.mxu0 0
        %3986 = vmatpush1.bf16.msra.mxu0 0
        %3987 = vmatprep.subr.bf16.mxu0 0
        %3988 = vmatpush1.bf16.msra.mxu0 0
        %3989 = vmatprep.subr.bf16.mxu0 0
        %3990 = vmatpush1.bf16.msra.mxu0 0
        %3991 = vmatprep.subr.bf16.mxu0 0
        %3992 = vmatpush1.bf16.msra.mxu0 0
        %3993 = vmatprep.subr.bf16.mxu0 0
        %3994 = vmatpush1.bf16.msra.mxu0 0
        %3995 = vmatprep.mubr.bf16.mxu0 0
        %3996 = vmatmul.mubr.bf16.gmra.mrb[0].mxu0 %v3961
        %v3997 = vpop.f32.mrb[0].mxu0
        %v3998 = vadd.f32 %v3946, %v3997
        %v3999 = vpop.f32.mrb[0].mxu0
        %v4000 = vpop.f32.mrb[0].mxu0
        %v4001 = vpop.f32.mrb[0].mxu0
        %4002 = vdwg.mxu0
        %v4005 = vunpack.c.l.s4 1983009808
        %v4006 = vunpack.c.0.s8 %v4005
        %v4007 = vlaneseq
        %v4008 = vshrl.u32 %v4007, 7
        %v4009 = vsub.s32 %v4006, %v4008
        %v4010 = vrot.slane %v3998, %v4009
        %v4011 = vcombine.high %v4010, %v4010
        %v4014 = vld [vmem:[%s1012] sm:$0xf]
        %v4015 = vld [vmem:[%s1012 + $0x4] sm:$0xf]
        %v4016 = vld [vmem:[%s1012 + $0x8] sm:$0xf]
        %v4017 = vld [vmem:[%s1012 + $0xc] sm:$0xf]
        %v4018 = vpack.c.bf16 %v3913, %v3913
        %v4019 = vpack.c.bf16 %v3920, %v3920
        %v4020 = vpack.c.bf16 %v4010, %v4010
        %v4021 = vpack.c.bf16 %v4011, %v4011
        %v4023 = vsel %vm1867, %v4018, 0
        %v4026 = vsel %vm1867, %v4020, 0
        %4028 = vmatprep.subr.bf16.mxu0 0
        %4029 = vmatpush1.bf16.xpose.msra.mxu0 %v4026
        %4030 = vmatprep.subr.bf16.mxu0 0
        %4031 = vmatpush1.bf16.xpose.msra.mxu0 0
        %4032 = vmatprep.subr.bf16.mxu0 0
        %4033 = vmatpush1.bf16.xpose.msra.mxu0 0
        %4034 = vmatprep.subr.bf16.mxu0 0
        %4035 = vmatpush1.bf16.xpose.msra.mxu0 0
        %4036 = vmatprep.subr.bf16.mxu0 0
        %4037 = vmatpush1.bf16.xpose.msra.mxu0 0
        %4038 = vmatprep.subr.bf16.mxu0 0
        %4039 = vmatpush1.bf16.xpose.msra.mxu0 0
        %4040 = vmatprep.subr.bf16.mxu0 0
        %4041 = vmatpush1.bf16.xpose.msra.mxu0 0
        %4042 = vmatprep.subr.bf16.mxu0 0
        %4043 = vmatpush1.bf16.xpose.msra.mxu0 0
        %4044 = vmatprep.subr.bf16.mxu0 0
        %4045 = vmatpush1.bf16.xpose.msra.mxu0 0
        %4046 = vmatprep.subr.bf16.mxu0 0
        %4047 = vmatpush1.bf16.xpose.msra.mxu0 0
        %4048 = vmatprep.subr.bf16.mxu0 0
        %4049 = vmatpush1.bf16.xpose.msra.mxu0 0
        %4050 = vmatprep.subr.bf16.mxu0 0
        %4051 = vmatpush1.bf16.xpose.msra.mxu0 0
        %4052 = vmatprep.subr.bf16.mxu0 0
        %4053 = vmatpush1.bf16.xpose.msra.mxu0 0
        %4054 = vmatprep.subr.bf16.mxu0 0
        %4055 = vmatpush1.bf16.xpose.msra.mxu0 0
        %4056 = vmatprep.subr.bf16.mxu0 0
        %4057 = vmatpush1.bf16.xpose.msra.mxu0 0
        %4058 = vmatprep.subr.bf16.mxu0 0
        %4059 = vmatpush1.bf16.xpose.msra.mxu0 0
        %4060 = vmatprep.mubr.bf16.mxu0 0
        %4061 = vmatmul.mubr.bf16.gmra.mrb[0].mxu0 %v4023
        %v4062 = vpop.f32.mrb[0].mxu0
        %v4063 = vadd.f32 0.0, %v4062
        %v4064 = vpop.f32.mrb[0].mxu0
        %v4065 = vpop.f32.mrb[0].mxu0
        %v4066 = vpop.f32.mrb[0].mxu0
        %4067 = vdwg.mxu0
        %v4069 = vsel %vm1867, %v4019, 0
        %v4072 = vsel %vm1867, %v4021, 0
        %4074 = vmatprep.subr.bf16.mxu0 0
        %4075 = vmatpush1.bf16.xpose.msra.mxu0 %v4072
        %4076 = vmatprep.subr.bf16.mxu0 0
        %4077 = vmatpush1.bf16.xpose.msra.mxu0 0
        %4078 = vmatprep.subr.bf16.mxu0 0
        %4079 = vmatpush1.bf16.xpose.msra.mxu0 0
        %4080 = vmatprep.subr.bf16.mxu0 0
        %4081 = vmatpush1.bf16.xpose.msra.mxu0 0
        %4082 = vmatprep.subr.bf16.mxu0 0
        %4083 = vmatpush1.bf16.xpose.msra.mxu0 0
        %4084 = vmatprep.subr.bf16.mxu0 0
        %4085 = vmatpush1.bf16.xpose.msra.mxu0 0
        %4086 = vmatprep.subr.bf16.mxu0 0
        %4087 = vmatpush1.bf16.xpose.msra.mxu0 0
        %4088 = vmatprep.subr.bf16.mxu0 0
        %4089 = vmatpush1.bf16.xpose.msra.mxu0 0
        %4090 = vmatprep.subr.bf16.mxu0 0
        %4091 = vmatpush1.bf16.xpose.msra.mxu0 0
        %4092 = vmatprep.subr.bf16.mxu0 0
        %4093 = vmatpush1.bf16.xpose.msra.mxu0 0
        %4094 = vmatprep.subr.bf16.mxu0 0
        %4095 = vmatpush1.bf16.xpose.msra.mxu0 0
        %4096 = vmatprep.subr.bf16.mxu0 0
        %4097 = vmatpush1.bf16.xpose.msra.mxu0 0
        %4098 = vmatprep.subr.bf16.mxu0 0
        %4099 = vmatpush1.bf16.xpose.msra.mxu0 0
        %4100 = vmatprep.subr.bf16.mxu0 0
        %4101 = vmatpush1.bf16.xpose.msra.mxu0 0
        %4102 = vmatprep.subr.bf16.mxu0 0
        %4103 = vmatpush1.bf16.xpose.msra.mxu0 0
        %4104 = vmatprep.subr.bf16.mxu0 0
        %4105 = vmatpush1.bf16.xpose.msra.mxu0 0
        %4106 = vmatprep.mubr.bf16.mxu0 0
        %4107 = vmatmul.mubr.bf16.gmra.mrb[0].mxu0 %v4069
        %v4108 = vpop.f32.mrb[0].mxu0
        %v4109 = vadd.f32 0.0, %v4108
        %v4110 = vpop.f32.mrb[0].mxu0
        %v4111 = vpop.f32.mrb[0].mxu0
        %v4112 = vpop.f32.mrb[0].mxu0
        %4113 = vdwg.mxu0
        %vm4114 = vcmask 8192
        %v4115 = vsel %vm4114, %v4063, -inf
        %4116 = vmax.xlane.f32.xlu0 %v4115
        %v4117 = vpop.xlane.xlu0 %4116
        %v4118 = vsel %vm4114, %v4109, -inf
        %4119 = vmax.xlane.f32.xlu0 %v4118
        %v4120 = vpop.xlane.xlu0 %4119
        %v4121 = vsub.f32 %v4063, %v4117
        %v4122 = vsub.f32 %v4109, %v4120
        %v4123 = vmul.f32 %v4121, 1.442695
        %v4124 = vpow.pop %v4123
        %v4125 = vmul.f32 %v4122, 1.442695
        %v4126 = vpow.pop %v4125
        %v4127 = vsel %vm4114, %v4124, 0.0
        %4128 = vadd.xlane.f32.xlu0 %v4127
        %v4129 = vpop.xlane.xlu0 %4128
        %v4130 = vsel %vm4114, %v4126, 0.0
        %4131 = vadd.xlane.f32.xlu0 %v4130
        %v4132 = vpop.xlane.xlu0 %4131
        %v4133 = vrcp.pop %v4129
        %v4134 = vmul.f32 %v4124, %v4133
        %v4135 = vrcp.pop %v4132
        %v4136 = vmul.f32 %v4126, %v4135
        %v4137 = vpack.c.bf16 %v4134, %v4134
        %v4138 = vpack.c.bf16 %v4136, %v4136
        %4140 = vrot.lane.b32.xlu0 %v4020, 96
        %v4141 = vpop.permute.xlu0 %4140
        %vm4142 = vcmask 15360
        %v4144 = vsel %vm4142, %v4137, 0
        %vm4146 = vcmask 1040384
        %v4148 = vsel %vm4146, %v4141, 0
        %4150 = vmatprep.subr.bf16.mxu0 0
        %4151 = vmatpush1.bf16.msra.mxu0 %v4148
        %4152 = vmatprep.subr.bf16.mxu0 0
        %4153 = vmatpush1.bf16.msra.mxu0 0
        %4154 = vmatprep.subr.bf16.mxu0 0
        %4155 = vmatpush1.bf16.msra.mxu0 0
        %4156 = vmatprep.subr.bf16.mxu0 0
        %4157 = vmatpush1.bf16.msra.mxu0 0
        %4158 = vmatprep.subr.bf16.mxu0 0
        %4159 = vmatpush1.bf16.msra.mxu0 0
        %4160 = vmatprep.subr.bf16.mxu0 0
        %4161 = vmatpush1.bf16.msra.mxu0 0
        %4162 = vmatprep.subr.bf16.mxu0 0
        %4163 = vmatpush1.bf16.msra.mxu0 0
        %4164 = vmatprep.subr.bf16.mxu0 0
        %4165 = vmatpush1.bf16.msra.mxu0 0
        %4166 = vmatprep.subr.bf16.mxu0 0
        %4167 = vmatpush1.bf16.msra.mxu0 0
        %4168 = vmatprep.subr.bf16.mxu0 0
        %4169 = vmatpush1.bf16.msra.mxu0 0
        %4170 = vmatprep.subr.bf16.mxu0 0
        %4171 = vmatpush1.bf16.msra.mxu0 0
        %4172 = vmatprep.subr.bf16.mxu0 0
        %4173 = vmatpush1.bf16.msra.mxu0 0
        %4174 = vmatprep.subr.bf16.mxu0 0
        %4175 = vmatpush1.bf16.msra.mxu0 0
        %4176 = vmatprep.subr.bf16.mxu0 0
        %4177 = vmatpush1.bf16.msra.mxu0 0
        %4178 = vmatprep.subr.bf16.mxu0 0
        %4179 = vmatpush1.bf16.msra.mxu0 0
        %4180 = vmatprep.subr.bf16.mxu0 0
        %4181 = vmatpush1.bf16.msra.mxu0 0
        %4182 = vmatprep.mubr.bf16.mxu0 0
        %4183 = vmatmul.mubr.bf16.gmra.mrb[0].mxu0 %v4144
        %v4184 = vpop.f32.mrb[0].mxu0
        %v4185 = vadd.f32 0.0, %v4184
        %v4186 = vpop.f32.mrb[0].mxu0
        %v4187 = vpop.f32.mrb[0].mxu0
        %v4188 = vpop.f32.mrb[0].mxu0
        %4189 = vdwg.mxu0
        %4191 = vrot.lane.b32.xlu0 %v4021, 96
        %v4192 = vpop.permute.xlu0 %4191
        %v4194 = vsel %vm4142, %v4138, 0
        %v4197 = vsel %vm4146, %v4192, 0
        %4199 = vmatprep.subr.bf16.mxu0 0
        %4200 = vmatpush1.bf16.msra.mxu0 %v4197
        %4201 = vmatprep.subr.bf16.mxu0 0
        %4202 = vmatpush1.bf16.msra.mxu0 0
        %4203 = vmatprep.subr.bf16.mxu0 0
        %4204 = vmatpush1.bf16.msra.mxu0 0
        %4205 = vmatprep.subr.bf16.mxu0 0
        %4206 = vmatpush1.bf16.msra.mxu0 0
        %4207 = vmatprep.subr.bf16.mxu0 0
        %4208 = vmatpush1.bf16.msra.mxu0 0
        %4209 = vmatprep.subr.bf16.mxu0 0
        %4210 = vmatpush1.bf16.msra.mxu0 0
        %4211 = vmatprep.subr.bf16.mxu0 0
        %4212 = vmatpush1.bf16.msra.mxu0 0
        %4213 = vmatprep.subr.bf16.mxu0 0
        %4214 = vmatpush1.bf16.msra.mxu0 0
        %4215 = vmatprep.subr.bf16.mxu0 0
        %4216 = vmatpush1.bf16.msra.mxu0 0
        %4217 = vmatprep.subr.bf16.mxu0 0
        %4218 = vmatpush1.bf16.msra.mxu0 0
        %4219 = vmatprep.subr.bf16.mxu0 0
        %4220 = vmatpush1.bf16.msra.mxu0 0
        %4221 = vmatprep.subr.bf16.mxu0 0
        %4222 = vmatpush1.bf16.msra.mxu0 0
        %4223 = vmatprep.subr.bf16.mxu0 0
        %4224 = vmatpush1.bf16.msra.mxu0 0
        %4225 = vmatprep.subr.bf16.mxu0 0
        %4226 = vmatpush1.bf16.msra.mxu0 0
        %4227 = vmatprep.subr.bf16.mxu0 0
        %4228 = vmatpush1.bf16.msra.mxu0 0
        %4229 = vmatprep.subr.bf16.mxu0 0
        %4230 = vmatpush1.bf16.msra.mxu0 0
        %4231 = vmatprep.mubr.bf16.mxu0 0
        %4232 = vmatmul.mubr.bf16.gmra.mrb[0].mxu0 %v4194
        %v4233 = vpop.f32.mrb[0].mxu0
        %v4234 = vadd.f32 0.0, %v4233
        %v4235 = vpop.f32.mrb[0].mxu0
        %v4236 = vpop.f32.mrb[0].mxu0
        %v4237 = vpop.f32.mrb[0].mxu0
        %4238 = vdwg.mxu0
        %v4239 = vpack.c.bf16 %v4185, %v4185
        %v4240 = vpack.c.bf16 %v4234, %v4234
        %4242 = vrot.lane.b32.xlu0 %v4018, 120
        %v4243 = vpop.permute.xlu0 %4242
        %4244 = vrot.lane.b32.xlu0 %v4020, 120
        %v4245 = vpop.permute.xlu0 %4244
        %v4247 = vsel %vm1867, %v4243, 0
        %v4250 = vsel %vm1867, %v4245, 0
        %4252 = vmatprep.subr.bf16.mxu0 0
        %4253 = vmatpush1.bf16.xpose.msra.mxu0 %v4250
        %4254 = vmatprep.subr.bf16.mxu0 0
        %4255 = vmatpush1.bf16.xpose.msra.mxu0 0
        %4256 = vmatprep.subr.bf16.mxu0 0
        %4257 = vmatpush1.bf16.xpose.msra.mxu0 0
        %4258 = vmatprep.subr.bf16.mxu0 0
        %4259 = vmatpush1.bf16.xpose.msra.mxu0 0
        %4260 = vmatprep.subr.bf16.mxu0 0
        %4261 = vmatpush1.bf16.xpose.msra.mxu0 0
        %4262 = vmatprep.subr.bf16.mxu0 0
        %4263 = vmatpush1.bf16.xpose.msra.mxu0 0
        %4264 = vmatprep.subr.bf16.mxu0 0
        %4265 = vmatpush1.bf16.xpose.msra.mxu0 0
        %4266 = vmatprep.subr.bf16.mxu0 0
        %4267 = vmatpush1.bf16.xpose.msra.mxu0 0
        %4268 = vmatprep.subr.bf16.mxu0 0
        %4269 = vmatpush1.bf16.xpose.msra.mxu0 0
        %4270 = vmatprep.subr.bf16.mxu0 0
        %4271 = vmatpush1.bf16.xpose.msra.mxu0 0
        %4272 = vmatprep.subr.bf16.mxu0 0
        %4273 = vmatpush1.bf16.xpose.msra.mxu0 0
        %4274 = vmatprep.subr.bf16.mxu0 0
        %4275 = vmatpush1.bf16.xpose.msra.mxu0 0
        %4276 = vmatprep.subr.bf16.mxu0 0
        %4277 = vmatpush1.bf16.xpose.msra.mxu0 0
        %4278 = vmatprep.subr.bf16.mxu0 0
        %4279 = vmatpush1.bf16.xpose.msra.mxu0 0
        %4280 = vmatprep.subr.bf16.mxu0 0
        %4281 = vmatpush1.bf16.xpose.msra.mxu0 0
        %4282 = vmatprep.subr.bf16.mxu0 0
        %4283 = vmatpush1.bf16.xpose.msra.mxu0 0
        %4284 = vmatprep.mubr.bf16.mxu0 0
        %4285 = vmatmul.mubr.bf16.gmra.mrb[0].mxu0 %v4247
        %v4286 = vpop.f32.mrb[0].mxu0
        %v4287 = vadd.f32 0.0, %v4286
        %v4288 = vpop.f32.mrb[0].mxu0
        %v4289 = vpop.f32.mrb[0].mxu0
        %v4290 = vpop.f32.mrb[0].mxu0
        %4291 = vdwg.mxu0
        %4293 = vrot.lane.b32.xlu0 %v4019, 120
        %v4294 = vpop.permute.xlu0 %4293
        %4295 = vrot.lane.b32.xlu0 %v4021, 120
        %v4296 = vpop.permute.xlu0 %4295
        %v4298 = vsel %vm1867, %v4294, 0
        %v4301 = vsel %vm1867, %v4296, 0
        %4303 = vmatprep.subr.bf16.mxu0 0
        %4304 = vmatpush1.bf16.xpose.msra.mxu0 %v4301
        %4305 = vmatprep.subr.bf16.mxu0 0
        %4306 = vmatpush1.bf16.xpose.msra.mxu0 0
        %4307 = vmatprep.subr.bf16.mxu0 0
        %4308 = vmatpush1.bf16.xpose.msra.mxu0 0
        %4309 = vmatprep.subr.bf16.mxu0 0
        %4310 = vmatpush1.bf16.xpose.msra.mxu0 0
        %4311 = vmatprep.subr.bf16.mxu0 0
        %4312 = vmatpush1.bf16.xpose.msra.mxu0 0
        %4313 = vmatprep.subr.bf16.mxu0 0
        %4314 = vmatpush1.bf16.xpose.msra.mxu0 0
        %4315 = vmatprep.subr.bf16.mxu0 0
        %4316 = vmatpush1.bf16.xpose.msra.mxu0 0
        %4317 = vmatprep.subr.bf16.mxu0 0
        %4318 = vmatpush1.bf16.xpose.msra.mxu0 0
        %4319 = vmatprep.subr.bf16.mxu0 0
        %4320 = vmatpush1.bf16.xpose.msra.mxu0 0
        %4321 = vmatprep.subr.bf16.mxu0 0
        %4322 = vmatpush1.bf16.xpose.msra.mxu0 0
        %4323 = vmatprep.subr.bf16.mxu0 0
        %4324 = vmatpush1.bf16.xpose.msra.mxu0 0
        %4325 = vmatprep.subr.bf16.mxu0 0
        %4326 = vmatpush1.bf16.xpose.msra.mxu0 0
        %4327 = vmatprep.subr.bf16.mxu0 0
        %4328 = vmatpush1.bf16.xpose.msra.mxu0 0
        %4329 = vmatprep.subr.bf16.mxu0 0
        %4330 = vmatpush1.bf16.xpose.msra.mxu0 0
        %4331 = vmatprep.subr.bf16.mxu0 0
        %4332 = vmatpush1.bf16.xpose.msra.mxu0 0
        %4333 = vmatprep.subr.bf16.mxu0 0
        %4334 = vmatpush1.bf16.xpose.msra.mxu0 0
        %4335 = vmatprep.mubr.bf16.mxu0 0
        %4336 = vmatmul.mubr.bf16.gmra.mrb[0].mxu0 %v4298
        %v4337 = vpop.f32.mrb[0].mxu0
        %v4338 = vadd.f32 0.0, %v4337
        %v4339 = vpop.f32.mrb[0].mxu0
        %v4340 = vpop.f32.mrb[0].mxu0
        %v4341 = vpop.f32.mrb[0].mxu0
        %4342 = vdwg.mxu0
        %v4343 = vsel %vm4114, %v4287, -inf
        %4344 = vmax.xlane.f32.xlu0 %v4343
        %v4345 = vpop.xlane.xlu0 %4344
        %v4346 = vsel %vm4114, %v4338, -inf
        %4347 = vmax.xlane.f32.xlu0 %v4346
        %v4348 = vpop.xlane.xlu0 %4347
        %v4349 = vsub.f32 %v4287, %v4345
        %v4350 = vsub.f32 %v4338, %v4348
        %v4351 = vmul.f32 %v4349, 1.442695
        %v4352 = vpow.pop %v4351
        %v4353 = vmul.f32 %v4350, 1.442695
        %v4354 = vpow.pop %v4353
        %v4355 = vsel %vm4114, %v4352, 0.0
        %4356 = vadd.xlane.f32.xlu0 %v4355
        %v4357 = vpop.xlane.xlu0 %4356
        %v4358 = vsel %vm4114, %v4354, 0.0
        %4359 = vadd.xlane.f32.xlu0 %v4358
        %v4360 = vpop.xlane.xlu0 %4359
        %v4361 = vrcp.pop %v4357
        %v4362 = vmul.f32 %v4352, %v4361
        %v4363 = vrcp.pop %v4360
        %v4364 = vmul.f32 %v4354, %v4363
        %v4365 = vpack.c.bf16 %v4362, %v4362
        %v4366 = vpack.c.bf16 %v4364, %v4364
        %4367 = vrot.lane.b32.xlu0 %v4020, 88
        %v4368 = vpop.permute.xlu0 %4367
        %v4370 = vsel %vm4142, %v4365, 0
        %v4373 = vsel %vm4146, %v4368, 0
        %4375 = vmatprep.subr.bf16.mxu0 0
        %4376 = vmatpush1.bf16.msra.mxu0 %v4373
        %4377 = vmatprep.subr.bf16.mxu0 0
        %4378 = vmatpush1.bf16.msra.mxu0 0
        %4379 = vmatprep.subr.bf16.mxu0 0
        %4380 = vmatpush1.bf16.msra.mxu0 0
        %4381 = vmatprep.subr.bf16.mxu0 0
        %4382 = vmatpush1.bf16.msra.mxu0 0
        %4383 = vmatprep.subr.bf16.mxu0 0
        %4384 = vmatpush1.bf16.msra.mxu0 0
        %4385 = vmatprep.subr.bf16.mxu0 0
        %4386 = vmatpush1.bf16.msra.mxu0 0
        %4387 = vmatprep.subr.bf16.mxu0 0
        %4388 = vmatpush1.bf16.msra.mxu0 0
        %4389 = vmatprep.subr.bf16.mxu0 0
        %4390 = vmatpush1.bf16.msra.mxu0 0
        %4391 = vmatprep.subr.bf16.mxu0 0
        %4392 = vmatpush1.bf16.msra.mxu0 0
        %4393 = vmatprep.subr.bf16.mxu0 0
        %4394 = vmatpush1.bf16.msra.mxu0 0
        %4395 = vmatprep.subr.bf16.mxu0 0
        %4396 = vmatpush1.bf16.msra.mxu0 0
        %4397 = vmatprep.subr.bf16.mxu0 0
        %4398 = vmatpush1.bf16.msra.mxu0 0
        %4399 = vmatprep.subr.bf16.mxu0 0
        %4400 = vmatpush1.bf16.msra.mxu0 0
        %4401 = vmatprep.subr.bf16.mxu0 0
        %4402 = vmatpush1.bf16.msra.mxu0 0
        %4403 = vmatprep.subr.bf16.mxu0 0
        %4404 = vmatpush1.bf16.msra.mxu0 0
        %4405 = vmatprep.subr.bf16.mxu0 0
        %4406 = vmatpush1.bf16.msra.mxu0 0
        %4407 = vmatprep.mubr.bf16.mxu0 0
        %4408 = vmatmul.mubr.bf16.gmra.mrb[0].mxu0 %v4370
        %v4409 = vpop.f32.mrb[0].mxu0
        %v4410 = vadd.f32 0.0, %v4409
        %v4411 = vpop.f32.mrb[0].mxu0
        %v4412 = vpop.f32.mrb[0].mxu0
        %v4413 = vpop.f32.mrb[0].mxu0
        %4414 = vdwg.mxu0
        %4415 = vrot.lane.b32.xlu0 %v4021, 88
        %v4416 = vpop.permute.xlu0 %4415
        %v4418 = vsel %vm4142, %v4366, 0
        %v4421 = vsel %vm4146, %v4416, 0
        %4423 = vmatprep.subr.bf16.mxu0 0
        %4424 = vmatpush1.bf16.msra.mxu0 %v4421
        %4425 = vmatprep.subr.bf16.mxu0 0
        %4426 = vmatpush1.bf16.msra.mxu0 0
        %4427 = vmatprep.subr.bf16.mxu0 0
        %4428 = vmatpush1.bf16.msra.mxu0 0
        %4429 = vmatprep.subr.bf16.mxu0 0
        %4430 = vmatpush1.bf16.msra.mxu0 0
        %4431 = vmatprep.subr.bf16.mxu0 0
        %4432 = vmatpush1.bf16.msra.mxu0 0
        %4433 = vmatprep.subr.bf16.mxu0 0
        %4434 = vmatpush1.bf16.msra.mxu0 0
        %4435 = vmatprep.subr.bf16.mxu0 0
        %4436 = vmatpush1.bf16.msra.mxu0 0
        %4437 = vmatprep.subr.bf16.mxu0 0
        %4438 = vmatpush1.bf16.msra.mxu0 0
        %4439 = vmatprep.subr.bf16.mxu0 0
        %4440 = vmatpush1.bf16.msra.mxu0 0
        %4441 = vmatprep.subr.bf16.mxu0 0
        %4442 = vmatpush1.bf16.msra.mxu0 0
        %4443 = vmatprep.subr.bf16.mxu0 0
        %4444 = vmatpush1.bf16.msra.mxu0 0
        %4445 = vmatprep.subr.bf16.mxu0 0
        %4446 = vmatpush1.bf16.msra.mxu0 0
        %4447 = vmatprep.subr.bf16.mxu0 0
        %4448 = vmatpush1.bf16.msra.mxu0 0
        %4449 = vmatprep.subr.bf16.mxu0 0
        %4450 = vmatpush1.bf16.msra.mxu0 0
        %4451 = vmatprep.subr.bf16.mxu0 0
        %4452 = vmatpush1.bf16.msra.mxu0 0
        %4453 = vmatprep.subr.bf16.mxu0 0
        %4454 = vmatpush1.bf16.msra.mxu0 0
        %4455 = vmatprep.mubr.bf16.mxu0 0
        %4456 = vmatmul.mubr.bf16.gmra.mrb[0].mxu0 %v4418
        %v4457 = vpop.f32.mrb[0].mxu0
        %v4458 = vadd.f32 0.0, %v4457
        %v4459 = vpop.f32.mrb[0].mxu0
        %v4460 = vpop.f32.mrb[0].mxu0
        %v4461 = vpop.f32.mrb[0].mxu0
        %4462 = vdwg.mxu0
        %v4463 = vpack.c.bf16 %v4410, %v4410
        %v4464 = vpack.c.bf16 %v4458, %v4458
        %v4467 = vunpack.c.l.b16 %v4463
        %v4468 = vunpack.c.l.b16 %v4464
        %v4469 = vrot.slane %v4468, 7
        %v4470 = vsel %vm3840, %v4469, %v4467
        %v4471 = vpack.c.b16 %v4470, %v4470
        %v4473 = vsel %vm1867, %v4471, 0
        %v4476 = vsel %vm2418, %v4015, 0
        %4478 = vmatprep.subr.bf16.mxu0 0
        %4479 = vmatpush1.bf16.msra.mxu0 %v4476
        %4480 = vmatprep.subr.bf16.mxu0 0
        %4481 = vmatpush1.bf16.msra.mxu0 0
        %4482 = vmatprep.subr.bf16.mxu0 0
        %4483 = vmatpush1.bf16.msra.mxu0 0
        %4484 = vmatprep.subr.bf16.mxu0 0
        %4485 = vmatpush1.bf16.msra.mxu0 0
        %4486 = vmatprep.subr.bf16.mxu0 0
        %4487 = vmatpush1.bf16.msra.mxu0 0
        %4488 = vmatprep.subr.bf16.mxu0 0
        %4489 = vmatpush1.bf16.msra.mxu0 0
        %4490 = vmatprep.subr.bf16.mxu0 0
        %4491 = vmatpush1.bf16.msra.mxu0 0
        %4492 = vmatprep.subr.bf16.mxu0 0
        %4493 = vmatpush1.bf16.msra.mxu0 0
        %4494 = vmatprep.subr.bf16.mxu0 0
        %4495 = vmatpush1.bf16.msra.mxu0 0
        %4496 = vmatprep.subr.bf16.mxu0 0
        %4497 = vmatpush1.bf16.msra.mxu0 0
        %4498 = vmatprep.subr.bf16.mxu0 0
        %4499 = vmatpush1.bf16.msra.mxu0 0
        %4500 = vmatprep.subr.bf16.mxu0 0
        %4501 = vmatpush1.bf16.msra.mxu0 0
        %4502 = vmatprep.subr.bf16.mxu0 0
        %4503 = vmatpush1.bf16.msra.mxu0 0
        %4504 = vmatprep.subr.bf16.mxu0 0
        %4505 = vmatpush1.bf16.msra.mxu0 0
        %4506 = vmatprep.subr.bf16.mxu0 0
        %4507 = vmatpush1.bf16.msra.mxu0 0
        %4508 = vmatprep.subr.bf16.mxu0 0
        %4509 = vmatpush1.bf16.msra.mxu0 0
        %4510 = vmatprep.mubr.bf16.mxu0 0
        %4511 = vmatmul.mubr.bf16.gmra.mrb[0].mxu0 %v4473
        %v4512 = vpop.f32.mrb[0].mxu0
        %v4513 = vadd.f32 0.0, %v4512
        %v4514 = vpop.f32.mrb[0].mxu0
        %v4515 = vpop.f32.mrb[0].mxu0
        %v4516 = vpop.f32.mrb[0].mxu0
        %4517 = vdwg.mxu0
        %v4520 = vunpack.c.l.b16 %v4239
        %v4521 = vunpack.c.l.b16 %v4240
        %v4522 = vrot.slane %v4521, 7
        %v4523 = vsel %vm3840, %v4522, %v4520
        %v4524 = vpack.c.b16 %v4523, %v4523
        %v4526 = vsel %vm1867, %v4524, 0
        %v4529 = vsel %vm2418, %v4014, 0
        %4531 = vmatprep.subr.bf16.mxu0 0
        %4532 = vmatpush1.bf16.msra.mxu0 %v4529
        %4533 = vmatprep.subr.bf16.mxu0 0
        %4534 = vmatpush1.bf16.msra.mxu0 0
        %4535 = vmatprep.subr.bf16.mxu0 0
        %4536 = vmatpush1.bf16.msra.mxu0 0
        %4537 = vmatprep.subr.bf16.mxu0 0
        %4538 = vmatpush1.bf16.msra.mxu0 0
        %4539 = vmatprep.subr.bf16.mxu0 0
        %4540 = vmatpush1.bf16.msra.mxu0 0
        %4541 = vmatprep.subr.bf16.mxu0 0
        %4542 = vmatpush1.bf16.msra.mxu0 0
        %4543 = vmatprep.subr.bf16.mxu0 0
        %4544 = vmatpush1.bf16.msra.mxu0 0
        %4545 = vmatprep.subr.bf16.mxu0 0
        %4546 = vmatpush1.bf16.msra.mxu0 0
        %4547 = vmatprep.subr.bf16.mxu0 0
        %4548 = vmatpush1.bf16.msra.mxu0 0
        %4549 = vmatprep.subr.bf16.mxu0 0
        %4550 = vmatpush1.bf16.msra.mxu0 0
        %4551 = vmatprep.subr.bf16.mxu0 0
        %4552 = vmatpush1.bf16.msra.mxu0 0
        %4553 = vmatprep.subr.bf16.mxu0 0
        %4554 = vmatpush1.bf16.msra.mxu0 0
        %4555 = vmatprep.subr.bf16.mxu0 0
        %4556 = vmatpush1.bf16.msra.mxu0 0
        %4557 = vmatprep.subr.bf16.mxu0 0
        %4558 = vmatpush1.bf16.msra.mxu0 0
        %4559 = vmatprep.subr.bf16.mxu0 0
        %4560 = vmatpush1.bf16.msra.mxu0 0
        %4561 = vmatprep.subr.bf16.mxu0 0
        %4562 = vmatpush1.bf16.msra.mxu0 0
        %4563 = vmatprep.mubr.bf16.mxu0 0
        %4564 = vmatmul.mubr.bf16.gmra.mrb[0].mxu0 %v4526
        %v4565 = vpop.f32.mrb[0].mxu0
        %v4566 = vadd.f32 %v4513, %v4565
        %v4567 = vpop.f32.mrb[0].mxu0
        %v4568 = vpop.f32.mrb[0].mxu0
        %v4569 = vpop.f32.mrb[0].mxu0
        %4570 = vdwg.mxu0
        %v4573 = vunpack.c.l.s4 1966171168
        %v4574 = vunpack.c.0.s8 %v4573
        %v4575 = vlaneseq
        %v4576 = vshrl.u32 %v4575, 7
        %v4577 = vsub.s32 %v4574, %v4576
        %v4578 = vrot.slane %v4566, %v4577
        %v4579 = vcombine.high %v4578, %v4578
        %v4581 = vunpack.c.l.s4 1966171168
        %v4582 = vunpack.c.0.s8 %v4581
        %v4583 = vlaneseq
        %v4584 = vshrl.u32 %v4583, 7
        %v4585 = vsub.s32 %v4582, %v4584
        %v4586 = vrot.slane %v4578, %v4585
        %v4588 = vunpack.c.l.s4 1966171168
        %v4589 = vunpack.c.0.s8 %v4588
        %v4590 = vlaneseq
        %v4591 = vshrl.u32 %v4590, 7
        %v4592 = vsub.s32 %v4589, %v4591
        %v4593 = vrot.slane %v4579, %v4592
        %4596 = vrot.lane.b32.xlu0 %v4018, 112
        %v4597 = vpop.permute.xlu0 %4596
        %4598 = vrot.lane.b32.xlu0 %v4020, 112
        %v4599 = vpop.permute.xlu0 %4598
        %v4601 = vsel %vm1867, %v4597, 0
        %v4604 = vsel %vm1867, %v4599, 0
        %4606 = vmatprep.subr.bf16.mxu0 0
        %4607 = vmatpush1.bf16.xpose.msra.mxu0 %v4604
        %4608 = vmatprep.subr.bf16.mxu0 0
        %4609 = vmatpush1.bf16.xpose.msra.mxu0 0
        %4610 = vmatprep.subr.bf16.mxu0 0
        %4611 = vmatpush1.bf16.xpose.msra.mxu0 0
        %4612 = vmatprep.subr.bf16.mxu0 0
        %4613 = vmatpush1.bf16.xpose.msra.mxu0 0
        %4614 = vmatprep.subr.bf16.mxu0 0
        %4615 = vmatpush1.bf16.xpose.msra.mxu0 0
        %4616 = vmatprep.subr.bf16.mxu0 0
        %4617 = vmatpush1.bf16.xpose.msra.mxu0 0
        %4618 = vmatprep.subr.bf16.mxu0 0
        %4619 = vmatpush1.bf16.xpose.msra.mxu0 0
        %4620 = vmatprep.subr.bf16.mxu0 0
        %4621 = vmatpush1.bf16.xpose.msra.mxu0 0
        %4622 = vmatprep.subr.bf16.mxu0 0
        %4623 = vmatpush1.bf16.xpose.msra.mxu0 0
        %4624 = vmatprep.subr.bf16.mxu0 0
        %4625 = vmatpush1.bf16.xpose.msra.mxu0 0
        %4626 = vmatprep.subr.bf16.mxu0 0
        %4627 = vmatpush1.bf16.xpose.msra.mxu0 0
        %4628 = vmatprep.subr.bf16.mxu0 0
        %4629 = vmatpush1.bf16.xpose.msra.mxu0 0
        %4630 = vmatprep.subr.bf16.mxu0 0
        %4631 = vmatpush1.bf16.xpose.msra.mxu0 0
        %4632 = vmatprep.subr.bf16.mxu0 0
        %4633 = vmatpush1.bf16.xpose.msra.mxu0 0
        %4634 = vmatprep.subr.bf16.mxu0 0
        %4635 = vmatpush1.bf16.xpose.msra.mxu0 0
        %4636 = vmatprep.subr.bf16.mxu0 0
        %4637 = vmatpush1.bf16.xpose.msra.mxu0 0
        %4638 = vmatprep.mubr.bf16.mxu0 0
        %4639 = vmatmul.mubr.bf16.gmra.mrb[0].mxu0 %v4601
        %v4640 = vpop.f32.mrb[0].mxu0
        %v4641 = vadd.f32 0.0, %v4640
        %v4642 = vpop.f32.mrb[0].mxu0
        %v4643 = vpop.f32.mrb[0].mxu0
        %v4644 = vpop.f32.mrb[0].mxu0
        %4645 = vdwg.mxu0
        %4646 = vrot.lane.b32.xlu0 %v4019, 112
        %v4647 = vpop.permute.xlu0 %4646
        %4648 = vrot.lane.b32.xlu0 %v4021, 112
        %v4649 = vpop.permute.xlu0 %4648
        %v4651 = vsel %vm1867, %v4647, 0
        %v4654 = vsel %vm1867, %v4649, 0
        %4656 = vmatprep.subr.bf16.mxu0 0
        %4657 = vmatpush1.bf16.xpose.msra.mxu0 %v4654
        %4658 = vmatprep.subr.bf16.mxu0 0
        %4659 = vmatpush1.bf16.xpose.msra.mxu0 0
        %4660 = vmatprep.subr.bf16.mxu0 0
        %4661 = vmatpush1.bf16.xpose.msra.mxu0 0
        %4662 = vmatprep.subr.bf16.mxu0 0
        %4663 = vmatpush1.bf16.xpose.msra.mxu0 0
        %4664 = vmatprep.subr.bf16.mxu0 0
        %4665 = vmatpush1.bf16.xpose.msra.mxu0 0
        %4666 = vmatprep.subr.bf16.mxu0 0
        %4667 = vmatpush1.bf16.xpose.msra.mxu0 0
        %4668 = vmatprep.subr.bf16.mxu0 0
        %4669 = vmatpush1.bf16.xpose.msra.mxu0 0
        %4670 = vmatprep.subr.bf16.mxu0 0
        %4671 = vmatpush1.bf16.xpose.msra.mxu0 0
        %4672 = vmatprep.subr.bf16.mxu0 0
        %4673 = vmatpush1.bf16.xpose.msra.mxu0 0
        %4674 = vmatprep.subr.bf16.mxu0 0
        %4675 = vmatpush1.bf16.xpose.msra.mxu0 0
        %4676 = vmatprep.subr.bf16.mxu0 0
        %4677 = vmatpush1.bf16.xpose.msra.mxu0 0
        %4678 = vmatprep.subr.bf16.mxu0 0
        %4679 = vmatpush1.bf16.xpose.msra.mxu0 0
        %4680 = vmatprep.subr.bf16.mxu0 0
        %4681 = vmatpush1.bf16.xpose.msra.mxu0 0
        %4682 = vmatprep.subr.bf16.mxu0 0
        %4683 = vmatpush1.bf16.xpose.msra.mxu0 0
        %4684 = vmatprep.subr.bf16.mxu0 0
        %4685 = vmatpush1.bf16.xpose.msra.mxu0 0
        %4686 = vmatprep.subr.bf16.mxu0 0
        %4687 = vmatpush1.bf16.xpose.msra.mxu0 0
        %4688 = vmatprep.mubr.bf16.mxu0 0
        %4689 = vmatmul.mubr.bf16.gmra.mrb[0].mxu0 %v4651
        %v4690 = vpop.f32.mrb[0].mxu0
        %v4691 = vadd.f32 0.0, %v4690
        %v4692 = vpop.f32.mrb[0].mxu0
        %v4693 = vpop.f32.mrb[0].mxu0
        %v4694 = vpop.f32.mrb[0].mxu0
        %4695 = vdwg.mxu0
        %v4696 = vsel %vm4114, %v4641, -inf
        %4697 = vmax.xlane.f32.xlu0 %v4696
        %v4698 = vpop.xlane.xlu0 %4697
        %v4699 = vsel %vm4114, %v4691, -inf
        %4700 = vmax.xlane.f32.xlu0 %v4699
        %v4701 = vpop.xlane.xlu0 %4700
        %v4702 = vsub.f32 %v4641, %v4698
        %v4703 = vsub.f32 %v4691, %v4701
        %v4704 = vmul.f32 %v4702, 1.442695
        %v4705 = vpow.pop %v4704
        %v4706 = vmul.f32 %v4703, 1.442695
        %v4707 = vpow.pop %v4706
        %v4708 = vsel %vm4114, %v4705, 0.0
        %4709 = vadd.xlane.f32.xlu0 %v4708
        %v4710 = vpop.xlane.xlu0 %4709
        %v4711 = vsel %vm4114, %v4707, 0.0
        %4712 = vadd.xlane.f32.xlu0 %v4711
        %v4713 = vpop.xlane.xlu0 %4712
        %v4714 = vrcp.pop %v4710
        %v4715 = vmul.f32 %v4705, %v4714
        %v4716 = vrcp.pop %v4713
        %v4717 = vmul.f32 %v4707, %v4716
        %v4718 = vpack.c.bf16 %v4715, %v4715
        %v4719 = vpack.c.bf16 %v4717, %v4717
        %4720 = vrot.lane.b32.xlu0 %v4020, 80
        %v4721 = vpop.permute.xlu0 %4720
        %v4723 = vsel %vm4142, %v4718, 0
        %v4726 = vsel %vm4146, %v4721, 0
        %4728 = vmatprep.subr.bf16.mxu0 0
        %4729 = vmatpush1.bf16.msra.mxu0 %v4726
        %4730 = vmatprep.subr.bf16.mxu0 0
        %4731 = vmatpush1.bf16.msra.mxu0 0
        %4732 = vmatprep.subr.bf16.mxu0 0
        %4733 = vmatpush1.bf16.msra.mxu0 0
        %4734 = vmatprep.subr.bf16.mxu0 0
        %4735 = vmatpush1.bf16.msra.mxu0 0
        %4736 = vmatprep.subr.bf16.mxu0 0
        %4737 = vmatpush1.bf16.msra.mxu0 0
        %4738 = vmatprep.subr.bf16.mxu0 0
        %4739 = vmatpush1.bf16.msra.mxu0 0
        %4740 = vmatprep.subr.bf16.mxu0 0
        %4741 = vmatpush1.bf16.msra.mxu0 0
        %4742 = vmatprep.subr.bf16.mxu0 0
        %4743 = vmatpush1.bf16.msra.mxu0 0
        %4744 = vmatprep.subr.bf16.mxu0 0
        %4745 = vmatpush1.bf16.msra.mxu0 0
        %4746 = vmatprep.subr.bf16.mxu0 0
        %4747 = vmatpush1.bf16.msra.mxu0 0
        %4748 = vmatprep.subr.bf16.mxu0 0
        %4749 = vmatpush1.bf16.msra.mxu0 0
        %4750 = vmatprep.subr.bf16.mxu0 0
        %4751 = vmatpush1.bf16.msra.mxu0 0
        %4752 = vmatprep.subr.bf16.mxu0 0
        %4753 = vmatpush1.bf16.msra.mxu0 0
        %4754 = vmatprep.subr.bf16.mxu0 0
        %4755 = vmatpush1.bf16.msra.mxu0 0
        %4756 = vmatprep.subr.bf16.mxu0 0
        %4757 = vmatpush1.bf16.msra.mxu0 0
        %4758 = vmatprep.subr.bf16.mxu0 0
        %4759 = vmatpush1.bf16.msra.mxu0 0
        %4760 = vmatprep.mubr.bf16.mxu0 0
        %4761 = vmatmul.mubr.bf16.gmra.mrb[0].mxu0 %v4723
        %v4762 = vpop.f32.mrb[0].mxu0
        %v4763 = vadd.f32 0.0, %v4762
        %v4764 = vpop.f32.mrb[0].mxu0
        %v4765 = vpop.f32.mrb[0].mxu0
        %v4766 = vpop.f32.mrb[0].mxu0
        %4767 = vdwg.mxu0
        %4768 = vrot.lane.b32.xlu0 %v4021, 80
        %v4769 = vpop.permute.xlu0 %4768
        %v4771 = vsel %vm4142, %v4719, 0
        %v4774 = vsel %vm4146, %v4769, 0
        %4776 = vmatprep.subr.bf16.mxu0 0
        %4777 = vmatpush1.bf16.msra.mxu0 %v4774
        %4778 = vmatprep.subr.bf16.mxu0 0
        %4779 = vmatpush1.bf16.msra.mxu0 0
        %4780 = vmatprep.subr.bf16.mxu0 0
        %4781 = vmatpush1.bf16.msra.mxu0 0
        %4782 = vmatprep.subr.bf16.mxu0 0
        %4783 = vmatpush1.bf16.msra.mxu0 0
        %4784 = vmatprep.subr.bf16.mxu0 0
        %4785 = vmatpush1.bf16.msra.mxu0 0
        %4786 = vmatprep.subr.bf16.mxu0 0
        %4787 = vmatpush1.bf16.msra.mxu0 0
        %4788 = vmatprep.subr.bf16.mxu0 0
        %4789 = vmatpush1.bf16.msra.mxu0 0
        %4790 = vmatprep.subr.bf16.mxu0 0
        %4791 = vmatpush1.bf16.msra.mxu0 0
        %4792 = vmatprep.subr.bf16.mxu0 0
        %4793 = vmatpush1.bf16.msra.mxu0 0
        %4794 = vmatprep.subr.bf16.mxu0 0
        %4795 = vmatpush1.bf16.msra.mxu0 0
        %4796 = vmatprep.subr.bf16.mxu0 0
        %4797 = vmatpush1.bf16.msra.mxu0 0
        %4798 = vmatprep.subr.bf16.mxu0 0
        %4799 = vmatpush1.bf16.msra.mxu0 0
        %4800 = vmatprep.subr.bf16.mxu0 0
        %4801 = vmatpush1.bf16.msra.mxu0 0
        %4802 = vmatprep.subr.bf16.mxu0 0
        %4803 = vmatpush1.bf16.msra.mxu0 0
        %4804 = vmatprep.subr.bf16.mxu0 0
        %4805 = vmatpush1.bf16.msra.mxu0 0
        %4806 = vmatprep.subr.bf16.mxu0 0
        %4807 = vmatpush1.bf16.msra.mxu0 0
        %4808 = vmatprep.mubr.bf16.mxu0 0
        %4809 = vmatmul.mubr.bf16.gmra.mrb[0].mxu0 %v4771
        %v4810 = vpop.f32.mrb[0].mxu0
        %v4811 = vadd.f32 0.0, %v4810
        %v4812 = vpop.f32.mrb[0].mxu0
        %v4813 = vpop.f32.mrb[0].mxu0
        %v4814 = vpop.f32.mrb[0].mxu0
        %4815 = vdwg.mxu0
        %v4816 = vpack.c.bf16 %v4763, %v4763
        %v4817 = vpack.c.bf16 %v4811, %v4811
        %v4820 = vunpack.c.l.b16 %v4816
        %v4821 = vunpack.c.l.b16 %v4817
        %v4822 = vrot.slane %v4821, 7
        %v4823 = vsel %vm3840, %v4822, %v4820
        %v4824 = vpack.c.b16 %v4823, %v4823
        %v4826 = vsel %vm1867, %v4824, 0
        %v4829 = vsel %vm2418, %v4016, 0
        %4831 = vmatprep.subr.bf16.mxu0 0
        %4832 = vmatpush1.bf16.msra.mxu0 %v4829
        %4833 = vmatprep.subr.bf16.mxu0 0
        %4834 = vmatpush1.bf16.msra.mxu0 0
        %4835 = vmatprep.subr.bf16.mxu0 0
        %4836 = vmatpush1.bf16.msra.mxu0 0
        %4837 = vmatprep.subr.bf16.mxu0 0
        %4838 = vmatpush1.bf16.msra.mxu0 0
        %4839 = vmatprep.subr.bf16.mxu0 0
        %4840 = vmatpush1.bf16.msra.mxu0 0
        %4841 = vmatprep.subr.bf16.mxu0 0
        %4842 = vmatpush1.bf16.msra.mxu0 0
        %4843 = vmatprep.subr.bf16.mxu0 0
        %4844 = vmatpush1.bf16.msra.mxu0 0
        %4845 = vmatprep.subr.bf16.mxu0 0
        %4846 = vmatpush1.bf16.msra.mxu0 0
        %4847 = vmatprep.subr.bf16.mxu0 0
        %4848 = vmatpush1.bf16.msra.mxu0 0
        %4849 = vmatprep.subr.bf16.mxu0 0
        %4850 = vmatpush1.bf16.msra.mxu0 0
        %4851 = vmatprep.subr.bf16.mxu0 0
        %4852 = vmatpush1.bf16.msra.mxu0 0
        %4853 = vmatprep.subr.bf16.mxu0 0
        %4854 = vmatpush1.bf16.msra.mxu0 0
        %4855 = vmatprep.subr.bf16.mxu0 0
        %4856 = vmatpush1.bf16.msra.mxu0 0
        %4857 = vmatprep.subr.bf16.mxu0 0
        %4858 = vmatpush1.bf16.msra.mxu0 0
        %4859 = vmatprep.subr.bf16.mxu0 0
        %4860 = vmatpush1.bf16.msra.mxu0 0
        %4861 = vmatprep.subr.bf16.mxu0 0
        %4862 = vmatpush1.bf16.msra.mxu0 0
        %4863 = vmatprep.mubr.bf16.mxu0 0
        %4864 = vmatmul.mubr.bf16.gmra.mrb[0].mxu0 %v4826
        %v4865 = vpop.f32.mrb[0].mxu0
        %v4866 = vadd.f32 0.0, %v4865
        %v4867 = vpop.f32.mrb[0].mxu0
        %v4868 = vpop.f32.mrb[0].mxu0
        %v4869 = vpop.f32.mrb[0].mxu0
        %4870 = vdwg.mxu0
        %v4873 = vunpack.c.l.s4 1966171168
        %v4874 = vunpack.c.0.s8 %v4873
        %v4875 = vlaneseq
        %v4876 = vshrl.u32 %v4875, 7
        %v4877 = vsub.s32 %v4874, %v4876
        %v4878 = vrot.slane %v4866, %v4877
        %v4879 = vcombine.high %v4878, %v4878
        %v4881 = vunpack.c.l.s4 1966171168
        %v4882 = vunpack.c.0.s8 %v4881
        %v4883 = vlaneseq
        %v4884 = vshrl.u32 %v4883, 7
        %v4885 = vsub.s32 %v4882, %v4884
        %v4886 = vrot.slane %v4878, %v4885
        %v4888 = vunpack.c.l.s4 1966171168
        %v4889 = vunpack.c.0.s8 %v4888
        %v4890 = vlaneseq
        %v4891 = vshrl.u32 %v4890, 7
        %v4892 = vsub.s32 %v4889, %v4891
        %v4893 = vrot.slane %v4879, %v4892
        %v4896 = vadd.f32 %v4586, %v4886
        %v4897 = vadd.f32 %v4593, %v4893
        %4898 = vrot.lane.b32.xlu0 %v4018, 104
        %v4899 = vpop.permute.xlu0 %4898
        %4900 = vrot.lane.b32.xlu0 %v4020, 104
        %v4901 = vpop.permute.xlu0 %4900
        %v4903 = vsel %vm1867, %v4899, 0
        %v4906 = vsel %vm1867, %v4901, 0
        %4908 = vmatprep.subr.bf16.mxu0 0
        %4909 = vmatpush1.bf16.xpose.msra.mxu0 %v4906
        %4910 = vmatprep.subr.bf16.mxu0 0
        %4911 = vmatpush1.bf16.xpose.msra.mxu0 0
        %4912 = vmatprep.subr.bf16.mxu0 0
        %4913 = vmatpush1.bf16.xpose.msra.mxu0 0
        %4914 = vmatprep.subr.bf16.mxu0 0
        %4915 = vmatpush1.bf16.xpose.msra.mxu0 0
        %4916 = vmatprep.subr.bf16.mxu0 0
        %4917 = vmatpush1.bf16.xpose.msra.mxu0 0
        %4918 = vmatprep.subr.bf16.mxu0 0
        %4919 = vmatpush1.bf16.xpose.msra.mxu0 0
        %4920 = vmatprep.subr.bf16.mxu0 0
        %4921 = vmatpush1.bf16.xpose.msra.mxu0 0
        %4922 = vmatprep.subr.bf16.mxu0 0
        %4923 = vmatpush1.bf16.xpose.msra.mxu0 0
        %4924 = vmatprep.subr.bf16.mxu0 0
        %4925 = vmatpush1.bf16.xpose.msra.mxu0 0
        %4926 = vmatprep.subr.bf16.mxu0 0
        %4927 = vmatpush1.bf16.xpose.msra.mxu0 0
        %4928 = vmatprep.subr.bf16.mxu0 0
        %4929 = vmatpush1.bf16.xpose.msra.mxu0 0
        %4930 = vmatprep.subr.bf16.mxu0 0
        %4931 = vmatpush1.bf16.xpose.msra.mxu0 0
        %4932 = vmatprep.subr.bf16.mxu0 0
        %4933 = vmatpush1.bf16.xpose.msra.mxu0 0
        %4934 = vmatprep.subr.bf16.mxu0 0
        %4935 = vmatpush1.bf16.xpose.msra.mxu0 0
        %4936 = vmatprep.subr.bf16.mxu0 0
        %4937 = vmatpush1.bf16.xpose.msra.mxu0 0
        %4938 = vmatprep.subr.bf16.mxu0 0
        %4939 = vmatpush1.bf16.xpose.msra.mxu0 0
        %4940 = vmatprep.mubr.bf16.mxu0 0
        %4941 = vmatmul.mubr.bf16.gmra.mrb[0].mxu0 %v4903
        %v4942 = vpop.f32.mrb[0].mxu0
        %v4943 = vadd.f32 0.0, %v4942
        %v4944 = vpop.f32.mrb[0].mxu0
        %v4945 = vpop.f32.mrb[0].mxu0
        %v4946 = vpop.f32.mrb[0].mxu0
        %4947 = vdwg.mxu0
        %4948 = vrot.lane.b32.xlu0 %v4019, 104
        %v4949 = vpop.permute.xlu0 %4948
        %4950 = vrot.lane.b32.xlu0 %v4021, 104
        %v4951 = vpop.permute.xlu0 %4950
        %v4953 = vsel %vm1867, %v4949, 0
        %v4956 = vsel %vm1867, %v4951, 0
        %4958 = vmatprep.subr.bf16.mxu0 0
        %4959 = vmatpush1.bf16.xpose.msra.mxu0 %v4956
        %4960 = vmatprep.subr.bf16.mxu0 0
        %4961 = vmatpush1.bf16.xpose.msra.mxu0 0
        %4962 = vmatprep.subr.bf16.mxu0 0
        %4963 = vmatpush1.bf16.xpose.msra.mxu0 0
        %4964 = vmatprep.subr.bf16.mxu0 0
        %4965 = vmatpush1.bf16.xpose.msra.mxu0 0
        %4966 = vmatprep.subr.bf16.mxu0 0
        %4967 = vmatpush1.bf16.xpose.msra.mxu0 0
        %4968 = vmatprep.subr.bf16.mxu0 0
        %4969 = vmatpush1.bf16.xpose.msra.mxu0 0
        %4970 = vmatprep.subr.bf16.mxu0 0
        %4971 = vmatpush1.bf16.xpose.msra.mxu0 0
        %4972 = vmatprep.subr.bf16.mxu0 0
        %4973 = vmatpush1.bf16.xpose.msra.mxu0 0
        %4974 = vmatprep.subr.bf16.mxu0 0
        %4975 = vmatpush1.bf16.xpose.msra.mxu0 0
        %4976 = vmatprep.subr.bf16.mxu0 0
        %4977 = vmatpush1.bf16.xpose.msra.mxu0 0
        %4978 = vmatprep.subr.bf16.mxu0 0
        %4979 = vmatpush1.bf16.xpose.msra.mxu0 0
        %4980 = vmatprep.subr.bf16.mxu0 0
        %4981 = vmatpush1.bf16.xpose.msra.mxu0 0
        %4982 = vmatprep.subr.bf16.mxu0 0
        %4983 = vmatpush1.bf16.xpose.msra.mxu0 0
        %4984 = vmatprep.subr.bf16.mxu0 0
        %4985 = vmatpush1.bf16.xpose.msra.mxu0 0
        %4986 = vmatprep.subr.bf16.mxu0 0
        %4987 = vmatpush1.bf16.xpose.msra.mxu0 0
        %4988 = vmatprep.subr.bf16.mxu0 0
        %4989 = vmatpush1.bf16.xpose.msra.mxu0 0
        %4990 = vmatprep.mubr.bf16.mxu0 0
        %4991 = vmatmul.mubr.bf16.gmra.mrb[0].mxu0 %v4953
        %v4992 = vpop.f32.mrb[0].mxu0
        %v4993 = vadd.f32 0.0, %v4992
        %v4994 = vpop.f32.mrb[0].mxu0
        %v4995 = vpop.f32.mrb[0].mxu0
        %v4996 = vpop.f32.mrb[0].mxu0
        %4997 = vdwg.mxu0
        %v4998 = vsel %vm4114, %v4943, -inf
        %4999 = vmax.xlane.f32.xlu0 %v4998
        %v5000 = vpop.xlane.xlu0 %4999
        %v5001 = vsel %vm4114, %v4993, -inf
        %5002 = vmax.xlane.f32.xlu0 %v5001
        %v5003 = vpop.xlane.xlu0 %5002
        %v5004 = vsub.f32 %v4943, %v5000
        %v5005 = vsub.f32 %v4993, %v5003
        %v5006 = vmul.f32 %v5004, 1.442695
        %v5007 = vpow.pop %v5006
        %v5008 = vmul.f32 %v5005, 1.442695
        %v5009 = vpow.pop %v5008
        %v5010 = vsel %vm4114, %v5007, 0.0
        %5011 = vadd.xlane.f32.xlu0 %v5010
        %v5012 = vpop.xlane.xlu0 %5011
        %v5013 = vsel %vm4114, %v5009, 0.0
        %5014 = vadd.xlane.f32.xlu0 %v5013
        %v5015 = vpop.xlane.xlu0 %5014
        %v5016 = vrcp.pop %v5012
        %v5017 = vmul.f32 %v5007, %v5016
        %v5018 = vrcp.pop %v5015
        %v5019 = vmul.f32 %v5009, %v5018
        %v5020 = vpack.c.bf16 %v5017, %v5017
        %v5021 = vpack.c.bf16 %v5019, %v5019
        %5022 = vrot.lane.b32.xlu0 %v4020, 72
        %v5023 = vpop.permute.xlu0 %5022
        %v5025 = vsel %vm4142, %v5020, 0
        %v5028 = vsel %vm4146, %v5023, 0
        %5030 = vmatprep.subr.bf16.mxu0 0
        %5031 = vmatpush1.bf16.msra.mxu0 %v5028
        %5032 = vmatprep.subr.bf16.mxu0 0
        %5033 = vmatpush1.bf16.msra.mxu0 0
        %5034 = vmatprep.subr.bf16.mxu0 0
        %5035 = vmatpush1.bf16.msra.mxu0 0
        %5036 = vmatprep.subr.bf16.mxu0 0
        %5037 = vmatpush1.bf16.msra.mxu0 0
        %5038 = vmatprep.subr.bf16.mxu0 0
        %5039 = vmatpush1.bf16.msra.mxu0 0
        %5040 = vmatprep.subr.bf16.mxu0 0
        %5041 = vmatpush1.bf16.msra.mxu0 0
        %5042 = vmatprep.subr.bf16.mxu0 0
        %5043 = vmatpush1.bf16.msra.mxu0 0
        %5044 = vmatprep.subr.bf16.mxu0 0
        %5045 = vmatpush1.bf16.msra.mxu0 0
        %5046 = vmatprep.subr.bf16.mxu0 0
        %5047 = vmatpush1.bf16.msra.mxu0 0
        %5048 = vmatprep.subr.bf16.mxu0 0
        %5049 = vmatpush1.bf16.msra.mxu0 0
        %5050 = vmatprep.subr.bf16.mxu0 0
        %5051 = vmatpush1.bf16.msra.mxu0 0
        %5052 = vmatprep.subr.bf16.mxu0 0
        %5053 = vmatpush1.bf16.msra.mxu0 0
        %5054 = vmatprep.subr.bf16.mxu0 0
        %5055 = vmatpush1.bf16.msra.mxu0 0
        %5056 = vmatprep.subr.bf16.mxu0 0
        %5057 = vmatpush1.bf16.msra.mxu0 0
        %5058 = vmatprep.subr.bf16.mxu0 0
        %5059 = vmatpush1.bf16.msra.mxu0 0
        %5060 = vmatprep.subr.bf16.mxu0 0
        %5061 = vmatpush1.bf16.msra.mxu0 0
        %5062 = vmatprep.mubr.bf16.mxu0 0
        %5063 = vmatmul.mubr.bf16.gmra.mrb[0].mxu0 %v5025
        %v5064 = vpop.f32.mrb[0].mxu0
        %v5065 = vadd.f32 0.0, %v5064
        %v5066 = vpop.f32.mrb[0].mxu0
        %v5067 = vpop.f32.mrb[0].mxu0
        %v5068 = vpop.f32.mrb[0].mxu0
        %5069 = vdwg.mxu0
        %5070 = vrot.lane.b32.xlu0 %v4021, 72
        %v5071 = vpop.permute.xlu0 %5070
        %v5073 = vsel %vm4142, %v5021, 0
        %v5076 = vsel %vm4146, %v5071, 0
        %5078 = vmatprep.subr.bf16.mxu0 0
        %5079 = vmatpush1.bf16.msra.mxu0 %v5076
        %5080 = vmatprep.subr.bf16.mxu0 0
        %5081 = vmatpush1.bf16.msra.mxu0 0
        %5082 = vmatprep.subr.bf16.mxu0 0
        %5083 = vmatpush1.bf16.msra.mxu0 0
        %5084 = vmatprep.subr.bf16.mxu0 0
        %5085 = vmatpush1.bf16.msra.mxu0 0
        %5086 = vmatprep.subr.bf16.mxu0 0
        %5087 = vmatpush1.bf16.msra.mxu0 0
        %5088 = vmatprep.subr.bf16.mxu0 0
        %5089 = vmatpush1.bf16.msra.mxu0 0
        %5090 = vmatprep.subr.bf16.mxu0 0
        %5091 = vmatpush1.bf16.msra.mxu0 0
        %5092 = vmatprep.subr.bf16.mxu0 0
        %5093 = vmatpush1.bf16.msra.mxu0 0
        %5094 = vmatprep.subr.bf16.mxu0 0
        %5095 = vmatpush1.bf16.msra.mxu0 0
        %5096 = vmatprep.subr.bf16.mxu0 0
        %5097 = vmatpush1.bf16.msra.mxu0 0
        %5098 = vmatprep.subr.bf16.mxu0 0
        %5099 = vmatpush1.bf16.msra.mxu0 0
        %5100 = vmatprep.subr.bf16.mxu0 0
        %5101 = vmatpush1.bf16.msra.mxu0 0
        %5102 = vmatprep.subr.bf16.mxu0 0
        %5103 = vmatpush1.bf16.msra.mxu0 0
        %5104 = vmatprep.subr.bf16.mxu0 0
        %5105 = vmatpush1.bf16.msra.mxu0 0
        %5106 = vmatprep.subr.bf16.mxu0 0
        %5107 = vmatpush1.bf16.msra.mxu0 0
        %5108 = vmatprep.subr.bf16.mxu0 0
        %5109 = vmatpush1.bf16.msra.mxu0 0
        %5110 = vmatprep.mubr.bf16.mxu0 0
        %5111 = vmatmul.mubr.bf16.gmra.mrb[0].mxu0 %v5073
        %v5112 = vpop.f32.mrb[0].mxu0
        %v5113 = vadd.f32 0.0, %v5112
        %v5114 = vpop.f32.mrb[0].mxu0
        %v5115 = vpop.f32.mrb[0].mxu0
        %v5116 = vpop.f32.mrb[0].mxu0
        %5117 = vdwg.mxu0
        %v5118 = vpack.c.bf16 %v5065, %v5065
        %v5119 = vpack.c.bf16 %v5113, %v5113
        %v5122 = vunpack.c.l.b16 %v5118
        %v5123 = vunpack.c.l.b16 %v5119
        %v5124 = vrot.slane %v5123, 7
        %v5125 = vsel %vm3840, %v5124, %v5122
        %v5126 = vpack.c.b16 %v5125, %v5125
        %v5128 = vsel %vm1867, %v5126, 0
        %v5131 = vsel %vm2418, %v4017, 0
        %5133 = vmatprep.subr.bf16.mxu0 0
        %5134 = vmatpush1.bf16.msra.mxu0 %v5131
        %5135 = vmatprep.subr.bf16.mxu0 0
        %5136 = vmatpush1.bf16.msra.mxu0 0
        %5137 = vmatprep.subr.bf16.mxu0 0
        %5138 = vmatpush1.bf16.msra.mxu0 0
        %5139 = vmatprep.subr.bf16.mxu0 0
        %5140 = vmatpush1.bf16.msra.mxu0 0
        %5141 = vmatprep.subr.bf16.mxu0 0
        %5142 = vmatpush1.bf16.msra.mxu0 0
        %5143 = vmatprep.subr.bf16.mxu0 0
        %5144 = vmatpush1.bf16.msra.mxu0 0
        %5145 = vmatprep.subr.bf16.mxu0 0
        %5146 = vmatpush1.bf16.msra.mxu0 0
        %5147 = vmatprep.subr.bf16.mxu0 0
        %5148 = vmatpush1.bf16.msra.mxu0 0
        %5149 = vmatprep.subr.bf16.mxu0 0
        %5150 = vmatpush1.bf16.msra.mxu0 0
        %5151 = vmatprep.subr.bf16.mxu0 0
        %5152 = vmatpush1.bf16.msra.mxu0 0
        %5153 = vmatprep.subr.bf16.mxu0 0
        %5154 = vmatpush1.bf16.msra.mxu0 0
        %5155 = vmatprep.subr.bf16.mxu0 0
        %5156 = vmatpush1.bf16.msra.mxu0 0
        %5157 = vmatprep.subr.bf16.mxu0 0
        %5158 = vmatpush1.bf16.msra.mxu0 0
        %5159 = vmatprep.subr.bf16.mxu0 0
        %5160 = vmatpush1.bf16.msra.mxu0 0
        %5161 = vmatprep.subr.bf16.mxu0 0
        %5162 = vmatpush1.bf16.msra.mxu0 0
        %5163 = vmatprep.subr.bf16.mxu0 0
        %5164 = vmatpush1.bf16.msra.mxu0 0
        %5165 = vmatprep.mubr.bf16.mxu0 0
        %5166 = vmatmul.mubr.bf16.gmra.mrb[0].mxu0 %v5128
        %v5167 = vpop.f32.mrb[0].mxu0
        %v5168 = vadd.f32 0.0, %v5167
        %v5169 = vpop.f32.mrb[0].mxu0
        %v5170 = vpop.f32.mrb[0].mxu0
        %v5171 = vpop.f32.mrb[0].mxu0
        %5172 = vdwg.mxu0
        %v5175 = vunpack.c.l.s4 1966171168
        %v5176 = vunpack.c.0.s8 %v5175
        %v5177 = vlaneseq
        %v5178 = vshrl.u32 %v5177, 7
        %v5179 = vsub.s32 %v5176, %v5178
        %v5180 = vrot.slane %v5168, %v5179
        %v5181 = vcombine.high %v5180, %v5180
        %v5183 = vunpack.c.l.s4 1966171168
        %v5184 = vunpack.c.0.s8 %v5183
        %v5185 = vlaneseq
        %v5186 = vshrl.u32 %v5185, 7
        %v5187 = vsub.s32 %v5184, %v5186
        %v5188 = vrot.slane %v5180, %v5187
        %v5190 = vunpack.c.l.s4 1966171168
        %v5191 = vunpack.c.0.s8 %v5190
        %v5192 = vlaneseq
        %v5193 = vshrl.u32 %v5192, 7
        %v5194 = vsub.s32 %v5191, %v5193
        %v5195 = vrot.slane %v5181, %v5194
        %v5198 = vadd.f32 %v4896, %v5188
        %v5199 = vadd.f32 %v4897, %v5195
        %v5200 = vld [vmem:[%s1202] sm:$0x1]
        %v5202 = vlaneseq
        %v5203 = vshrl.u32 %v5202, 7
        %v5204 = vsub.s32 0, %v5203
        %v5205 = vrot.slane %v5200, %v5204
        %v5207 = vunpack.c.l.s4 1966171168
        %v5208 = vunpack.c.0.s8 %v5207
        %v5209 = vlaneseq
        %v5210 = vshrl.u32 %v5209, 7
        %v5211 = vsub.s32 %v5208, %v5210
        %v5212 = vrot.slane %v5205, %v5211
        %v5213 = vcombine.high %v5212, %v5212
        %v5215 = vunpack.c.l.s4 1966171168
        %v5216 = vunpack.c.0.s8 %v5215
        %v5217 = vlaneseq
        %v5218 = vshrl.u32 %v5217, 7
        %v5219 = vsub.s32 %v5216, %v5218
        %v5220 = vrot.slane %v5212, %v5219
        %v5222 = vunpack.c.l.s4 1966171168
        %v5223 = vunpack.c.0.s8 %v5222
        %v5224 = vlaneseq
        %v5225 = vshrl.u32 %v5224, 7
        %v5226 = vsub.s32 %v5223, %v5225
        %v5227 = vrot.slane %v5213, %v5226
        %v5230 = vadd.f32 %v5198, %v5220
        %v5231 = vadd.f32 %v5199, %v5227
        %v5234 = vlaneseq
        %v5235 = vshrl.u32 %v5234, 7
        %v5236 = vsub.s32 0, %v5235
        %v5237 = vrot.slane %v5230, %v5236
        %v5238 = vlaneseq
        %v5239 = vshrl.u32 %v5238, 7
        %v5240 = vsub.s32 0, %v5239
        %v5241 = vrot.slane %v5231, %v5240
        %v5244 = vadd.f32 %v3819, %v5237
        %v5245 = vadd.f32 %v3820, %v5241
        %v5246 = vld [vmem:[%s1020] sm:$0x1]
        %v5247 = vld [vmem:[%s1028] sm:$0x1]
        %v5250 = vrot.slane %v5245, 7
        %vm5251 = vcmask 1045509
        %v5252 = vsel %vm5251, %v5250, %v5244
        %vm5254 = vcmask 259076
        %v5255 = vsel %vm5254, %v5252, 0.0
        %5256 = vadd.xlane.f32.xlu0 %v5255
        %v5257 = vpop.xlane.xlu0 %5256
        %v5258 = vmul.f32 %v5257, %v3784
        %v5260 = vrot.slane %v5258, 1
        %v5263 = vsub.f32 %v5244, %v5258
        %v5264 = vsub.f32 %v5245, %v5260
        %v5265 = vmul.f32 %v5263, %v5263
        %v5266 = vmul.f32 %v5264, %v5264
        %v5269 = vrot.slane %v5266, 7
        %v5270 = vsel %vm5251, %v5269, %v5265
        %v5272 = vsel %vm5254, %v5270, 0.0
        %5273 = vadd.xlane.f32.xlu0 %v5272
        %v5274 = vpop.xlane.xlu0 %5273
        %v5275 = vmul.f32 %v5274, %v3784
        %v5276 = vadd.f32 %v5275, 1e-05
        %v5277 = vrsqrt.pop %v5276
        %v5279 = vrot.slane %v5277, 1
        %v5282 = vmul.f32 %v5263, %v5277
        %v5283 = vmul.f32 %v5264, %v5279
        %v5285 = vlaneseq
        %v5286 = vshrl.u32 %v5285, 7
        %v5287 = vsub.s32 0, %v5286
        %v5288 = vrot.slane %v5246, %v5287
        %v5290 = vmul.f32 %v5282, %v5288
        %v5291 = vmul.f32 %v5283, %v5288
        %v5293 = vlaneseq
        %v5294 = vshrl.u32 %v5293, 7
        %v5295 = vsub.s32 0, %v5294
        %v5296 = vrot.slane %v5247, %v5295
        %v5298 = vadd.f32 %v5290, %v5296
        %v5299 = vadd.f32 %v5291, %v5296
        %v5300 = vld [vmem:[%s1205] sm:$0x1]
        %v5301 = vld [vmem:[%s1208] sm:$0x1]
        %v5304 = vcombine.low %v3819, %v3820
        %v5306 = vsel %vm1660, %v5304, 0.0
        %5307 = vadd.xlane.f32.xlu0 %v5306
        %v5308 = vpop.xlane.xlu0 %5307
        %v5309 = vmul.f32 %v5308, %v3784
        %v5312 = vunpack.c.l.s4 839922192
        %v5313 = vunpack.c.0.s8 %v5312
        %v5314 = vlaneseq
        %v5315 = vshrl.u32 %v5314, 7
        %v5316 = vsub.s32 %v5313, %v5315
        %v5317 = vrot.slane %v5309, %v5316
        %v5319 = vunpack.c.l.s4 1985246804
        %v5320 = vunpack.c.0.s8 %v5319
        %v5321 = vlaneseq
        %v5322 = vshrl.u32 %v5321, 7
        %v5323 = vsub.s32 %v5320, %v5322
        %v5324 = vrot.slane %v5309, %v5323
        %v5327 = vsub.f32 %v3819, %v5317
        %v5328 = vsub.f32 %v3820, %v5324
        %v5329 = vmul.f32 %v5327, %v5327
        %v5330 = vmul.f32 %v5328, %v5328
        %v5333 = vcombine.low %v5329, %v5330
        %v5335 = vsel %vm1660, %v5333, 0.0
        %5336 = vadd.xlane.f32.xlu0 %v5335
        %v5337 = vpop.xlane.xlu0 %5336
        %v5338 = vmul.f32 %v5337, %v3784
        %v5339 = vadd.f32 %v5338, 1e-05
        %v5340 = vrsqrt.pop %v5339
        %v5343 = vunpack.c.l.s4 839922192
        %v5344 = vunpack.c.0.s8 %v5343
        %v5345 = vlaneseq
        %v5346 = vshrl.u32 %v5345, 7
        %v5347 = vsub.s32 %v5344, %v5346
        %v5348 = vrot.slane %v5340, %v5347
        %v5350 = vunpack.c.l.s4 1985246804
        %v5351 = vunpack.c.0.s8 %v5350
        %v5352 = vlaneseq
        %v5353 = vshrl.u32 %v5352, 7
        %v5354 = vsub.s32 %v5351, %v5353
        %v5355 = vrot.slane %v5340, %v5354
        %v5358 = vmul.f32 %v5327, %v5348
        %v5359 = vmul.f32 %v5328, %v5355
        %v5361 = vlaneseq
        %v5362 = vshrl.u32 %v5361, 7
        %v5363 = vsub.s32 0, %v5362
        %v5364 = vrot.slane %v5300, %v5363
        %v5366 = vcombine.high %v5364, %v5364
        %v5368 = vmul.f32 %v5358, %v5364
        %v5369 = vmul.f32 %v5359, %v5366
        %v5371 = vlaneseq
        %v5372 = vshrl.u32 %v5371, 7
        %v5373 = vsub.s32 0, %v5372
        %v5374 = vrot.slane %v5301, %v5373
        %v5376 = vcombine.high %v5374, %v5374
        %v5378 = vadd.f32 %v5368, %v5374
        %v5379 = vadd.f32 %v5369, %v5376
        %v5382 = vcombine.low %v5378, %v5379
        %v5384 = vpack.c.bf16 %v5382, %v5382
        %v5385 = vld [vmem:[%s1213] sm:$0xf]
        %v5386 = vld [vmem:[%s1213 + $0x4] sm:$0xf]
        %v5387 = vld [vmem:[%s1213 + $0x8] sm:$0xf]
        %v5388 = vld [vmem:[%s1213 + $0xc] sm:$0xf]
        %v5389 = vld [vmem:[%s1216] sm:$0x1]
        %v5391 = vlaneseq
        %v5392 = vshrl.u32 %v5391, 7
        %v5393 = vsub.s32 0, %v5392
        %v5394 = vrot.slane %v5389, %v5393
        %v5400 = vunpack.c.l.b16 %v5385
        %v5401 = vunpack.c.l.b16 %v5386
        %v5402 = vunpack.c.l.b16 %v5387
        %v5403 = vunpack.c.l.b16 %v5388
        %v5404 = vpack.c.b16 %v5401, %v5400
        %v5405 = vpack.c.b16 %v5403, %v5402
        %v5409 = vsel %vm1660, %v5384, 0
        %5411 = vmatprep.subr.bf16.mxu0 0
        %5412 = vmatpush1.bf16.msra.mxu0 %v5404
        %5413 = vmatprep.subr.bf16.mxu0 0
        %5414 = vmatpush1.bf16.msra.mxu0 %v5405
        %5415 = vmatprep.subr.bf16.mxu0 0
        %5416 = vmatpush1.bf16.msra.mxu0 0
        %5417 = vmatprep.subr.bf16.mxu0 0
        %5418 = vmatpush1.bf16.msra.mxu0 0
        %5419 = vmatprep.subr.bf16.mxu0 0
        %5420 = vmatpush1.bf16.msra.mxu0 0
        %5421 = vmatprep.subr.bf16.mxu0 0
        %5422 = vmatpush1.bf16.msra.mxu0 0
        %5423 = vmatprep.subr.bf16.mxu0 0
        %5424 = vmatpush1.bf16.msra.mxu0 0
        %5425 = vmatprep.subr.bf16.mxu0 0
        %5426 = vmatpush1.bf16.msra.mxu0 0
        %5427 = vmatprep.subr.bf16.mxu0 0
        %5428 = vmatpush1.bf16.msra.mxu0 0
        %5429 = vmatprep.subr.bf16.mxu0 0
        %5430 = vmatpush1.bf16.msra.mxu0 0
        %5431 = vmatprep.subr.bf16.mxu0 0
        %5432 = vmatpush1.bf16.msra.mxu0 0
        %5433 = vmatprep.subr.bf16.mxu0 0
        %5434 = vmatpush1.bf16.msra.mxu0 0
        %5435 = vmatprep.subr.bf16.mxu0 0
        %5436 = vmatpush1.bf16.msra.mxu0 0
        %5437 = vmatprep.subr.bf16.mxu0 0
        %5438 = vmatpush1.bf16.msra.mxu0 0
        %5439 = vmatprep.subr.bf16.mxu0 0
        %5440 = vmatpush1.bf16.msra.mxu0 0
        %5441 = vmatprep.subr.bf16.mxu0 0
        %5442 = vmatpush1.bf16.msra.mxu0 0
        %5443 = vmatprep.mubr.bf16.mxu0 0
        %5444 = vmatmul.mubr.bf16.gmra.mrb[0].mxu0 %v5409
        %v5445 = vpop.f32.mrb[0].mxu0
        %v5446 = vadd.f32 %v5394, %v5445
        %v5447 = vpop.f32.mrb[0].mxu0
        %v5448 = vpop.f32.mrb[0].mxu0
        %v5449 = vpop.f32.mrb[0].mxu0
        %5450 = vdwg.mxu0
        %v5451 = vmax.f32 %v5446, 0.0
        %v5452 = vpack.c.bf16 %v5451, %v5451
        %v5453 = vld [vmem:[%s1037] sm:$0xf]
        %v5454 = vld [vmem:[%s1037 + $0x4] sm:$0xf]
        %v5455 = vld [vmem:[%s1037 + $0x8] sm:$0xf]
        %v5456 = vld [vmem:[%s1037 + $0xc] sm:$0xf]
        %v5457 = vld [vmem:[%s1219] sm:$0x1]
        %v5459 = vlaneseq
        %v5460 = vshrl.u32 %v5459, 7
        %v5461 = vsub.s32 0, %v5460
        %v5462 = vrot.slane %v5457, %v5461
        %v5468 = vunpack.c.l.b16 %v5453
        %v5469 = vunpack.c.l.b16 %v5454
        %v5470 = vunpack.c.l.b16 %v5455
        %v5471 = vunpack.c.l.b16 %v5456
        %v5472 = vpack.c.b16 %v5469, %v5468
        %v5473 = vpack.c.b16 %v5471, %v5470
        %v5477 = vsel %vm1660, %v5452, 0
        %5479 = vmatprep.subr.bf16.mxu0 0
        %5480 = vmatpush1.bf16.msra.mxu0 %v5472
        %5481 = vmatprep.subr.bf16.mxu0 0
        %5482 = vmatpush1.bf16.msra.mxu0 %v5473
        %5483 = vmatprep.subr.bf16.mxu0 0
        %5484 = vmatpush1.bf16.msra.mxu0 0
        %5485 = vmatprep.subr.bf16.mxu0 0
        %5486 = vmatpush1.bf16.msra.mxu0 0
        %5487 = vmatprep.subr.bf16.mxu0 0
        %5488 = vmatpush1.bf16.msra.mxu0 0
        %5489 = vmatprep.subr.bf16.mxu0 0
        %5490 = vmatpush1.bf16.msra.mxu0 0
        %5491 = vmatprep.subr.bf16.mxu0 0
        %5492 = vmatpush1.bf16.msra.mxu0 0
        %5493 = vmatprep.subr.bf16.mxu0 0
        %5494 = vmatpush1.bf16.msra.mxu0 0
        %5495 = vmatprep.subr.bf16.mxu0 0
        %5496 = vmatpush1.bf16.msra.mxu0 0
        %5497 = vmatprep.subr.bf16.mxu0 0
        %5498 = vmatpush1.bf16.msra.mxu0 0
        %5499 = vmatprep.subr.bf16.mxu0 0
        %5500 = vmatpush1.bf16.msra.mxu0 0
        %5501 = vmatprep.subr.bf16.mxu0 0
        %5502 = vmatpush1.bf16.msra.mxu0 0
        %5503 = vmatprep.subr.bf16.mxu0 0
        %5504 = vmatpush1.bf16.msra.mxu0 0
        %5505 = vmatprep.subr.bf16.mxu0 0
        %5506 = vmatpush1.bf16.msra.mxu0 0
        %5507 = vmatprep.subr.bf16.mxu0 0
        %5508 = vmatpush1.bf16.msra.mxu0 0
        %5509 = vmatprep.subr.bf16.mxu0 0
        %5510 = vmatpush1.bf16.msra.mxu0 0
        %5511 = vmatprep.mubr.bf16.mxu0 0
        %5512 = vmatmul.mubr.bf16.gmra.mrb[0].mxu0 %v5477
        %v5513 = vpop.f32.mrb[0].mxu0
        %v5514 = vadd.f32 %v5462, %v5513
        %v5515 = vpop.f32.mrb[0].mxu0
        %v5516 = vpop.f32.mrb[0].mxu0
        %v5517 = vpop.f32.mrb[0].mxu0
        %5518 = vdwg.mxu0
        %v5521 = vrot.slane %v5299, 7
        %v5522 = vsel %vm5251, %v5521, %v5298
        %v5524 = vsel %vm5254, %v5522, 0.0
        %5525 = vadd.xlane.f32.xlu0 %v5524
        %v5526 = vpop.xlane.xlu0 %5525
        %v5527 = vmul.f32 %v5526, %v3784
        %v5529 = vrot.slane %v5527, 1
        %v5532 = vsub.f32 %v5298, %v5527
        %v5533 = vsub.f32 %v5299, %v5529
        %v5534 = vmul.f32 %v5532, %v5532
        %v5535 = vmul.f32 %v5533, %v5533
        %v5538 = vrot.slane %v5535, 7
        %v5539 = vsel %vm5251, %v5538, %v5534
        %v5541 = vsel %vm5254, %v5539, 0.0
        %5542 = vadd.xlane.f32.xlu0 %v5541
        %v5543 = vpop.xlane.xlu0 %5542
        %v5544 = vmul.f32 %v5543, %v3784
        %v5545 = vadd.f32 %v5544, 1e-05
        %v5546 = vrsqrt.pop %v5545
        %v5548 = vrot.slane %v5546, 1
        %v5551 = vmul.f32 %v5532, %v5546
        %v5552 = vmul.f32 %v5533, %v5548
        %v5553 = vmul.f32 %v5551, %v5364
        %v5554 = vmul.f32 %v5552, %v5364
        %v5555 = vadd.f32 %v5553, %v5374
        %v5556 = vadd.f32 %v5554, %v5374
        %v5557 = vpack.c.bf16 %v5555, %v5555
        %v5558 = vpack.c.bf16 %v5556, %v5556
        %v5561 = vunpack.c.l.b16 %v5557
        %v5562 = vunpack.c.l.b16 %v5558
        %v5563 = vrot.slane %v5561, 4
        %v5564 = vrot.slane %v5562, 3
        %v5565 = vsel %vm3840, %v5564, %v5563
        %v5566 = vpack.c.b16 %v5565, %v5565
        %v5568 = vsel %vm1660, %v5566, 0
        %5570 = vmatprep.subr.bf16.mxu0 0
        %5571 = vmatpush1.bf16.msra.mxu0 %v5404
        %5572 = vmatprep.subr.bf16.mxu0 0
        %5573 = vmatpush1.bf16.msra.mxu0 %v5405
        %5574 = vmatprep.subr.bf16.mxu0 0
        %5575 = vmatpush1.bf16.msra.mxu0 0
        %5576 = vmatprep.subr.bf16.mxu0 0
        %5577 = vmatpush1.bf16.msra.mxu0 0
        %5578 = vmatprep.subr.bf16.mxu0 0
        %5579 = vmatpush1.bf16.msra.mxu0 0
        %5580 = vmatprep.subr.bf16.mxu0 0
        %5581 = vmatpush1.bf16.msra.mxu0 0
        %5582 = vmatprep.subr.bf16.mxu0 0
        %5583 = vmatpush1.bf16.msra.mxu0 0
        %5584 = vmatprep.subr.bf16.mxu0 0
        %5585 = vmatpush1.bf16.msra.mxu0 0
        %5586 = vmatprep.subr.bf16.mxu0 0
        %5587 = vmatpush1.bf16.msra.mxu0 0
        %5588 = vmatprep.subr.bf16.mxu0 0
        %5589 = vmatpush1.bf16.msra.mxu0 0
        %5590 = vmatprep.subr.bf16.mxu0 0
        %5591 = vmatpush1.bf16.msra.mxu0 0
        %5592 = vmatprep.subr.bf16.mxu0 0
        %5593 = vmatpush1.bf16.msra.mxu0 0
        %5594 = vmatprep.subr.bf16.mxu0 0
        %5595 = vmatpush1.bf16.msra.mxu0 0
        %5596 = vmatprep.subr.bf16.mxu0 0
        %5597 = vmatpush1.bf16.msra.mxu0 0
        %5598 = vmatprep.subr.bf16.mxu0 0
        %5599 = vmatpush1.bf16.msra.mxu0 0
        %5600 = vmatprep.subr.bf16.mxu0 0
        %5601 = vmatpush1.bf16.msra.mxu0 0
        %5602 = vmatprep.mubr.bf16.mxu0 0
        %5603 = vmatmul.mubr.bf16.gmra.mrb[0].mxu0 %v5568
        %v5604 = vpop.f32.mrb[0].mxu0
        %v5605 = vadd.f32 %v5394, %v5604
        %v5606 = vpop.f32.mrb[0].mxu0
        %v5607 = vpop.f32.mrb[0].mxu0
        %v5608 = vpop.f32.mrb[0].mxu0
        %5609 = vdwg.mxu0
        %v5610 = vmax.f32 %v5605, 0.0
        %v5611 = vpack.c.bf16 %v5610, %v5610
        %v5613 = vsel %vm1660, %v5611, 0
        %5615 = vmatprep.subr.bf16.mxu0 0
        %5616 = vmatpush1.bf16.msra.mxu0 %v5472
        %5617 = vmatprep.subr.bf16.mxu0 0
        %5618 = vmatpush1.bf16.msra.mxu0 %v5473
        %5619 = vmatprep.subr.bf16.mxu0 0
        %5620 = vmatpush1.bf16.msra.mxu0 0
        %5621 = vmatprep.subr.bf16.mxu0 0
        %5622 = vmatpush1.bf16.msra.mxu0 0
        %5623 = vmatprep.subr.bf16.mxu0 0
        %5624 = vmatpush1.bf16.msra.mxu0 0
        %5625 = vmatprep.subr.bf16.mxu0 0
        %5626 = vmatpush1.bf16.msra.mxu0 0
        %5627 = vmatprep.subr.bf16.mxu0 0
        %5628 = vmatpush1.bf16.msra.mxu0 0
        %5629 = vmatprep.subr.bf16.mxu0 0
        %5630 = vmatpush1.bf16.msra.mxu0 0
        %5631 = vmatprep.subr.bf16.mxu0 0
        %5632 = vmatpush1.bf16.msra.mxu0 0
        %5633 = vmatprep.subr.bf16.mxu0 0
        %5634 = vmatpush1.bf16.msra.mxu0 0
        %5635 = vmatprep.subr.bf16.mxu0 0
        %5636 = vmatpush1.bf16.msra.mxu0 0
        %5637 = vmatprep.subr.bf16.mxu0 0
        %5638 = vmatpush1.bf16.msra.mxu0 0
        %5639 = vmatprep.subr.bf16.mxu0 0
        %5640 = vmatpush1.bf16.msra.mxu0 0
        %5641 = vmatprep.subr.bf16.mxu0 0
        %5642 = vmatpush1.bf16.msra.mxu0 0
        %5643 = vmatprep.subr.bf16.mxu0 0
        %5644 = vmatpush1.bf16.msra.mxu0 0
        %5645 = vmatprep.subr.bf16.mxu0 0
        %5646 = vmatpush1.bf16.msra.mxu0 0
        %5647 = vmatprep.mubr.bf16.mxu0 0
        %5648 = vmatmul.mubr.bf16.gmra.mrb[0].mxu0 %v5613
        %v5649 = vpop.f32.mrb[0].mxu0
        %v5650 = vadd.f32 %v5462, %v5649
        %v5651 = vpop.f32.mrb[0].mxu0
        %v5652 = vpop.f32.mrb[0].mxu0
        %v5653 = vpop.f32.mrb[0].mxu0
        %5654 = vdwg.mxu0
        %v5656 = vcombine.high %v5514, %v5514
        %vm5658 = vcmask 257024
        %5659 = vst.msk [vmem:[#allocation2] sm:$0xf] %vm5658, %v5514
        %5660 = vst.msk [vmem:[#allocation2 + $0x8] sm:$0xf] %vm5658, %v5656
        %v5663 = vunpack.c.l.s4 1966171168
        %v5664 = vunpack.c.0.s8 %v5663
        %v5665 = vlaneseq
        %v5666 = vshrl.u32 %v5665, 7
        %v5667 = vsub.s32 %v5664, %v5666
        %v5668 = vrot.slane %v5650, %v5667
        %v5669 = vcombine.high %v5668, %v5668
        %v5671 = vunpack.c.l.s4 1966171168
        %v5672 = vunpack.c.0.s8 %v5671
        %v5673 = vlaneseq
        %v5674 = vshrl.u32 %v5673, 7
        %v5675 = vsub.s32 %v5672, %v5674
        %v5676 = vrot.slane %v5668, %v5675
        %v5678 = vunpack.c.l.s4 1966171168
        %v5679 = vunpack.c.0.s8 %v5678
        %v5680 = vlaneseq
        %v5681 = vshrl.u32 %v5680, 7
        %v5682 = vsub.s32 %v5679, %v5681
        %v5683 = vrot.slane %v5669, %v5682
        %vm5686 = vcmask 253952
        %5687 = vst.msk [vmem:[#allocation2 + $0x4] sm:$0x1] %vm5686, %v5676
        %5688 = vst.msk [vmem:[#allocation2 + $0xc] sm:$0x1] %vm5686, %v5683
        %p5689 = scmp.eq.s32.totalorder %s48, 1
        // Predicated region
        $region169: #{timexer_forward.1} parent=127 // pred_check
          %p5690 = pneg %p5689
        $region170: #{timexer_forward.1} parent=127 // pred_check_branch
          %5692 = sbr.rel (%p5690) target = $region172
        $region171: #{timexer_forward.1} parent=127 // pred_region
          %v5693 = vpack.c.bf16 %v5650, %v5650
          %v5694 = vld [vmem:[%s7] sm:$0xf]
          %v5695 = vld [vmem:[%s7 + $0x4] sm:$0xf]
          %v5696 = vld [vmem:[%s7 + $0x8] sm:$0xf]
          %v5697 = vld [vmem:[%s7 + $0xc] sm:$0xf]
          %v5698 = vld [vmem:[#allocation12] sm:$0x1]
          %v5700 = vlaneseq
          %v5701 = vshrl.u32 %v5700, 7
          %v5702 = vsub.s32 0, %v5701
          %v5703 = vrot.slane %v5698, %v5702
          %v5709 = vunpack.c.l.b16 %v5694
          %v5710 = vunpack.c.l.b16 %v5695
          %v5711 = vunpack.c.l.b16 %v5696
          %v5712 = vunpack.c.l.b16 %v5697
          %v5713 = vpack.c.b16 %v5710, %v5709
          %v5714 = vpack.c.b16 %v5712, %v5711
          %v5718 = vsel %vm1660, %v5693, 0
          %5720 = vmatprep.subr.bf16.mxu0 0
          %5721 = vmatpush1.bf16.msra.mxu0 %v5713
          %5722 = vmatprep.subr.bf16.mxu0 0
          %5723 = vmatpush1.bf16.msra.mxu0 %v5714
          %5724 = vmatprep.subr.bf16.mxu0 0
          %5725 = vmatpush1.bf16.msra.mxu0 0
          %5726 = vmatprep.subr.bf16.mxu0 0
          %5727 = vmatpush1.bf16.msra.mxu0 0
          %5728 = vmatprep.subr.bf16.mxu0 0
          %5729 = vmatpush1.bf16.msra.mxu0 0
          %5730 = vmatprep.subr.bf16.mxu0 0
          %5731 = vmatpush1.bf16.msra.mxu0 0
          %5732 = vmatprep.subr.bf16.mxu0 0
          %5733 = vmatpush1.bf16.msra.mxu0 0
          %5734 = vmatprep.subr.bf16.mxu0 0
          %5735 = vmatpush1.bf16.msra.mxu0 0
          %5736 = vmatprep.subr.bf16.mxu0 0
          %5737 = vmatpush1.bf16.msra.mxu0 0
          %5738 = vmatprep.subr.bf16.mxu0 0
          %5739 = vmatpush1.bf16.msra.mxu0 0
          %5740 = vmatprep.subr.bf16.mxu0 0
          %5741 = vmatpush1.bf16.msra.mxu0 0
          %5742 = vmatprep.subr.bf16.mxu0 0
          %5743 = vmatpush1.bf16.msra.mxu0 0
          %5744 = vmatprep.subr.bf16.mxu0 0
          %5745 = vmatpush1.bf16.msra.mxu0 0
          %5746 = vmatprep.subr.bf16.mxu0 0
          %5747 = vmatpush1.bf16.msra.mxu0 0
          %5748 = vmatprep.subr.bf16.mxu0 0
          %5749 = vmatpush1.bf16.msra.mxu0 0
          %5750 = vmatprep.subr.bf16.mxu0 0
          %5751 = vmatpush1.bf16.msra.mxu0 0
          %5752 = vmatprep.mubr.bf16.mxu0 0
          %5753 = vmatmul.mubr.bf16.gmra.mrb[0].mxu0 %v5718
          %v5754 = vpop.f32.mrb[0].mxu0
          %v5755 = vadd.f32 %v5703, %v5754
          %v5756 = vpop.f32.mrb[0].mxu0
          %v5757 = vpop.f32.mrb[0].mxu0
          %v5758 = vpop.f32.mrb[0].mxu0
          %5759 = vdwg.mxu0
          %vm5760 = vcmask 41984
          %5761 = vst.msk [vmem:[#allocation19] sm:$0x3] %vm5760, %v5755
        $region172: #{timexer_forward.1} parent=127 // pred_fallthru
          _
        // Predicated region
        $region173: #{timexer_forward.1} parent=127 // pred_check
          %p5762 = pneg %p718
        $region174: #{timexer_forward.1} parent=127 // pred_check_branch
          %5764 = sbr.rel (%p5762) target = $region176
        $region175: #{timexer_forward.1} parent=127 // pred_region
          %s5766 = ssub.s32 32, 32
          %5767 = vsyncadd [#allocation6], %s5766
          %s5769 = sshll.u32 [#allocation19], 4
          %s5770 = int_to_ptr.vmem [resolvable:$true] %s5769
          %5772 = dma.vmem_to_hbm [thread:$0]  %s5770, 32, %s27, [#allocation6]
        $region176: #{timexer_forward.1} parent=127 // pred_fallthru
          _
        // Predicated region
        $region177: #{timexer_forward.1} parent=127 // pred_check
          %p5773 = pneg %p718
        $region178: #{timexer_forward.1} parent=127 // pred_check_branch
          %5775 = sbr.rel (%p5773) target = $region180
        $region179: #{timexer_forward.1} parent=127 // pred_region
          %5776 = dma.done [#allocation6], 32
        $region180: #{timexer_forward.1} parent=127 // pred_fallthru
          _
      $region128: #{timexer_forward.1} parent=5 // pred_fallthru
        _
      %p5777 = scmp.le.s32.totalorder 2, %s43
      // Predicated region
      $region181: #{timexer_forward.1} parent=5 // pred_check
        %p5778 = pneg %p5777
      $region182: #{timexer_forward.1} parent=5 // pred_check_branch
        %5780 = sbr.rel (%p5778) target = $region184
      $region183: #{timexer_forward.1} parent=5 // pred_region
        %s5781 = ssub.s32 %s43, 2
      $region184: #{timexer_forward.1} parent=5 // pred_fallthru
        _
    $region6: #{timexer_forward.1} parent=1 // loop_footer
      %s47 = sadd.s32 1, %s43
    $region7: #{timexer_forward.1} parent=1 // loop_footer_branch
      %42 = sbr.rel target = $region3
    $region8: #{timexer_forward.1} parent=1 // loop_exit
      _
    %5782 = vsyncpa [#allocation5], 1
    %s5783 = scalar_lea.sflag [#allocation5], 1
    %5784 = vsyncpa %s5783, 1
    %5785 = vsyncpa [#allocation8], 1
    %5786 = vsyncpa [#allocation11], 1
    %5787 = vsyncpa [#allocation14], 1
    %s5788 = scalar_lea.sflag [#allocation14], 1
    %5789 = vsyncpa %s5788, 1
    %5790 = vsyncpa [#allocation17], 1
    %s5791 = scalar_lea.sflag [#allocation17], 1
    %5792 = vsyncpa %s5791, 1
    %5793 = vsyncpa [#allocation6], 1
    %s5794 = scalar_lea.sflag [#allocation6], 1
    %5795 = vsyncpa %s5794, 1

</llo_original>
